<compile_context>
chip_gen: v7x
topology: tpu7x:2x2x1
jax: 0.10.0
libtpu: 0.0.40
codegen_flags: <defaults>
</compile_context>

<pallas_src>
import math
import functools

import jax
import jax.numpy as jnp
from jax.experimental import pallas as pl
from jax.experimental.pallas import tpu as pltpu


# ----------------------------------------------------------------------------
# Helpers
# ----------------------------------------------------------------------------
def _layer_norm(x, g, b, eps):
    """LayerNorm with fused moments: var = E[x^2] - mu^2 (one pass over x)."""
    mu = jnp.mean(x, axis=-1, keepdims=True)
    ms = jnp.mean(x * x, axis=-1, keepdims=True)
    var = jnp.maximum(ms - mu * mu, 0.0)
    return (x - mu) * jax.lax.rsqrt(var + eps) * g + b


def _default_batch_block(B, Lq):
    """Batch block so each grid step has >=128 matmul rows, keeping >=2 grid
    steps (megacore balance) when the batch allows it."""
    divs = [d for d in range(1, B + 1) if B % d == 0]
    cands = [d for d in divs if d * Lq >= 128 and B // d >= 2]
    if cands:
        return min(cands)
    cands = [d for d in divs if B // d >= 2]
    if cands:
        return max(cands)
    return B


# ----------------------------------------------------------------------------
# Kernel: whole encoder layer for one batch block (grid = (B // Bblk,))
# ----------------------------------------------------------------------------
def _encoder_layer_kernel(q_ref, s_ref,
                          wq_ref, bq_ref,        # (D, D) cdt, (1, D) f32  [1/sqrt(hd) folded]
                          wkv_ref, bkv_ref,      # (D, 2D) cdt, (1, 2D) f32
                          wo_ref, bo_ref,        # (D, D) cdt, (1, D) f32
                          g1_ref, be1_ref, g2_ref, be2_ref,   # (1, D) f32
                          w1_ref, b1_ref,        # (D, dff) cdt, (1, dff) f32
                          w2_ref, b2_ref,        # (dff, D) cdt, (1, D) f32
                          out_ref,
                          *, nhead, eps):
    Bb, Lq, D = q_ref.shape
    hd = D // nhead
    cdt = wq_ref.dtype                     # MXU operand dtype (bf16 in production)

    # Flatten the batch block: all projection / FFN / LN matmuls see M = Bb*Lq.
    q2 = q_ref[...].reshape(Bb * Lq, D)
    s2 = s_ref[...].reshape(Bb * s_ref.shape[1], D)
    qf = q2.astype(jnp.float32)            # raw query kept in f32 for residuals

    # ---- Q and fused K|V projections: lane-dense 2-D matmuls ----------------
    Qc = (jnp.dot(q2.astype(cdt), wq_ref[...],
                  preferred_element_type=jnp.float32) + bq_ref[...]).astype(cdt)
    KVc = (jnp.dot(s2.astype(cdt), wkv_ref[...],
                   preferred_element_type=jnp.float32) + bkv_ref[...]).astype(cdt)
    Kc = KVc[:, :D]
    Vc = KVc[:, D:]

    Q3 = Qc.reshape(Bb, Lq, D)             # leading-dim split: free
    K3 = Kc.reshape(Bb, -1, D)
    V3 = Vc.reshape(Bb, -1, D)

    # ---- scaled dot-product attention (per head; hd is inherently narrow) ---
    # TODO(synk): tile over Ls with an online (flash-style) softmax before
    # running long sequences; full (Bb, Lq, Ls) scores are materialized here.
    ctx_parts = []
    for h in range(nhead):
        lo = h * hd
        qh = Q3[:, :, lo:lo + hd]                                  # (Bb, Lq, hd)
        kh = K3[:, :, lo:lo + hd]                                  # (Bb, Ls, hd)
        vh = V3[:, :, lo:lo + hd]
        sc = jnp.einsum('bqc,bkc->bqk', qh, kh,
                        preferred_element_type=jnp.float32)        # (Bb, Lq, Ls)
        m = jnp.max(sc, axis=-1, keepdims=True)
        p = jnp.exp(sc - m)
        inv = 1.0 / jnp.sum(p, axis=-1, keepdims=True)             # exact divide
        pv = jnp.einsum('bqk,bkc->bqc', p.astype(cdt), vh,
                        preferred_element_type=jnp.float32)        # (Bb, Lq, hd)
        ctx_parts.append(pv * inv)                                 # normalize on hd cols
    ctx = jnp.concatenate(ctx_parts, axis=-1).reshape(Bb * Lq, D)

    # ---- output projection: single lane-dense (M, D) x (D, D) matmul --------
    attn_out = (jnp.dot(ctx.astype(cdt), wo_ref[...],
                        preferred_element_type=jnp.float32) + bo_ref[...])

    # ---- residual (raw q) + LayerNorm1 (dropout1 = identity) ----------------
    x = _layer_norm(qf + attn_out, g1_ref[...], be1_ref[...], eps)

    # ---- feed-forward block (dropout = identity) -----------------------------
    h1 = jnp.maximum(
        jnp.dot(x.astype(cdt), w1_ref[...],
                preferred_element_type=jnp.float32) + b1_ref[...], 0.0)
    ff = (jnp.dot(h1.astype(cdt), w2_ref[...],
                  preferred_element_type=jnp.float32) + b2_ref[...])

    # ---- residual with the RAW query (per the module) + LayerNorm2 ----------
    y = _layer_norm(qf + ff, g2_ref[...], be2_ref[...], eps)

    out_ref[...] = y.reshape(Bb, Lq, D).astype(out_ref.dtype)


# ----------------------------------------------------------------------------
# One-time parameter preparation (load time, NOT per call)
# ----------------------------------------------------------------------------
def prepare_params(params, *, nhead, compute_dtype=jnp.bfloat16):
    """Transpose / fuse PyTorch-layout weights once.

    Emits lane-dense matmul weights (in `compute_dtype`, bf16 by default for
    MXU-native operands) with the 1/sqrt(hd) attention scale folded into the Q
    projection, plus f32 biases / LayerNorm params.  The kernel then only ever
    computes x @ W with f32 accumulation.
    """
    D = params["out_proj_w"].shape[0]
    assert D % nhead == 0, "d_model must be divisible by nhead"
    hd = D // nhead
    scale = 1.0 / math.sqrt(hd)

    wq = (params["in_proj_w"][:D] * scale).T                      # (D, D)
    wk = params["in_proj_w"][D:2 * D].T                           # (D, D)
    wv = params["in_proj_w"][2 * D:].T                            # (D, D)
    bq = params["in_proj_b"][:D] * scale
    bkv = jnp.concatenate([params["in_proj_b"][D:2 * D],
                           params["in_proj_b"][2 * D:]])

    cdt = compute_dtype
    row = lambda a: a.reshape(1, -1).astype(jnp.float32)
    return {
        "wq": wq.astype(cdt),  "bq": row(bq),
        "wkv": jnp.concatenate([wk, wv], axis=1).astype(cdt), "bkv": row(bkv),
        "wo": params["out_proj_w"].T.astype(cdt), "bo": row(params["out_proj_b"]),
        "g1": row(params["ln1_g"]), "be1": row(params["ln1_b"]),
        "g2": row(params["ln2_g"]), "be2": row(params["ln2_b"]),
        "w1": params["w1"].T.astype(cdt), "b1": row(params["b1"]),
        "w2": params["w2"].T.astype(cdt), "b2": row(params["b2"]),
    }


# ----------------------------------------------------------------------------
# Wrapper
# ----------------------------------------------------------------------------
def transformer_cam_encoder_layer(s, q, prepped, *, nhead, eps=1e-5,
                                  batch_block=None):
    """s: (B, Ls, D) keys/values, q: (B, Lq, D) queries.  Returns (B, Lq, D)."""
    B, Lq, D = q.shape
    _, Ls, _ = s.shape
    hd = D // nhead
    dff = prepped["w1"].shape[1]

    if batch_block is None:
        batch_block = _default_batch_block(B, Lq)
    assert B % batch_block == 0, "batch must be divisible by batch_block"
    Bb = batch_block
    grid = (B // Bb,)

    kernel = functools.partial(_encoder_layer_kernel, nhead=nhead, eps=eps)

    # Whole-array, single-buffered VMEM residency for weights / biases / LN.
    wspec = pl.BlockSpec(memory_space=pltpu.MemorySpace.VMEM)

    # ---- honest VMEM estimate (f32 intermediates counted at 4 B) ------------
    a_item = jnp.dtype(q.dtype).itemsize
    w_item = jnp.dtype(prepped["wq"].dtype).itemsize
    rows_q, rows_s = Bb * Lq, Bb * Ls
    act_bytes = 2 * (Bb * Lq * D + Bb * Ls * D + Bb * Lq * D) * a_item  # 2x: dbl buf
    weight_bytes = (3 * D * D + D * 2 * D + 2 * D * dff) * w_item \
                   + (9 * D + dff + 2 * D) * 4
    interm_bytes = 4 * (rows_q * D            # Q
                        + rows_s * 2 * D      # KV
                        + 2 * Bb * Lq * Ls    # scores + p (per head)
                        + 2 * rows_q * D      # ctx + attn_out
                        + 2 * rows_q * D      # residual / LN temps
                        + rows_q * dff)       # h1
    est_bytes = act_bytes + weight_bytes + interm_bytes
    try:
        phys_vmem = getattr(pltpu.get_tpu_info(), "vmem_capacity_bytes",
                            64 * 1024 * 1024)
    except Exception:  # pragma: no cover - conservative v7x (64 MiB) fallback
        phys_vmem = 64 * 1024 * 1024
    cap = max(phys_vmem - 8 * 1024 * 1024, 32 * 1024 * 1024)
    vmem_limit = int(min(max(2 * est_bytes, 32 * 1024 * 1024), cap))

    # ---- advisory cost estimate ----------------------------------------------
    flops = 2 * B * (Lq * D * D              # Q projection
                     + Ls * D * 2 * D        # fused K|V projection
                     + 2 * nhead * Lq * Ls * hd   # scores + attn@V
                     + Lq * D * D            # output projection
                     + 2 * Lq * D * dff)     # FFN
    transcendentals = B * nhead * Lq * Ls
    bytes_accessed = B * (2 * Lq * D + Ls * D) * a_item \
                     + (3 * D * D + D * 2 * D + 2 * D * dff) * w_item \
                     + (9 * D + dff + 2 * D) * 4

    return pl.pallas_call(
        kernel,
        out_shape=jax.ShapeDtypeStruct((B, Lq, D), q.dtype),
        grid_spec=pltpu.PrefetchScalarGridSpec(
            num_scalar_prefetch=0,
            grid=grid,
            in_specs=[
                pl.BlockSpec((Bb, Lq, D), lambda b: (b, 0, 0)),   # q (blocked)
                pl.BlockSpec((Bb, Ls, D), lambda b: (b, 0, 0)),   # s (blocked)
                wspec, wspec,        # wq, bq
                wspec, wspec,        # wkv, bkv
                wspec, wspec,        # wo, bo
                wspec, wspec,        # ln1 gamma / beta
                wspec, wspec,        # ln2 gamma / beta
                wspec, wspec,        # w1, b1
                wspec, wspec,        # w2, b2
            ],
            out_specs=pl.BlockSpec((Bb, Lq, D), lambda b: (b, 0, 0)),
        ),
        compiler_params=pltpu.CompilerParams(
            dimension_semantics=("parallel",),
            vmem_limit_bytes=vmem_limit),
        cost_estimate=pl.CostEstimate(
            flops=int(flops),
            transcendentals=int(transcendentals),
            bytes_accessed=int(bytes_accessed)),
    )(q, s,
      prepped["wq"], prepped["bq"],
      prepped["wkv"], prepped["bkv"],
      prepped["wo"], prepped["bo"],
      prepped["g1"], prepped["be1"], prepped["g2"], prepped["be2"],
      prepped["w1"], prepped["b1"], prepped["w2"], prepped["b2"])


# ----------------------------------------------------------------------------
# Pure-JAX reference for verification (raw PyTorch-layout params)
# ----------------------------------------------------------------------------
def _reference(s, q, params, *, nhead, eps=1e-5):
    B, Lq, D = q.shape
    Ls = s.shape[1]
    hd = D // nhead

    def lin(x, w, b):
        return jnp.einsum("...i,oi->...o", x, w) + b

    Q = lin(q, params["in_proj_w"][:D], params["in_proj_b"][:D])
    K = lin(s, params["in_proj_w"][D:2 * D], params["in_proj_b"][D:2 * D])
    V = lin(s, params["in_proj_w"][2 * D:], params["in_proj_b"][2 * D:])
    Q = Q.reshape(B, Lq, nhead, hd).transpose(0, 2, 1, 3)
    K = K.reshape(B, Ls, nhead, hd).transpose(0, 2, 1, 3)
    V = V.reshape(B, Ls, nhead, hd).transpose(0, 2, 1, 3)
    scores = jnp.einsum("bhqd,bhkd->bhqk", Q, K) / math.sqrt(hd)
    attn = jax.nn.softmax(scores, axis=-1)
    ctx = jnp.einsum("bhqk,bhkd->bhqd", attn, V)
    ctx = ctx.transpose(0, 2, 1, 3).reshape(B, Lq, D)
    attn_out = lin(ctx, params["out_proj_w"], params["out_proj_b"])

    def ln(x, g, b):
        mu = x.mean(-1, keepdims=True)
        var = ((x - mu) ** 2).mean(-1, keepdims=True)
        return (x - mu) * jax.lax.rsqrt(var + eps) * g + b

    x = ln(q + attn_out, params["ln1_g"], params["ln1_b"])
    ff = lin(jnp.maximum(lin(x, params["w1"], params["b1"]), 0.0),
             params["w2"], params["b2"])
    return ln(q + ff, params["ln2_g"], params["ln2_b"])


# ----------------------------------------------------------------------------
if __name__ == "__main__":
    # Small but lane-dense shapes; B=16 with Bblk=8 gives M=128-row matmuls
    # and a 2-step grid (megacore-balanced).
    B, Lq, Ls = 16, 16, 32
    d_model, nhead, dff = 128, 4, 256

    key = jax.random.PRNGKey(0)
    ks = jax.random.split(key, 10)

    params = {
        "in_proj_w":  0.05 * jax.random.normal(ks[0], (3 * d_model, d_model), jnp.float32),
        "in_proj_b":  0.01 * jax.random.normal(ks[1], (3 * d_model,), jnp.float32),
        "out_proj_w": 0.05 * jax.random.normal(ks[2], (d_model, d_model), jnp.float32),
        "out_proj_b": 0.01 * jax.random.normal(ks[3], (d_model,), jnp.float32),
        "w1":         0.05 * jax.random.normal(ks[4], (dff, d_model), jnp.float32),
        "b1":         0.01 * jax.random.normal(ks[5], (dff,), jnp.float32),
        "w2":         0.05 * jax.random.normal(ks[6], (d_model, dff), jnp.float32),
        "b2":         0.01 * jax.random.normal(ks[7], (d_model,), jnp.float32),
        "ln1_g": jnp.ones((d_model,), jnp.float32),
        "ln1_b": jnp.zeros((d_model,), jnp.float32),
        "ln2_g": jnp.ones((d_model,), jnp.float32),
        "ln2_b": jnp.zeros((d_model,), jnp.float32),
    }

    q = jax.random.normal(ks[8], (B, Lq, d_model), jnp.float32)
    s = jax.random.normal(ks[9], (B, Ls, d_model), jnp.float32)

    ref = _reference(s, q, params, nhead=nhead)

    # 1) Exact-path check: f32 weights / MXU operands, tight tolerance.
    prepped_f32 = prepare_params(params, nhead=nhead, compute_dtype=jnp.float32)
    out_f32 = jax.block_until_ready(
        transformer_cam_encoder_layer(s, q, prepped_f32, nhead=nhead))
    assert out_f32.shape == (B, Lq, d_model)
    err_f32 = float(jnp.max(jnp.abs(out_f32 - ref)))
    assert jnp.allclose(out_f32, ref, rtol=3e-3, atol=3e-3), err_f32

    # 2) Production path: bf16 MXU operands, f32 accumulation / softmax / LN.
    prepped_bf16 = prepare_params(params, nhead=nhead, compute_dtype=jnp.bfloat16)
    out_bf16 = jax.block_until_ready(
        transformer_cam_encoder_layer(s, q, prepped_bf16, nhead=nhead))
    err_bf16 = float(jnp.max(jnp.abs(out_bf16 - ref)))
    assert jnp.allclose(out_bf16, ref, rtol=6e-2, atol=6e-2), err_bf16

    print("KERNEL_OK")
</pallas_src>

<mosaic_0001>
module attributes {stable_mosaic.version = 11 : i64} {
  func.func @_encoder_layer_kernel(%arg0: i32, %arg1: memref<8x16x128xf32, #tpu.memory_space<vmem>>, %arg2: memref<8x32x128xf32, #tpu.memory_space<vmem>>, %arg3: memref<128x128xf32, #tpu.memory_space<vmem>>, %arg4: memref<1x128xf32, #tpu.memory_space<vmem>>, %arg5: memref<128x256xf32, #tpu.memory_space<vmem>>, %arg6: memref<1x256xf32, #tpu.memory_space<vmem>>, %arg7: memref<128x128xf32, #tpu.memory_space<vmem>>, %arg8: memref<1x128xf32, #tpu.memory_space<vmem>>, %arg9: memref<1x128xf32, #tpu.memory_space<vmem>>, %arg10: memref<1x128xf32, #tpu.memory_space<vmem>>, %arg11: memref<1x128xf32, #tpu.memory_space<vmem>>, %arg12: memref<1x128xf32, #tpu.memory_space<vmem>>, %arg13: memref<128x256xf32, #tpu.memory_space<vmem>>, %arg14: memref<1x256xf32, #tpu.memory_space<vmem>>, %arg15: memref<256x128xf32, #tpu.memory_space<vmem>>, %arg16: memref<1x128xf32, #tpu.memory_space<vmem>>, %arg17: memref<8x16x128xf32, #tpu.memory_space<vmem>>) attributes {dimension_semantics = [#tpu.dimension_semantics<parallel>], iteration_bounds = array<i64: 2>, scalar_prefetch = 0 : i64, scratch_operands = 0 : i64, tpu.core_type = #tpu.core_type<tc>, window_params = [{transform_indices = @transform_0, window_bounds = array<i64: 8, 16, 128>}, {transform_indices = @transform_1, window_bounds = array<i64: 8, 32, 128>}, {pipeline_mode = #tpu.pipeline_mode<synchronous>, transform_indices = @transform_2, window_bounds = array<i64: 128, 128>}, {pipeline_mode = #tpu.pipeline_mode<synchronous>, transform_indices = @transform_3, window_bounds = array<i64: 1, 128>}, {pipeline_mode = #tpu.pipeline_mode<synchronous>, transform_indices = @transform_4, window_bounds = array<i64: 128, 256>}, {pipeline_mode = #tpu.pipeline_mode<synchronous>, transform_indices = @transform_5, window_bounds = array<i64: 1, 256>}, {pipeline_mode = #tpu.pipeline_mode<synchronous>, transform_indices = @transform_6, window_bounds = array<i64: 128, 128>}, {pipeline_mode = #tpu.pipeline_mode<synchronous>, transform_indices = @transform_7, window_bounds = array<i64: 1, 128>}, {pipeline_mode = #tpu.pipeline_mode<synchronous>, transform_indices = @transform_8, window_bounds = array<i64: 1, 128>}, {pipeline_mode = #tpu.pipeline_mode<synchronous>, transform_indices = @transform_9, window_bounds = array<i64: 1, 128>}, {pipeline_mode = #tpu.pipeline_mode<synchronous>, transform_indices = @transform_10, window_bounds = array<i64: 1, 128>}, {pipeline_mode = #tpu.pipeline_mode<synchronous>, transform_indices = @transform_11, window_bounds = array<i64: 1, 128>}, {pipeline_mode = #tpu.pipeline_mode<synchronous>, transform_indices = @transform_12, window_bounds = array<i64: 128, 256>}, {pipeline_mode = #tpu.pipeline_mode<synchronous>, transform_indices = @transform_13, window_bounds = array<i64: 1, 256>}, {pipeline_mode = #tpu.pipeline_mode<synchronous>, transform_indices = @transform_14, window_bounds = array<i64: 256, 128>}, {pipeline_mode = #tpu.pipeline_mode<synchronous>, transform_indices = @transform_15, window_bounds = array<i64: 1, 128>}, {transform_indices = @transform_16, window_bounds = array<i64: 8, 16, 128>}]} {
    %c0 = arith.constant 0 : index
    %c0_0 = arith.constant 0 : index
    %c0_1 = arith.constant 0 : index
    %0 = vector.load %arg1[%c0, %c0_0, %c0_1] : memref<8x16x128xf32, #tpu.memory_space<vmem>>, vector<8x16x128xf32>
    %1 = vector.shape_cast %0 : vector<8x16x128xf32> to vector<128x128xf32>
    %c0_2 = arith.constant 0 : index
    %c0_3 = arith.constant 0 : index
    %c0_4 = arith.constant 0 : index
    %2 = vector.load %arg2[%c0_2, %c0_3, %c0_4] : memref<8x32x128xf32, #tpu.memory_space<vmem>>, vector<8x32x128xf32>
    %3 = vector.shape_cast %2 : vector<8x32x128xf32> to vector<256x128xf32>
    %c0_5 = arith.constant 0 : index
    %c0_6 = arith.constant 0 : index
    %4 = vector.load %arg3[%c0_5, %c0_6] : memref<128x128xf32, #tpu.memory_space<vmem>>, vector<128x128xf32>
    %cst = arith.constant dense<0.000000e+00> : vector<128x128xf32>
    %5 = tpu.matmul %1, %4, %cst {dimension_numbers = #tpu.dot_dimension_numbers<[1], [0], [0], [1], [0, 0, 1, 1], [], []>} : vector<128x128xf32>, vector<128x128xf32>, vector<128x128xf32> -> vector<128x128xf32>
    %c0_7 = arith.constant 0 : index
    %c0_8 = arith.constant 0 : index
    %6 = vector.load %arg4[%c0_7, %c0_8] : memref<1x128xf32, #tpu.memory_space<vmem>>, vector<1x128xf32>
    %7 = vector.broadcast %6 : vector<1x128xf32> to vector<128x128xf32>
    %8 = arith.addf %5, %7 : vector<128x128xf32>
    %c0_9 = arith.constant 0 : index
    %c0_10 = arith.constant 0 : index
    %9 = vector.load %arg5[%c0_9, %c0_10] : memref<128x256xf32, #tpu.memory_space<vmem>>, vector<128x256xf32>
    %cst_11 = arith.constant dense<0.000000e+00> : vector<256x256xf32>
    %10 = tpu.matmul %3, %9, %cst_11 {dimension_numbers = #tpu.dot_dimension_numbers<[1], [0], [0], [1], [0, 0, 1, 1], [], []>} : vector<256x128xf32>, vector<128x256xf32>, vector<256x256xf32> -> vector<256x256xf32>
    %c0_12 = arith.constant 0 : index
    %c0_13 = arith.constant 0 : index
    %11 = vector.load %arg6[%c0_12, %c0_13] : memref<1x256xf32, #tpu.memory_space<vmem>>, vector<1x256xf32>
    %12 = vector.broadcast %11 : vector<1x256xf32> to vector<256x256xf32>
    %13 = arith.addf %10, %12 : vector<256x256xf32>
    %14 = vector.extract_strided_slice %13 {offsets = [0, 0], sizes = [256, 128], strides = [1, 1]} : vector<256x256xf32> to vector<256x128xf32>
    %15 = vector.extract_strided_slice %13 {offsets = [0, 128], sizes = [256, 128], strides = [1, 1]} : vector<256x256xf32> to vector<256x128xf32>
    %16 = vector.shape_cast %8 : vector<128x128xf32> to vector<8x16x128xf32>
    %17 = vector.shape_cast %14 : vector<256x128xf32> to vector<8x32x128xf32>
    %18 = vector.shape_cast %15 : vector<256x128xf32> to vector<8x32x128xf32>
    %19 = vector.extract_strided_slice %16 {offsets = [0, 0, 0], sizes = [8, 16, 32], strides = [1, 1, 1]} : vector<8x16x128xf32> to vector<8x16x32xf32>
    %20 = vector.extract_strided_slice %17 {offsets = [0, 0, 0], sizes = [8, 32, 32], strides = [1, 1, 1]} : vector<8x32x128xf32> to vector<8x32x32xf32>
    %21 = vector.extract_strided_slice %18 {offsets = [0, 0, 0], sizes = [8, 32, 32], strides = [1, 1, 1]} : vector<8x32x128xf32> to vector<8x32x32xf32>
    "tpu.trace_start"() <{level = 10 : i32, message = "bqc,bkc->bqk"}> : () -> ()
    %cst_14 = arith.constant dense<0.000000e+00> : vector<8x16x32xf32>
    %22 = tpu.matmul %19, %20, %cst_14 {dimension_numbers = #tpu.dot_dimension_numbers<[2], [2], [1], [1], [0, 0, 0, 1, 1, 1], [0], [0]>} : vector<8x16x32xf32>, vector<8x32x32xf32>, vector<8x16x32xf32> -> vector<8x16x32xf32>
    "tpu.trace_stop"() : () -> ()
    %cst_15 = arith.constant dense<0xFF800000> : vector<8x16xf32>
    %23 = vector.multi_reduction <maximumf>, %22, %cst_15 [2] : vector<8x16x32xf32> to vector<8x16xf32>
    %24 = vector.shape_cast %23 : vector<8x16xf32> to vector<8x16x1xf32>
    %25 = vector.broadcast %24 : vector<8x16x1xf32> to vector<8x16x32xf32>
    %26 = arith.subf %22, %25 : vector<8x16x32xf32>
    %27 = math.exp %26 : vector<8x16x32xf32>
    %cst_16 = arith.constant dense<0.000000e+00> : vector<8x16xf32>
    %28 = vector.multi_reduction <add>, %27, %cst_16 [2] : vector<8x16x32xf32> to vector<8x16xf32>
    %29 = vector.shape_cast %28 : vector<8x16xf32> to vector<8x16x1xf32>
    %cst_17 = arith.constant 1.000000e+00 : f32
    %30 = vector.broadcast %cst_17 : f32 to vector<8x16x1xf32>
    %31 = arith.divf %30, %29 : vector<8x16x1xf32>
    "tpu.trace_start"() <{level = 10 : i32, message = "bqk,bkc->bqc"}> : () -> ()
    %cst_18 = arith.constant dense<0.000000e+00> : vector<8x16x32xf32>
    %32 = tpu.matmul %27, %21, %cst_18 {dimension_numbers = #tpu.dot_dimension_numbers<[2], [1], [1], [2], [0, 0, 0, 1, 1, 2], [0], [0]>} : vector<8x16x32xf32>, vector<8x32x32xf32>, vector<8x16x32xf32> -> vector<8x16x32xf32>
    "tpu.trace_stop"() : () -> ()
    %33 = vector.broadcast %31 : vector<8x16x1xf32> to vector<8x16x32xf32>
    %34 = arith.mulf %32, %33 : vector<8x16x32xf32>
    %35 = vector.extract_strided_slice %16 {offsets = [0, 0, 32], sizes = [8, 16, 32], strides = [1, 1, 1]} : vector<8x16x128xf32> to vector<8x16x32xf32>
    %36 = vector.extract_strided_slice %17 {offsets = [0, 0, 32], sizes = [8, 32, 32], strides = [1, 1, 1]} : vector<8x32x128xf32> to vector<8x32x32xf32>
    %37 = vector.extract_strided_slice %18 {offsets = [0, 0, 32], sizes = [8, 32, 32], strides = [1, 1, 1]} : vector<8x32x128xf32> to vector<8x32x32xf32>
    "tpu.trace_start"() <{level = 10 : i32, message = "bqc,bkc->bqk"}> : () -> ()
    %cst_19 = arith.constant dense<0.000000e+00> : vector<8x16x32xf32>
    %38 = tpu.matmul %35, %36, %cst_19 {dimension_numbers = #tpu.dot_dimension_numbers<[2], [2], [1], [1], [0, 0, 0, 1, 1, 1], [0], [0]>} : vector<8x16x32xf32>, vector<8x32x32xf32>, vector<8x16x32xf32> -> vector<8x16x32xf32>
    "tpu.trace_stop"() : () -> ()
    %cst_20 = arith.constant dense<0xFF800000> : vector<8x16xf32>
    %39 = vector.multi_reduction <maximumf>, %38, %cst_20 [2] : vector<8x16x32xf32> to vector<8x16xf32>
    %40 = vector.shape_cast %39 : vector<8x16xf32> to vector<8x16x1xf32>
    %41 = vector.broadcast %40 : vector<8x16x1xf32> to vector<8x16x32xf32>
    %42 = arith.subf %38, %41 : vector<8x16x32xf32>
    %43 = math.exp %42 : vector<8x16x32xf32>
    %cst_21 = arith.constant dense<0.000000e+00> : vector<8x16xf32>
    %44 = vector.multi_reduction <add>, %43, %cst_21 [2] : vector<8x16x32xf32> to vector<8x16xf32>
    %45 = vector.shape_cast %44 : vector<8x16xf32> to vector<8x16x1xf32>
    %cst_22 = arith.constant 1.000000e+00 : f32
    %46 = vector.broadcast %cst_22 : f32 to vector<8x16x1xf32>
    %47 = arith.divf %46, %45 : vector<8x16x1xf32>
    "tpu.trace_start"() <{level = 10 : i32, message = "bqk,bkc->bqc"}> : () -> ()
    %cst_23 = arith.constant dense<0.000000e+00> : vector<8x16x32xf32>
    %48 = tpu.matmul %43, %37, %cst_23 {dimension_numbers = #tpu.dot_dimension_numbers<[2], [1], [1], [2], [0, 0, 0, 1, 1, 2], [0], [0]>} : vector<8x16x32xf32>, vector<8x32x32xf32>, vector<8x16x32xf32> -> vector<8x16x32xf32>
    "tpu.trace_stop"() : () -> ()
    %49 = vector.broadcast %47 : vector<8x16x1xf32> to vector<8x16x32xf32>
    %50 = arith.mulf %48, %49 : vector<8x16x32xf32>
    %51 = vector.extract_strided_slice %16 {offsets = [0, 0, 64], sizes = [8, 16, 32], strides = [1, 1, 1]} : vector<8x16x128xf32> to vector<8x16x32xf32>
    %52 = vector.extract_strided_slice %17 {offsets = [0, 0, 64], sizes = [8, 32, 32], strides = [1, 1, 1]} : vector<8x32x128xf32> to vector<8x32x32xf32>
    %53 = vector.extract_strided_slice %18 {offsets = [0, 0, 64], sizes = [8, 32, 32], strides = [1, 1, 1]} : vector<8x32x128xf32> to vector<8x32x32xf32>
    "tpu.trace_start"() <{level = 10 : i32, message = "bqc,bkc->bqk"}> : () -> ()
    %cst_24 = arith.constant dense<0.000000e+00> : vector<8x16x32xf32>
    %54 = tpu.matmul %51, %52, %cst_24 {dimension_numbers = #tpu.dot_dimension_numbers<[2], [2], [1], [1], [0, 0, 0, 1, 1, 1], [0], [0]>} : vector<8x16x32xf32>, vector<8x32x32xf32>, vector<8x16x32xf32> -> vector<8x16x32xf32>
    "tpu.trace_stop"() : () -> ()
    %cst_25 = arith.constant dense<0xFF800000> : vector<8x16xf32>
    %55 = vector.multi_reduction <maximumf>, %54, %cst_25 [2] : vector<8x16x32xf32> to vector<8x16xf32>
    %56 = vector.shape_cast %55 : vector<8x16xf32> to vector<8x16x1xf32>
    %57 = vector.broadcast %56 : vector<8x16x1xf32> to vector<8x16x32xf32>
    %58 = arith.subf %54, %57 : vector<8x16x32xf32>
    %59 = math.exp %58 : vector<8x16x32xf32>
    %cst_26 = arith.constant dense<0.000000e+00> : vector<8x16xf32>
    %60 = vector.multi_reduction <add>, %59, %cst_26 [2] : vector<8x16x32xf32> to vector<8x16xf32>
    %61 = vector.shape_cast %60 : vector<8x16xf32> to vector<8x16x1xf32>
    %cst_27 = arith.constant 1.000000e+00 : f32
    %62 = vector.broadcast %cst_27 : f32 to vector<8x16x1xf32>
    %63 = arith.divf %62, %61 : vector<8x16x1xf32>
    "tpu.trace_start"() <{level = 10 : i32, message = "bqk,bkc->bqc"}> : () -> ()
    %cst_28 = arith.constant dense<0.000000e+00> : vector<8x16x32xf32>
    %64 = tpu.matmul %59, %53, %cst_28 {dimension_numbers = #tpu.dot_dimension_numbers<[2], [1], [1], [2], [0, 0, 0, 1, 1, 2], [0], [0]>} : vector<8x16x32xf32>, vector<8x32x32xf32>, vector<8x16x32xf32> -> vector<8x16x32xf32>
    "tpu.trace_stop"() : () -> ()
    %65 = vector.broadcast %63 : vector<8x16x1xf32> to vector<8x16x32xf32>
    %66 = arith.mulf %64, %65 : vector<8x16x32xf32>
    %67 = vector.extract_strided_slice %16 {offsets = [0, 0, 96], sizes = [8, 16, 32], strides = [1, 1, 1]} : vector<8x16x128xf32> to vector<8x16x32xf32>
    %68 = vector.extract_strided_slice %17 {offsets = [0, 0, 96], sizes = [8, 32, 32], strides = [1, 1, 1]} : vector<8x32x128xf32> to vector<8x32x32xf32>
    %69 = vector.extract_strided_slice %18 {offsets = [0, 0, 96], sizes = [8, 32, 32], strides = [1, 1, 1]} : vector<8x32x128xf32> to vector<8x32x32xf32>
    "tpu.trace_start"() <{level = 10 : i32, message = "bqc,bkc->bqk"}> : () -> ()
    %cst_29 = arith.constant dense<0.000000e+00> : vector<8x16x32xf32>
    %70 = tpu.matmul %67, %68, %cst_29 {dimension_numbers = #tpu.dot_dimension_numbers<[2], [2], [1], [1], [0, 0, 0, 1, 1, 1], [0], [0]>} : vector<8x16x32xf32>, vector<8x32x32xf32>, vector<8x16x32xf32> -> vector<8x16x32xf32>
    "tpu.trace_stop"() : () -> ()
    %cst_30 = arith.constant dense<0xFF800000> : vector<8x16xf32>
    %71 = vector.multi_reduction <maximumf>, %70, %cst_30 [2] : vector<8x16x32xf32> to vector<8x16xf32>
    %72 = vector.shape_cast %71 : vector<8x16xf32> to vector<8x16x1xf32>
    %73 = vector.broadcast %72 : vector<8x16x1xf32> to vector<8x16x32xf32>
    %74 = arith.subf %70, %73 : vector<8x16x32xf32>
    %75 = math.exp %74 : vector<8x16x32xf32>
    %cst_31 = arith.constant dense<0.000000e+00> : vector<8x16xf32>
    %76 = vector.multi_reduction <add>, %75, %cst_31 [2] : vector<8x16x32xf32> to vector<8x16xf32>
    %77 = vector.shape_cast %76 : vector<8x16xf32> to vector<8x16x1xf32>
    %cst_32 = arith.constant 1.000000e+00 : f32
    %78 = vector.broadcast %cst_32 : f32 to vector<8x16x1xf32>
    %79 = arith.divf %78, %77 : vector<8x16x1xf32>
    "tpu.trace_start"() <{level = 10 : i32, message = "bqk,bkc->bqc"}> : () -> ()
    %cst_33 = arith.constant dense<0.000000e+00> : vector<8x16x32xf32>
    %80 = tpu.matmul %75, %69, %cst_33 {dimension_numbers = #tpu.dot_dimension_numbers<[2], [1], [1], [2], [0, 0, 0, 1, 1, 2], [0], [0]>} : vector<8x16x32xf32>, vector<8x32x32xf32>, vector<8x16x32xf32> -> vector<8x16x32xf32>
    "tpu.trace_stop"() : () -> ()
    %81 = vector.broadcast %79 : vector<8x16x1xf32> to vector<8x16x32xf32>
    %82 = arith.mulf %80, %81 : vector<8x16x32xf32>
    %83 = tpu.concatenate %34, %50, %66, %82 in 2 : vector<8x16x32xf32>, vector<8x16x32xf32>, vector<8x16x32xf32>, vector<8x16x32xf32> -> vector<8x16x128xf32>
    %84 = vector.shape_cast %83 : vector<8x16x128xf32> to vector<128x128xf32>
    %c0_34 = arith.constant 0 : index
    %c0_35 = arith.constant 0 : index
    %85 = vector.load %arg7[%c0_34, %c0_35] : memref<128x128xf32, #tpu.memory_space<vmem>>, vector<128x128xf32>
    %cst_36 = arith.constant dense<0.000000e+00> : vector<128x128xf32>
    %86 = tpu.matmul %84, %85, %cst_36 {dimension_numbers = #tpu.dot_dimension_numbers<[1], [0], [0], [1], [0, 0, 1, 1], [], []>} : vector<128x128xf32>, vector<128x128xf32>, vector<128x128xf32> -> vector<128x128xf32>
    %c0_37 = arith.constant 0 : index
    %c0_38 = arith.constant 0 : index
    %87 = vector.load %arg8[%c0_37, %c0_38] : memref<1x128xf32, #tpu.memory_space<vmem>>, vector<1x128xf32>
    %88 = vector.broadcast %87 : vector<1x128xf32> to vector<128x128xf32>
    %89 = arith.addf %86, %88 : vector<128x128xf32>
    %90 = arith.addf %1, %89 : vector<128x128xf32>
    %c0_39 = arith.constant 0 : index
    %c0_40 = arith.constant 0 : index
    %91 = vector.load %arg9[%c0_39, %c0_40] : memref<1x128xf32, #tpu.memory_space<vmem>>, vector<1x128xf32>
    %c0_41 = arith.constant 0 : index
    %c0_42 = arith.constant 0 : index
    %92 = vector.load %arg10[%c0_41, %c0_42] : memref<1x128xf32, #tpu.memory_space<vmem>>, vector<1x128xf32>
    %cst_43 = arith.constant dense<0.000000e+00> : vector<128xf32>
    %93 = vector.multi_reduction <add>, %90, %cst_43 [1] : vector<128x128xf32> to vector<128xf32>
    %94 = vector.shape_cast %93 : vector<128xf32> to vector<128x1xf32>
    %cst_44 = arith.constant 1.280000e+02 : f32
    %95 = vector.broadcast %cst_44 : f32 to vector<128x1xf32>
    %96 = arith.divf %94, %95 : vector<128x1xf32>
    %97 = arith.mulf %90, %90 : vector<128x128xf32>
    %cst_45 = arith.constant dense<0.000000e+00> : vector<128xf32>
    %98 = vector.multi_reduction <add>, %97, %cst_45 [1] : vector<128x128xf32> to vector<128xf32>
    %99 = vector.shape_cast %98 : vector<128xf32> to vector<128x1xf32>
    %cst_46 = arith.constant 1.280000e+02 : f32
    %100 = vector.broadcast %cst_46 : f32 to vector<128x1xf32>
    %101 = arith.divf %99, %100 : vector<128x1xf32>
    %102 = arith.mulf %96, %96 : vector<128x1xf32>
    %103 = arith.subf %101, %102 : vector<128x1xf32>
    %cst_47 = arith.constant 0.000000e+00 : f32
    %104 = vector.broadcast %cst_47 : f32 to vector<128x1xf32>
    %105 = arith.maximumf %103, %104 : vector<128x1xf32>
    %106 = vector.broadcast %96 : vector<128x1xf32> to vector<128x128xf32>
    %107 = arith.subf %90, %106 : vector<128x128xf32>
    %cst_48 = arith.constant 9.99999974E-6 : f32
    %108 = vector.broadcast %cst_48 : f32 to vector<128x1xf32>
    %109 = arith.addf %105, %108 : vector<128x1xf32>
    %110 = math.rsqrt %109 : vector<128x1xf32>
    %111 = vector.broadcast %110 : vector<128x1xf32> to vector<128x128xf32>
    %112 = arith.mulf %107, %111 : vector<128x128xf32>
    %113 = vector.broadcast %91 : vector<1x128xf32> to vector<128x128xf32>
    %114 = arith.mulf %112, %113 : vector<128x128xf32>
    %115 = vector.broadcast %92 : vector<1x128xf32> to vector<128x128xf32>
    %116 = arith.addf %114, %115 : vector<128x128xf32>
    %c0_49 = arith.constant 0 : index
    %c0_50 = arith.constant 0 : index
    %117 = vector.load %arg13[%c0_49, %c0_50] : memref<128x256xf32, #tpu.memory_space<vmem>>, vector<128x256xf32>
    %cst_51 = arith.constant dense<0.000000e+00> : vector<128x256xf32>
    %118 = tpu.matmul %116, %117, %cst_51 {dimension_numbers = #tpu.dot_dimension_numbers<[1], [0], [0], [1], [0, 0, 1, 1], [], []>} : vector<128x128xf32>, vector<128x256xf32>, vector<128x256xf32> -> vector<128x256xf32>
    %c0_52 = arith.constant 0 : index
    %c0_53 = arith.constant 0 : index
    %119 = vector.load %arg14[%c0_52, %c0_53] : memref<1x256xf32, #tpu.memory_space<vmem>>, vector<1x256xf32>
    %120 = vector.broadcast %119 : vector<1x256xf32> to vector<128x256xf32>
    %121 = arith.addf %118, %120 : vector<128x256xf32>
    %cst_54 = arith.constant 0.000000e+00 : f32
    %122 = vector.broadcast %cst_54 : f32 to vector<128x256xf32>
    %123 = arith.maximumf %121, %122 : vector<128x256xf32>
    %c0_55 = arith.constant 0 : index
    %c0_56 = arith.constant 0 : index
    %124 = vector.load %arg15[%c0_55, %c0_56] : memref<256x128xf32, #tpu.memory_space<vmem>>, vector<256x128xf32>
    %cst_57 = arith.constant dense<0.000000e+00> : vector<128x128xf32>
    %125 = tpu.matmul %123, %124, %cst_57 {dimension_numbers = #tpu.dot_dimension_numbers<[1], [0], [0], [1], [0, 0, 1, 1], [], []>} : vector<128x256xf32>, vector<256x128xf32>, vector<128x128xf32> -> vector<128x128xf32>
    %c0_58 = arith.constant 0 : index
    %c0_59 = arith.constant 0 : index
    %126 = vector.load %arg16[%c0_58, %c0_59] : memref<1x128xf32, #tpu.memory_space<vmem>>, vector<1x128xf32>
    %127 = vector.broadcast %126 : vector<1x128xf32> to vector<128x128xf32>
    %128 = arith.addf %125, %127 : vector<128x128xf32>
    %129 = arith.addf %1, %128 : vector<128x128xf32>
    %c0_60 = arith.constant 0 : index
    %c0_61 = arith.constant 0 : index
    %130 = vector.load %arg11[%c0_60, %c0_61] : memref<1x128xf32, #tpu.memory_space<vmem>>, vector<1x128xf32>
    %c0_62 = arith.constant 0 : index
    %c0_63 = arith.constant 0 : index
    %131 = vector.load %arg12[%c0_62, %c0_63] : memref<1x128xf32, #tpu.memory_space<vmem>>, vector<1x128xf32>
    %cst_64 = arith.constant dense<0.000000e+00> : vector<128xf32>
    %132 = vector.multi_reduction <add>, %129, %cst_64 [1] : vector<128x128xf32> to vector<128xf32>
    %133 = vector.shape_cast %132 : vector<128xf32> to vector<128x1xf32>
    %cst_65 = arith.constant 1.280000e+02 : f32
    %134 = vector.broadcast %cst_65 : f32 to vector<128x1xf32>
    %135 = arith.divf %133, %134 : vector<128x1xf32>
    %136 = arith.mulf %129, %129 : vector<128x128xf32>
    %cst_66 = arith.constant dense<0.000000e+00> : vector<128xf32>
    %137 = vector.multi_reduction <add>, %136, %cst_66 [1] : vector<128x128xf32> to vector<128xf32>
    %138 = vector.shape_cast %137 : vector<128xf32> to vector<128x1xf32>
    %cst_67 = arith.constant 1.280000e+02 : f32
    %139 = vector.broadcast %cst_67 : f32 to vector<128x1xf32>
    %140 = arith.divf %138, %139 : vector<128x1xf32>
    %141 = arith.mulf %135, %135 : vector<128x1xf32>
    %142 = arith.subf %140, %141 : vector<128x1xf32>
    %cst_68 = arith.constant 0.000000e+00 : f32
    %143 = vector.broadcast %cst_68 : f32 to vector<128x1xf32>
    %144 = arith.maximumf %142, %143 : vector<128x1xf32>
    %145 = vector.broadcast %135 : vector<128x1xf32> to vector<128x128xf32>
    %146 = arith.subf %129, %145 : vector<128x128xf32>
    %cst_69 = arith.constant 9.99999974E-6 : f32
    %147 = vector.broadcast %cst_69 : f32 to vector<128x1xf32>
    %148 = arith.addf %144, %147 : vector<128x1xf32>
    %149 = math.rsqrt %148 : vector<128x1xf32>
    %150 = vector.broadcast %149 : vector<128x1xf32> to vector<128x128xf32>
    %151 = arith.mulf %146, %150 : vector<128x128xf32>
    %152 = vector.broadcast %130 : vector<1x128xf32> to vector<128x128xf32>
    %153 = arith.mulf %151, %152 : vector<128x128xf32>
    %154 = vector.broadcast %131 : vector<1x128xf32> to vector<128x128xf32>
    %155 = arith.addf %153, %154 : vector<128x128xf32>
    %156 = vector.shape_cast %155 : vector<128x128xf32> to vector<8x16x128xf32>
    %c0_70 = arith.constant 0 : index
    %c0_71 = arith.constant 0 : index
    %c0_72 = arith.constant 0 : index
    %157 = vector.load %arg17[%c0_70, %c0_71, %c0_72] : memref<8x16x128xf32, #tpu.memory_space<vmem>>, vector<8x16x128xf32>
    tpu.vector_store %arg17[%c0_70, %c0_71, %c0_72], %156 {strides = array<i32>} : memref<8x16x128xf32, #tpu.memory_space<vmem>>, vector<8x16x128xf32>,
    return
  }
  func.func @transform_0(%arg0: i32) -> (i32, i32, i32) {
    %c0_i32 = arith.constant 0 : i32
    %c0_i32_0 = arith.constant 0 : i32
    %c0_i32_1 = arith.constant 0 : i32
    return %arg0, %c0_i32, %c0_i32_0 : i32, i32, i32
  }
  func.func @transform_1(%arg0: i32) -> (i32, i32, i32) {
    %c0_i32 = arith.constant 0 : i32
    %c0_i32_0 = arith.constant 0 : i32
    %c0_i32_1 = arith.constant 0 : i32
    return %arg0, %c0_i32, %c0_i32_0 : i32, i32, i32
  }
  func.func @transform_2(%arg0: i32) -> (i32, i32) {
    %c0_i32 = arith.constant 0 : i32
    %c0_i32_0 = arith.constant 0 : i32
    %c0_i32_1 = arith.constant 0 : i32
    return %c0_i32, %c0_i32_0 : i32, i32
  }
  func.func @transform_3(%arg0: i32) -> (i32, i32) {
    %c0_i32 = arith.constant 0 : i32
    %c0_i32_0 = arith.constant 0 : i32
    %c0_i32_1 = arith.constant 0 : i32
    return %c0_i32, %c0_i32_0 : i32, i32
  }
  func.func @transform_4(%arg0: i32) -> (i32, i32) {
    %c0_i32 = arith.constant 0 : i32
    %c0_i32_0 = arith.constant 0 : i32
    %c0_i32_1 = arith.constant 0 : i32
    return %c0_i32, %c0_i32_0 : i32, i32
  }
  func.func @transform_5(%arg0: i32) -> (i32, i32) {
    %c0_i32 = arith.constant 0 : i32
    %c0_i32_0 = arith.constant 0 : i32
    %c0_i32_1 = arith.constant 0 : i32
    return %c0_i32, %c0_i32_0 : i32, i32
  }
  func.func @transform_6(%arg0: i32) -> (i32, i32) {
    %c0_i32 = arith.constant 0 : i32
    %c0_i32_0 = arith.constant 0 : i32
    %c0_i32_1 = arith.constant 0 : i32
    return %c0_i32, %c0_i32_0 : i32, i32
  }
  func.func @transform_7(%arg0: i32) -> (i32, i32) {
    %c0_i32 = arith.constant 0 : i32
    %c0_i32_0 = arith.constant 0 : i32
    %c0_i32_1 = arith.constant 0 : i32
    return %c0_i32, %c0_i32_0 : i32, i32
  }
  func.func @transform_8(%arg0: i32) -> (i32, i32) {
    %c0_i32 = arith.constant 0 : i32
    %c0_i32_0 = arith.constant 0 : i32
    %c0_i32_1 = arith.constant 0 : i32
    return %c0_i32, %c0_i32_0 : i32, i32
  }
  func.func @transform_9(%arg0: i32) -> (i32, i32) {
    %c0_i32 = arith.constant 0 : i32
    %c0_i32_0 = arith.constant 0 : i32
    %c0_i32_1 = arith.constant 0 : i32
    return %c0_i32, %c0_i32_0 : i32, i32
  }
  func.func @transform_10(%arg0: i32) -> (i32, i32) {
    %c0_i32 = arith.constant 0 : i32
    %c0_i32_0 = arith.constant 0 : i32
    %c0_i32_1 = arith.constant 0 : i32
    return %c0_i32, %c0_i32_0 : i32, i32
  }
  func.func @transform_11(%arg0: i32) -> (i32, i32) {
    %c0_i32 = arith.constant 0 : i32
    %c0_i32_0 = arith.constant 0 : i32
    %c0_i32_1 = arith.constant 0 : i32
    return %c0_i32, %c0_i32_0 : i32, i32
  }
  func.func @transform_12(%arg0: i32) -> (i32, i32) {
    %c0_i32 = arith.constant 0 : i32
    %c0_i32_0 = arith.constant 0 : i32
    %c0_i32_1 = arith.constant 0 : i32
    return %c0_i32, %c0_i32_0 : i32, i32
  }
  func.func @transform_13(%arg0: i32) -> (i32, i32) {
    %c0_i32 = arith.constant 0 : i32
    %c0_i32_0 = arith.constant 0 : i32
    %c0_i32_1 = arith.constant 0 : i32
    return %c0_i32, %c0_i32_0 : i32, i32
  }
  func.func @transform_14(%arg0: i32) -> (i32, i32) {
    %c0_i32 = arith.constant 0 : i32
    %c0_i32_0 = arith.constant 0 : i32
    %c0_i32_1 = arith.constant 0 : i32
    return %c0_i32, %c0_i32_0 : i32, i32
  }
  func.func @transform_15(%arg0: i32) -> (i32, i32) {
    %c0_i32 = arith.constant 0 : i32
    %c0_i32_0 = arith.constant 0 : i32
    %c0_i32_1 = arith.constant 0 : i32
    return %c0_i32, %c0_i32_0 : i32, i32
  }
  func.func @transform_16(%arg0: i32) -> (i32, i32, i32) {
    %c0_i32 = arith.constant 0 : i32
    %c0_i32_0 = arith.constant 0 : i32
    %c0_i32_1 = arith.constant 0 : i32
    return %arg0, %c0_i32, %c0_i32_0 : i32, i32, i32
  }
}

</mosaic_0001>

<llo_original>
// kernel: tpu_custom_call.1
$region0: #{tpu_custom_call.1}
  #allocation0 [shape = 'u32[]', space=smem, size = 0x4, offset = 0x4, fixed_abs, tag = 'smem constant byte address 0x4 - core index']
  #allocation1 [shape = 'u32[144,128]{1,0:T(1,128)}', space=vmem, size = 0x12000, scoped, tag = 'internal scratch']
  %s0 = inlined_call_operand.hbm [shape: f32[16,16,128], index: 0, kind: input, shape index: {}]
  %s1 = inlined_call_operand.hbm [shape: f32[16,32,128], index: 1, kind: input, shape index: {}]
  %s2 = inlined_call_operand.hbm [shape: f32[128,128], index: 2, kind: input, shape index: {}]
  %s3 = inlined_call_operand.vmem [shape: f32[1,128], index: 3, kind: input, shape index: {}]
  %s4 = inlined_call_operand.hbm [shape: f32[128,256], index: 4, kind: input, shape index: {}]
  %s5 = inlined_call_operand.vmem [shape: f32[1,256], index: 5, kind: input, shape index: {}]
  %s6 = inlined_call_operand.hbm [shape: f32[128,128], index: 6, kind: input, shape index: {}]
  %s7 = inlined_call_operand.vmem [shape: f32[1,128], index: 7, kind: input, shape index: {}]
  %s8 = inlined_call_operand.vmem [shape: f32[1,128], index: 8, kind: input, shape index: {}]
  %s9 = inlined_call_operand.vmem [shape: f32[1,128], index: 9, kind: input, shape index: {}]
  %s10 = inlined_call_operand.vmem [shape: f32[1,128], index: 10, kind: input, shape index: {}]
  %s11 = inlined_call_operand.vmem [shape: f32[1,128], index: 11, kind: input, shape index: {}]
  %s12 = inlined_call_operand.hbm [shape: f32[128,256], index: 12, kind: input, shape index: {}]
  %s13 = inlined_call_operand.vmem [shape: f32[1,256], index: 13, kind: input, shape index: {}]
  %s14 = inlined_call_operand.hbm [shape: f32[256,128], index: 14, kind: input, shape index: {}]
  %s15 = inlined_call_operand.vmem [shape: f32[1,128], index: 15, kind: input, shape index: {}]
  %s16 = inlined_call_operand.hbm [shape: f32[16,16,128], index: 16, kind: output, shape index: {}]
  %s17 = sld [smem:[#allocation0]]
  $region125: #{tpu_custom_call.1} parent=0
    _
  %s19 = ssub.s32 1, %s17
  %s20 = scalar_select 0, %s19, %s17
  $region1: #{tpu_custom_call.1} parent=0
    #allocation2 [shape = 'u8[131072]{0}', space=vmem, size = 0x20000, scoped, tag = 'input window, operand 0']
    #allocation3 [shape = 's32[2]{0}', space=sflag, size = 0x8, scoped, tag = 'scoped memory for tpu_custom_call.1']
    #allocation4 [shape = 's32[2]{0}', space=sflag, size = 0x8, scoped, tag = 'scoped memory for tpu_custom_call.1']
    #allocation5 [shape = 'u8[262144]{0}', space=vmem, size = 0x40000, scoped, tag = 'input window, operand 1']
    #allocation6 [shape = 's32[2]{0}', space=sflag, size = 0x8, scoped, tag = 'scoped memory for tpu_custom_call.1']
    #allocation7 [shape = 'u8[65536]{0}', space=vmem, size = 0x10000, scoped, tag = 'input window, operand 2, single buffered']
    #allocation8 [shape = 'u8[131072]{0}', space=vmem, size = 0x20000, scoped, tag = 'input window, operand 4, single buffered']
    #allocation9 [shape = 's32[1]{0}', space=sflag, size = 0x4, scoped, tag = 'scoped memory for tpu_custom_call.1']
    #allocation10 [shape = 'u8[65536]{0}', space=vmem, size = 0x10000, scoped, tag = 'input window, operand 6, single buffered']
    #allocation11 [shape = 'u8[131072]{0}', space=vmem, size = 0x20000, scoped, tag = 'input window, operand 12, single buffered']
    #allocation12 [shape = 's32[1]{0}', space=sflag, size = 0x4, scoped, tag = 'scoped memory for tpu_custom_call.1']
    #allocation13 [shape = 'u8[131072]{0}', space=vmem, size = 0x20000, scoped, tag = 'input window, operand 14, single buffered']
    #allocation14 [shape = 'u8[131072]{0}', space=vmem, size = 0x20000, scoped, tag = 'output window, operand 0']
    %21 = vsyncpa [#allocation3], 0
    %s22 = scalar_lea.sflag [#allocation3], 1
    %23 = vsyncpa %s22, 0
    %24 = vsyncpa [#allocation6], 0
    %s25 = scalar_lea.sflag [#allocation6], 1
    %26 = vsyncpa %s25, 0
    %27 = vsyncpa [#allocation9], 0
    %28 = vsyncpa [#allocation12], 0
    %29 = vsyncpa [#allocation4], 0
    %s30 = scalar_lea.sflag [#allocation4], 1
    %31 = vsyncpa %s30, 0
    loop: start=0, step=1, limit=4
    $region2: #{tpu_custom_call.1} parent=1 // loop_pre_header
      _
    $region3: #{tpu_custom_call.1} parent=1 // loop_header
      %s33 = sphi 0, %s37
      %p34 = scmp.ge.s32.totalorder %s33, 4
      %s43 = sphi 0, %s45
      %s46 = sphi 0, %s43
      %s47 = sphi 0, %s46
      %s63 = sphi 0, %s47
      %s69 = sphi 0, %s71
      %s72 = sphi 0, %s69
      %s73 = sphi 0, %s72
      %s89 = sphi 0, %s73
      %s93 = sphi 0, %s93
      %s95 = sphi 0, %s93
      %s96 = sphi 0, %s95
      %s110 = sphi 0, %s96
      %s114 = sphi 0, %s114
      %s116 = sphi 0, %s114
      %s117 = sphi 0, %s116
      %s131 = sphi 0, %s117
      %s135 = sphi 0, %s135
      %s137 = sphi 0, %s135
      %s138 = sphi 0, %s137
      %s152 = sphi 0, %s138
      %s156 = sphi 0, %s156
      %s158 = sphi 0, %s156
      %s159 = sphi 0, %s158
      %s173 = sphi 0, %s159
      %s177 = sphi 0, %s177
      %s179 = sphi 0, %s177
      %s180 = sphi 0, %s179
      %s194 = sphi 0, %s180
      %s198 = sphi 0, %s198
      %s200 = sphi 0, %s198
      %s201 = sphi 0, %s200
      %s215 = sphi 0, %s201
      %s219 = sphi 0, %s219
      %s221 = sphi 0, %s219
      %s222 = sphi 0, %s221
      %s236 = sphi 0, %s222
      %s240 = sphi 0, %s240
      %s242 = sphi 0, %s240
      %s243 = sphi 0, %s242
      %s257 = sphi 0, %s243
      %s261 = sphi 0, %s261
      %s263 = sphi 0, %s261
      %s264 = sphi 0, %s263
      %s278 = sphi 0, %s264
      %s282 = sphi 0, %s282
      %s284 = sphi 0, %s282
      %s285 = sphi 0, %s284
      %s299 = sphi 0, %s285
      %s303 = sphi 0, %s303
      %s305 = sphi 0, %s303
      %s306 = sphi 0, %s305
      %s320 = sphi 0, %s306
      %s324 = sphi 0, %s324
      %s326 = sphi 0, %s324
      %s327 = sphi 0, %s326
      %s341 = sphi 0, %s327
      %s345 = sphi 0, %s345
      %s347 = sphi 0, %s345
      %s348 = sphi 0, %s347
      %s362 = sphi 0, %s348
      %s366 = sphi 0, %s366
      %s368 = sphi 0, %s366
      %s369 = sphi 0, %s368
      %s383 = sphi 0, %s369
      %s389 = sphi 0, %s391
      %s392 = sphi 0, %s389
      %s393 = sphi 0, %s392
      %s409 = sphi 0, %s393
    $region4: #{tpu_custom_call.1} parent=1 // loop_header_branch
      %36 = sbr.rel (%p34) target = $region8
    $region5: #{tpu_custom_call.1} parent=1 // loop_body
      %s38 = ssub.s32 %s33, 1
      %s39 = ssub.s32 %s33, 2
      %s40 = sadd.s32 %s33, 1
      %s41 = ssub.s32 %s33, %s40
      %p42 = scmp.eq.s32.totalorder %s41, 0
      %s44 = sadd.s32 %s43, 1
      %s45 = scalar_select %p42, %s43, %s44
      %p48 = pneg %p42
      %p49 = scmp.eq.s32.totalorder %s33, 1
      %p50 = por %p48, %p49
      %p51 = scmp.ne.s32.totalorder %s43, %s46
      %p52 = scmp.eq.s32.totalorder %s33, 0
      %p53 = por %p51, %p52
      %p54 = scmp.ne.s32.totalorder %s43, %s46
      %p55 = scmp.eq.s32.totalorder %s38, 1
      %p56 = por %p54, %p55
      %p57 = scmp.ne.s32.totalorder %s46, %s47
      %p58 = scmp.eq.s32.totalorder %s38, 0
      %p59 = por %p57, %p58
      %p60 = scmp.ne.s32.totalorder %s46, %s47
      %p61 = scmp.eq.s32.totalorder %s39, 1
      %p62 = por %p60, %p61
      %p64 = scmp.ne.s32.totalorder %s47, %s63
      %p65 = scmp.eq.s32.totalorder %s39, 0
      %p66 = por %p64, %p65
      %s67 = ssub.s32 %s33, %s40
      %p68 = scmp.eq.s32.totalorder %s67, 0
      %s70 = sadd.s32 %s69, 1
      %s71 = scalar_select %p68, %s69, %s70
      %p74 = pneg %p68
      %p75 = scmp.eq.s32.totalorder %s33, 1
      %p76 = por %p74, %p75
      %p77 = scmp.ne.s32.totalorder %s69, %s72
      %p78 = scmp.eq.s32.totalorder %s33, 0
      %p79 = por %p77, %p78
      %p80 = scmp.ne.s32.totalorder %s69, %s72
      %p81 = scmp.eq.s32.totalorder %s38, 1
      %p82 = por %p80, %p81
      %p83 = scmp.ne.s32.totalorder %s72, %s73
      %p84 = scmp.eq.s32.totalorder %s38, 0
      %p85 = por %p83, %p84
      %p86 = scmp.ne.s32.totalorder %s72, %s73
      %p87 = scmp.eq.s32.totalorder %s39, 1
      %p88 = por %p86, %p87
      %p90 = scmp.ne.s32.totalorder %s73, %s89
      %p91 = scmp.eq.s32.totalorder %s39, 0
      %p92 = por %p90, %p91
      %s94 = sadd.s32 %s93, 1
      %p97 = scmp.eq.s32.totalorder %s33, 1
      %p98 = scmp.ne.s32.totalorder %s93, %s95
      %p99 = scmp.eq.s32.totalorder %s33, 0
      %p100 = por %p98, %p99
      %p101 = scmp.ne.s32.totalorder %s93, %s95
      %p102 = scmp.eq.s32.totalorder %s38, 1
      %p103 = por %p101, %p102
      %p104 = scmp.ne.s32.totalorder %s95, %s96
      %p105 = scmp.eq.s32.totalorder %s38, 0
      %p106 = por %p104, %p105
      %p107 = scmp.ne.s32.totalorder %s95, %s96
      %p108 = scmp.eq.s32.totalorder %s39, 1
      %p109 = por %p107, %p108
      %p111 = scmp.ne.s32.totalorder %s96, %s110
      %p112 = scmp.eq.s32.totalorder %s39, 0
      %p113 = por %p111, %p112
      %s115 = sadd.s32 %s114, 1
      %p118 = scmp.eq.s32.totalorder %s33, 1
      %p119 = scmp.ne.s32.totalorder %s114, %s116
      %p120 = scmp.eq.s32.totalorder %s33, 0
      %p121 = por %p119, %p120
      %p122 = scmp.ne.s32.totalorder %s114, %s116
      %p123 = scmp.eq.s32.totalorder %s38, 1
      %p124 = por %p122, %p123
      %p125 = scmp.ne.s32.totalorder %s116, %s117
      %p126 = scmp.eq.s32.totalorder %s38, 0
      %p127 = por %p125, %p126
      %p128 = scmp.ne.s32.totalorder %s116, %s117
      %p129 = scmp.eq.s32.totalorder %s39, 1
      %p130 = por %p128, %p129
      %p132 = scmp.ne.s32.totalorder %s117, %s131
      %p133 = scmp.eq.s32.totalorder %s39, 0
      %p134 = por %p132, %p133
      %s136 = sadd.s32 %s135, 1
      %p139 = scmp.eq.s32.totalorder %s33, 1
      %p140 = scmp.ne.s32.totalorder %s135, %s137
      %p141 = scmp.eq.s32.totalorder %s33, 0
      %p142 = por %p140, %p141
      %p143 = scmp.ne.s32.totalorder %s135, %s137
      %p144 = scmp.eq.s32.totalorder %s38, 1
      %p145 = por %p143, %p144
      %p146 = scmp.ne.s32.totalorder %s137, %s138
      %p147 = scmp.eq.s32.totalorder %s38, 0
      %p148 = por %p146, %p147
      %p149 = scmp.ne.s32.totalorder %s137, %s138
      %p150 = scmp.eq.s32.totalorder %s39, 1
      %p151 = por %p149, %p150
      %p153 = scmp.ne.s32.totalorder %s138, %s152
      %p154 = scmp.eq.s32.totalorder %s39, 0
      %p155 = por %p153, %p154
      %s157 = sadd.s32 %s156, 1
      %p160 = scmp.eq.s32.totalorder %s33, 1
      %p161 = scmp.ne.s32.totalorder %s156, %s158
      %p162 = scmp.eq.s32.totalorder %s33, 0
      %p163 = por %p161, %p162
      %p164 = scmp.ne.s32.totalorder %s156, %s158
      %p165 = scmp.eq.s32.totalorder %s38, 1
      %p166 = por %p164, %p165
      %p167 = scmp.ne.s32.totalorder %s158, %s159
      %p168 = scmp.eq.s32.totalorder %s38, 0
      %p169 = por %p167, %p168
      %p170 = scmp.ne.s32.totalorder %s158, %s159
      %p171 = scmp.eq.s32.totalorder %s39, 1
      %p172 = por %p170, %p171
      %p174 = scmp.ne.s32.totalorder %s159, %s173
      %p175 = scmp.eq.s32.totalorder %s39, 0
      %p176 = por %p174, %p175
      %s178 = sadd.s32 %s177, 1
      %p181 = scmp.eq.s32.totalorder %s33, 1
      %p182 = scmp.ne.s32.totalorder %s177, %s179
      %p183 = scmp.eq.s32.totalorder %s33, 0
      %p184 = por %p182, %p183
      %p185 = scmp.ne.s32.totalorder %s177, %s179
      %p186 = scmp.eq.s32.totalorder %s38, 1
      %p187 = por %p185, %p186
      %p188 = scmp.ne.s32.totalorder %s179, %s180
      %p189 = scmp.eq.s32.totalorder %s38, 0
      %p190 = por %p188, %p189
      %p191 = scmp.ne.s32.totalorder %s179, %s180
      %p192 = scmp.eq.s32.totalorder %s39, 1
      %p193 = por %p191, %p192
      %p195 = scmp.ne.s32.totalorder %s180, %s194
      %p196 = scmp.eq.s32.totalorder %s39, 0
      %p197 = por %p195, %p196
      %s199 = sadd.s32 %s198, 1
      %p202 = scmp.eq.s32.totalorder %s33, 1
      %p203 = scmp.ne.s32.totalorder %s198, %s200
      %p204 = scmp.eq.s32.totalorder %s33, 0
      %p205 = por %p203, %p204
      %p206 = scmp.ne.s32.totalorder %s198, %s200
      %p207 = scmp.eq.s32.totalorder %s38, 1
      %p208 = por %p206, %p207
      %p209 = scmp.ne.s32.totalorder %s200, %s201
      %p210 = scmp.eq.s32.totalorder %s38, 0
      %p211 = por %p209, %p210
      %p212 = scmp.ne.s32.totalorder %s200, %s201
      %p213 = scmp.eq.s32.totalorder %s39, 1
      %p214 = por %p212, %p213
      %p216 = scmp.ne.s32.totalorder %s201, %s215
      %p217 = scmp.eq.s32.totalorder %s39, 0
      %p218 = por %p216, %p217
      %s220 = sadd.s32 %s219, 1
      %p223 = scmp.eq.s32.totalorder %s33, 1
      %p224 = scmp.ne.s32.totalorder %s219, %s221
      %p225 = scmp.eq.s32.totalorder %s33, 0
      %p226 = por %p224, %p225
      %p227 = scmp.ne.s32.totalorder %s219, %s221
      %p228 = scmp.eq.s32.totalorder %s38, 1
      %p229 = por %p227, %p228
      %p230 = scmp.ne.s32.totalorder %s221, %s222
      %p231 = scmp.eq.s32.totalorder %s38, 0
      %p232 = por %p230, %p231
      %p233 = scmp.ne.s32.totalorder %s221, %s222
      %p234 = scmp.eq.s32.totalorder %s39, 1
      %p235 = por %p233, %p234
      %p237 = scmp.ne.s32.totalorder %s222, %s236
      %p238 = scmp.eq.s32.totalorder %s39, 0
      %p239 = por %p237, %p238
      %s241 = sadd.s32 %s240, 1
      %p244 = scmp.eq.s32.totalorder %s33, 1
      %p245 = scmp.ne.s32.totalorder %s240, %s242
      %p246 = scmp.eq.s32.totalorder %s33, 0
      %p247 = por %p245, %p246
      %p248 = scmp.ne.s32.totalorder %s240, %s242
      %p249 = scmp.eq.s32.totalorder %s38, 1
      %p250 = por %p248, %p249
      %p251 = scmp.ne.s32.totalorder %s242, %s243
      %p252 = scmp.eq.s32.totalorder %s38, 0
      %p253 = por %p251, %p252
      %p254 = scmp.ne.s32.totalorder %s242, %s243
      %p255 = scmp.eq.s32.totalorder %s39, 1
      %p256 = por %p254, %p255
      %p258 = scmp.ne.s32.totalorder %s243, %s257
      %p259 = scmp.eq.s32.totalorder %s39, 0
      %p260 = por %p258, %p259
      %s262 = sadd.s32 %s261, 1
      %p265 = scmp.eq.s32.totalorder %s33, 1
      %p266 = scmp.ne.s32.totalorder %s261, %s263
      %p267 = scmp.eq.s32.totalorder %s33, 0
      %p268 = por %p266, %p267
      %p269 = scmp.ne.s32.totalorder %s261, %s263
      %p270 = scmp.eq.s32.totalorder %s38, 1
      %p271 = por %p269, %p270
      %p272 = scmp.ne.s32.totalorder %s263, %s264
      %p273 = scmp.eq.s32.totalorder %s38, 0
      %p274 = por %p272, %p273
      %p275 = scmp.ne.s32.totalorder %s263, %s264
      %p276 = scmp.eq.s32.totalorder %s39, 1
      %p277 = por %p275, %p276
      %p279 = scmp.ne.s32.totalorder %s264, %s278
      %p280 = scmp.eq.s32.totalorder %s39, 0
      %p281 = por %p279, %p280
      %s283 = sadd.s32 %s282, 1
      %p286 = scmp.eq.s32.totalorder %s33, 1
      %p287 = scmp.ne.s32.totalorder %s282, %s284
      %p288 = scmp.eq.s32.totalorder %s33, 0
      %p289 = por %p287, %p288
      %p290 = scmp.ne.s32.totalorder %s282, %s284
      %p291 = scmp.eq.s32.totalorder %s38, 1
      %p292 = por %p290, %p291
      %p293 = scmp.ne.s32.totalorder %s284, %s285
      %p294 = scmp.eq.s32.totalorder %s38, 0
      %p295 = por %p293, %p294
      %p296 = scmp.ne.s32.totalorder %s284, %s285
      %p297 = scmp.eq.s32.totalorder %s39, 1
      %p298 = por %p296, %p297
      %p300 = scmp.ne.s32.totalorder %s285, %s299
      %p301 = scmp.eq.s32.totalorder %s39, 0
      %p302 = por %p300, %p301
      %s304 = sadd.s32 %s303, 1
      %p307 = scmp.eq.s32.totalorder %s33, 1
      %p308 = scmp.ne.s32.totalorder %s303, %s305
      %p309 = scmp.eq.s32.totalorder %s33, 0
      %p310 = por %p308, %p309
      %p311 = scmp.ne.s32.totalorder %s303, %s305
      %p312 = scmp.eq.s32.totalorder %s38, 1
      %p313 = por %p311, %p312
      %p314 = scmp.ne.s32.totalorder %s305, %s306
      %p315 = scmp.eq.s32.totalorder %s38, 0
      %p316 = por %p314, %p315
      %p317 = scmp.ne.s32.totalorder %s305, %s306
      %p318 = scmp.eq.s32.totalorder %s39, 1
      %p319 = por %p317, %p318
      %p321 = scmp.ne.s32.totalorder %s306, %s320
      %p322 = scmp.eq.s32.totalorder %s39, 0
      %p323 = por %p321, %p322
      %s325 = sadd.s32 %s324, 1
      %p328 = scmp.eq.s32.totalorder %s33, 1
      %p329 = scmp.ne.s32.totalorder %s324, %s326
      %p330 = scmp.eq.s32.totalorder %s33, 0
      %p331 = por %p329, %p330
      %p332 = scmp.ne.s32.totalorder %s324, %s326
      %p333 = scmp.eq.s32.totalorder %s38, 1
      %p334 = por %p332, %p333
      %p335 = scmp.ne.s32.totalorder %s326, %s327
      %p336 = scmp.eq.s32.totalorder %s38, 0
      %p337 = por %p335, %p336
      %p338 = scmp.ne.s32.totalorder %s326, %s327
      %p339 = scmp.eq.s32.totalorder %s39, 1
      %p340 = por %p338, %p339
      %p342 = scmp.ne.s32.totalorder %s327, %s341
      %p343 = scmp.eq.s32.totalorder %s39, 0
      %p344 = por %p342, %p343
      %s346 = sadd.s32 %s345, 1
      %p349 = scmp.eq.s32.totalorder %s33, 1
      %p350 = scmp.ne.s32.totalorder %s345, %s347
      %p351 = scmp.eq.s32.totalorder %s33, 0
      %p352 = por %p350, %p351
      %p353 = scmp.ne.s32.totalorder %s345, %s347
      %p354 = scmp.eq.s32.totalorder %s38, 1
      %p355 = por %p353, %p354
      %p356 = scmp.ne.s32.totalorder %s347, %s348
      %p357 = scmp.eq.s32.totalorder %s38, 0
      %p358 = por %p356, %p357
      %p359 = scmp.ne.s32.totalorder %s347, %s348
      %p360 = scmp.eq.s32.totalorder %s39, 1
      %p361 = por %p359, %p360
      %p363 = scmp.ne.s32.totalorder %s348, %s362
      %p364 = scmp.eq.s32.totalorder %s39, 0
      %p365 = por %p363, %p364
      %s367 = sadd.s32 %s366, 1
      %p370 = scmp.eq.s32.totalorder %s33, 1
      %p371 = scmp.ne.s32.totalorder %s366, %s368
      %p372 = scmp.eq.s32.totalorder %s33, 0
      %p373 = por %p371, %p372
      %p374 = scmp.ne.s32.totalorder %s366, %s368
      %p375 = scmp.eq.s32.totalorder %s38, 1
      %p376 = por %p374, %p375
      %p377 = scmp.ne.s32.totalorder %s368, %s369
      %p378 = scmp.eq.s32.totalorder %s38, 0
      %p379 = por %p377, %p378
      %p380 = scmp.ne.s32.totalorder %s368, %s369
      %p381 = scmp.eq.s32.totalorder %s39, 1
      %p382 = por %p380, %p381
      %p384 = scmp.ne.s32.totalorder %s369, %s383
      %p385 = scmp.eq.s32.totalorder %s39, 0
      %p386 = por %p384, %p385
      %s387 = ssub.s32 %s33, %s40
      %p388 = scmp.eq.s32.totalorder %s387, 0
      %s390 = sadd.s32 %s389, 1
      %s391 = scalar_select %p388, %s389, %s390
      %p394 = pneg %p388
      %p395 = scmp.eq.s32.totalorder %s33, 1
      %p396 = por %p394, %p395
      %p397 = scmp.ne.s32.totalorder %s389, %s392
      %p398 = scmp.eq.s32.totalorder %s33, 0
      %p399 = por %p397, %p398
      %p400 = scmp.ne.s32.totalorder %s389, %s392
      %p401 = scmp.eq.s32.totalorder %s38, 1
      %p402 = por %p400, %p401
      %p403 = scmp.ne.s32.totalorder %s392, %s393
      %p404 = scmp.eq.s32.totalorder %s38, 0
      %p405 = por %p403, %p404
      %p406 = scmp.ne.s32.totalorder %s392, %s393
      %p407 = scmp.eq.s32.totalorder %s39, 1
      %p408 = por %p406, %p407
      %p410 = scmp.ne.s32.totalorder %s393, %s409
      %p411 = scmp.eq.s32.totalorder %s39, 0
      %p412 = por %p410, %p411
      %p413 = scmp.le.s32.totalorder 1, %s33
      %p414 = scmp.lt.s32.totalorder %s33, 3
      %p415 = pnand %p413, %p414
      %p416 = pneg %p415
      // Predicated region
      $region9: #{tpu_custom_call.1} parent=5 // pred_check
        _
      $region10: #{tpu_custom_call.1} parent=5 // pred_check_branch
        %418 = sbr.rel (%p415) target = $region12
      $region11: #{tpu_custom_call.1} parent=5 // pred_region
        %s419 = ssub.s32 %s33, 1
        // Predicated region
        $region13: #{tpu_custom_call.1} parent=11 // pred_check
          %p420 = pneg %p106
        $region14: #{tpu_custom_call.1} parent=11 // pred_check_branch
          %422 = sbr.rel (%p420) target = $region16
        $region15: #{tpu_custom_call.1} parent=11 // pred_region
          %s424 = ssub.s32 2048, 2048
          %425 = vsyncadd [#allocation6], %s424
          %s426 = sshll.u32 [#allocation7], 4
          %s427 = int_to_ptr.vmem [resolvable:$true] %s426
          %432 = dma.hbm_to_vmem [thread:$0]  %s2, 2048, %s427, [#allocation6], 128, 128, 8
        $region16: #{tpu_custom_call.1} parent=11 // pred_fallthru
          _
        // Predicated region
        $region17: #{tpu_custom_call.1} parent=11 // pred_check
          %p433 = pneg %p127
        $region18: #{tpu_custom_call.1} parent=11 // pred_check_branch
          %435 = sbr.rel (%p433) target = $region20
        $region19: #{tpu_custom_call.1} parent=11 // pred_region
          _
        $region20: #{tpu_custom_call.1} parent=11 // pred_fallthru
          _
        // Predicated region
        $region21: #{tpu_custom_call.1} parent=11 // pred_check
          %p436 = pneg %p148
        $region22: #{tpu_custom_call.1} parent=11 // pred_check_branch
          %438 = sbr.rel (%p436) target = $region24
        $region23: #{tpu_custom_call.1} parent=11 // pred_region
          %s440 = ssub.s32 4096, 4096
          %441 = vsyncadd [#allocation9], %s440
          %s442 = sshll.u32 [#allocation8], 4
          %s443 = int_to_ptr.vmem [resolvable:$true] %s442
          %448 = dma.hbm_to_vmem [thread:$0]  %s4, 4096, %s443, [#allocation9], 256, 256, 16
        $region24: #{tpu_custom_call.1} parent=11 // pred_fallthru
          _
        // Predicated region
        $region25: #{tpu_custom_call.1} parent=11 // pred_check
          %p449 = pneg %p169
        $region26: #{tpu_custom_call.1} parent=11 // pred_check_branch
          %451 = sbr.rel (%p449) target = $region28
        $region27: #{tpu_custom_call.1} parent=11 // pred_region
          _
        $region28: #{tpu_custom_call.1} parent=11 // pred_fallthru
          _
        // Predicated region
        $region29: #{tpu_custom_call.1} parent=11 // pred_check
          %p452 = pneg %p190
        $region30: #{tpu_custom_call.1} parent=11 // pred_check_branch
          %454 = sbr.rel (%p452) target = $region32
        $region31: #{tpu_custom_call.1} parent=11 // pred_region
          %s456 = ssub.s32 2048, 2048
          %457 = vsyncadd [#allocation9], %s456
          %s458 = sshll.u32 [#allocation10], 4
          %s459 = int_to_ptr.vmem [resolvable:$true] %s458
          %464 = dma.hbm_to_vmem [thread:$0]  %s6, 2048, %s459, [#allocation9], 128, 128, 8
        $region32: #{tpu_custom_call.1} parent=11 // pred_fallthru
          _
        // Predicated region
        $region33: #{tpu_custom_call.1} parent=11 // pred_check
          %p465 = pneg %p211
        $region34: #{tpu_custom_call.1} parent=11 // pred_check_branch
          %467 = sbr.rel (%p465) target = $region36
        $region35: #{tpu_custom_call.1} parent=11 // pred_region
          _
        $region36: #{tpu_custom_call.1} parent=11 // pred_fallthru
          _
        // Predicated region
        $region37: #{tpu_custom_call.1} parent=11 // pred_check
          %p468 = pneg %p232
        $region38: #{tpu_custom_call.1} parent=11 // pred_check_branch
          %470 = sbr.rel (%p468) target = $region40
        $region39: #{tpu_custom_call.1} parent=11 // pred_region
          _
        $region40: #{tpu_custom_call.1} parent=11 // pred_fallthru
          _
        // Predicated region
        $region41: #{tpu_custom_call.1} parent=11 // pred_check
          %p471 = pneg %p253
        $region42: #{tpu_custom_call.1} parent=11 // pred_check_branch
          %473 = sbr.rel (%p471) target = $region44
        $region43: #{tpu_custom_call.1} parent=11 // pred_region
          _
        $region44: #{tpu_custom_call.1} parent=11 // pred_fallthru
          _
        // Predicated region
        $region45: #{tpu_custom_call.1} parent=11 // pred_check
          %p474 = pneg %p274
        $region46: #{tpu_custom_call.1} parent=11 // pred_check_branch
          %476 = sbr.rel (%p474) target = $region48
        $region47: #{tpu_custom_call.1} parent=11 // pred_region
          _
        $region48: #{tpu_custom_call.1} parent=11 // pred_fallthru
          _
        // Predicated region
        $region49: #{tpu_custom_call.1} parent=11 // pred_check
          %p477 = pneg %p295
        $region50: #{tpu_custom_call.1} parent=11 // pred_check_branch
          %479 = sbr.rel (%p477) target = $region52
        $region51: #{tpu_custom_call.1} parent=11 // pred_region
          _
        $region52: #{tpu_custom_call.1} parent=11 // pred_fallthru
          _
        // Predicated region
        $region53: #{tpu_custom_call.1} parent=11 // pred_check
          %p480 = pneg %p316
        $region54: #{tpu_custom_call.1} parent=11 // pred_check_branch
          %482 = sbr.rel (%p480) target = $region56
        $region55: #{tpu_custom_call.1} parent=11 // pred_region
          %s484 = ssub.s32 4096, 4096
          %485 = vsyncadd [#allocation12], %s484
          %s486 = sshll.u32 [#allocation11], 4
          %s487 = int_to_ptr.vmem [resolvable:$true] %s486
          %492 = dma.hbm_to_vmem [thread:$0]  %s12, 4096, %s487, [#allocation12], 256, 256, 16
        $region56: #{tpu_custom_call.1} parent=11 // pred_fallthru
          _
        // Predicated region
        $region57: #{tpu_custom_call.1} parent=11 // pred_check
          %p493 = pneg %p337
        $region58: #{tpu_custom_call.1} parent=11 // pred_check_branch
          %495 = sbr.rel (%p493) target = $region60
        $region59: #{tpu_custom_call.1} parent=11 // pred_region
          _
        $region60: #{tpu_custom_call.1} parent=11 // pred_fallthru
          _
        // Predicated region
        $region61: #{tpu_custom_call.1} parent=11 // pred_check
          %p496 = pneg %p358
        $region62: #{tpu_custom_call.1} parent=11 // pred_check_branch
          %498 = sbr.rel (%p496) target = $region64
        $region63: #{tpu_custom_call.1} parent=11 // pred_region
          %s500 = ssub.s32 4096, 4096
          %501 = vsyncadd [#allocation12], %s500
          %s502 = sshll.u32 [#allocation13], 4
          %s503 = int_to_ptr.vmem [resolvable:$true] %s502
          %508 = dma.hbm_to_vmem [thread:$0]  %s14, 4096, %s503, [#allocation12], 128, 128, 8
        $region64: #{tpu_custom_call.1} parent=11 // pred_fallthru
          _
        // Predicated region
        $region65: #{tpu_custom_call.1} parent=11 // pred_check
          %p509 = pneg %p379
        $region66: #{tpu_custom_call.1} parent=11 // pred_check_branch
          %511 = sbr.rel (%p509) target = $region68
        $region67: #{tpu_custom_call.1} parent=11 // pred_region
          _
        $region68: #{tpu_custom_call.1} parent=11 // pred_fallthru
          _
      $region12: #{tpu_custom_call.1} parent=5 // pred_fallthru
        _
      %p512 = scmp.lt.s32.totalorder %s33, 2
      // Predicated region
      $region69: #{tpu_custom_call.1} parent=5 // pred_check
        %p513 = pneg %p512
      $region70: #{tpu_custom_call.1} parent=5 // pred_check_branch
        %515 = sbr.rel (%p513) target = $region72
      $region71: #{tpu_custom_call.1} parent=5 // pred_region
        // Predicated region
        $region73: #{tpu_custom_call.1} parent=71 // pred_check
          %p516 = pneg %p53
        $region74: #{tpu_custom_call.1} parent=71 // pred_check_branch
          %518 = sbr.rel (%p516) target = $region76
        $region75: #{tpu_custom_call.1} parent=71 // pred_region
          %s519 = sand.u32 %s43, 1
          %s520 = scalar_lea.sflag [#allocation3], %s519
          %s521 = sand.u32 %s43, 1
          %s522 = smul.addr %s521, 128
          %s523 = scalar_lea.vmem [#allocation2], %s522
          %s524 = smul.u32 8, %s33
          %s526 = ssub.s32 2048, 2048
          %527 = vsyncadd %s520, %s526
          %s528 = smul.addr %s524, 2
          %s529 = smul.addr %s528, 128
          %s530 = scalar_lea.hbm %s0, %s529
          %s531 = sshll.u32 %s523, 4
          %s532 = int_to_ptr.vmem [resolvable:$true] %s531
          %537 = dma.hbm_to_vmem [thread:$0]  %s530, 2048, %s532, %s520, 128, 128, 8
        $region76: #{tpu_custom_call.1} parent=71 // pred_fallthru
          _
        // Predicated region
        $region77: #{tpu_custom_call.1} parent=71 // pred_check
          %p538 = pneg %p79
        $region78: #{tpu_custom_call.1} parent=71 // pred_check_branch
          %540 = sbr.rel (%p538) target = $region80
        $region79: #{tpu_custom_call.1} parent=71 // pred_region
          %s541 = sand.u32 %s33, 1
          %s542 = scalar_lea.sflag [#allocation6], %s541
          %s543 = sand.u32 %s69, 1
          %s544 = smul.addr %s543, 256
          %s545 = scalar_lea.vmem [#allocation5], %s544
          %s546 = smul.u32 8, %s33
          %s548 = ssub.s32 4096, 4096
          %549 = vsyncadd %s542, %s548
          %s550 = smul.addr %s546, 4
          %s551 = smul.addr %s550, 128
          %s552 = scalar_lea.hbm %s1, %s551
          %s553 = sshll.u32 %s545, 4
          %s554 = int_to_ptr.vmem [resolvable:$true] %s553
          %559 = dma.hbm_to_vmem [thread:$0]  %s552, 4096, %s554, %s542, 128, 128, 8
        $region80: #{tpu_custom_call.1} parent=71 // pred_fallthru
          _
      $region72: #{tpu_custom_call.1} parent=5 // pred_fallthru
        _
      %p560 = scmp.le.s32.totalorder 1, %s33
      %p561 = scmp.lt.s32.totalorder %s33, 3
      %p562 = pnand %p560, %p561
      %p563 = pneg %p562
      // Predicated region
      $region81: #{tpu_custom_call.1} parent=5 // pred_check
        _
      $region82: #{tpu_custom_call.1} parent=5 // pred_check_branch
        %565 = sbr.rel (%p562) target = $region84
      $region83: #{tpu_custom_call.1} parent=5 // pred_region
        %s566 = ssub.s32 %s33, 1
        %s567 = sand.u32 %s46, 1
        %s568 = scalar_lea.sflag [#allocation3], %s567
        %s569 = sand.u32 %s46, 1
        %s570 = smul.addr %s569, 128
        %s571 = scalar_lea.vmem [#allocation2], %s570
        // Predicated region
        $region85: #{tpu_custom_call.1} parent=83 // pred_check
          %p572 = pneg %p59
        $region86: #{tpu_custom_call.1} parent=83 // pred_check_branch
          %574 = sbr.rel (%p572) target = $region88
        $region87: #{tpu_custom_call.1} parent=83 // pred_region
          %575 = dma.done %s568, 2048
        $region88: #{tpu_custom_call.1} parent=83 // pred_fallthru
          _
        %s576 = sand.u32 %s38, 1
        %s577 = scalar_lea.sflag [#allocation6], %s576
        %s578 = sand.u32 %s72, 1
        %s579 = smul.addr %s578, 256
        %s580 = scalar_lea.vmem [#allocation5], %s579
        // Predicated region
        $region89: #{tpu_custom_call.1} parent=83 // pred_check
          %p581 = pneg %p85
        $region90: #{tpu_custom_call.1} parent=83 // pred_check_branch
          %583 = sbr.rel (%p581) target = $region92
        $region91: #{tpu_custom_call.1} parent=83 // pred_region
          %584 = dma.done %s577, 4096
        $region92: #{tpu_custom_call.1} parent=83 // pred_fallthru
          _
        // Predicated region
        $region93: #{tpu_custom_call.1} parent=83 // pred_check
          %p585 = pneg %p106
        $region94: #{tpu_custom_call.1} parent=83 // pred_check_branch
          %587 = sbr.rel (%p585) target = $region96
        $region95: #{tpu_custom_call.1} parent=83 // pred_region
          %588 = dma.done [#allocation6], 2048
        $region96: #{tpu_custom_call.1} parent=83 // pred_fallthru
          _
        // Predicated region
        $region97: #{tpu_custom_call.1} parent=83 // pred_check
          %p589 = pneg %p148
        $region98: #{tpu_custom_call.1} parent=83 // pred_check_branch
          %591 = sbr.rel (%p589) target = $region100
        $region99: #{tpu_custom_call.1} parent=83 // pred_region
          %592 = dma.done [#allocation9], 4096
        $region100: #{tpu_custom_call.1} parent=83 // pred_fallthru
          _
        // Predicated region
        $region101: #{tpu_custom_call.1} parent=83 // pred_check
          %p593 = pneg %p190
        $region102: #{tpu_custom_call.1} parent=83 // pred_check_branch
          %595 = sbr.rel (%p593) target = $region104
        $region103: #{tpu_custom_call.1} parent=83 // pred_region
          %596 = dma.done [#allocation9], 2048
        $region104: #{tpu_custom_call.1} parent=83 // pred_fallthru
          _
        // Predicated region
        $region105: #{tpu_custom_call.1} parent=83 // pred_check
          %p597 = pneg %p316
        $region106: #{tpu_custom_call.1} parent=83 // pred_check_branch
          %599 = sbr.rel (%p597) target = $region108
        $region107: #{tpu_custom_call.1} parent=83 // pred_region
          %600 = dma.done [#allocation12], 4096
        $region108: #{tpu_custom_call.1} parent=83 // pred_fallthru
          _
        // Predicated region
        $region109: #{tpu_custom_call.1} parent=83 // pred_check
          %p601 = pneg %p358
        $region110: #{tpu_custom_call.1} parent=83 // pred_check_branch
          %603 = sbr.rel (%p601) target = $region112
        $region111: #{tpu_custom_call.1} parent=83 // pred_region
          %604 = dma.done [#allocation12], 4096
        $region112: #{tpu_custom_call.1} parent=83 // pred_fallthru
          _
        %s605 = sand.u32 %s46, 1
        %s606 = scalar_lea.sflag [#allocation3], %s605
        %s607 = sand.u32 %s46, 1
        %s608 = smul.addr %s607, 128
        %s609 = scalar_lea.vmem [#allocation2], %s608
        %p610 = pneg %p59
        %p611 = pneg %p56
        %s612 = sand.u32 %s38, 1
        %s613 = scalar_lea.sflag [#allocation6], %s612
        %s614 = sand.u32 %s72, 1
        %s615 = smul.addr %s614, 256
        %s616 = scalar_lea.vmem [#allocation5], %s615
        %p617 = pneg %p85
        %p618 = pneg %p82
        %p619 = pneg %p106
        %p620 = pneg %p103
        %p621 = pneg %p127
        %p622 = pneg %p124
        %p623 = pneg %p148
        %p624 = pneg %p145
        %p625 = pneg %p169
        %p626 = pneg %p166
        %p627 = pneg %p190
        %p628 = pneg %p187
        %p629 = pneg %p211
        %p630 = pneg %p208
        %p631 = pneg %p232
        %p632 = pneg %p229
        %p633 = pneg %p253
        %p634 = pneg %p250
        %p635 = pneg %p274
        %p636 = pneg %p271
        %p637 = pneg %p295
        %p638 = pneg %p292
        %p639 = pneg %p316
        %p640 = pneg %p313
        %p641 = pneg %p337
        %p642 = pneg %p334
        %p643 = pneg %p358
        %p644 = pneg %p355
        %p645 = pneg %p379
        %p646 = pneg %p376
        %p647 = pneg %p405
        %p648 = pneg %p402
        %s649 = sand.u32 %s392, 1
        %s650 = scalar_lea.sflag [#allocation4], %s649
        %s651 = sand.u32 %s392, 1
        %s652 = smul.addr %s651, 128
        %s653 = scalar_lea.vmem [#allocation14], %s652
        %s654 = smul.u32 8, %s38
        %s655 = smul.u32 8, %s38
        %s656 = smul.u32 8, %s38
        %v657 = vld [vmem:[%s571] sm:$0xff]
        %v658 = vld [vmem:[%s571 + $0x8] sm:$0xff]
        %v659 = vld [vmem:[%s571 + $0x10] sm:$0xff]
        %v660 = vld [vmem:[%s571 + $0x18] sm:$0xff]
        %v661 = vld [vmem:[%s571 + $0x20] sm:$0xff]
        %v662 = vld [vmem:[%s571 + $0x28] sm:$0xff]
        %v663 = vld [vmem:[%s571 + $0x30] sm:$0xff]
        %v664 = vld [vmem:[%s571 + $0x38] sm:$0xff]
        %v665 = vld [vmem:[%s571 + $0x40] sm:$0xff]
        %v666 = vld [vmem:[%s571 + $0x48] sm:$0xff]
        %v667 = vld [vmem:[%s571 + $0x50] sm:$0xff]
        %v668 = vld [vmem:[%s571 + $0x58] sm:$0xff]
        %v669 = vld [vmem:[%s571 + $0x60] sm:$0xff]
        %v670 = vld [vmem:[%s571 + $0x68] sm:$0xff]
        %v671 = vld [vmem:[%s571 + $0x70] sm:$0xff]
        %v672 = vld [vmem:[%s571 + $0x78] sm:$0xff]
        %v673 = vld [vmem:[%s580] sm:$0xff]
        %v674 = vld [vmem:[%s580 + $0x8] sm:$0xff]
        %v675 = vld [vmem:[%s580 + $0x10] sm:$0xff]
        %v676 = vld [vmem:[%s580 + $0x18] sm:$0xff]
        %v677 = vld [vmem:[%s580 + $0x20] sm:$0xff]
        %v678 = vld [vmem:[%s580 + $0x28] sm:$0xff]
        %v679 = vld [vmem:[%s580 + $0x30] sm:$0xff]
        %v680 = vld [vmem:[%s580 + $0x38] sm:$0xff]
        %v681 = vld [vmem:[%s580 + $0x40] sm:$0xff]
        %v682 = vld [vmem:[%s580 + $0x48] sm:$0xff]
        %v683 = vld [vmem:[%s580 + $0x50] sm:$0xff]
        %v684 = vld [vmem:[%s580 + $0x58] sm:$0xff]
        %v685 = vld [vmem:[%s580 + $0x60] sm:$0xff]
        %v686 = vld [vmem:[%s580 + $0x68] sm:$0xff]
        %v687 = vld [vmem:[%s580 + $0x70] sm:$0xff]
        %v688 = vld [vmem:[%s580 + $0x78] sm:$0xff]
        %v689 = vld [vmem:[%s580 + $0x80] sm:$0xff]
        %v690 = vld [vmem:[%s580 + $0x88] sm:$0xff]
        %v691 = vld [vmem:[%s580 + $0x90] sm:$0xff]
        %v692 = vld [vmem:[%s580 + $0x98] sm:$0xff]
        %v693 = vld [vmem:[%s580 + $0xa0] sm:$0xff]
        %v694 = vld [vmem:[%s580 + $0xa8] sm:$0xff]
        %v695 = vld [vmem:[%s580 + $0xb0] sm:$0xff]
        %v696 = vld [vmem:[%s580 + $0xb8] sm:$0xff]
        %v697 = vld [vmem:[%s580 + $0xc0] sm:$0xff]
        %v698 = vld [vmem:[%s580 + $0xc8] sm:$0xff]
        %v699 = vld [vmem:[%s580 + $0xd0] sm:$0xff]
        %v700 = vld [vmem:[%s580 + $0xd8] sm:$0xff]
        %v701 = vld [vmem:[%s580 + $0xe0] sm:$0xff]
        %v702 = vld [vmem:[%s580 + $0xe8] sm:$0xff]
        %v703 = vld [vmem:[%s580 + $0xf0] sm:$0xff]
        %v704 = vld [vmem:[%s580 + $0xf8] sm:$0xff]
        %v705 = vld [vmem:[#allocation7] sm:$0xff]
        %v706 = vld [vmem:[#allocation7 + $0x8] sm:$0xff]
        %v707 = vld [vmem:[#allocation7 + $0x10] sm:$0xff]
        %v708 = vld [vmem:[#allocation7 + $0x18] sm:$0xff]
        %v709 = vld [vmem:[#allocation7 + $0x20] sm:$0xff]
        %v710 = vld [vmem:[#allocation7 + $0x28] sm:$0xff]
        %v711 = vld [vmem:[#allocation7 + $0x30] sm:$0xff]
        %v712 = vld [vmem:[#allocation7 + $0x38] sm:$0xff]
        %v713 = vld [vmem:[#allocation7 + $0x40] sm:$0xff]
        %v714 = vld [vmem:[#allocation7 + $0x48] sm:$0xff]
        %v715 = vld [vmem:[#allocation7 + $0x50] sm:$0xff]
        %v716 = vld [vmem:[#allocation7 + $0x58] sm:$0xff]
        %v717 = vld [vmem:[#allocation7 + $0x60] sm:$0xff]
        %v718 = vld [vmem:[#allocation7 + $0x68] sm:$0xff]
        %v719 = vld [vmem:[#allocation7 + $0x70] sm:$0xff]
        %v720 = vld [vmem:[#allocation7 + $0x78] sm:$0xff]
        %v721 = vld [vmem:[%s3] sm:$0x1]
        %v723 = vlaneseq
        %v724 = vshrl.u32 %v723, 7
        %v725 = vsub.s32 0, %v724
        %v726 = vrot.slane %v721, %v725
        %728 = vmatprep.subr.mxu0 0.0
        %729 = vmatpush1.msra.mxu0 %v705
        %730 = vmatprep.subr.mxu0 0.0
        %731 = vmatpush1.msra.mxu0 %v706
        %732 = vmatprep.subr.mxu0 0.0
        %733 = vmatpush1.msra.mxu0 %v707
        %734 = vmatprep.subr.mxu0 0.0
        %735 = vmatpush1.msra.mxu0 %v708
        %736 = vmatprep.subr.mxu0 0.0
        %737 = vmatpush1.msra.mxu0 %v709
        %738 = vmatprep.subr.mxu0 0.0
        %739 = vmatpush1.msra.mxu0 %v710
        %740 = vmatprep.subr.mxu0 0.0
        %741 = vmatpush1.msra.mxu0 %v711
        %742 = vmatprep.subr.mxu0 0.0
        %743 = vmatpush1.msra.mxu0 %v712
        %744 = vmatprep.subr.mxu0 0.0
        %745 = vmatpush1.msra.mxu0 %v713
        %746 = vmatprep.subr.mxu0 0.0
        %747 = vmatpush1.msra.mxu0 %v714
        %748 = vmatprep.subr.mxu0 0.0
        %749 = vmatpush1.msra.mxu0 %v715
        %750 = vmatprep.subr.mxu0 0.0
        %751 = vmatpush1.msra.mxu0 %v716
        %752 = vmatprep.subr.mxu0 0.0
        %753 = vmatpush1.msra.mxu0 %v717
        %754 = vmatprep.subr.mxu0 0.0
        %755 = vmatpush1.msra.mxu0 %v718
        %756 = vmatprep.subr.mxu0 0.0
        %757 = vmatpush1.msra.mxu0 %v719
        %758 = vmatprep.subr.mxu0 0.0
        %759 = vmatpush1.msra.mxu0 %v720
        %760 = vmatprep.subr.mxu0 0.0
        %761 = vmatpush1.msra.mxu0 0.0
        %762 = vmatprep.subr.mxu0 0.0
        %763 = vmatpush1.msra.mxu0 0.0
        %764 = vmatprep.subr.mxu0 0.0
        %765 = vmatpush1.msra.mxu0 0.0
        %766 = vmatprep.subr.mxu0 0.0
        %767 = vmatpush1.msra.mxu0 0.0
        %768 = vmatprep.subr.mxu0 0.0
        %769 = vmatpush1.msra.mxu0 0.0
        %770 = vmatprep.subr.mxu0 0.0
        %771 = vmatpush1.msra.mxu0 0.0
        %772 = vmatprep.subr.mxu0 0.0
        %773 = vmatpush1.msra.mxu0 0.0
        %774 = vmatprep.subr.mxu0 0.0
        %775 = vmatpush1.msra.mxu0 0.0
        %776 = vmatprep.subr.mxu0 0.0
        %777 = vmatpush1.msra.mxu0 0.0
        %778 = vmatprep.subr.mxu0 0.0
        %779 = vmatpush1.msra.mxu0 0.0
        %780 = vmatprep.subr.mxu0 0.0
        %781 = vmatpush1.msra.mxu0 0.0
        %782 = vmatprep.subr.mxu0 0.0
        %783 = vmatpush1.msra.mxu0 0.0
        %784 = vmatprep.subr.mxu0 0.0
        %785 = vmatpush1.msra.mxu0 0.0
        %786 = vmatprep.subr.mxu0 0.0
        %787 = vmatpush1.msra.mxu0 0.0
        %788 = vmatprep.subr.mxu0 0.0
        %789 = vmatpush1.msra.mxu0 0.0
        %790 = vmatprep.subr.mxu0 0.0
        %791 = vmatpush1.msra.mxu0 0.0
        %792 = vmatprep.mubr.f32.mxu0 0.0
        %793 = vmatmul.mubr.f32.gmra.mrb[0].mxu0 %v657
        %v794 = vpop.f32.mrb[0].mxu0
        %v795 = vadd.f32 %v726, %v794
        %v796 = vpop.f32.mrb[0].mxu0
        %797 = vmatprep.mubr.f32.mxu0 0.0
        %798 = vmatmul.mubr.f32.gmra.mrb[0].mxu0 %v658
        %v799 = vpop.f32.mrb[0].mxu0
        %v800 = vadd.f32 %v726, %v799
        %v801 = vpop.f32.mrb[0].mxu0
        %802 = vmatprep.mubr.f32.mxu0 0.0
        %803 = vmatmul.mubr.f32.gmra.mrb[0].mxu0 %v659
        %v804 = vpop.f32.mrb[0].mxu0
        %v805 = vadd.f32 %v726, %v804
        %v806 = vpop.f32.mrb[0].mxu0
        %807 = vmatprep.mubr.f32.mxu0 0.0
        %808 = vmatmul.mubr.f32.gmra.mrb[0].mxu0 %v660
        %v809 = vpop.f32.mrb[0].mxu0
        %v810 = vadd.f32 %v726, %v809
        %v811 = vpop.f32.mrb[0].mxu0
        %812 = vmatprep.mubr.f32.mxu0 0.0
        %813 = vmatmul.mubr.f32.gmra.mrb[0].mxu0 %v661
        %v814 = vpop.f32.mrb[0].mxu0
        %v815 = vadd.f32 %v726, %v814
        %v816 = vpop.f32.mrb[0].mxu0
        %817 = vmatprep.mubr.f32.mxu0 0.0
        %818 = vmatmul.mubr.f32.gmra.mrb[0].mxu0 %v662
        %v819 = vpop.f32.mrb[0].mxu0
        %v820 = vadd.f32 %v726, %v819
        %v821 = vpop.f32.mrb[0].mxu0
        %822 = vmatprep.mubr.f32.mxu0 0.0
        %823 = vmatmul.mubr.f32.gmra.mrb[0].mxu0 %v663
        %v824 = vpop.f32.mrb[0].mxu0
        %v825 = vadd.f32 %v726, %v824
        %v826 = vpop.f32.mrb[0].mxu0
        %827 = vmatprep.mubr.f32.mxu0 0.0
        %828 = vmatmul.mubr.f32.gmra.mrb[0].mxu0 %v664
        %v829 = vpop.f32.mrb[0].mxu0
        %v830 = vadd.f32 %v726, %v829
        %v831 = vpop.f32.mrb[0].mxu0
        %832 = vmatprep.mubr.f32.mxu0 0.0
        %833 = vmatmul.mubr.f32.gmra.mrb[0].mxu0 %v665
        %v834 = vpop.f32.mrb[0].mxu0
        %v835 = vadd.f32 %v726, %v834
        %v836 = vpop.f32.mrb[0].mxu0
        %837 = vmatprep.mubr.f32.mxu0 0.0
        %838 = vmatmul.mubr.f32.gmra.mrb[0].mxu0 %v666
        %v839 = vpop.f32.mrb[0].mxu0
        %v840 = vadd.f32 %v726, %v839
        %v841 = vpop.f32.mrb[0].mxu0
        %842 = vmatprep.mubr.f32.mxu0 0.0
        %843 = vmatmul.mubr.f32.gmra.mrb[0].mxu0 %v667
        %v844 = vpop.f32.mrb[0].mxu0
        %v845 = vadd.f32 %v726, %v844
        %v846 = vpop.f32.mrb[0].mxu0
        %847 = vmatprep.mubr.f32.mxu0 0.0
        %848 = vmatmul.mubr.f32.gmra.mrb[0].mxu0 %v668
        %v849 = vpop.f32.mrb[0].mxu0
        %v850 = vadd.f32 %v726, %v849
        %v851 = vpop.f32.mrb[0].mxu0
        %852 = vmatprep.mubr.f32.mxu0 0.0
        %853 = vmatmul.mubr.f32.gmra.mrb[0].mxu0 %v669
        %v854 = vpop.f32.mrb[0].mxu0
        %v855 = vadd.f32 %v726, %v854
        %v856 = vpop.f32.mrb[0].mxu0
        %857 = vmatprep.mubr.f32.mxu0 0.0
        %858 = vmatmul.mubr.f32.gmra.mrb[0].mxu0 %v670
        %v859 = vpop.f32.mrb[0].mxu0
        %v860 = vadd.f32 %v726, %v859
        %v861 = vpop.f32.mrb[0].mxu0
        %862 = vmatprep.mubr.f32.mxu0 0.0
        %863 = vmatmul.mubr.f32.gmra.mrb[0].mxu0 %v671
        %v864 = vpop.f32.mrb[0].mxu0
        %v865 = vadd.f32 %v726, %v864
        %v866 = vpop.f32.mrb[0].mxu0
        %867 = vmatprep.mubr.f32.mxu0 0.0
        %868 = vmatmul.mubr.f32.gmra.mrb[0].mxu0 %v672
        %v869 = vpop.f32.mrb[0].mxu0
        %v870 = vadd.f32 %v726, %v869
        %v871 = vpop.f32.mrb[0].mxu0
        %872 = vdwg.mxu0
        %v873 = vld [vmem:[#allocation8] sm:$0xff]
        %v874 = vld [vmem:[#allocation8 + $0x8] sm:$0xff]
        %v875 = vld [vmem:[#allocation8 + $0x10] sm:$0xff]
        %v876 = vld [vmem:[#allocation8 + $0x18] sm:$0xff]
        %v877 = vld [vmem:[#allocation8 + $0x20] sm:$0xff]
        %v878 = vld [vmem:[#allocation8 + $0x28] sm:$0xff]
        %v879 = vld [vmem:[#allocation8 + $0x30] sm:$0xff]
        %v880 = vld [vmem:[#allocation8 + $0x38] sm:$0xff]
        %v881 = vld [vmem:[#allocation8 + $0x40] sm:$0xff]
        %v882 = vld [vmem:[#allocation8 + $0x48] sm:$0xff]
        %v883 = vld [vmem:[#allocation8 + $0x50] sm:$0xff]
        %v884 = vld [vmem:[#allocation8 + $0x58] sm:$0xff]
        %v885 = vld [vmem:[#allocation8 + $0x60] sm:$0xff]
        %v886 = vld [vmem:[#allocation8 + $0x68] sm:$0xff]
        %v887 = vld [vmem:[#allocation8 + $0x70] sm:$0xff]
        %v888 = vld [vmem:[#allocation8 + $0x78] sm:$0xff]
        %v889 = vld [vmem:[#allocation8 + $0x80] sm:$0xff]
        %v890 = vld [vmem:[#allocation8 + $0x88] sm:$0xff]
        %v891 = vld [vmem:[#allocation8 + $0x90] sm:$0xff]
        %v892 = vld [vmem:[#allocation8 + $0x98] sm:$0xff]
        %v893 = vld [vmem:[#allocation8 + $0xa0] sm:$0xff]
        %v894 = vld [vmem:[#allocation8 + $0xa8] sm:$0xff]
        %v895 = vld [vmem:[#allocation8 + $0xb0] sm:$0xff]
        %v896 = vld [vmem:[#allocation8 + $0xb8] sm:$0xff]
        %v897 = vld [vmem:[#allocation8 + $0xc0] sm:$0xff]
        %v898 = vld [vmem:[#allocation8 + $0xc8] sm:$0xff]
        %v899 = vld [vmem:[#allocation8 + $0xd0] sm:$0xff]
        %v900 = vld [vmem:[#allocation8 + $0xd8] sm:$0xff]
        %v901 = vld [vmem:[#allocation8 + $0xe0] sm:$0xff]
        %v902 = vld [vmem:[#allocation8 + $0xe8] sm:$0xff]
        %v903 = vld [vmem:[#allocation8 + $0xf0] sm:$0xff]
        %v904 = vld [vmem:[#allocation8 + $0xf8] sm:$0xff]
        %v905 = vld [vmem:[%s5] sm:$0x3]
        %v907 = vlaneseq
        %v908 = vshrl.u32 %v907, 7
        %v909 = vsub.s32 0, %v908
        %v910 = vrot.slane %v905, %v909
        %v911 = vlaneseq
        %v912 = vshrl.u32 %v911, 7
        %v913 = vsub.s32 1, %v912
        %v914 = vrot.slane %v905, %v913
        %917 = vmatprep.subr.mxu0 %v874
        %918 = vmatpush1.msra.mxu0 %v873
        %919 = vmatprep.subr.mxu0 %v876
        %920 = vmatpush1.msra.mxu0 %v875
        %921 = vmatprep.subr.mxu0 %v878
        %922 = vmatpush1.msra.mxu0 %v877
        %923 = vmatprep.subr.mxu0 %v880
        %924 = vmatpush1.msra.mxu0 %v879
        %925 = vmatprep.subr.mxu0 %v882
        %926 = vmatpush1.msra.mxu0 %v881
        %927 = vmatprep.subr.mxu0 %v884
        %928 = vmatpush1.msra.mxu0 %v883
        %929 = vmatprep.subr.mxu0 %v886
        %930 = vmatpush1.msra.mxu0 %v885
        %931 = vmatprep.subr.mxu0 %v888
        %932 = vmatpush1.msra.mxu0 %v887
        %933 = vmatprep.subr.mxu0 %v890
        %934 = vmatpush1.msra.mxu0 %v889
        %935 = vmatprep.subr.mxu0 %v892
        %936 = vmatpush1.msra.mxu0 %v891
        %937 = vmatprep.subr.mxu0 %v894
        %938 = vmatpush1.msra.mxu0 %v893
        %939 = vmatprep.subr.mxu0 %v896
        %940 = vmatpush1.msra.mxu0 %v895
        %941 = vmatprep.subr.mxu0 %v898
        %942 = vmatpush1.msra.mxu0 %v897
        %943 = vmatprep.subr.mxu0 %v900
        %944 = vmatpush1.msra.mxu0 %v899
        %945 = vmatprep.subr.mxu0 %v902
        %946 = vmatpush1.msra.mxu0 %v901
        %947 = vmatprep.subr.mxu0 %v904
        %948 = vmatpush1.msra.mxu0 %v903
        %949 = vmatprep.subr.mxu0 0.0
        %950 = vmatpush1.msra.mxu0 0.0
        %951 = vmatprep.subr.mxu0 0.0
        %952 = vmatpush1.msra.mxu0 0.0
        %953 = vmatprep.subr.mxu0 0.0
        %954 = vmatpush1.msra.mxu0 0.0
        %955 = vmatprep.subr.mxu0 0.0
        %956 = vmatpush1.msra.mxu0 0.0
        %957 = vmatprep.subr.mxu0 0.0
        %958 = vmatpush1.msra.mxu0 0.0
        %959 = vmatprep.subr.mxu0 0.0
        %960 = vmatpush1.msra.mxu0 0.0
        %961 = vmatprep.subr.mxu0 0.0
        %962 = vmatpush1.msra.mxu0 0.0
        %963 = vmatprep.subr.mxu0 0.0
        %964 = vmatpush1.msra.mxu0 0.0
        %965 = vmatprep.subr.mxu0 0.0
        %966 = vmatpush1.msra.mxu0 0.0
        %967 = vmatprep.subr.mxu0 0.0
        %968 = vmatpush1.msra.mxu0 0.0
        %969 = vmatprep.subr.mxu0 0.0
        %970 = vmatpush1.msra.mxu0 0.0
        %971 = vmatprep.subr.mxu0 0.0
        %972 = vmatpush1.msra.mxu0 0.0
        %973 = vmatprep.subr.mxu0 0.0
        %974 = vmatpush1.msra.mxu0 0.0
        %975 = vmatprep.subr.mxu0 0.0
        %976 = vmatpush1.msra.mxu0 0.0
        %977 = vmatprep.subr.mxu0 0.0
        %978 = vmatpush1.msra.mxu0 0.0
        %979 = vmatprep.subr.mxu0 0.0
        %980 = vmatpush1.msra.mxu0 0.0
        %981 = vmatprep.mubr.f32.mxu0 0.0
        %982 = vmatmul.mubr.f32.gmra.mrb[0].mxu0 %v673
        %v983 = vpop.f32.mrb[0].mxu0
        %v984 = vadd.f32 %v910, %v983
        %v985 = vpop.f32.mrb[0].mxu0
        %v986 = vadd.f32 %v914, %v985
        %987 = vmatprep.mubr.f32.mxu0 0.0
        %988 = vmatmul.mubr.f32.gmra.mrb[0].mxu0 %v674
        %v989 = vpop.f32.mrb[0].mxu0
        %v990 = vadd.f32 %v910, %v989
        %v991 = vpop.f32.mrb[0].mxu0
        %v992 = vadd.f32 %v914, %v991
        %993 = vmatprep.mubr.f32.mxu0 0.0
        %994 = vmatmul.mubr.f32.gmra.mrb[0].mxu0 %v675
        %v995 = vpop.f32.mrb[0].mxu0
        %v996 = vadd.f32 %v910, %v995
        %v997 = vpop.f32.mrb[0].mxu0
        %v998 = vadd.f32 %v914, %v997
        %999 = vmatprep.mubr.f32.mxu0 0.0
        %1000 = vmatmul.mubr.f32.gmra.mrb[0].mxu0 %v676
        %v1001 = vpop.f32.mrb[0].mxu0
        %v1002 = vadd.f32 %v910, %v1001
        %v1003 = vpop.f32.mrb[0].mxu0
        %v1004 = vadd.f32 %v914, %v1003
        %1005 = vmatprep.mubr.f32.mxu0 0.0
        %1006 = vmatmul.mubr.f32.gmra.mrb[0].mxu0 %v677
        %v1007 = vpop.f32.mrb[0].mxu0
        %v1008 = vadd.f32 %v910, %v1007
        %v1009 = vpop.f32.mrb[0].mxu0
        %v1010 = vadd.f32 %v914, %v1009
        %1011 = vmatprep.mubr.f32.mxu0 0.0
        %1012 = vmatmul.mubr.f32.gmra.mrb[0].mxu0 %v678
        %v1013 = vpop.f32.mrb[0].mxu0
        %v1014 = vadd.f32 %v910, %v1013
        %v1015 = vpop.f32.mrb[0].mxu0
        %v1016 = vadd.f32 %v914, %v1015
        %1017 = vmatprep.mubr.f32.mxu0 0.0
        %1018 = vmatmul.mubr.f32.gmra.mrb[0].mxu0 %v679
        %v1019 = vpop.f32.mrb[0].mxu0
        %v1020 = vadd.f32 %v910, %v1019
        %v1021 = vpop.f32.mrb[0].mxu0
        %v1022 = vadd.f32 %v914, %v1021
        %1023 = vmatprep.mubr.f32.mxu0 0.0
        %1024 = vmatmul.mubr.f32.gmra.mrb[0].mxu0 %v680
        %v1025 = vpop.f32.mrb[0].mxu0
        %v1026 = vadd.f32 %v910, %v1025
        %v1027 = vpop.f32.mrb[0].mxu0
        %v1028 = vadd.f32 %v914, %v1027
        %1029 = vmatprep.mubr.f32.mxu0 0.0
        %1030 = vmatmul.mubr.f32.gmra.mrb[0].mxu0 %v681
        %v1031 = vpop.f32.mrb[0].mxu0
        %v1032 = vadd.f32 %v910, %v1031
        %v1033 = vpop.f32.mrb[0].mxu0
        %v1034 = vadd.f32 %v914, %v1033
        %1035 = vmatprep.mubr.f32.mxu0 0.0
        %1036 = vmatmul.mubr.f32.gmra.mrb[0].mxu0 %v682
        %v1037 = vpop.f32.mrb[0].mxu0
        %v1038 = vadd.f32 %v910, %v1037
        %v1039 = vpop.f32.mrb[0].mxu0
        %v1040 = vadd.f32 %v914, %v1039
        %1041 = vmatprep.mubr.f32.mxu0 0.0
        %1042 = vmatmul.mubr.f32.gmra.mrb[0].mxu0 %v683
        %v1043 = vpop.f32.mrb[0].mxu0
        %v1044 = vadd.f32 %v910, %v1043
        %v1045 = vpop.f32.mrb[0].mxu0
        %v1046 = vadd.f32 %v914, %v1045
        %1047 = vmatprep.mubr.f32.mxu0 0.0
        %1048 = vmatmul.mubr.f32.gmra.mrb[0].mxu0 %v684
        %v1049 = vpop.f32.mrb[0].mxu0
        %v1050 = vadd.f32 %v910, %v1049
        %v1051 = vpop.f32.mrb[0].mxu0
        %v1052 = vadd.f32 %v914, %v1051
        %1053 = vmatprep.mubr.f32.mxu0 0.0
        %1054 = vmatmul.mubr.f32.gmra.mrb[0].mxu0 %v685
        %v1055 = vpop.f32.mrb[0].mxu0
        %v1056 = vadd.f32 %v910, %v1055
        %v1057 = vpop.f32.mrb[0].mxu0
        %v1058 = vadd.f32 %v914, %v1057
        %1059 = vmatprep.mubr.f32.mxu0 0.0
        %1060 = vmatmul.mubr.f32.gmra.mrb[0].mxu0 %v686
        %v1061 = vpop.f32.mrb[0].mxu0
        %v1062 = vadd.f32 %v910, %v1061
        %v1063 = vpop.f32.mrb[0].mxu0
        %v1064 = vadd.f32 %v914, %v1063
        %1065 = vmatprep.mubr.f32.mxu0 0.0
        %1066 = vmatmul.mubr.f32.gmra.mrb[0].mxu0 %v687
        %v1067 = vpop.f32.mrb[0].mxu0
        %v1068 = vadd.f32 %v910, %v1067
        %v1069 = vpop.f32.mrb[0].mxu0
        %v1070 = vadd.f32 %v914, %v1069
        %1071 = vmatprep.mubr.f32.mxu0 0.0
        %1072 = vmatmul.mubr.f32.gmra.mrb[0].mxu0 %v688
        %v1073 = vpop.f32.mrb[0].mxu0
        %v1074 = vadd.f32 %v910, %v1073
        %v1075 = vpop.f32.mrb[0].mxu0
        %v1076 = vadd.f32 %v914, %v1075
        %1077 = vmatprep.mubr.f32.mxu0 0.0
        %1078 = vmatmul.mubr.f32.gmra.mrb[0].mxu0 %v689
        %v1079 = vpop.f32.mrb[0].mxu0
        %v1080 = vadd.f32 %v910, %v1079
        %v1081 = vpop.f32.mrb[0].mxu0
        %v1082 = vadd.f32 %v914, %v1081
        %1083 = vmatprep.mubr.f32.mxu0 0.0
        %1084 = vmatmul.mubr.f32.gmra.mrb[0].mxu0 %v690
        %v1085 = vpop.f32.mrb[0].mxu0
        %v1086 = vadd.f32 %v910, %v1085
        %v1087 = vpop.f32.mrb[0].mxu0
        %v1088 = vadd.f32 %v914, %v1087
        %1089 = vmatprep.mubr.f32.mxu0 0.0
        %1090 = vmatmul.mubr.f32.gmra.mrb[0].mxu0 %v691
        %v1091 = vpop.f32.mrb[0].mxu0
        %v1092 = vadd.f32 %v910, %v1091
        %v1093 = vpop.f32.mrb[0].mxu0
        %v1094 = vadd.f32 %v914, %v1093
        %1095 = vmatprep.mubr.f32.mxu0 0.0
        %1096 = vmatmul.mubr.f32.gmra.mrb[0].mxu0 %v692
        %v1097 = vpop.f32.mrb[0].mxu0
        %v1098 = vadd.f32 %v910, %v1097
        %v1099 = vpop.f32.mrb[0].mxu0
        %v1100 = vadd.f32 %v914, %v1099
        %1101 = vmatprep.mubr.f32.mxu0 0.0
        %1102 = vmatmul.mubr.f32.gmra.mrb[0].mxu0 %v693
        %v1103 = vpop.f32.mrb[0].mxu0
        %v1104 = vadd.f32 %v910, %v1103
        %v1105 = vpop.f32.mrb[0].mxu0
        %v1106 = vadd.f32 %v914, %v1105
        %1107 = vmatprep.mubr.f32.mxu0 0.0
        %1108 = vmatmul.mubr.f32.gmra.mrb[0].mxu0 %v694
        %v1109 = vpop.f32.mrb[0].mxu0
        %v1110 = vadd.f32 %v910, %v1109
        %v1111 = vpop.f32.mrb[0].mxu0
        %v1112 = vadd.f32 %v914, %v1111
        %1113 = vmatprep.mubr.f32.mxu0 0.0
        %1114 = vmatmul.mubr.f32.gmra.mrb[0].mxu0 %v695
        %v1115 = vpop.f32.mrb[0].mxu0
        %v1116 = vadd.f32 %v910, %v1115
        %v1117 = vpop.f32.mrb[0].mxu0
        %v1118 = vadd.f32 %v914, %v1117
        %1119 = vmatprep.mubr.f32.mxu0 0.0
        %1120 = vmatmul.mubr.f32.gmra.mrb[0].mxu0 %v696
        %v1121 = vpop.f32.mrb[0].mxu0
        %v1122 = vadd.f32 %v910, %v1121
        %v1123 = vpop.f32.mrb[0].mxu0
        %v1124 = vadd.f32 %v914, %v1123
        %1125 = vmatprep.mubr.f32.mxu0 0.0
        %1126 = vmatmul.mubr.f32.gmra.mrb[0].mxu0 %v697
        %v1127 = vpop.f32.mrb[0].mxu0
        %v1128 = vadd.f32 %v910, %v1127
        %v1129 = vpop.f32.mrb[0].mxu0
        %v1130 = vadd.f32 %v914, %v1129
        %1131 = vmatprep.mubr.f32.mxu0 0.0
        %1132 = vmatmul.mubr.f32.gmra.mrb[0].mxu0 %v698
        %v1133 = vpop.f32.mrb[0].mxu0
        %v1134 = vadd.f32 %v910, %v1133
        %v1135 = vpop.f32.mrb[0].mxu0
        %v1136 = vadd.f32 %v914, %v1135
        %1137 = vmatprep.mubr.f32.mxu0 0.0
        %1138 = vmatmul.mubr.f32.gmra.mrb[0].mxu0 %v699
        %v1139 = vpop.f32.mrb[0].mxu0
        %v1140 = vadd.f32 %v910, %v1139
        %v1141 = vpop.f32.mrb[0].mxu0
        %v1142 = vadd.f32 %v914, %v1141
        %1143 = vmatprep.mubr.f32.mxu0 0.0
        %1144 = vmatmul.mubr.f32.gmra.mrb[0].mxu0 %v700
        %v1145 = vpop.f32.mrb[0].mxu0
        %v1146 = vadd.f32 %v910, %v1145
        %v1147 = vpop.f32.mrb[0].mxu0
        %v1148 = vadd.f32 %v914, %v1147
        %1149 = vmatprep.mubr.f32.mxu0 0.0
        %1150 = vmatmul.mubr.f32.gmra.mrb[0].mxu0 %v701
        %v1151 = vpop.f32.mrb[0].mxu0
        %v1152 = vadd.f32 %v910, %v1151
        %v1153 = vpop.f32.mrb[0].mxu0
        %v1154 = vadd.f32 %v914, %v1153
        %1155 = vmatprep.mubr.f32.mxu0 0.0
        %1156 = vmatmul.mubr.f32.gmra.mrb[0].mxu0 %v702
        %v1157 = vpop.f32.mrb[0].mxu0
        %v1158 = vadd.f32 %v910, %v1157
        %v1159 = vpop.f32.mrb[0].mxu0
        %v1160 = vadd.f32 %v914, %v1159
        %1161 = vmatprep.mubr.f32.mxu0 0.0
        %1162 = vmatmul.mubr.f32.gmra.mrb[0].mxu0 %v703
        %v1163 = vpop.f32.mrb[0].mxu0
        %v1164 = vadd.f32 %v910, %v1163
        %v1165 = vpop.f32.mrb[0].mxu0
        %v1166 = vadd.f32 %v914, %v1165
        %1167 = vmatprep.mubr.f32.mxu0 0.0
        %1168 = vmatmul.mubr.f32.gmra.mrb[0].mxu0 %v704
        %v1169 = vpop.f32.mrb[0].mxu0
        %v1170 = vadd.f32 %v910, %v1169
        %v1171 = vpop.f32.mrb[0].mxu0
        %v1172 = vadd.f32 %v914, %v1171
        %1173 = vdwg.mxu0
        %vm1174 = vcmask 261120
        %v1176 = vsel %vm1174, %v795, 0
        %v1179 = vsel %vm1174, %v800, 0
        %v1182 = vsel %vm1174, %v984, 0
        %v1185 = vsel %vm1174, %v990, 0
        %v1188 = vsel %vm1174, %v996, 0
        %v1191 = vsel %vm1174, %v1002, 0
        %1193 = vmatprep.subr.mxu0 0.0
        %1194 = vmatpush1.xpose.msra.mxu0 %v1182
        %1195 = vmatprep.subr.mxu0 0.0
        %1196 = vmatpush1.xpose.msra.mxu0 %v1185
        %1197 = vmatprep.subr.mxu0 0.0
        %1198 = vmatpush1.xpose.msra.mxu0 %v1188
        %1199 = vmatprep.subr.mxu0 0.0
        %1200 = vmatpush1.xpose.msra.mxu0 %v1191
        %1201 = vmatprep.subr.mxu0 0.0
        %1202 = vmatpush1.xpose.msra.mxu0 0.0
        %1203 = vmatprep.subr.mxu0 0.0
        %1204 = vmatpush1.xpose.msra.mxu0 0.0
        %1205 = vmatprep.subr.mxu0 0.0
        %1206 = vmatpush1.xpose.msra.mxu0 0.0
        %1207 = vmatprep.subr.mxu0 0.0
        %1208 = vmatpush1.xpose.msra.mxu0 0.0
        %1209 = vmatprep.subr.mxu0 0.0
        %1210 = vmatpush1.xpose.msra.mxu0 0.0
        %1211 = vmatprep.subr.mxu0 0.0
        %1212 = vmatpush1.xpose.msra.mxu0 0.0
        %1213 = vmatprep.subr.mxu0 0.0
        %1214 = vmatpush1.xpose.msra.mxu0 0.0
        %1215 = vmatprep.subr.mxu0 0.0
        %1216 = vmatpush1.xpose.msra.mxu0 0.0
        %1217 = vmatprep.subr.mxu0 0.0
        %1218 = vmatpush1.xpose.msra.mxu0 0.0
        %1219 = vmatprep.subr.mxu0 0.0
        %1220 = vmatpush1.xpose.msra.mxu0 0.0
        %1221 = vmatprep.subr.mxu0 0.0
        %1222 = vmatpush1.xpose.msra.mxu0 0.0
        %1223 = vmatprep.subr.mxu0 0.0
        %1224 = vmatpush1.xpose.msra.mxu0 0.0
        %1225 = vmatprep.subr.mxu0 0.0
        %1226 = vmatpush1.xpose.msra.mxu0 0.0
        %1227 = vmatprep.subr.mxu0 0.0
        %1228 = vmatpush1.xpose.msra.mxu0 0.0
        %1229 = vmatprep.subr.mxu0 0.0
        %1230 = vmatpush1.xpose.msra.mxu0 0.0
        %1231 = vmatprep.subr.mxu0 0.0
        %1232 = vmatpush1.xpose.msra.mxu0 0.0
        %1233 = vmatprep.subr.mxu0 0.0
        %1234 = vmatpush1.xpose.msra.mxu0 0.0
        %1235 = vmatprep.subr.mxu0 0.0
        %1236 = vmatpush1.xpose.msra.mxu0 0.0
        %1237 = vmatprep.subr.mxu0 0.0
        %1238 = vmatpush1.xpose.msra.mxu0 0.0
        %1239 = vmatprep.subr.mxu0 0.0
        %1240 = vmatpush1.xpose.msra.mxu0 0.0
        %1241 = vmatprep.subr.mxu0 0.0
        %1242 = vmatpush1.xpose.msra.mxu0 0.0
        %1243 = vmatprep.subr.mxu0 0.0
        %1244 = vmatpush1.xpose.msra.mxu0 0.0
        %1245 = vmatprep.subr.mxu0 0.0
        %1246 = vmatpush1.xpose.msra.mxu0 0.0
        %1247 = vmatprep.subr.mxu0 0.0
        %1248 = vmatpush1.xpose.msra.mxu0 0.0
        %1249 = vmatprep.subr.mxu0 0.0
        %1250 = vmatpush1.xpose.msra.mxu0 0.0
        %1251 = vmatprep.subr.mxu0 0.0
        %1252 = vmatpush1.xpose.msra.mxu0 0.0
        %1253 = vmatprep.subr.mxu0 0.0
        %1254 = vmatpush1.xpose.msra.mxu0 0.0
        %1255 = vmatprep.subr.mxu0 0.0
        %1256 = vmatpush1.xpose.msra.mxu0 0.0
        %1257 = vmatprep.mubr.f32.mxu0 0.0
        %1258 = vmatmul.mubr.f32.gmra.mrb[0].mxu0 %v1176
        %v1259 = vpop.f32.mrb[0].mxu0
        %v1260 = vadd.f32 0.0, %v1259
        %v1261 = vpop.f32.mrb[0].mxu0
        %1262 = vmatprep.mubr.f32.mxu0 0.0
        %1263 = vmatmul.mubr.f32.gmra.mrb[0].mxu0 %v1179
        %v1264 = vpop.f32.mrb[0].mxu0
        %v1265 = vadd.f32 0.0, %v1264
        %v1266 = vpop.f32.mrb[0].mxu0
        %1267 = vdwg.mxu0
        %v1269 = vsel %vm1174, %v805, 0
        %v1272 = vsel %vm1174, %v810, 0
        %v1275 = vsel %vm1174, %v1008, 0
        %v1278 = vsel %vm1174, %v1014, 0
        %v1281 = vsel %vm1174, %v1020, 0
        %v1284 = vsel %vm1174, %v1026, 0
        %1286 = vmatprep.subr.mxu0 0.0
        %1287 = vmatpush1.xpose.msra.mxu0 %v1275
        %1288 = vmatprep.subr.mxu0 0.0
        %1289 = vmatpush1.xpose.msra.mxu0 %v1278
        %1290 = vmatprep.subr.mxu0 0.0
        %1291 = vmatpush1.xpose.msra.mxu0 %v1281
        %1292 = vmatprep.subr.mxu0 0.0
        %1293 = vmatpush1.xpose.msra.mxu0 %v1284
        %1294 = vmatprep.subr.mxu0 0.0
        %1295 = vmatpush1.xpose.msra.mxu0 0.0
        %1296 = vmatprep.subr.mxu0 0.0
        %1297 = vmatpush1.xpose.msra.mxu0 0.0
        %1298 = vmatprep.subr.mxu0 0.0
        %1299 = vmatpush1.xpose.msra.mxu0 0.0
        %1300 = vmatprep.subr.mxu0 0.0
        %1301 = vmatpush1.xpose.msra.mxu0 0.0
        %1302 = vmatprep.subr.mxu0 0.0
        %1303 = vmatpush1.xpose.msra.mxu0 0.0
        %1304 = vmatprep.subr.mxu0 0.0
        %1305 = vmatpush1.xpose.msra.mxu0 0.0
        %1306 = vmatprep.subr.mxu0 0.0
        %1307 = vmatpush1.xpose.msra.mxu0 0.0
        %1308 = vmatprep.subr.mxu0 0.0
        %1309 = vmatpush1.xpose.msra.mxu0 0.0
        %1310 = vmatprep.subr.mxu0 0.0
        %1311 = vmatpush1.xpose.msra.mxu0 0.0
        %1312 = vmatprep.subr.mxu0 0.0
        %1313 = vmatpush1.xpose.msra.mxu0 0.0
        %1314 = vmatprep.subr.mxu0 0.0
        %1315 = vmatpush1.xpose.msra.mxu0 0.0
        %1316 = vmatprep.subr.mxu0 0.0
        %1317 = vmatpush1.xpose.msra.mxu0 0.0
        %1318 = vmatprep.subr.mxu0 0.0
        %1319 = vmatpush1.xpose.msra.mxu0 0.0
        %1320 = vmatprep.subr.mxu0 0.0
        %1321 = vmatpush1.xpose.msra.mxu0 0.0
        %1322 = vmatprep.subr.mxu0 0.0
        %1323 = vmatpush1.xpose.msra.mxu0 0.0
        %1324 = vmatprep.subr.mxu0 0.0
        %1325 = vmatpush1.xpose.msra.mxu0 0.0
        %1326 = vmatprep.subr.mxu0 0.0
        %1327 = vmatpush1.xpose.msra.mxu0 0.0
        %1328 = vmatprep.subr.mxu0 0.0
        %1329 = vmatpush1.xpose.msra.mxu0 0.0
        %1330 = vmatprep.subr.mxu0 0.0
        %1331 = vmatpush1.xpose.msra.mxu0 0.0
        %1332 = vmatprep.subr.mxu0 0.0
        %1333 = vmatpush1.xpose.msra.mxu0 0.0
        %1334 = vmatprep.subr.mxu0 0.0
        %1335 = vmatpush1.xpose.msra.mxu0 0.0
        %1336 = vmatprep.subr.mxu0 0.0
        %1337 = vmatpush1.xpose.msra.mxu0 0.0
        %1338 = vmatprep.subr.mxu0 0.0
        %1339 = vmatpush1.xpose.msra.mxu0 0.0
        %1340 = vmatprep.subr.mxu0 0.0
        %1341 = vmatpush1.xpose.msra.mxu0 0.0
        %1342 = vmatprep.subr.mxu0 0.0
        %1343 = vmatpush1.xpose.msra.mxu0 0.0
        %1344 = vmatprep.subr.mxu0 0.0
        %1345 = vmatpush1.xpose.msra.mxu0 0.0
        %1346 = vmatprep.subr.mxu0 0.0
        %1347 = vmatpush1.xpose.msra.mxu0 0.0
        %1348 = vmatprep.subr.mxu0 0.0
        %1349 = vmatpush1.xpose.msra.mxu0 0.0
        %1350 = vmatprep.mubr.f32.mxu0 0.0
        %1351 = vmatmul.mubr.f32.gmra.mrb[0].mxu0 %v1269
        %v1352 = vpop.f32.mrb[0].mxu0
        %v1353 = vadd.f32 0.0, %v1352
        %v1354 = vpop.f32.mrb[0].mxu0
        %1355 = vmatprep.mubr.f32.mxu0 0.0
        %1356 = vmatmul.mubr.f32.gmra.mrb[0].mxu0 %v1272
        %v1357 = vpop.f32.mrb[0].mxu0
        %v1358 = vadd.f32 0.0, %v1357
        %v1359 = vpop.f32.mrb[0].mxu0
        %1360 = vdwg.mxu0
        %v1362 = vsel %vm1174, %v815, 0
        %v1365 = vsel %vm1174, %v820, 0
        %v1368 = vsel %vm1174, %v1032, 0
        %v1371 = vsel %vm1174, %v1038, 0
        %v1374 = vsel %vm1174, %v1044, 0
        %v1377 = vsel %vm1174, %v1050, 0
        %1379 = vmatprep.subr.mxu0 0.0
        %1380 = vmatpush1.xpose.msra.mxu0 %v1368
        %1381 = vmatprep.subr.mxu0 0.0
        %1382 = vmatpush1.xpose.msra.mxu0 %v1371
        %1383 = vmatprep.subr.mxu0 0.0
        %1384 = vmatpush1.xpose.msra.mxu0 %v1374
        %1385 = vmatprep.subr.mxu0 0.0
        %1386 = vmatpush1.xpose.msra.mxu0 %v1377
        %1387 = vmatprep.subr.mxu0 0.0
        %1388 = vmatpush1.xpose.msra.mxu0 0.0
        %1389 = vmatprep.subr.mxu0 0.0
        %1390 = vmatpush1.xpose.msra.mxu0 0.0
        %1391 = vmatprep.subr.mxu0 0.0
        %1392 = vmatpush1.xpose.msra.mxu0 0.0
        %1393 = vmatprep.subr.mxu0 0.0
        %1394 = vmatpush1.xpose.msra.mxu0 0.0
        %1395 = vmatprep.subr.mxu0 0.0
        %1396 = vmatpush1.xpose.msra.mxu0 0.0
        %1397 = vmatprep.subr.mxu0 0.0
        %1398 = vmatpush1.xpose.msra.mxu0 0.0
        %1399 = vmatprep.subr.mxu0 0.0
        %1400 = vmatpush1.xpose.msra.mxu0 0.0
        %1401 = vmatprep.subr.mxu0 0.0
        %1402 = vmatpush1.xpose.msra.mxu0 0.0
        %1403 = vmatprep.subr.mxu0 0.0
        %1404 = vmatpush1.xpose.msra.mxu0 0.0
        %1405 = vmatprep.subr.mxu0 0.0
        %1406 = vmatpush1.xpose.msra.mxu0 0.0
        %1407 = vmatprep.subr.mxu0 0.0
        %1408 = vmatpush1.xpose.msra.mxu0 0.0
        %1409 = vmatprep.subr.mxu0 0.0
        %1410 = vmatpush1.xpose.msra.mxu0 0.0
        %1411 = vmatprep.subr.mxu0 0.0
        %1412 = vmatpush1.xpose.msra.mxu0 0.0
        %1413 = vmatprep.subr.mxu0 0.0
        %1414 = vmatpush1.xpose.msra.mxu0 0.0
        %1415 = vmatprep.subr.mxu0 0.0
        %1416 = vmatpush1.xpose.msra.mxu0 0.0
        %1417 = vmatprep.subr.mxu0 0.0
        %1418 = vmatpush1.xpose.msra.mxu0 0.0
        %1419 = vmatprep.subr.mxu0 0.0
        %1420 = vmatpush1.xpose.msra.mxu0 0.0
        %1421 = vmatprep.subr.mxu0 0.0
        %1422 = vmatpush1.xpose.msra.mxu0 0.0
        %1423 = vmatprep.subr.mxu0 0.0
        %1424 = vmatpush1.xpose.msra.mxu0 0.0
        %1425 = vmatprep.subr.mxu0 0.0
        %1426 = vmatpush1.xpose.msra.mxu0 0.0
        %1427 = vmatprep.subr.mxu0 0.0
        %1428 = vmatpush1.xpose.msra.mxu0 0.0
        %1429 = vmatprep.subr.mxu0 0.0
        %1430 = vmatpush1.xpose.msra.mxu0 0.0
        %1431 = vmatprep.subr.mxu0 0.0
        %1432 = vmatpush1.xpose.msra.mxu0 0.0
        %1433 = vmatprep.subr.mxu0 0.0
        %1434 = vmatpush1.xpose.msra.mxu0 0.0
        %1435 = vmatprep.subr.mxu0 0.0
        %1436 = vmatpush1.xpose.msra.mxu0 0.0
        %1437 = vmatprep.subr.mxu0 0.0
        %1438 = vmatpush1.xpose.msra.mxu0 0.0
        %1439 = vmatprep.subr.mxu0 0.0
        %1440 = vmatpush1.xpose.msra.mxu0 0.0
        %1441 = vmatprep.subr.mxu0 0.0
        %1442 = vmatpush1.xpose.msra.mxu0 0.0
        %1443 = vmatprep.mubr.f32.mxu0 0.0
        %1444 = vmatmul.mubr.f32.gmra.mrb[0].mxu0 %v1362
        %v1445 = vpop.f32.mrb[0].mxu0
        %v1446 = vadd.f32 0.0, %v1445
        %v1447 = vpop.f32.mrb[0].mxu0
        %1448 = vmatprep.mubr.f32.mxu0 0.0
        %1449 = vmatmul.mubr.f32.gmra.mrb[0].mxu0 %v1365
        %v1450 = vpop.f32.mrb[0].mxu0
        %v1451 = vadd.f32 0.0, %v1450
        %v1452 = vpop.f32.mrb[0].mxu0
        %1453 = vdwg.mxu0
        %v1455 = vsel %vm1174, %v825, 0
        %v1458 = vsel %vm1174, %v830, 0
        %v1461 = vsel %vm1174, %v1056, 0
        %v1464 = vsel %vm1174, %v1062, 0
        %v1467 = vsel %vm1174, %v1068, 0
        %v1470 = vsel %vm1174, %v1074, 0
        %1472 = vmatprep.subr.mxu0 0.0
        %1473 = vmatpush1.xpose.msra.mxu0 %v1461
        %1474 = vmatprep.subr.mxu0 0.0
        %1475 = vmatpush1.xpose.msra.mxu0 %v1464
        %1476 = vmatprep.subr.mxu0 0.0
        %1477 = vmatpush1.xpose.msra.mxu0 %v1467
        %1478 = vmatprep.subr.mxu0 0.0
        %1479 = vmatpush1.xpose.msra.mxu0 %v1470
        %1480 = vmatprep.subr.mxu0 0.0
        %1481 = vmatpush1.xpose.msra.mxu0 0.0
        %1482 = vmatprep.subr.mxu0 0.0
        %1483 = vmatpush1.xpose.msra.mxu0 0.0
        %1484 = vmatprep.subr.mxu0 0.0
        %1485 = vmatpush1.xpose.msra.mxu0 0.0
        %1486 = vmatprep.subr.mxu0 0.0
        %1487 = vmatpush1.xpose.msra.mxu0 0.0
        %1488 = vmatprep.subr.mxu0 0.0
        %1489 = vmatpush1.xpose.msra.mxu0 0.0
        %1490 = vmatprep.subr.mxu0 0.0
        %1491 = vmatpush1.xpose.msra.mxu0 0.0
        %1492 = vmatprep.subr.mxu0 0.0
        %1493 = vmatpush1.xpose.msra.mxu0 0.0
        %1494 = vmatprep.subr.mxu0 0.0
        %1495 = vmatpush1.xpose.msra.mxu0 0.0
        %1496 = vmatprep.subr.mxu0 0.0
        %1497 = vmatpush1.xpose.msra.mxu0 0.0
        %1498 = vmatprep.subr.mxu0 0.0
        %1499 = vmatpush1.xpose.msra.mxu0 0.0
        %1500 = vmatprep.subr.mxu0 0.0
        %1501 = vmatpush1.xpose.msra.mxu0 0.0
        %1502 = vmatprep.subr.mxu0 0.0
        %1503 = vmatpush1.xpose.msra.mxu0 0.0
        %1504 = vmatprep.subr.mxu0 0.0
        %1505 = vmatpush1.xpose.msra.mxu0 0.0
        %1506 = vmatprep.subr.mxu0 0.0
        %1507 = vmatpush1.xpose.msra.mxu0 0.0
        %1508 = vmatprep.subr.mxu0 0.0
        %1509 = vmatpush1.xpose.msra.mxu0 0.0
        %1510 = vmatprep.subr.mxu0 0.0
        %1511 = vmatpush1.xpose.msra.mxu0 0.0
        %1512 = vmatprep.subr.mxu0 0.0
        %1513 = vmatpush1.xpose.msra.mxu0 0.0
        %1514 = vmatprep.subr.mxu0 0.0
        %1515 = vmatpush1.xpose.msra.mxu0 0.0
        %1516 = vmatprep.subr.mxu0 0.0
        %1517 = vmatpush1.xpose.msra.mxu0 0.0
        %1518 = vmatprep.subr.mxu0 0.0
        %1519 = vmatpush1.xpose.msra.mxu0 0.0
        %1520 = vmatprep.subr.mxu0 0.0
        %1521 = vmatpush1.xpose.msra.mxu0 0.0
        %1522 = vmatprep.subr.mxu0 0.0
        %1523 = vmatpush1.xpose.msra.mxu0 0.0
        %1524 = vmatprep.subr.mxu0 0.0
        %1525 = vmatpush1.xpose.msra.mxu0 0.0
        %1526 = vmatprep.subr.mxu0 0.0
        %1527 = vmatpush1.xpose.msra.mxu0 0.0
        %1528 = vmatprep.subr.mxu0 0.0
        %1529 = vmatpush1.xpose.msra.mxu0 0.0
        %1530 = vmatprep.subr.mxu0 0.0
        %1531 = vmatpush1.xpose.msra.mxu0 0.0
        %1532 = vmatprep.subr.mxu0 0.0
        %1533 = vmatpush1.xpose.msra.mxu0 0.0
        %1534 = vmatprep.subr.mxu0 0.0
        %1535 = vmatpush1.xpose.msra.mxu0 0.0
        %1536 = vmatprep.mubr.f32.mxu0 0.0
        %1537 = vmatmul.mubr.f32.gmra.mrb[0].mxu0 %v1455
        %v1538 = vpop.f32.mrb[0].mxu0
        %v1539 = vadd.f32 0.0, %v1538
        %v1540 = vpop.f32.mrb[0].mxu0
        %1541 = vmatprep.mubr.f32.mxu0 0.0
        %1542 = vmatmul.mubr.f32.gmra.mrb[0].mxu0 %v1458
        %v1543 = vpop.f32.mrb[0].mxu0
        %v1544 = vadd.f32 0.0, %v1543
        %v1545 = vpop.f32.mrb[0].mxu0
        %1546 = vdwg.mxu0
        %v1548 = vsel %vm1174, %v835, 0
        %v1551 = vsel %vm1174, %v840, 0
        %v1554 = vsel %vm1174, %v1080, 0
        %v1557 = vsel %vm1174, %v1086, 0
        %v1560 = vsel %vm1174, %v1092, 0
        %v1563 = vsel %vm1174, %v1098, 0
        %1565 = vmatprep.subr.mxu0 0.0
        %1566 = vmatpush1.xpose.msra.mxu0 %v1554
        %1567 = vmatprep.subr.mxu0 0.0
        %1568 = vmatpush1.xpose.msra.mxu0 %v1557
        %1569 = vmatprep.subr.mxu0 0.0
        %1570 = vmatpush1.xpose.msra.mxu0 %v1560
        %1571 = vmatprep.subr.mxu0 0.0
        %1572 = vmatpush1.xpose.msra.mxu0 %v1563
        %1573 = vmatprep.subr.mxu0 0.0
        %1574 = vmatpush1.xpose.msra.mxu0 0.0
        %1575 = vmatprep.subr.mxu0 0.0
        %1576 = vmatpush1.xpose.msra.mxu0 0.0
        %1577 = vmatprep.subr.mxu0 0.0
        %1578 = vmatpush1.xpose.msra.mxu0 0.0
        %1579 = vmatprep.subr.mxu0 0.0
        %1580 = vmatpush1.xpose.msra.mxu0 0.0
        %1581 = vmatprep.subr.mxu0 0.0
        %1582 = vmatpush1.xpose.msra.mxu0 0.0
        %1583 = vmatprep.subr.mxu0 0.0
        %1584 = vmatpush1.xpose.msra.mxu0 0.0
        %1585 = vmatprep.subr.mxu0 0.0
        %1586 = vmatpush1.xpose.msra.mxu0 0.0
        %1587 = vmatprep.subr.mxu0 0.0
        %1588 = vmatpush1.xpose.msra.mxu0 0.0
        %1589 = vmatprep.subr.mxu0 0.0
        %1590 = vmatpush1.xpose.msra.mxu0 0.0
        %1591 = vmatprep.subr.mxu0 0.0
        %1592 = vmatpush1.xpose.msra.mxu0 0.0
        %1593 = vmatprep.subr.mxu0 0.0
        %1594 = vmatpush1.xpose.msra.mxu0 0.0
        %1595 = vmatprep.subr.mxu0 0.0
        %1596 = vmatpush1.xpose.msra.mxu0 0.0
        %1597 = vmatprep.subr.mxu0 0.0
        %1598 = vmatpush1.xpose.msra.mxu0 0.0
        %1599 = vmatprep.subr.mxu0 0.0
        %1600 = vmatpush1.xpose.msra.mxu0 0.0
        %1601 = vmatprep.subr.mxu0 0.0
        %1602 = vmatpush1.xpose.msra.mxu0 0.0
        %1603 = vmatprep.subr.mxu0 0.0
        %1604 = vmatpush1.xpose.msra.mxu0 0.0
        %1605 = vmatprep.subr.mxu0 0.0
        %1606 = vmatpush1.xpose.msra.mxu0 0.0
        %1607 = vmatprep.subr.mxu0 0.0
        %1608 = vmatpush1.xpose.msra.mxu0 0.0
        %1609 = vmatprep.subr.mxu0 0.0
        %1610 = vmatpush1.xpose.msra.mxu0 0.0
        %1611 = vmatprep.subr.mxu0 0.0
        %1612 = vmatpush1.xpose.msra.mxu0 0.0
        %1613 = vmatprep.subr.mxu0 0.0
        %1614 = vmatpush1.xpose.msra.mxu0 0.0
        %1615 = vmatprep.subr.mxu0 0.0
        %1616 = vmatpush1.xpose.msra.mxu0 0.0
        %1617 = vmatprep.subr.mxu0 0.0
        %1618 = vmatpush1.xpose.msra.mxu0 0.0
        %1619 = vmatprep.subr.mxu0 0.0
        %1620 = vmatpush1.xpose.msra.mxu0 0.0
        %1621 = vmatprep.subr.mxu0 0.0
        %1622 = vmatpush1.xpose.msra.mxu0 0.0
        %1623 = vmatprep.subr.mxu0 0.0
        %1624 = vmatpush1.xpose.msra.mxu0 0.0
        %1625 = vmatprep.subr.mxu0 0.0
        %1626 = vmatpush1.xpose.msra.mxu0 0.0
        %1627 = vmatprep.subr.mxu0 0.0
        %1628 = vmatpush1.xpose.msra.mxu0 0.0
        %1629 = vmatprep.mubr.f32.mxu0 0.0
        %1630 = vmatmul.mubr.f32.gmra.mrb[0].mxu0 %v1548
        %v1631 = vpop.f32.mrb[0].mxu0
        %v1632 = vadd.f32 0.0, %v1631
        %v1633 = vpop.f32.mrb[0].mxu0
        %1634 = vmatprep.mubr.f32.mxu0 0.0
        %1635 = vmatmul.mubr.f32.gmra.mrb[0].mxu0 %v1551
        %v1636 = vpop.f32.mrb[0].mxu0
        %v1637 = vadd.f32 0.0, %v1636
        %v1638 = vpop.f32.mrb[0].mxu0
        %1639 = vdwg.mxu0
        %v1641 = vsel %vm1174, %v845, 0
        %v1644 = vsel %vm1174, %v850, 0
        %v1647 = vsel %vm1174, %v1104, 0
        %v1650 = vsel %vm1174, %v1110, 0
        %v1653 = vsel %vm1174, %v1116, 0
        %v1656 = vsel %vm1174, %v1122, 0
        %1658 = vmatprep.subr.mxu0 0.0
        %1659 = vmatpush1.xpose.msra.mxu0 %v1647
        %1660 = vmatprep.subr.mxu0 0.0
        %1661 = vmatpush1.xpose.msra.mxu0 %v1650
        %1662 = vmatprep.subr.mxu0 0.0
        %1663 = vmatpush1.xpose.msra.mxu0 %v1653
        %1664 = vmatprep.subr.mxu0 0.0
        %1665 = vmatpush1.xpose.msra.mxu0 %v1656
        %1666 = vmatprep.subr.mxu0 0.0
        %1667 = vmatpush1.xpose.msra.mxu0 0.0
        %1668 = vmatprep.subr.mxu0 0.0
        %1669 = vmatpush1.xpose.msra.mxu0 0.0
        %1670 = vmatprep.subr.mxu0 0.0
        %1671 = vmatpush1.xpose.msra.mxu0 0.0
        %1672 = vmatprep.subr.mxu0 0.0
        %1673 = vmatpush1.xpose.msra.mxu0 0.0
        %1674 = vmatprep.subr.mxu0 0.0
        %1675 = vmatpush1.xpose.msra.mxu0 0.0
        %1676 = vmatprep.subr.mxu0 0.0
        %1677 = vmatpush1.xpose.msra.mxu0 0.0
        %1678 = vmatprep.subr.mxu0 0.0
        %1679 = vmatpush1.xpose.msra.mxu0 0.0
        %1680 = vmatprep.subr.mxu0 0.0
        %1681 = vmatpush1.xpose.msra.mxu0 0.0
        %1682 = vmatprep.subr.mxu0 0.0
        %1683 = vmatpush1.xpose.msra.mxu0 0.0
        %1684 = vmatprep.subr.mxu0 0.0
        %1685 = vmatpush1.xpose.msra.mxu0 0.0
        %1686 = vmatprep.subr.mxu0 0.0
        %1687 = vmatpush1.xpose.msra.mxu0 0.0
        %1688 = vmatprep.subr.mxu0 0.0
        %1689 = vmatpush1.xpose.msra.mxu0 0.0
        %1690 = vmatprep.subr.mxu0 0.0
        %1691 = vmatpush1.xpose.msra.mxu0 0.0
        %1692 = vmatprep.subr.mxu0 0.0
        %1693 = vmatpush1.xpose.msra.mxu0 0.0
        %1694 = vmatprep.subr.mxu0 0.0
        %1695 = vmatpush1.xpose.msra.mxu0 0.0
        %1696 = vmatprep.subr.mxu0 0.0
        %1697 = vmatpush1.xpose.msra.mxu0 0.0
        %1698 = vmatprep.subr.mxu0 0.0
        %1699 = vmatpush1.xpose.msra.mxu0 0.0
        %1700 = vmatprep.subr.mxu0 0.0
        %1701 = vmatpush1.xpose.msra.mxu0 0.0
        %1702 = vmatprep.subr.mxu0 0.0
        %1703 = vmatpush1.xpose.msra.mxu0 0.0
        %1704 = vmatprep.subr.mxu0 0.0
        %1705 = vmatpush1.xpose.msra.mxu0 0.0
        %1706 = vmatprep.subr.mxu0 0.0
        %1707 = vmatpush1.xpose.msra.mxu0 0.0
        %1708 = vmatprep.subr.mxu0 0.0
        %1709 = vmatpush1.xpose.msra.mxu0 0.0
        %1710 = vmatprep.subr.mxu0 0.0
        %1711 = vmatpush1.xpose.msra.mxu0 0.0
        %1712 = vmatprep.subr.mxu0 0.0
        %1713 = vmatpush1.xpose.msra.mxu0 0.0
        %1714 = vmatprep.subr.mxu0 0.0
        %1715 = vmatpush1.xpose.msra.mxu0 0.0
        %1716 = vmatprep.subr.mxu0 0.0
        %1717 = vmatpush1.xpose.msra.mxu0 0.0
        %1718 = vmatprep.subr.mxu0 0.0
        %1719 = vmatpush1.xpose.msra.mxu0 0.0
        %1720 = vmatprep.subr.mxu0 0.0
        %1721 = vmatpush1.xpose.msra.mxu0 0.0
        %1722 = vmatprep.mubr.f32.mxu0 0.0
        %1723 = vmatmul.mubr.f32.gmra.mrb[0].mxu0 %v1641
        %v1724 = vpop.f32.mrb[0].mxu0
        %v1725 = vadd.f32 0.0, %v1724
        %v1726 = vpop.f32.mrb[0].mxu0
        %1727 = vmatprep.mubr.f32.mxu0 0.0
        %1728 = vmatmul.mubr.f32.gmra.mrb[0].mxu0 %v1644
        %v1729 = vpop.f32.mrb[0].mxu0
        %v1730 = vadd.f32 0.0, %v1729
        %v1731 = vpop.f32.mrb[0].mxu0
        %1732 = vdwg.mxu0
        %v1734 = vsel %vm1174, %v855, 0
        %v1737 = vsel %vm1174, %v860, 0
        %v1740 = vsel %vm1174, %v1128, 0
        %v1743 = vsel %vm1174, %v1134, 0
        %v1746 = vsel %vm1174, %v1140, 0
        %v1749 = vsel %vm1174, %v1146, 0
        %1751 = vmatprep.subr.mxu0 0.0
        %1752 = vmatpush1.xpose.msra.mxu0 %v1740
        %1753 = vmatprep.subr.mxu0 0.0
        %1754 = vmatpush1.xpose.msra.mxu0 %v1743
        %1755 = vmatprep.subr.mxu0 0.0
        %1756 = vmatpush1.xpose.msra.mxu0 %v1746
        %1757 = vmatprep.subr.mxu0 0.0
        %1758 = vmatpush1.xpose.msra.mxu0 %v1749
        %1759 = vmatprep.subr.mxu0 0.0
        %1760 = vmatpush1.xpose.msra.mxu0 0.0
        %1761 = vmatprep.subr.mxu0 0.0
        %1762 = vmatpush1.xpose.msra.mxu0 0.0
        %1763 = vmatprep.subr.mxu0 0.0
        %1764 = vmatpush1.xpose.msra.mxu0 0.0
        %1765 = vmatprep.subr.mxu0 0.0
        %1766 = vmatpush1.xpose.msra.mxu0 0.0
        %1767 = vmatprep.subr.mxu0 0.0
        %1768 = vmatpush1.xpose.msra.mxu0 0.0
        %1769 = vmatprep.subr.mxu0 0.0
        %1770 = vmatpush1.xpose.msra.mxu0 0.0
        %1771 = vmatprep.subr.mxu0 0.0
        %1772 = vmatpush1.xpose.msra.mxu0 0.0
        %1773 = vmatprep.subr.mxu0 0.0
        %1774 = vmatpush1.xpose.msra.mxu0 0.0
        %1775 = vmatprep.subr.mxu0 0.0
        %1776 = vmatpush1.xpose.msra.mxu0 0.0
        %1777 = vmatprep.subr.mxu0 0.0
        %1778 = vmatpush1.xpose.msra.mxu0 0.0
        %1779 = vmatprep.subr.mxu0 0.0
        %1780 = vmatpush1.xpose.msra.mxu0 0.0
        %1781 = vmatprep.subr.mxu0 0.0
        %1782 = vmatpush1.xpose.msra.mxu0 0.0
        %1783 = vmatprep.subr.mxu0 0.0
        %1784 = vmatpush1.xpose.msra.mxu0 0.0
        %1785 = vmatprep.subr.mxu0 0.0
        %1786 = vmatpush1.xpose.msra.mxu0 0.0
        %1787 = vmatprep.subr.mxu0 0.0
        %1788 = vmatpush1.xpose.msra.mxu0 0.0
        %1789 = vmatprep.subr.mxu0 0.0
        %1790 = vmatpush1.xpose.msra.mxu0 0.0
        %1791 = vmatprep.subr.mxu0 0.0
        %1792 = vmatpush1.xpose.msra.mxu0 0.0
        %1793 = vmatprep.subr.mxu0 0.0
        %1794 = vmatpush1.xpose.msra.mxu0 0.0
        %1795 = vmatprep.subr.mxu0 0.0
        %1796 = vmatpush1.xpose.msra.mxu0 0.0
        %1797 = vmatprep.subr.mxu0 0.0
        %1798 = vmatpush1.xpose.msra.mxu0 0.0
        %1799 = vmatprep.subr.mxu0 0.0
        %1800 = vmatpush1.xpose.msra.mxu0 0.0
        %1801 = vmatprep.subr.mxu0 0.0
        %1802 = vmatpush1.xpose.msra.mxu0 0.0
        %1803 = vmatprep.subr.mxu0 0.0
        %1804 = vmatpush1.xpose.msra.mxu0 0.0
        %1805 = vmatprep.subr.mxu0 0.0
        %1806 = vmatpush1.xpose.msra.mxu0 0.0
        %1807 = vmatprep.subr.mxu0 0.0
        %1808 = vmatpush1.xpose.msra.mxu0 0.0
        %1809 = vmatprep.subr.mxu0 0.0
        %1810 = vmatpush1.xpose.msra.mxu0 0.0
        %1811 = vmatprep.subr.mxu0 0.0
        %1812 = vmatpush1.xpose.msra.mxu0 0.0
        %1813 = vmatprep.subr.mxu0 0.0
        %1814 = vmatpush1.xpose.msra.mxu0 0.0
        %1815 = vmatprep.mubr.f32.mxu0 0.0
        %1816 = vmatmul.mubr.f32.gmra.mrb[0].mxu0 %v1734
        %v1817 = vpop.f32.mrb[0].mxu0
        %v1818 = vadd.f32 0.0, %v1817
        %v1819 = vpop.f32.mrb[0].mxu0
        %1820 = vmatprep.mubr.f32.mxu0 0.0
        %1821 = vmatmul.mubr.f32.gmra.mrb[0].mxu0 %v1737
        %v1822 = vpop.f32.mrb[0].mxu0
        %v1823 = vadd.f32 0.0, %v1822
        %v1824 = vpop.f32.mrb[0].mxu0
        %1825 = vdwg.mxu0
        %v1827 = vsel %vm1174, %v865, 0
        %v1830 = vsel %vm1174, %v870, 0
        %v1833 = vsel %vm1174, %v1152, 0
        %v1836 = vsel %vm1174, %v1158, 0
        %v1839 = vsel %vm1174, %v1164, 0
        %v1842 = vsel %vm1174, %v1170, 0
        %1844 = vmatprep.subr.mxu0 0.0
        %1845 = vmatpush1.xpose.msra.mxu0 %v1833
        %1846 = vmatprep.subr.mxu0 0.0
        %1847 = vmatpush1.xpose.msra.mxu0 %v1836
        %1848 = vmatprep.subr.mxu0 0.0
        %1849 = vmatpush1.xpose.msra.mxu0 %v1839
        %1850 = vmatprep.subr.mxu0 0.0
        %1851 = vmatpush1.xpose.msra.mxu0 %v1842
        %1852 = vmatprep.subr.mxu0 0.0
        %1853 = vmatpush1.xpose.msra.mxu0 0.0
        %1854 = vmatprep.subr.mxu0 0.0
        %1855 = vmatpush1.xpose.msra.mxu0 0.0
        %1856 = vmatprep.subr.mxu0 0.0
        %1857 = vmatpush1.xpose.msra.mxu0 0.0
        %1858 = vmatprep.subr.mxu0 0.0
        %1859 = vmatpush1.xpose.msra.mxu0 0.0
        %1860 = vmatprep.subr.mxu0 0.0
        %1861 = vmatpush1.xpose.msra.mxu0 0.0
        %1862 = vmatprep.subr.mxu0 0.0
        %1863 = vmatpush1.xpose.msra.mxu0 0.0
        %1864 = vmatprep.subr.mxu0 0.0
        %1865 = vmatpush1.xpose.msra.mxu0 0.0
        %1866 = vmatprep.subr.mxu0 0.0
        %1867 = vmatpush1.xpose.msra.mxu0 0.0
        %1868 = vmatprep.subr.mxu0 0.0
        %1869 = vmatpush1.xpose.msra.mxu0 0.0
        %1870 = vmatprep.subr.mxu0 0.0
        %1871 = vmatpush1.xpose.msra.mxu0 0.0
        %1872 = vmatprep.subr.mxu0 0.0
        %1873 = vmatpush1.xpose.msra.mxu0 0.0
        %1874 = vmatprep.subr.mxu0 0.0
        %1875 = vmatpush1.xpose.msra.mxu0 0.0
        %1876 = vmatprep.subr.mxu0 0.0
        %1877 = vmatpush1.xpose.msra.mxu0 0.0
        %1878 = vmatprep.subr.mxu0 0.0
        %1879 = vmatpush1.xpose.msra.mxu0 0.0
        %1880 = vmatprep.subr.mxu0 0.0
        %1881 = vmatpush1.xpose.msra.mxu0 0.0
        %1882 = vmatprep.subr.mxu0 0.0
        %1883 = vmatpush1.xpose.msra.mxu0 0.0
        %1884 = vmatprep.subr.mxu0 0.0
        %1885 = vmatpush1.xpose.msra.mxu0 0.0
        %1886 = vmatprep.subr.mxu0 0.0
        %1887 = vmatpush1.xpose.msra.mxu0 0.0
        %1888 = vmatprep.subr.mxu0 0.0
        %1889 = vmatpush1.xpose.msra.mxu0 0.0
        %1890 = vmatprep.subr.mxu0 0.0
        %1891 = vmatpush1.xpose.msra.mxu0 0.0
        %1892 = vmatprep.subr.mxu0 0.0
        %1893 = vmatpush1.xpose.msra.mxu0 0.0
        %1894 = vmatprep.subr.mxu0 0.0
        %1895 = vmatpush1.xpose.msra.mxu0 0.0
        %1896 = vmatprep.subr.mxu0 0.0
        %1897 = vmatpush1.xpose.msra.mxu0 0.0
        %1898 = vmatprep.subr.mxu0 0.0
        %1899 = vmatpush1.xpose.msra.mxu0 0.0
        %1900 = vmatprep.subr.mxu0 0.0
        %1901 = vmatpush1.xpose.msra.mxu0 0.0
        %1902 = vmatprep.subr.mxu0 0.0
        %1903 = vmatpush1.xpose.msra.mxu0 0.0
        %1904 = vmatprep.subr.mxu0 0.0
        %1905 = vmatpush1.xpose.msra.mxu0 0.0
        %1906 = vmatprep.subr.mxu0 0.0
        %1907 = vmatpush1.xpose.msra.mxu0 0.0
        %1908 = vmatprep.mubr.f32.mxu0 0.0
        %1909 = vmatmul.mubr.f32.gmra.mrb[0].mxu0 %v1827
        %v1910 = vpop.f32.mrb[0].mxu0
        %v1911 = vadd.f32 0.0, %v1910
        %v1912 = vpop.f32.mrb[0].mxu0
        %1913 = vmatprep.mubr.f32.mxu0 0.0
        %1914 = vmatmul.mubr.f32.gmra.mrb[0].mxu0 %v1830
        %v1915 = vpop.f32.mrb[0].mxu0
        %v1916 = vadd.f32 0.0, %v1915
        %v1917 = vpop.f32.mrb[0].mxu0
        %1918 = vdwg.mxu0
        %v1919 = vsel %vm1174, %v1260, -inf
        %1920 = vmax.xlane.f32.xlu0 %v1919
        %v1921 = vpop.xlane.xlu0 %1920
        %v1922 = vsel %vm1174, %v1265, -inf
        %1923 = vmax.xlane.f32.xlu0 %v1922
        %v1924 = vpop.xlane.xlu0 %1923
        %v1925 = vsel %vm1174, %v1353, -inf
        %1926 = vmax.xlane.f32.xlu0 %v1925
        %v1927 = vpop.xlane.xlu0 %1926
        %v1928 = vsel %vm1174, %v1358, -inf
        %1929 = vmax.xlane.f32.xlu0 %v1928
        %v1930 = vpop.xlane.xlu0 %1929
        %v1931 = vsel %vm1174, %v1446, -inf
        %1932 = vmax.xlane.f32.xlu0 %v1931
        %v1933 = vpop.xlane.xlu0 %1932
        %v1934 = vsel %vm1174, %v1451, -inf
        %1935 = vmax.xlane.f32.xlu0 %v1934
        %v1936 = vpop.xlane.xlu0 %1935
        %v1937 = vsel %vm1174, %v1539, -inf
        %1938 = vmax.xlane.f32.xlu0 %v1937
        %v1939 = vpop.xlane.xlu0 %1938
        %v1940 = vsel %vm1174, %v1544, -inf
        %1941 = vmax.xlane.f32.xlu0 %v1940
        %v1942 = vpop.xlane.xlu0 %1941
        %v1943 = vsel %vm1174, %v1632, -inf
        %1944 = vmax.xlane.f32.xlu0 %v1943
        %v1945 = vpop.xlane.xlu0 %1944
        %v1946 = vsel %vm1174, %v1637, -inf
        %1947 = vmax.xlane.f32.xlu0 %v1946
        %v1948 = vpop.xlane.xlu0 %1947
        %v1949 = vsel %vm1174, %v1725, -inf
        %1950 = vmax.xlane.f32.xlu0 %v1949
        %v1951 = vpop.xlane.xlu0 %1950
        %v1952 = vsel %vm1174, %v1730, -inf
        %1953 = vmax.xlane.f32.xlu0 %v1952
        %v1954 = vpop.xlane.xlu0 %1953
        %v1955 = vsel %vm1174, %v1818, -inf
        %1956 = vmax.xlane.f32.xlu0 %v1955
        %v1957 = vpop.xlane.xlu0 %1956
        %v1958 = vsel %vm1174, %v1823, -inf
        %1959 = vmax.xlane.f32.xlu0 %v1958
        %v1960 = vpop.xlane.xlu0 %1959
        %v1961 = vsel %vm1174, %v1911, -inf
        %1962 = vmax.xlane.f32.xlu0 %v1961
        %v1963 = vpop.xlane.xlu0 %1962
        %v1964 = vsel %vm1174, %v1916, -inf
        %1965 = vmax.xlane.f32.xlu0 %v1964
        %v1966 = vpop.xlane.xlu0 %1965
        %v1967 = vsub.f32 %v1260, %v1921
        %v1968 = vsub.f32 %v1265, %v1924
        %v1969 = vsub.f32 %v1353, %v1927
        %v1970 = vsub.f32 %v1358, %v1930
        %v1971 = vsub.f32 %v1446, %v1933
        %v1972 = vsub.f32 %v1451, %v1936
        %v1973 = vsub.f32 %v1539, %v1939
        %v1974 = vsub.f32 %v1544, %v1942
        %v1975 = vsub.f32 %v1632, %v1945
        %v1976 = vsub.f32 %v1637, %v1948
        %v1977 = vsub.f32 %v1725, %v1951
        %v1978 = vsub.f32 %v1730, %v1954
        %v1979 = vsub.f32 %v1818, %v1957
        %v1980 = vsub.f32 %v1823, %v1960
        %v1981 = vsub.f32 %v1911, %v1963
        %v1982 = vsub.f32 %v1916, %v1966
        %v1983 = vmul.f32 %v1967, 1.442695
        %v1984 = vpow.pop %v1983
        %v1985 = vmul.f32 %v1968, 1.442695
        %v1986 = vpow.pop %v1985
        %v1987 = vmul.f32 %v1969, 1.442695
        %v1988 = vpow.pop %v1987
        %v1989 = vmul.f32 %v1970, 1.442695
        %v1990 = vpow.pop %v1989
        %v1991 = vmul.f32 %v1971, 1.442695
        %v1992 = vpow.pop %v1991
        %v1993 = vmul.f32 %v1972, 1.442695
        %v1994 = vpow.pop %v1993
        %v1995 = vmul.f32 %v1973, 1.442695
        %v1996 = vpow.pop %v1995
        %v1997 = vmul.f32 %v1974, 1.442695
        %v1998 = vpow.pop %v1997
        %v1999 = vmul.f32 %v1975, 1.442695
        %v2000 = vpow.pop %v1999
        %v2001 = vmul.f32 %v1976, 1.442695
        %v2002 = vpow.pop %v2001
        %v2003 = vmul.f32 %v1977, 1.442695
        %v2004 = vpow.pop %v2003
        %v2005 = vmul.f32 %v1978, 1.442695
        %v2006 = vpow.pop %v2005
        %v2007 = vmul.f32 %v1979, 1.442695
        %v2008 = vpow.pop %v2007
        %v2009 = vmul.f32 %v1980, 1.442695
        %v2010 = vpow.pop %v2009
        %v2011 = vmul.f32 %v1981, 1.442695
        %v2012 = vpow.pop %v2011
        %v2013 = vmul.f32 %v1982, 1.442695
        %v2014 = vpow.pop %v2013
        %v2015 = vsel %vm1174, %v1984, 0.0
        %2016 = vadd.xlane.f32.xlu0 %v2015
        %v2017 = vpop.xlane.xlu0 %2016
        %v2018 = vsel %vm1174, %v1986, 0.0
        %2019 = vadd.xlane.f32.xlu0 %v2018
        %v2020 = vpop.xlane.xlu0 %2019
        %v2021 = vsel %vm1174, %v1988, 0.0
        %2022 = vadd.xlane.f32.xlu0 %v2021
        %v2023 = vpop.xlane.xlu0 %2022
        %v2024 = vsel %vm1174, %v1990, 0.0
        %2025 = vadd.xlane.f32.xlu0 %v2024
        %v2026 = vpop.xlane.xlu0 %2025
        %v2027 = vsel %vm1174, %v1992, 0.0
        %2028 = vadd.xlane.f32.xlu0 %v2027
        %v2029 = vpop.xlane.xlu0 %2028
        %v2030 = vsel %vm1174, %v1994, 0.0
        %2031 = vadd.xlane.f32.xlu0 %v2030
        %v2032 = vpop.xlane.xlu0 %2031
        %v2033 = vsel %vm1174, %v1996, 0.0
        %2034 = vadd.xlane.f32.xlu0 %v2033
        %v2035 = vpop.xlane.xlu0 %2034
        %v2036 = vsel %vm1174, %v1998, 0.0
        %2037 = vadd.xlane.f32.xlu0 %v2036
        %v2038 = vpop.xlane.xlu0 %2037
        %v2039 = vsel %vm1174, %v2000, 0.0
        %2040 = vadd.xlane.f32.xlu0 %v2039
        %v2041 = vpop.xlane.xlu0 %2040
        %v2042 = vsel %vm1174, %v2002, 0.0
        %2043 = vadd.xlane.f32.xlu0 %v2042
        %v2044 = vpop.xlane.xlu0 %2043
        %v2045 = vsel %vm1174, %v2004, 0.0
        %2046 = vadd.xlane.f32.xlu0 %v2045
        %v2047 = vpop.xlane.xlu0 %2046
        %v2048 = vsel %vm1174, %v2006, 0.0
        %2049 = vadd.xlane.f32.xlu0 %v2048
        %v2050 = vpop.xlane.xlu0 %2049
        %v2051 = vsel %vm1174, %v2008, 0.0
        %2052 = vadd.xlane.f32.xlu0 %v2051
        %v2053 = vpop.xlane.xlu0 %2052
        %v2054 = vsel %vm1174, %v2010, 0.0
        %2055 = vadd.xlane.f32.xlu0 %v2054
        %v2056 = vpop.xlane.xlu0 %2055
        %v2057 = vsel %vm1174, %v2012, 0.0
        %2058 = vadd.xlane.f32.xlu0 %v2057
        %v2059 = vpop.xlane.xlu0 %2058
        %v2060 = vsel %vm1174, %v2014, 0.0
        %2061 = vadd.xlane.f32.xlu0 %v2060
        %v2062 = vpop.xlane.xlu0 %2061
        %v2063 = vrcp.pop %v2017
        %v2064 = vmul.f32 1.0, %v2063
        %v2065 = vrcp.pop %v2020
        %v2066 = vmul.f32 1.0, %v2065
        %v2067 = vrcp.pop %v2023
        %v2068 = vmul.f32 1.0, %v2067
        %v2069 = vrcp.pop %v2026
        %v2070 = vmul.f32 1.0, %v2069
        %v2071 = vrcp.pop %v2029
        %v2072 = vmul.f32 1.0, %v2071
        %v2073 = vrcp.pop %v2032
        %v2074 = vmul.f32 1.0, %v2073
        %v2075 = vrcp.pop %v2035
        %v2076 = vmul.f32 1.0, %v2075
        %v2077 = vrcp.pop %v2038
        %v2078 = vmul.f32 1.0, %v2077
        %v2079 = vrcp.pop %v2041
        %v2080 = vmul.f32 1.0, %v2079
        %v2081 = vrcp.pop %v2044
        %v2082 = vmul.f32 1.0, %v2081
        %v2083 = vrcp.pop %v2047
        %v2084 = vmul.f32 1.0, %v2083
        %v2085 = vrcp.pop %v2050
        %v2086 = vmul.f32 1.0, %v2085
        %v2087 = vrcp.pop %v2053
        %v2088 = vmul.f32 1.0, %v2087
        %v2089 = vrcp.pop %v2056
        %v2090 = vmul.f32 1.0, %v2089
        %v2091 = vrcp.pop %v2059
        %v2092 = vmul.f32 1.0, %v2091
        %v2093 = vrcp.pop %v2062
        %v2094 = vmul.f32 1.0, %v2093
        %v2096 = vsel %vm1174, %v1984, 0
        %v2099 = vsel %vm1174, %v1986, 0
        %2101 = vmatprep.subr.mxu0 0.0
        %2102 = vmatpush1.msra.mxu0 %v986
        %2103 = vmatprep.subr.mxu0 0.0
        %2104 = vmatpush1.msra.mxu0 %v992
        %2105 = vmatprep.subr.mxu0 0.0
        %2106 = vmatpush1.msra.mxu0 %v998
        %2107 = vmatprep.subr.mxu0 0.0
        %2108 = vmatpush1.msra.mxu0 %v1004
        %2109 = vmatprep.subr.mxu0 0.0
        %2110 = vmatpush1.msra.mxu0 0.0
        %2111 = vmatprep.subr.mxu0 0.0
        %2112 = vmatpush1.msra.mxu0 0.0
        %2113 = vmatprep.subr.mxu0 0.0
        %2114 = vmatpush1.msra.mxu0 0.0
        %2115 = vmatprep.subr.mxu0 0.0
        %2116 = vmatpush1.msra.mxu0 0.0
        %2117 = vmatprep.subr.mxu0 0.0
        %2118 = vmatpush1.msra.mxu0 0.0
        %2119 = vmatprep.subr.mxu0 0.0
        %2120 = vmatpush1.msra.mxu0 0.0
        %2121 = vmatprep.subr.mxu0 0.0
        %2122 = vmatpush1.msra.mxu0 0.0
        %2123 = vmatprep.subr.mxu0 0.0
        %2124 = vmatpush1.msra.mxu0 0.0
        %2125 = vmatprep.subr.mxu0 0.0
        %2126 = vmatpush1.msra.mxu0 0.0
        %2127 = vmatprep.subr.mxu0 0.0
        %2128 = vmatpush1.msra.mxu0 0.0
        %2129 = vmatprep.subr.mxu0 0.0
        %2130 = vmatpush1.msra.mxu0 0.0
        %2131 = vmatprep.subr.mxu0 0.0
        %2132 = vmatpush1.msra.mxu0 0.0
        %2133 = vmatprep.subr.mxu0 0.0
        %2134 = vmatpush1.msra.mxu0 0.0
        %2135 = vmatprep.subr.mxu0 0.0
        %2136 = vmatpush1.msra.mxu0 0.0
        %2137 = vmatprep.subr.mxu0 0.0
        %2138 = vmatpush1.msra.mxu0 0.0
        %2139 = vmatprep.subr.mxu0 0.0
        %2140 = vmatpush1.msra.mxu0 0.0
        %2141 = vmatprep.subr.mxu0 0.0
        %2142 = vmatpush1.msra.mxu0 0.0
        %2143 = vmatprep.subr.mxu0 0.0
        %2144 = vmatpush1.msra.mxu0 0.0
        %2145 = vmatprep.subr.mxu0 0.0
        %2146 = vmatpush1.msra.mxu0 0.0
        %2147 = vmatprep.subr.mxu0 0.0
        %2148 = vmatpush1.msra.mxu0 0.0
        %2149 = vmatprep.subr.mxu0 0.0
        %2150 = vmatpush1.msra.mxu0 0.0
        %2151 = vmatprep.subr.mxu0 0.0
        %2152 = vmatpush1.msra.mxu0 0.0
        %2153 = vmatprep.subr.mxu0 0.0
        %2154 = vmatpush1.msra.mxu0 0.0
        %2155 = vmatprep.subr.mxu0 0.0
        %2156 = vmatpush1.msra.mxu0 0.0
        %2157 = vmatprep.subr.mxu0 0.0
        %2158 = vmatpush1.msra.mxu0 0.0
        %2159 = vmatprep.subr.mxu0 0.0
        %2160 = vmatpush1.msra.mxu0 0.0
        %2161 = vmatprep.subr.mxu0 0.0
        %2162 = vmatpush1.msra.mxu0 0.0
        %2163 = vmatprep.subr.mxu0 0.0
        %2164 = vmatpush1.msra.mxu0 0.0
        %2165 = vmatprep.mubr.f32.mxu0 0.0
        %2166 = vmatmul.mubr.f32.gmra.mrb[0].mxu0 %v2096
        %v2167 = vpop.f32.mrb[0].mxu0
        %v2168 = vadd.f32 0.0, %v2167
        %v2169 = vpop.f32.mrb[0].mxu0
        %2170 = vmatprep.mubr.f32.mxu0 0.0
        %2171 = vmatmul.mubr.f32.gmra.mrb[0].mxu0 %v2099
        %v2172 = vpop.f32.mrb[0].mxu0
        %v2173 = vadd.f32 0.0, %v2172
        %v2174 = vpop.f32.mrb[0].mxu0
        %2175 = vdwg.mxu0
        %v2177 = vsel %vm1174, %v1988, 0
        %v2180 = vsel %vm1174, %v1990, 0
        %2182 = vmatprep.subr.mxu0 0.0
        %2183 = vmatpush1.msra.mxu0 %v1010
        %2184 = vmatprep.subr.mxu0 0.0
        %2185 = vmatpush1.msra.mxu0 %v1016
        %2186 = vmatprep.subr.mxu0 0.0
        %2187 = vmatpush1.msra.mxu0 %v1022
        %2188 = vmatprep.subr.mxu0 0.0
        %2189 = vmatpush1.msra.mxu0 %v1028
        %2190 = vmatprep.subr.mxu0 0.0
        %2191 = vmatpush1.msra.mxu0 0.0
        %2192 = vmatprep.subr.mxu0 0.0
        %2193 = vmatpush1.msra.mxu0 0.0
        %2194 = vmatprep.subr.mxu0 0.0
        %2195 = vmatpush1.msra.mxu0 0.0
        %2196 = vmatprep.subr.mxu0 0.0
        %2197 = vmatpush1.msra.mxu0 0.0
        %2198 = vmatprep.subr.mxu0 0.0
        %2199 = vmatpush1.msra.mxu0 0.0
        %2200 = vmatprep.subr.mxu0 0.0
        %2201 = vmatpush1.msra.mxu0 0.0
        %2202 = vmatprep.subr.mxu0 0.0
        %2203 = vmatpush1.msra.mxu0 0.0
        %2204 = vmatprep.subr.mxu0 0.0
        %2205 = vmatpush1.msra.mxu0 0.0
        %2206 = vmatprep.subr.mxu0 0.0
        %2207 = vmatpush1.msra.mxu0 0.0
        %2208 = vmatprep.subr.mxu0 0.0
        %2209 = vmatpush1.msra.mxu0 0.0
        %2210 = vmatprep.subr.mxu0 0.0
        %2211 = vmatpush1.msra.mxu0 0.0
        %2212 = vmatprep.subr.mxu0 0.0
        %2213 = vmatpush1.msra.mxu0 0.0
        %2214 = vmatprep.subr.mxu0 0.0
        %2215 = vmatpush1.msra.mxu0 0.0
        %2216 = vmatprep.subr.mxu0 0.0
        %2217 = vmatpush1.msra.mxu0 0.0
        %2218 = vmatprep.subr.mxu0 0.0
        %2219 = vmatpush1.msra.mxu0 0.0
        %2220 = vmatprep.subr.mxu0 0.0
        %2221 = vmatpush1.msra.mxu0 0.0
        %2222 = vmatprep.subr.mxu0 0.0
        %2223 = vmatpush1.msra.mxu0 0.0
        %2224 = vmatprep.subr.mxu0 0.0
        %2225 = vmatpush1.msra.mxu0 0.0
        %2226 = vmatprep.subr.mxu0 0.0
        %2227 = vmatpush1.msra.mxu0 0.0
        %2228 = vmatprep.subr.mxu0 0.0
        %2229 = vmatpush1.msra.mxu0 0.0
        %2230 = vmatprep.subr.mxu0 0.0
        %2231 = vmatpush1.msra.mxu0 0.0
        %2232 = vmatprep.subr.mxu0 0.0
        %2233 = vmatpush1.msra.mxu0 0.0
        %2234 = vmatprep.subr.mxu0 0.0
        %2235 = vmatpush1.msra.mxu0 0.0
        %2236 = vmatprep.subr.mxu0 0.0
        %2237 = vmatpush1.msra.mxu0 0.0
        %2238 = vmatprep.subr.mxu0 0.0
        %2239 = vmatpush1.msra.mxu0 0.0
        %2240 = vmatprep.subr.mxu0 0.0
        %2241 = vmatpush1.msra.mxu0 0.0
        %2242 = vmatprep.subr.mxu0 0.0
        %2243 = vmatpush1.msra.mxu0 0.0
        %2244 = vmatprep.subr.mxu0 0.0
        %2245 = vmatpush1.msra.mxu0 0.0
        %2246 = vmatprep.mubr.f32.mxu0 0.0
        %2247 = vmatmul.mubr.f32.gmra.mrb[0].mxu0 %v2177
        %v2248 = vpop.f32.mrb[0].mxu0
        %v2249 = vadd.f32 0.0, %v2248
        %v2250 = vpop.f32.mrb[0].mxu0
        %2251 = vmatprep.mubr.f32.mxu0 0.0
        %2252 = vmatmul.mubr.f32.gmra.mrb[0].mxu0 %v2180
        %v2253 = vpop.f32.mrb[0].mxu0
        %v2254 = vadd.f32 0.0, %v2253
        %v2255 = vpop.f32.mrb[0].mxu0
        %2256 = vdwg.mxu0
        %v2258 = vsel %vm1174, %v1992, 0
        %v2261 = vsel %vm1174, %v1994, 0
        %2263 = vmatprep.subr.mxu0 0.0
        %2264 = vmatpush1.msra.mxu0 %v1034
        %2265 = vmatprep.subr.mxu0 0.0
        %2266 = vmatpush1.msra.mxu0 %v1040
        %2267 = vmatprep.subr.mxu0 0.0
        %2268 = vmatpush1.msra.mxu0 %v1046
        %2269 = vmatprep.subr.mxu0 0.0
        %2270 = vmatpush1.msra.mxu0 %v1052
        %2271 = vmatprep.subr.mxu0 0.0
        %2272 = vmatpush1.msra.mxu0 0.0
        %2273 = vmatprep.subr.mxu0 0.0
        %2274 = vmatpush1.msra.mxu0 0.0
        %2275 = vmatprep.subr.mxu0 0.0
        %2276 = vmatpush1.msra.mxu0 0.0
        %2277 = vmatprep.subr.mxu0 0.0
        %2278 = vmatpush1.msra.mxu0 0.0
        %2279 = vmatprep.subr.mxu0 0.0
        %2280 = vmatpush1.msra.mxu0 0.0
        %2281 = vmatprep.subr.mxu0 0.0
        %2282 = vmatpush1.msra.mxu0 0.0
        %2283 = vmatprep.subr.mxu0 0.0
        %2284 = vmatpush1.msra.mxu0 0.0
        %2285 = vmatprep.subr.mxu0 0.0
        %2286 = vmatpush1.msra.mxu0 0.0
        %2287 = vmatprep.subr.mxu0 0.0
        %2288 = vmatpush1.msra.mxu0 0.0
        %2289 = vmatprep.subr.mxu0 0.0
        %2290 = vmatpush1.msra.mxu0 0.0
        %2291 = vmatprep.subr.mxu0 0.0
        %2292 = vmatpush1.msra.mxu0 0.0
        %2293 = vmatprep.subr.mxu0 0.0
        %2294 = vmatpush1.msra.mxu0 0.0
        %2295 = vmatprep.subr.mxu0 0.0
        %2296 = vmatpush1.msra.mxu0 0.0
        %2297 = vmatprep.subr.mxu0 0.0
        %2298 = vmatpush1.msra.mxu0 0.0
        %2299 = vmatprep.subr.mxu0 0.0
        %2300 = vmatpush1.msra.mxu0 0.0
        %2301 = vmatprep.subr.mxu0 0.0
        %2302 = vmatpush1.msra.mxu0 0.0
        %2303 = vmatprep.subr.mxu0 0.0
        %2304 = vmatpush1.msra.mxu0 0.0
        %2305 = vmatprep.subr.mxu0 0.0
        %2306 = vmatpush1.msra.mxu0 0.0
        %2307 = vmatprep.subr.mxu0 0.0
        %2308 = vmatpush1.msra.mxu0 0.0
        %2309 = vmatprep.subr.mxu0 0.0
        %2310 = vmatpush1.msra.mxu0 0.0
        %2311 = vmatprep.subr.mxu0 0.0
        %2312 = vmatpush1.msra.mxu0 0.0
        %2313 = vmatprep.subr.mxu0 0.0
        %2314 = vmatpush1.msra.mxu0 0.0
        %2315 = vmatprep.subr.mxu0 0.0
        %2316 = vmatpush1.msra.mxu0 0.0
        %2317 = vmatprep.subr.mxu0 0.0
        %2318 = vmatpush1.msra.mxu0 0.0
        %2319 = vmatprep.subr.mxu0 0.0
        %2320 = vmatpush1.msra.mxu0 0.0
        %2321 = vmatprep.subr.mxu0 0.0
        %2322 = vmatpush1.msra.mxu0 0.0
        %2323 = vmatprep.subr.mxu0 0.0
        %2324 = vmatpush1.msra.mxu0 0.0
        %2325 = vmatprep.subr.mxu0 0.0
        %2326 = vmatpush1.msra.mxu0 0.0
        %2327 = vmatprep.mubr.f32.mxu0 0.0
        %2328 = vmatmul.mubr.f32.gmra.mrb[0].mxu0 %v2258
        %v2329 = vpop.f32.mrb[0].mxu0
        %v2330 = vadd.f32 0.0, %v2329
        %v2331 = vpop.f32.mrb[0].mxu0
        %2332 = vmatprep.mubr.f32.mxu0 0.0
        %2333 = vmatmul.mubr.f32.gmra.mrb[0].mxu0 %v2261
        %v2334 = vpop.f32.mrb[0].mxu0
        %v2335 = vadd.f32 0.0, %v2334
        %v2336 = vpop.f32.mrb[0].mxu0
        %2337 = vdwg.mxu0
        %v2339 = vsel %vm1174, %v1996, 0
        %v2342 = vsel %vm1174, %v1998, 0
        %2344 = vmatprep.subr.mxu0 0.0
        %2345 = vmatpush1.msra.mxu0 %v1058
        %2346 = vmatprep.subr.mxu0 0.0
        %2347 = vmatpush1.msra.mxu0 %v1064
        %2348 = vmatprep.subr.mxu0 0.0
        %2349 = vmatpush1.msra.mxu0 %v1070
        %2350 = vmatprep.subr.mxu0 0.0
        %2351 = vmatpush1.msra.mxu0 %v1076
        %2352 = vmatprep.subr.mxu0 0.0
        %2353 = vmatpush1.msra.mxu0 0.0
        %2354 = vmatprep.subr.mxu0 0.0
        %2355 = vmatpush1.msra.mxu0 0.0
        %2356 = vmatprep.subr.mxu0 0.0
        %2357 = vmatpush1.msra.mxu0 0.0
        %2358 = vmatprep.subr.mxu0 0.0
        %2359 = vmatpush1.msra.mxu0 0.0
        %2360 = vmatprep.subr.mxu0 0.0
        %2361 = vmatpush1.msra.mxu0 0.0
        %2362 = vmatprep.subr.mxu0 0.0
        %2363 = vmatpush1.msra.mxu0 0.0
        %2364 = vmatprep.subr.mxu0 0.0
        %2365 = vmatpush1.msra.mxu0 0.0
        %2366 = vmatprep.subr.mxu0 0.0
        %2367 = vmatpush1.msra.mxu0 0.0
        %2368 = vmatprep.subr.mxu0 0.0
        %2369 = vmatpush1.msra.mxu0 0.0
        %2370 = vmatprep.subr.mxu0 0.0
        %2371 = vmatpush1.msra.mxu0 0.0
        %2372 = vmatprep.subr.mxu0 0.0
        %2373 = vmatpush1.msra.mxu0 0.0
        %2374 = vmatprep.subr.mxu0 0.0
        %2375 = vmatpush1.msra.mxu0 0.0
        %2376 = vmatprep.subr.mxu0 0.0
        %2377 = vmatpush1.msra.mxu0 0.0
        %2378 = vmatprep.subr.mxu0 0.0
        %2379 = vmatpush1.msra.mxu0 0.0
        %2380 = vmatprep.subr.mxu0 0.0
        %2381 = vmatpush1.msra.mxu0 0.0
        %2382 = vmatprep.subr.mxu0 0.0
        %2383 = vmatpush1.msra.mxu0 0.0
        %2384 = vmatprep.subr.mxu0 0.0
        %2385 = vmatpush1.msra.mxu0 0.0
        %2386 = vmatprep.subr.mxu0 0.0
        %2387 = vmatpush1.msra.mxu0 0.0
        %2388 = vmatprep.subr.mxu0 0.0
        %2389 = vmatpush1.msra.mxu0 0.0
        %2390 = vmatprep.subr.mxu0 0.0
        %2391 = vmatpush1.msra.mxu0 0.0
        %2392 = vmatprep.subr.mxu0 0.0
        %2393 = vmatpush1.msra.mxu0 0.0
        %2394 = vmatprep.subr.mxu0 0.0
        %2395 = vmatpush1.msra.mxu0 0.0
        %2396 = vmatprep.subr.mxu0 0.0
        %2397 = vmatpush1.msra.mxu0 0.0
        %2398 = vmatprep.subr.mxu0 0.0
        %2399 = vmatpush1.msra.mxu0 0.0
        %2400 = vmatprep.subr.mxu0 0.0
        %2401 = vmatpush1.msra.mxu0 0.0
        %2402 = vmatprep.subr.mxu0 0.0
        %2403 = vmatpush1.msra.mxu0 0.0
        %2404 = vmatprep.subr.mxu0 0.0
        %2405 = vmatpush1.msra.mxu0 0.0
        %2406 = vmatprep.subr.mxu0 0.0
        %2407 = vmatpush1.msra.mxu0 0.0
        %2408 = vmatprep.mubr.f32.mxu0 0.0
        %2409 = vmatmul.mubr.f32.gmra.mrb[0].mxu0 %v2339
        %v2410 = vpop.f32.mrb[0].mxu0
        %v2411 = vadd.f32 0.0, %v2410
        %v2412 = vpop.f32.mrb[0].mxu0
        %2413 = vmatprep.mubr.f32.mxu0 0.0
        %2414 = vmatmul.mubr.f32.gmra.mrb[0].mxu0 %v2342
        %v2415 = vpop.f32.mrb[0].mxu0
        %v2416 = vadd.f32 0.0, %v2415
        %v2417 = vpop.f32.mrb[0].mxu0
        %2418 = vdwg.mxu0
        %v2420 = vsel %vm1174, %v2000, 0
        %v2423 = vsel %vm1174, %v2002, 0
        %2425 = vmatprep.subr.mxu0 0.0
        %2426 = vmatpush1.msra.mxu0 %v1082
        %2427 = vmatprep.subr.mxu0 0.0
        %2428 = vmatpush1.msra.mxu0 %v1088
        %2429 = vmatprep.subr.mxu0 0.0
        %2430 = vmatpush1.msra.mxu0 %v1094
        %2431 = vmatprep.subr.mxu0 0.0
        %2432 = vmatpush1.msra.mxu0 %v1100
        %2433 = vmatprep.subr.mxu0 0.0
        %2434 = vmatpush1.msra.mxu0 0.0
        %2435 = vmatprep.subr.mxu0 0.0
        %2436 = vmatpush1.msra.mxu0 0.0
        %2437 = vmatprep.subr.mxu0 0.0
        %2438 = vmatpush1.msra.mxu0 0.0
        %2439 = vmatprep.subr.mxu0 0.0
        %2440 = vmatpush1.msra.mxu0 0.0
        %2441 = vmatprep.subr.mxu0 0.0
        %2442 = vmatpush1.msra.mxu0 0.0
        %2443 = vmatprep.subr.mxu0 0.0
        %2444 = vmatpush1.msra.mxu0 0.0
        %2445 = vmatprep.subr.mxu0 0.0
        %2446 = vmatpush1.msra.mxu0 0.0
        %2447 = vmatprep.subr.mxu0 0.0
        %2448 = vmatpush1.msra.mxu0 0.0
        %2449 = vmatprep.subr.mxu0 0.0
        %2450 = vmatpush1.msra.mxu0 0.0
        %2451 = vmatprep.subr.mxu0 0.0
        %2452 = vmatpush1.msra.mxu0 0.0
        %2453 = vmatprep.subr.mxu0 0.0
        %2454 = vmatpush1.msra.mxu0 0.0
        %2455 = vmatprep.subr.mxu0 0.0
        %2456 = vmatpush1.msra.mxu0 0.0
        %2457 = vmatprep.subr.mxu0 0.0
        %2458 = vmatpush1.msra.mxu0 0.0
        %2459 = vmatprep.subr.mxu0 0.0
        %2460 = vmatpush1.msra.mxu0 0.0
        %2461 = vmatprep.subr.mxu0 0.0
        %2462 = vmatpush1.msra.mxu0 0.0
        %2463 = vmatprep.subr.mxu0 0.0
        %2464 = vmatpush1.msra.mxu0 0.0
        %2465 = vmatprep.subr.mxu0 0.0
        %2466 = vmatpush1.msra.mxu0 0.0
        %2467 = vmatprep.subr.mxu0 0.0
        %2468 = vmatpush1.msra.mxu0 0.0
        %2469 = vmatprep.subr.mxu0 0.0
        %2470 = vmatpush1.msra.mxu0 0.0
        %2471 = vmatprep.subr.mxu0 0.0
        %2472 = vmatpush1.msra.mxu0 0.0
        %2473 = vmatprep.subr.mxu0 0.0
        %2474 = vmatpush1.msra.mxu0 0.0
        %2475 = vmatprep.subr.mxu0 0.0
        %2476 = vmatpush1.msra.mxu0 0.0
        %2477 = vmatprep.subr.mxu0 0.0
        %2478 = vmatpush1.msra.mxu0 0.0
        %2479 = vmatprep.subr.mxu0 0.0
        %2480 = vmatpush1.msra.mxu0 0.0
        %2481 = vmatprep.subr.mxu0 0.0
        %2482 = vmatpush1.msra.mxu0 0.0
        %2483 = vmatprep.subr.mxu0 0.0
        %2484 = vmatpush1.msra.mxu0 0.0
        %2485 = vmatprep.subr.mxu0 0.0
        %2486 = vmatpush1.msra.mxu0 0.0
        %2487 = vmatprep.subr.mxu0 0.0
        %2488 = vmatpush1.msra.mxu0 0.0
        %2489 = vmatprep.mubr.f32.mxu0 0.0
        %2490 = vmatmul.mubr.f32.gmra.mrb[0].mxu0 %v2420
        %v2491 = vpop.f32.mrb[0].mxu0
        %v2492 = vadd.f32 0.0, %v2491
        %v2493 = vpop.f32.mrb[0].mxu0
        %2494 = vmatprep.mubr.f32.mxu0 0.0
        %2495 = vmatmul.mubr.f32.gmra.mrb[0].mxu0 %v2423
        %v2496 = vpop.f32.mrb[0].mxu0
        %v2497 = vadd.f32 0.0, %v2496
        %v2498 = vpop.f32.mrb[0].mxu0
        %2499 = vdwg.mxu0
        %v2501 = vsel %vm1174, %v2004, 0
        %v2504 = vsel %vm1174, %v2006, 0
        %2506 = vmatprep.subr.mxu0 0.0
        %2507 = vmatpush1.msra.mxu0 %v1106
        %2508 = vmatprep.subr.mxu0 0.0
        %2509 = vmatpush1.msra.mxu0 %v1112
        %2510 = vmatprep.subr.mxu0 0.0
        %2511 = vmatpush1.msra.mxu0 %v1118
        %2512 = vmatprep.subr.mxu0 0.0
        %2513 = vmatpush1.msra.mxu0 %v1124
        %2514 = vmatprep.subr.mxu0 0.0
        %2515 = vmatpush1.msra.mxu0 0.0
        %2516 = vmatprep.subr.mxu0 0.0
        %2517 = vmatpush1.msra.mxu0 0.0
        %2518 = vmatprep.subr.mxu0 0.0
        %2519 = vmatpush1.msra.mxu0 0.0
        %2520 = vmatprep.subr.mxu0 0.0
        %2521 = vmatpush1.msra.mxu0 0.0
        %2522 = vmatprep.subr.mxu0 0.0
        %2523 = vmatpush1.msra.mxu0 0.0
        %2524 = vmatprep.subr.mxu0 0.0
        %2525 = vmatpush1.msra.mxu0 0.0
        %2526 = vmatprep.subr.mxu0 0.0
        %2527 = vmatpush1.msra.mxu0 0.0
        %2528 = vmatprep.subr.mxu0 0.0
        %2529 = vmatpush1.msra.mxu0 0.0
        %2530 = vmatprep.subr.mxu0 0.0
        %2531 = vmatpush1.msra.mxu0 0.0
        %2532 = vmatprep.subr.mxu0 0.0
        %2533 = vmatpush1.msra.mxu0 0.0
        %2534 = vmatprep.subr.mxu0 0.0
        %2535 = vmatpush1.msra.mxu0 0.0
        %2536 = vmatprep.subr.mxu0 0.0
        %2537 = vmatpush1.msra.mxu0 0.0
        %2538 = vmatprep.subr.mxu0 0.0
        %2539 = vmatpush1.msra.mxu0 0.0
        %2540 = vmatprep.subr.mxu0 0.0
        %2541 = vmatpush1.msra.mxu0 0.0
        %2542 = vmatprep.subr.mxu0 0.0
        %2543 = vmatpush1.msra.mxu0 0.0
        %2544 = vmatprep.subr.mxu0 0.0
        %2545 = vmatpush1.msra.mxu0 0.0
        %2546 = vmatprep.subr.mxu0 0.0
        %2547 = vmatpush1.msra.mxu0 0.0
        %2548 = vmatprep.subr.mxu0 0.0
        %2549 = vmatpush1.msra.mxu0 0.0
        %2550 = vmatprep.subr.mxu0 0.0
        %2551 = vmatpush1.msra.mxu0 0.0
        %2552 = vmatprep.subr.mxu0 0.0
        %2553 = vmatpush1.msra.mxu0 0.0
        %2554 = vmatprep.subr.mxu0 0.0
        %2555 = vmatpush1.msra.mxu0 0.0
        %2556 = vmatprep.subr.mxu0 0.0
        %2557 = vmatpush1.msra.mxu0 0.0
        %2558 = vmatprep.subr.mxu0 0.0
        %2559 = vmatpush1.msra.mxu0 0.0
        %2560 = vmatprep.subr.mxu0 0.0
        %2561 = vmatpush1.msra.mxu0 0.0
        %2562 = vmatprep.subr.mxu0 0.0
        %2563 = vmatpush1.msra.mxu0 0.0
        %2564 = vmatprep.subr.mxu0 0.0
        %2565 = vmatpush1.msra.mxu0 0.0
        %2566 = vmatprep.subr.mxu0 0.0
        %2567 = vmatpush1.msra.mxu0 0.0
        %2568 = vmatprep.subr.mxu0 0.0
        %2569 = vmatpush1.msra.mxu0 0.0
        %2570 = vmatprep.mubr.f32.mxu0 0.0
        %2571 = vmatmul.mubr.f32.gmra.mrb[0].mxu0 %v2501
        %v2572 = vpop.f32.mrb[0].mxu0
        %v2573 = vadd.f32 0.0, %v2572
        %v2574 = vpop.f32.mrb[0].mxu0
        %2575 = vmatprep.mubr.f32.mxu0 0.0
        %2576 = vmatmul.mubr.f32.gmra.mrb[0].mxu0 %v2504
        %v2577 = vpop.f32.mrb[0].mxu0
        %v2578 = vadd.f32 0.0, %v2577
        %v2579 = vpop.f32.mrb[0].mxu0
        %2580 = vdwg.mxu0
        %v2582 = vsel %vm1174, %v2008, 0
        %v2585 = vsel %vm1174, %v2010, 0
        %2587 = vmatprep.subr.mxu0 0.0
        %2588 = vmatpush1.msra.mxu0 %v1130
        %2589 = vmatprep.subr.mxu0 0.0
        %2590 = vmatpush1.msra.mxu0 %v1136
        %2591 = vmatprep.subr.mxu0 0.0
        %2592 = vmatpush1.msra.mxu0 %v1142
        %2593 = vmatprep.subr.mxu0 0.0
        %2594 = vmatpush1.msra.mxu0 %v1148
        %2595 = vmatprep.subr.mxu0 0.0
        %2596 = vmatpush1.msra.mxu0 0.0
        %2597 = vmatprep.subr.mxu0 0.0
        %2598 = vmatpush1.msra.mxu0 0.0
        %2599 = vmatprep.subr.mxu0 0.0
        %2600 = vmatpush1.msra.mxu0 0.0
        %2601 = vmatprep.subr.mxu0 0.0
        %2602 = vmatpush1.msra.mxu0 0.0
        %2603 = vmatprep.subr.mxu0 0.0
        %2604 = vmatpush1.msra.mxu0 0.0
        %2605 = vmatprep.subr.mxu0 0.0
        %2606 = vmatpush1.msra.mxu0 0.0
        %2607 = vmatprep.subr.mxu0 0.0
        %2608 = vmatpush1.msra.mxu0 0.0
        %2609 = vmatprep.subr.mxu0 0.0
        %2610 = vmatpush1.msra.mxu0 0.0
        %2611 = vmatprep.subr.mxu0 0.0
        %2612 = vmatpush1.msra.mxu0 0.0
        %2613 = vmatprep.subr.mxu0 0.0
        %2614 = vmatpush1.msra.mxu0 0.0
        %2615 = vmatprep.subr.mxu0 0.0
        %2616 = vmatpush1.msra.mxu0 0.0
        %2617 = vmatprep.subr.mxu0 0.0
        %2618 = vmatpush1.msra.mxu0 0.0
        %2619 = vmatprep.subr.mxu0 0.0
        %2620 = vmatpush1.msra.mxu0 0.0
        %2621 = vmatprep.subr.mxu0 0.0
        %2622 = vmatpush1.msra.mxu0 0.0
        %2623 = vmatprep.subr.mxu0 0.0
        %2624 = vmatpush1.msra.mxu0 0.0
        %2625 = vmatprep.subr.mxu0 0.0
        %2626 = vmatpush1.msra.mxu0 0.0
        %2627 = vmatprep.subr.mxu0 0.0
        %2628 = vmatpush1.msra.mxu0 0.0
        %2629 = vmatprep.subr.mxu0 0.0
        %2630 = vmatpush1.msra.mxu0 0.0
        %2631 = vmatprep.subr.mxu0 0.0
        %2632 = vmatpush1.msra.mxu0 0.0
        %2633 = vmatprep.subr.mxu0 0.0
        %2634 = vmatpush1.msra.mxu0 0.0
        %2635 = vmatprep.subr.mxu0 0.0
        %2636 = vmatpush1.msra.mxu0 0.0
        %2637 = vmatprep.subr.mxu0 0.0
        %2638 = vmatpush1.msra.mxu0 0.0
        %2639 = vmatprep.subr.mxu0 0.0
        %2640 = vmatpush1.msra.mxu0 0.0
        %2641 = vmatprep.subr.mxu0 0.0
        %2642 = vmatpush1.msra.mxu0 0.0
        %2643 = vmatprep.subr.mxu0 0.0
        %2644 = vmatpush1.msra.mxu0 0.0
        %2645 = vmatprep.subr.mxu0 0.0
        %2646 = vmatpush1.msra.mxu0 0.0
        %2647 = vmatprep.subr.mxu0 0.0
        %2648 = vmatpush1.msra.mxu0 0.0
        %2649 = vmatprep.subr.mxu0 0.0
        %2650 = vmatpush1.msra.mxu0 0.0
        %2651 = vmatprep.mubr.f32.mxu0 0.0
        %2652 = vmatmul.mubr.f32.gmra.mrb[0].mxu0 %v2582
        %v2653 = vpop.f32.mrb[0].mxu0
        %v2654 = vadd.f32 0.0, %v2653
        %v2655 = vpop.f32.mrb[0].mxu0
        %2656 = vmatprep.mubr.f32.mxu0 0.0
        %2657 = vmatmul.mubr.f32.gmra.mrb[0].mxu0 %v2585
        %v2658 = vpop.f32.mrb[0].mxu0
        %v2659 = vadd.f32 0.0, %v2658
        %v2660 = vpop.f32.mrb[0].mxu0
        %2661 = vdwg.mxu0
        %v2663 = vsel %vm1174, %v2012, 0
        %v2666 = vsel %vm1174, %v2014, 0
        %2668 = vmatprep.subr.mxu0 0.0
        %2669 = vmatpush1.msra.mxu0 %v1154
        %2670 = vmatprep.subr.mxu0 0.0
        %2671 = vmatpush1.msra.mxu0 %v1160
        %2672 = vmatprep.subr.mxu0 0.0
        %2673 = vmatpush1.msra.mxu0 %v1166
        %2674 = vmatprep.subr.mxu0 0.0
        %2675 = vmatpush1.msra.mxu0 %v1172
        %2676 = vmatprep.subr.mxu0 0.0
        %2677 = vmatpush1.msra.mxu0 0.0
        %2678 = vmatprep.subr.mxu0 0.0
        %2679 = vmatpush1.msra.mxu0 0.0
        %2680 = vmatprep.subr.mxu0 0.0
        %2681 = vmatpush1.msra.mxu0 0.0
        %2682 = vmatprep.subr.mxu0 0.0
        %2683 = vmatpush1.msra.mxu0 0.0
        %2684 = vmatprep.subr.mxu0 0.0
        %2685 = vmatpush1.msra.mxu0 0.0
        %2686 = vmatprep.subr.mxu0 0.0
        %2687 = vmatpush1.msra.mxu0 0.0
        %2688 = vmatprep.subr.mxu0 0.0
        %2689 = vmatpush1.msra.mxu0 0.0
        %2690 = vmatprep.subr.mxu0 0.0
        %2691 = vmatpush1.msra.mxu0 0.0
        %2692 = vmatprep.subr.mxu0 0.0
        %2693 = vmatpush1.msra.mxu0 0.0
        %2694 = vmatprep.subr.mxu0 0.0
        %2695 = vmatpush1.msra.mxu0 0.0
        %2696 = vmatprep.subr.mxu0 0.0
        %2697 = vmatpush1.msra.mxu0 0.0
        %2698 = vmatprep.subr.mxu0 0.0
        %2699 = vmatpush1.msra.mxu0 0.0
        %2700 = vmatprep.subr.mxu0 0.0
        %2701 = vmatpush1.msra.mxu0 0.0
        %2702 = vmatprep.subr.mxu0 0.0
        %2703 = vmatpush1.msra.mxu0 0.0
        %2704 = vmatprep.subr.mxu0 0.0
        %2705 = vmatpush1.msra.mxu0 0.0
        %2706 = vmatprep.subr.mxu0 0.0
        %2707 = vmatpush1.msra.mxu0 0.0
        %2708 = vmatprep.subr.mxu0 0.0
        %2709 = vmatpush1.msra.mxu0 0.0
        %2710 = vmatprep.subr.mxu0 0.0
        %2711 = vmatpush1.msra.mxu0 0.0
        %2712 = vmatprep.subr.mxu0 0.0
        %2713 = vmatpush1.msra.mxu0 0.0
        %2714 = vmatprep.subr.mxu0 0.0
        %2715 = vmatpush1.msra.mxu0 0.0
        %2716 = vmatprep.subr.mxu0 0.0
        %2717 = vmatpush1.msra.mxu0 0.0
        %2718 = vmatprep.subr.mxu0 0.0
        %2719 = vmatpush1.msra.mxu0 0.0
        %2720 = vmatprep.subr.mxu0 0.0
        %2721 = vmatpush1.msra.mxu0 0.0
        %2722 = vmatprep.subr.mxu0 0.0
        %2723 = vmatpush1.msra.mxu0 0.0
        %2724 = vmatprep.subr.mxu0 0.0
        %2725 = vmatpush1.msra.mxu0 0.0
        %2726 = vmatprep.subr.mxu0 0.0
        %2727 = vmatpush1.msra.mxu0 0.0
        %2728 = vmatprep.subr.mxu0 0.0
        %2729 = vmatpush1.msra.mxu0 0.0
        %2730 = vmatprep.subr.mxu0 0.0
        %2731 = vmatpush1.msra.mxu0 0.0
        %2732 = vmatprep.mubr.f32.mxu0 0.0
        %2733 = vmatmul.mubr.f32.gmra.mrb[0].mxu0 %v2663
        %v2734 = vpop.f32.mrb[0].mxu0
        %v2735 = vadd.f32 0.0, %v2734
        %v2736 = vpop.f32.mrb[0].mxu0
        %2737 = vmatprep.mubr.f32.mxu0 0.0
        %2738 = vmatmul.mubr.f32.gmra.mrb[0].mxu0 %v2666
        %v2739 = vpop.f32.mrb[0].mxu0
        %v2740 = vadd.f32 0.0, %v2739
        %v2741 = vpop.f32.mrb[0].mxu0
        %2742 = vdwg.mxu0
        %v2743 = vmul.f32 %v2168, %v2064
        %v2744 = vmul.f32 %v2173, %v2066
        %v2745 = vmul.f32 %v2249, %v2068
        %v2746 = vmul.f32 %v2254, %v2070
        %v2747 = vmul.f32 %v2330, %v2072
        %v2748 = vmul.f32 %v2335, %v2074
        %v2749 = vmul.f32 %v2411, %v2076
        %v2750 = vmul.f32 %v2416, %v2078
        %v2751 = vmul.f32 %v2492, %v2080
        %v2752 = vmul.f32 %v2497, %v2082
        %v2753 = vmul.f32 %v2573, %v2084
        %v2754 = vmul.f32 %v2578, %v2086
        %v2755 = vmul.f32 %v2654, %v2088
        %v2756 = vmul.f32 %v2659, %v2090
        %v2757 = vmul.f32 %v2735, %v2092
        %v2758 = vmul.f32 %v2740, %v2094
        %2759 = vrot.lane.b32.xlu0 %v795, 96
        %v2760 = vpop.permute.xlu0 %2759
        %2761 = vrot.lane.b32.xlu0 %v800, 96
        %v2762 = vpop.permute.xlu0 %2761
        %2763 = vrot.lane.b32.xlu0 %v984, 96
        %v2764 = vpop.permute.xlu0 %2763
        %2765 = vrot.lane.b32.xlu0 %v990, 96
        %v2766 = vpop.permute.xlu0 %2765
        %2767 = vrot.lane.b32.xlu0 %v996, 96
        %v2768 = vpop.permute.xlu0 %2767
        %2769 = vrot.lane.b32.xlu0 %v1002, 96
        %v2770 = vpop.permute.xlu0 %2769
        %v2771 = vsel %vm1174, %v2760, 0
        %v2773 = vsel %vm1174, %v2762, 0
        %v2775 = vsel %vm1174, %v2764, 0
        %v2777 = vsel %vm1174, %v2766, 0
        %v2779 = vsel %vm1174, %v2768, 0
        %v2781 = vsel %vm1174, %v2770, 0
        %2783 = vmatprep.subr.mxu0 0.0
        %2784 = vmatpush1.xpose.msra.mxu0 %v2775
        %2785 = vmatprep.subr.mxu0 0.0
        %2786 = vmatpush1.xpose.msra.mxu0 %v2777
        %2787 = vmatprep.subr.mxu0 0.0
        %2788 = vmatpush1.xpose.msra.mxu0 %v2779
        %2789 = vmatprep.subr.mxu0 0.0
        %2790 = vmatpush1.xpose.msra.mxu0 %v2781
        %2791 = vmatprep.subr.mxu0 0.0
        %2792 = vmatpush1.xpose.msra.mxu0 0.0
        %2793 = vmatprep.subr.mxu0 0.0
        %2794 = vmatpush1.xpose.msra.mxu0 0.0
        %2795 = vmatprep.subr.mxu0 0.0
        %2796 = vmatpush1.xpose.msra.mxu0 0.0
        %2797 = vmatprep.subr.mxu0 0.0
        %2798 = vmatpush1.xpose.msra.mxu0 0.0
        %2799 = vmatprep.subr.mxu0 0.0
        %2800 = vmatpush1.xpose.msra.mxu0 0.0
        %2801 = vmatprep.subr.mxu0 0.0
        %2802 = vmatpush1.xpose.msra.mxu0 0.0
        %2803 = vmatprep.subr.mxu0 0.0
        %2804 = vmatpush1.xpose.msra.mxu0 0.0
        %2805 = vmatprep.subr.mxu0 0.0
        %2806 = vmatpush1.xpose.msra.mxu0 0.0
        %2807 = vmatprep.subr.mxu0 0.0
        %2808 = vmatpush1.xpose.msra.mxu0 0.0
        %2809 = vmatprep.subr.mxu0 0.0
        %2810 = vmatpush1.xpose.msra.mxu0 0.0
        %2811 = vmatprep.subr.mxu0 0.0
        %2812 = vmatpush1.xpose.msra.mxu0 0.0
        %2813 = vmatprep.subr.mxu0 0.0
        %2814 = vmatpush1.xpose.msra.mxu0 0.0
        %2815 = vmatprep.subr.mxu0 0.0
        %2816 = vmatpush1.xpose.msra.mxu0 0.0
        %2817 = vmatprep.subr.mxu0 0.0
        %2818 = vmatpush1.xpose.msra.mxu0 0.0
        %2819 = vmatprep.subr.mxu0 0.0
        %2820 = vmatpush1.xpose.msra.mxu0 0.0
        %2821 = vmatprep.subr.mxu0 0.0
        %2822 = vmatpush1.xpose.msra.mxu0 0.0
        %2823 = vmatprep.subr.mxu0 0.0
        %2824 = vmatpush1.xpose.msra.mxu0 0.0
        %2825 = vmatprep.subr.mxu0 0.0
        %2826 = vmatpush1.xpose.msra.mxu0 0.0
        %2827 = vmatprep.subr.mxu0 0.0
        %2828 = vmatpush1.xpose.msra.mxu0 0.0
        %2829 = vmatprep.subr.mxu0 0.0
        %2830 = vmatpush1.xpose.msra.mxu0 0.0
        %2831 = vmatprep.subr.mxu0 0.0
        %2832 = vmatpush1.xpose.msra.mxu0 0.0
        %2833 = vmatprep.subr.mxu0 0.0
        %2834 = vmatpush1.xpose.msra.mxu0 0.0
        %2835 = vmatprep.subr.mxu0 0.0
        %2836 = vmatpush1.xpose.msra.mxu0 0.0
        %2837 = vmatprep.subr.mxu0 0.0
        %2838 = vmatpush1.xpose.msra.mxu0 0.0
        %2839 = vmatprep.subr.mxu0 0.0
        %2840 = vmatpush1.xpose.msra.mxu0 0.0
        %2841 = vmatprep.subr.mxu0 0.0
        %2842 = vmatpush1.xpose.msra.mxu0 0.0
        %2843 = vmatprep.subr.mxu0 0.0
        %2844 = vmatpush1.xpose.msra.mxu0 0.0
        %2845 = vmatprep.subr.mxu0 0.0
        %2846 = vmatpush1.xpose.msra.mxu0 0.0
        %2847 = vmatprep.mubr.f32.mxu0 0.0
        %2848 = vmatmul.mubr.f32.gmra.mrb[0].mxu0 %v2771
        %v2849 = vpop.f32.mrb[0].mxu0
        %v2850 = vadd.f32 0.0, %v2849
        %v2851 = vpop.f32.mrb[0].mxu0
        %2852 = vmatprep.mubr.f32.mxu0 0.0
        %2853 = vmatmul.mubr.f32.gmra.mrb[0].mxu0 %v2773
        %v2854 = vpop.f32.mrb[0].mxu0
        %v2855 = vadd.f32 0.0, %v2854
        %v2856 = vpop.f32.mrb[0].mxu0
        %2857 = vdwg.mxu0
        %2858 = vrot.lane.b32.xlu0 %v805, 96
        %v2859 = vpop.permute.xlu0 %2858
        %2860 = vrot.lane.b32.xlu0 %v810, 96
        %v2861 = vpop.permute.xlu0 %2860
        %2862 = vrot.lane.b32.xlu0 %v1008, 96
        %v2863 = vpop.permute.xlu0 %2862
        %2864 = vrot.lane.b32.xlu0 %v1014, 96
        %v2865 = vpop.permute.xlu0 %2864
        %2866 = vrot.lane.b32.xlu0 %v1020, 96
        %v2867 = vpop.permute.xlu0 %2866
        %2868 = vrot.lane.b32.xlu0 %v1026, 96
        %v2869 = vpop.permute.xlu0 %2868
        %v2870 = vsel %vm1174, %v2859, 0
        %v2872 = vsel %vm1174, %v2861, 0
        %v2874 = vsel %vm1174, %v2863, 0
        %v2876 = vsel %vm1174, %v2865, 0
        %v2878 = vsel %vm1174, %v2867, 0
        %v2880 = vsel %vm1174, %v2869, 0
        %2882 = vmatprep.subr.mxu0 0.0
        %2883 = vmatpush1.xpose.msra.mxu0 %v2874
        %2884 = vmatprep.subr.mxu0 0.0
        %2885 = vmatpush1.xpose.msra.mxu0 %v2876
        %2886 = vmatprep.subr.mxu0 0.0
        %2887 = vmatpush1.xpose.msra.mxu0 %v2878
        %2888 = vmatprep.subr.mxu0 0.0
        %2889 = vmatpush1.xpose.msra.mxu0 %v2880
        %2890 = vmatprep.subr.mxu0 0.0
        %2891 = vmatpush1.xpose.msra.mxu0 0.0
        %2892 = vmatprep.subr.mxu0 0.0
        %2893 = vmatpush1.xpose.msra.mxu0 0.0
        %2894 = vmatprep.subr.mxu0 0.0
        %2895 = vmatpush1.xpose.msra.mxu0 0.0
        %2896 = vmatprep.subr.mxu0 0.0
        %2897 = vmatpush1.xpose.msra.mxu0 0.0
        %2898 = vmatprep.subr.mxu0 0.0
        %2899 = vmatpush1.xpose.msra.mxu0 0.0
        %2900 = vmatprep.subr.mxu0 0.0
        %2901 = vmatpush1.xpose.msra.mxu0 0.0
        %2902 = vmatprep.subr.mxu0 0.0
        %2903 = vmatpush1.xpose.msra.mxu0 0.0
        %2904 = vmatprep.subr.mxu0 0.0
        %2905 = vmatpush1.xpose.msra.mxu0 0.0
        %2906 = vmatprep.subr.mxu0 0.0
        %2907 = vmatpush1.xpose.msra.mxu0 0.0
        %2908 = vmatprep.subr.mxu0 0.0
        %2909 = vmatpush1.xpose.msra.mxu0 0.0
        %2910 = vmatprep.subr.mxu0 0.0
        %2911 = vmatpush1.xpose.msra.mxu0 0.0
        %2912 = vmatprep.subr.mxu0 0.0
        %2913 = vmatpush1.xpose.msra.mxu0 0.0
        %2914 = vmatprep.subr.mxu0 0.0
        %2915 = vmatpush1.xpose.msra.mxu0 0.0
        %2916 = vmatprep.subr.mxu0 0.0
        %2917 = vmatpush1.xpose.msra.mxu0 0.0
        %2918 = vmatprep.subr.mxu0 0.0
        %2919 = vmatpush1.xpose.msra.mxu0 0.0
        %2920 = vmatprep.subr.mxu0 0.0
        %2921 = vmatpush1.xpose.msra.mxu0 0.0
        %2922 = vmatprep.subr.mxu0 0.0
        %2923 = vmatpush1.xpose.msra.mxu0 0.0
        %2924 = vmatprep.subr.mxu0 0.0
        %2925 = vmatpush1.xpose.msra.mxu0 0.0
        %2926 = vmatprep.subr.mxu0 0.0
        %2927 = vmatpush1.xpose.msra.mxu0 0.0
        %2928 = vmatprep.subr.mxu0 0.0
        %2929 = vmatpush1.xpose.msra.mxu0 0.0
        %2930 = vmatprep.subr.mxu0 0.0
        %2931 = vmatpush1.xpose.msra.mxu0 0.0
        %2932 = vmatprep.subr.mxu0 0.0
        %2933 = vmatpush1.xpose.msra.mxu0 0.0
        %2934 = vmatprep.subr.mxu0 0.0
        %2935 = vmatpush1.xpose.msra.mxu0 0.0
        %2936 = vmatprep.subr.mxu0 0.0
        %2937 = vmatpush1.xpose.msra.mxu0 0.0
        %2938 = vmatprep.subr.mxu0 0.0
        %2939 = vmatpush1.xpose.msra.mxu0 0.0
        %2940 = vmatprep.subr.mxu0 0.0
        %2941 = vmatpush1.xpose.msra.mxu0 0.0
        %2942 = vmatprep.subr.mxu0 0.0
        %2943 = vmatpush1.xpose.msra.mxu0 0.0
        %2944 = vmatprep.subr.mxu0 0.0
        %2945 = vmatpush1.xpose.msra.mxu0 0.0
        %2946 = vmatprep.mubr.f32.mxu0 0.0
        %2947 = vmatmul.mubr.f32.gmra.mrb[0].mxu0 %v2870
        %v2948 = vpop.f32.mrb[0].mxu0
        %v2949 = vadd.f32 0.0, %v2948
        %v2950 = vpop.f32.mrb[0].mxu0
        %2951 = vmatprep.mubr.f32.mxu0 0.0
        %2952 = vmatmul.mubr.f32.gmra.mrb[0].mxu0 %v2872
        %v2953 = vpop.f32.mrb[0].mxu0
        %v2954 = vadd.f32 0.0, %v2953
        %v2955 = vpop.f32.mrb[0].mxu0
        %2956 = vdwg.mxu0
        %2957 = vrot.lane.b32.xlu0 %v815, 96
        %v2958 = vpop.permute.xlu0 %2957
        %2959 = vrot.lane.b32.xlu0 %v820, 96
        %v2960 = vpop.permute.xlu0 %2959
        %2961 = vrot.lane.b32.xlu0 %v1032, 96
        %v2962 = vpop.permute.xlu0 %2961
        %2963 = vrot.lane.b32.xlu0 %v1038, 96
        %v2964 = vpop.permute.xlu0 %2963
        %2965 = vrot.lane.b32.xlu0 %v1044, 96
        %v2966 = vpop.permute.xlu0 %2965
        %2967 = vrot.lane.b32.xlu0 %v1050, 96
        %v2968 = vpop.permute.xlu0 %2967
        %v2969 = vsel %vm1174, %v2958, 0
        %v2971 = vsel %vm1174, %v2960, 0
        %v2973 = vsel %vm1174, %v2962, 0
        %v2975 = vsel %vm1174, %v2964, 0
        %v2977 = vsel %vm1174, %v2966, 0
        %v2979 = vsel %vm1174, %v2968, 0
        %2981 = vmatprep.subr.mxu0 0.0
        %2982 = vmatpush1.xpose.msra.mxu0 %v2973
        %2983 = vmatprep.subr.mxu0 0.0
        %2984 = vmatpush1.xpose.msra.mxu0 %v2975
        %2985 = vmatprep.subr.mxu0 0.0
        %2986 = vmatpush1.xpose.msra.mxu0 %v2977
        %2987 = vmatprep.subr.mxu0 0.0
        %2988 = vmatpush1.xpose.msra.mxu0 %v2979
        %2989 = vmatprep.subr.mxu0 0.0
        %2990 = vmatpush1.xpose.msra.mxu0 0.0
        %2991 = vmatprep.subr.mxu0 0.0
        %2992 = vmatpush1.xpose.msra.mxu0 0.0
        %2993 = vmatprep.subr.mxu0 0.0
        %2994 = vmatpush1.xpose.msra.mxu0 0.0
        %2995 = vmatprep.subr.mxu0 0.0
        %2996 = vmatpush1.xpose.msra.mxu0 0.0
        %2997 = vmatprep.subr.mxu0 0.0
        %2998 = vmatpush1.xpose.msra.mxu0 0.0
        %2999 = vmatprep.subr.mxu0 0.0
        %3000 = vmatpush1.xpose.msra.mxu0 0.0
        %3001 = vmatprep.subr.mxu0 0.0
        %3002 = vmatpush1.xpose.msra.mxu0 0.0
        %3003 = vmatprep.subr.mxu0 0.0
        %3004 = vmatpush1.xpose.msra.mxu0 0.0
        %3005 = vmatprep.subr.mxu0 0.0
        %3006 = vmatpush1.xpose.msra.mxu0 0.0
        %3007 = vmatprep.subr.mxu0 0.0
        %3008 = vmatpush1.xpose.msra.mxu0 0.0
        %3009 = vmatprep.subr.mxu0 0.0
        %3010 = vmatpush1.xpose.msra.mxu0 0.0
        %3011 = vmatprep.subr.mxu0 0.0
        %3012 = vmatpush1.xpose.msra.mxu0 0.0
        %3013 = vmatprep.subr.mxu0 0.0
        %3014 = vmatpush1.xpose.msra.mxu0 0.0
        %3015 = vmatprep.subr.mxu0 0.0
        %3016 = vmatpush1.xpose.msra.mxu0 0.0
        %3017 = vmatprep.subr.mxu0 0.0
        %3018 = vmatpush1.xpose.msra.mxu0 0.0
        %3019 = vmatprep.subr.mxu0 0.0
        %3020 = vmatpush1.xpose.msra.mxu0 0.0
        %3021 = vmatprep.subr.mxu0 0.0
        %3022 = vmatpush1.xpose.msra.mxu0 0.0
        %3023 = vmatprep.subr.mxu0 0.0
        %3024 = vmatpush1.xpose.msra.mxu0 0.0
        %3025 = vmatprep.subr.mxu0 0.0
        %3026 = vmatpush1.xpose.msra.mxu0 0.0
        %3027 = vmatprep.subr.mxu0 0.0
        %3028 = vmatpush1.xpose.msra.mxu0 0.0
        %3029 = vmatprep.subr.mxu0 0.0
        %3030 = vmatpush1.xpose.msra.mxu0 0.0
        %3031 = vmatprep.subr.mxu0 0.0
        %3032 = vmatpush1.xpose.msra.mxu0 0.0
        %3033 = vmatprep.subr.mxu0 0.0
        %3034 = vmatpush1.xpose.msra.mxu0 0.0
        %3035 = vmatprep.subr.mxu0 0.0
        %3036 = vmatpush1.xpose.msra.mxu0 0.0
        %3037 = vmatprep.subr.mxu0 0.0
        %3038 = vmatpush1.xpose.msra.mxu0 0.0
        %3039 = vmatprep.subr.mxu0 0.0
        %3040 = vmatpush1.xpose.msra.mxu0 0.0
        %3041 = vmatprep.subr.mxu0 0.0
        %3042 = vmatpush1.xpose.msra.mxu0 0.0
        %3043 = vmatprep.subr.mxu0 0.0
        %3044 = vmatpush1.xpose.msra.mxu0 0.0
        %3045 = vmatprep.mubr.f32.mxu0 0.0
        %3046 = vmatmul.mubr.f32.gmra.mrb[0].mxu0 %v2969
        %v3047 = vpop.f32.mrb[0].mxu0
        %v3048 = vadd.f32 0.0, %v3047
        %v3049 = vpop.f32.mrb[0].mxu0
        %3050 = vmatprep.mubr.f32.mxu0 0.0
        %3051 = vmatmul.mubr.f32.gmra.mrb[0].mxu0 %v2971
        %v3052 = vpop.f32.mrb[0].mxu0
        %v3053 = vadd.f32 0.0, %v3052
        %v3054 = vpop.f32.mrb[0].mxu0
        %3055 = vdwg.mxu0
        %3056 = vrot.lane.b32.xlu0 %v825, 96
        %v3057 = vpop.permute.xlu0 %3056
        %3058 = vrot.lane.b32.xlu0 %v830, 96
        %v3059 = vpop.permute.xlu0 %3058
        %3060 = vrot.lane.b32.xlu0 %v1056, 96
        %v3061 = vpop.permute.xlu0 %3060
        %3062 = vrot.lane.b32.xlu0 %v1062, 96
        %v3063 = vpop.permute.xlu0 %3062
        %3064 = vrot.lane.b32.xlu0 %v1068, 96
        %v3065 = vpop.permute.xlu0 %3064
        %3066 = vrot.lane.b32.xlu0 %v1074, 96
        %v3067 = vpop.permute.xlu0 %3066
        %v3068 = vsel %vm1174, %v3057, 0
        %v3070 = vsel %vm1174, %v3059, 0
        %v3072 = vsel %vm1174, %v3061, 0
        %v3074 = vsel %vm1174, %v3063, 0
        %v3076 = vsel %vm1174, %v3065, 0
        %v3078 = vsel %vm1174, %v3067, 0
        %3080 = vmatprep.subr.mxu0 0.0
        %3081 = vmatpush1.xpose.msra.mxu0 %v3072
        %3082 = vmatprep.subr.mxu0 0.0
        %3083 = vmatpush1.xpose.msra.mxu0 %v3074
        %3084 = vmatprep.subr.mxu0 0.0
        %3085 = vmatpush1.xpose.msra.mxu0 %v3076
        %3086 = vmatprep.subr.mxu0 0.0
        %3087 = vmatpush1.xpose.msra.mxu0 %v3078
        %3088 = vmatprep.subr.mxu0 0.0
        %3089 = vmatpush1.xpose.msra.mxu0 0.0
        %3090 = vmatprep.subr.mxu0 0.0
        %3091 = vmatpush1.xpose.msra.mxu0 0.0
        %3092 = vmatprep.subr.mxu0 0.0
        %3093 = vmatpush1.xpose.msra.mxu0 0.0
        %3094 = vmatprep.subr.mxu0 0.0
        %3095 = vmatpush1.xpose.msra.mxu0 0.0
        %3096 = vmatprep.subr.mxu0 0.0
        %3097 = vmatpush1.xpose.msra.mxu0 0.0
        %3098 = vmatprep.subr.mxu0 0.0
        %3099 = vmatpush1.xpose.msra.mxu0 0.0
        %3100 = vmatprep.subr.mxu0 0.0
        %3101 = vmatpush1.xpose.msra.mxu0 0.0
        %3102 = vmatprep.subr.mxu0 0.0
        %3103 = vmatpush1.xpose.msra.mxu0 0.0
        %3104 = vmatprep.subr.mxu0 0.0
        %3105 = vmatpush1.xpose.msra.mxu0 0.0
        %3106 = vmatprep.subr.mxu0 0.0
        %3107 = vmatpush1.xpose.msra.mxu0 0.0
        %3108 = vmatprep.subr.mxu0 0.0
        %3109 = vmatpush1.xpose.msra.mxu0 0.0
        %3110 = vmatprep.subr.mxu0 0.0
        %3111 = vmatpush1.xpose.msra.mxu0 0.0
        %3112 = vmatprep.subr.mxu0 0.0
        %3113 = vmatpush1.xpose.msra.mxu0 0.0
        %3114 = vmatprep.subr.mxu0 0.0
        %3115 = vmatpush1.xpose.msra.mxu0 0.0
        %3116 = vmatprep.subr.mxu0 0.0
        %3117 = vmatpush1.xpose.msra.mxu0 0.0
        %3118 = vmatprep.subr.mxu0 0.0
        %3119 = vmatpush1.xpose.msra.mxu0 0.0
        %3120 = vmatprep.subr.mxu0 0.0
        %3121 = vmatpush1.xpose.msra.mxu0 0.0
        %3122 = vmatprep.subr.mxu0 0.0
        %3123 = vmatpush1.xpose.msra.mxu0 0.0
        %3124 = vmatprep.subr.mxu0 0.0
        %3125 = vmatpush1.xpose.msra.mxu0 0.0
        %3126 = vmatprep.subr.mxu0 0.0
        %3127 = vmatpush1.xpose.msra.mxu0 0.0
        %3128 = vmatprep.subr.mxu0 0.0
        %3129 = vmatpush1.xpose.msra.mxu0 0.0
        %3130 = vmatprep.subr.mxu0 0.0
        %3131 = vmatpush1.xpose.msra.mxu0 0.0
        %3132 = vmatprep.subr.mxu0 0.0
        %3133 = vmatpush1.xpose.msra.mxu0 0.0
        %3134 = vmatprep.subr.mxu0 0.0
        %3135 = vmatpush1.xpose.msra.mxu0 0.0
        %3136 = vmatprep.subr.mxu0 0.0
        %3137 = vmatpush1.xpose.msra.mxu0 0.0
        %3138 = vmatprep.subr.mxu0 0.0
        %3139 = vmatpush1.xpose.msra.mxu0 0.0
        %3140 = vmatprep.subr.mxu0 0.0
        %3141 = vmatpush1.xpose.msra.mxu0 0.0
        %3142 = vmatprep.subr.mxu0 0.0
        %3143 = vmatpush1.xpose.msra.mxu0 0.0
        %3144 = vmatprep.mubr.f32.mxu0 0.0
        %3145 = vmatmul.mubr.f32.gmra.mrb[0].mxu0 %v3068
        %v3146 = vpop.f32.mrb[0].mxu0
        %v3147 = vadd.f32 0.0, %v3146
        %v3148 = vpop.f32.mrb[0].mxu0
        %3149 = vmatprep.mubr.f32.mxu0 0.0
        %3150 = vmatmul.mubr.f32.gmra.mrb[0].mxu0 %v3070
        %v3151 = vpop.f32.mrb[0].mxu0
        %v3152 = vadd.f32 0.0, %v3151
        %v3153 = vpop.f32.mrb[0].mxu0
        %3154 = vdwg.mxu0
        %3155 = vrot.lane.b32.xlu0 %v835, 96
        %v3156 = vpop.permute.xlu0 %3155
        %3157 = vrot.lane.b32.xlu0 %v840, 96
        %v3158 = vpop.permute.xlu0 %3157
        %3159 = vrot.lane.b32.xlu0 %v1080, 96
        %v3160 = vpop.permute.xlu0 %3159
        %3161 = vrot.lane.b32.xlu0 %v1086, 96
        %v3162 = vpop.permute.xlu0 %3161
        %3163 = vrot.lane.b32.xlu0 %v1092, 96
        %v3164 = vpop.permute.xlu0 %3163
        %3165 = vrot.lane.b32.xlu0 %v1098, 96
        %v3166 = vpop.permute.xlu0 %3165
        %v3167 = vsel %vm1174, %v3156, 0
        %v3169 = vsel %vm1174, %v3158, 0
        %v3171 = vsel %vm1174, %v3160, 0
        %v3173 = vsel %vm1174, %v3162, 0
        %v3175 = vsel %vm1174, %v3164, 0
        %v3177 = vsel %vm1174, %v3166, 0
        %3179 = vmatprep.subr.mxu0 0.0
        %3180 = vmatpush1.xpose.msra.mxu0 %v3171
        %3181 = vmatprep.subr.mxu0 0.0
        %3182 = vmatpush1.xpose.msra.mxu0 %v3173
        %3183 = vmatprep.subr.mxu0 0.0
        %3184 = vmatpush1.xpose.msra.mxu0 %v3175
        %3185 = vmatprep.subr.mxu0 0.0
        %3186 = vmatpush1.xpose.msra.mxu0 %v3177
        %3187 = vmatprep.subr.mxu0 0.0
        %3188 = vmatpush1.xpose.msra.mxu0 0.0
        %3189 = vmatprep.subr.mxu0 0.0
        %3190 = vmatpush1.xpose.msra.mxu0 0.0
        %3191 = vmatprep.subr.mxu0 0.0
        %3192 = vmatpush1.xpose.msra.mxu0 0.0
        %3193 = vmatprep.subr.mxu0 0.0
        %3194 = vmatpush1.xpose.msra.mxu0 0.0
        %3195 = vmatprep.subr.mxu0 0.0
        %3196 = vmatpush1.xpose.msra.mxu0 0.0
        %3197 = vmatprep.subr.mxu0 0.0
        %3198 = vmatpush1.xpose.msra.mxu0 0.0
        %3199 = vmatprep.subr.mxu0 0.0
        %3200 = vmatpush1.xpose.msra.mxu0 0.0
        %3201 = vmatprep.subr.mxu0 0.0
        %3202 = vmatpush1.xpose.msra.mxu0 0.0
        %3203 = vmatprep.subr.mxu0 0.0
        %3204 = vmatpush1.xpose.msra.mxu0 0.0
        %3205 = vmatprep.subr.mxu0 0.0
        %3206 = vmatpush1.xpose.msra.mxu0 0.0
        %3207 = vmatprep.subr.mxu0 0.0
        %3208 = vmatpush1.xpose.msra.mxu0 0.0
        %3209 = vmatprep.subr.mxu0 0.0
        %3210 = vmatpush1.xpose.msra.mxu0 0.0
        %3211 = vmatprep.subr.mxu0 0.0
        %3212 = vmatpush1.xpose.msra.mxu0 0.0
        %3213 = vmatprep.subr.mxu0 0.0
        %3214 = vmatpush1.xpose.msra.mxu0 0.0
        %3215 = vmatprep.subr.mxu0 0.0
        %3216 = vmatpush1.xpose.msra.mxu0 0.0
        %3217 = vmatprep.subr.mxu0 0.0
        %3218 = vmatpush1.xpose.msra.mxu0 0.0
        %3219 = vmatprep.subr.mxu0 0.0
        %3220 = vmatpush1.xpose.msra.mxu0 0.0
        %3221 = vmatprep.subr.mxu0 0.0
        %3222 = vmatpush1.xpose.msra.mxu0 0.0
        %3223 = vmatprep.subr.mxu0 0.0
        %3224 = vmatpush1.xpose.msra.mxu0 0.0
        %3225 = vmatprep.subr.mxu0 0.0
        %3226 = vmatpush1.xpose.msra.mxu0 0.0
        %3227 = vmatprep.subr.mxu0 0.0
        %3228 = vmatpush1.xpose.msra.mxu0 0.0
        %3229 = vmatprep.subr.mxu0 0.0
        %3230 = vmatpush1.xpose.msra.mxu0 0.0
        %3231 = vmatprep.subr.mxu0 0.0
        %3232 = vmatpush1.xpose.msra.mxu0 0.0
        %3233 = vmatprep.subr.mxu0 0.0
        %3234 = vmatpush1.xpose.msra.mxu0 0.0
        %3235 = vmatprep.subr.mxu0 0.0
        %3236 = vmatpush1.xpose.msra.mxu0 0.0
        %3237 = vmatprep.subr.mxu0 0.0
        %3238 = vmatpush1.xpose.msra.mxu0 0.0
        %3239 = vmatprep.subr.mxu0 0.0
        %3240 = vmatpush1.xpose.msra.mxu0 0.0
        %3241 = vmatprep.subr.mxu0 0.0
        %3242 = vmatpush1.xpose.msra.mxu0 0.0
        %3243 = vmatprep.mubr.f32.mxu0 0.0
        %3244 = vmatmul.mubr.f32.gmra.mrb[0].mxu0 %v3167
        %v3245 = vpop.f32.mrb[0].mxu0
        %v3246 = vadd.f32 0.0, %v3245
        %v3247 = vpop.f32.mrb[0].mxu0
        %3248 = vmatprep.mubr.f32.mxu0 0.0
        %3249 = vmatmul.mubr.f32.gmra.mrb[0].mxu0 %v3169
        %v3250 = vpop.f32.mrb[0].mxu0
        %v3251 = vadd.f32 0.0, %v3250
        %v3252 = vpop.f32.mrb[0].mxu0
        %3253 = vdwg.mxu0
        %3254 = vrot.lane.b32.xlu0 %v845, 96
        %v3255 = vpop.permute.xlu0 %3254
        %3256 = vrot.lane.b32.xlu0 %v850, 96
        %v3257 = vpop.permute.xlu0 %3256
        %3258 = vrot.lane.b32.xlu0 %v1104, 96
        %v3259 = vpop.permute.xlu0 %3258
        %3260 = vrot.lane.b32.xlu0 %v1110, 96
        %v3261 = vpop.permute.xlu0 %3260
        %3262 = vrot.lane.b32.xlu0 %v1116, 96
        %v3263 = vpop.permute.xlu0 %3262
        %3264 = vrot.lane.b32.xlu0 %v1122, 96
        %v3265 = vpop.permute.xlu0 %3264
        %v3266 = vsel %vm1174, %v3255, 0
        %v3268 = vsel %vm1174, %v3257, 0
        %v3270 = vsel %vm1174, %v3259, 0
        %v3272 = vsel %vm1174, %v3261, 0
        %v3274 = vsel %vm1174, %v3263, 0
        %v3276 = vsel %vm1174, %v3265, 0
        %3278 = vmatprep.subr.mxu0 0.0
        %3279 = vmatpush1.xpose.msra.mxu0 %v3270
        %3280 = vmatprep.subr.mxu0 0.0
        %3281 = vmatpush1.xpose.msra.mxu0 %v3272
        %3282 = vmatprep.subr.mxu0 0.0
        %3283 = vmatpush1.xpose.msra.mxu0 %v3274
        %3284 = vmatprep.subr.mxu0 0.0
        %3285 = vmatpush1.xpose.msra.mxu0 %v3276
        %3286 = vmatprep.subr.mxu0 0.0
        %3287 = vmatpush1.xpose.msra.mxu0 0.0
        %3288 = vmatprep.subr.mxu0 0.0
        %3289 = vmatpush1.xpose.msra.mxu0 0.0
        %3290 = vmatprep.subr.mxu0 0.0
        %3291 = vmatpush1.xpose.msra.mxu0 0.0
        %3292 = vmatprep.subr.mxu0 0.0
        %3293 = vmatpush1.xpose.msra.mxu0 0.0
        %3294 = vmatprep.subr.mxu0 0.0
        %3295 = vmatpush1.xpose.msra.mxu0 0.0
        %3296 = vmatprep.subr.mxu0 0.0
        %3297 = vmatpush1.xpose.msra.mxu0 0.0
        %3298 = vmatprep.subr.mxu0 0.0
        %3299 = vmatpush1.xpose.msra.mxu0 0.0
        %3300 = vmatprep.subr.mxu0 0.0
        %3301 = vmatpush1.xpose.msra.mxu0 0.0
        %3302 = vmatprep.subr.mxu0 0.0
        %3303 = vmatpush1.xpose.msra.mxu0 0.0
        %3304 = vmatprep.subr.mxu0 0.0
        %3305 = vmatpush1.xpose.msra.mxu0 0.0
        %3306 = vmatprep.subr.mxu0 0.0
        %3307 = vmatpush1.xpose.msra.mxu0 0.0
        %3308 = vmatprep.subr.mxu0 0.0
        %3309 = vmatpush1.xpose.msra.mxu0 0.0
        %3310 = vmatprep.subr.mxu0 0.0
        %3311 = vmatpush1.xpose.msra.mxu0 0.0
        %3312 = vmatprep.subr.mxu0 0.0
        %3313 = vmatpush1.xpose.msra.mxu0 0.0
        %3314 = vmatprep.subr.mxu0 0.0
        %3315 = vmatpush1.xpose.msra.mxu0 0.0
        %3316 = vmatprep.subr.mxu0 0.0
        %3317 = vmatpush1.xpose.msra.mxu0 0.0
        %3318 = vmatprep.subr.mxu0 0.0
        %3319 = vmatpush1.xpose.msra.mxu0 0.0
        %3320 = vmatprep.subr.mxu0 0.0
        %3321 = vmatpush1.xpose.msra.mxu0 0.0
        %3322 = vmatprep.subr.mxu0 0.0
        %3323 = vmatpush1.xpose.msra.mxu0 0.0
        %3324 = vmatprep.subr.mxu0 0.0
        %3325 = vmatpush1.xpose.msra.mxu0 0.0
        %3326 = vmatprep.subr.mxu0 0.0
        %3327 = vmatpush1.xpose.msra.mxu0 0.0
        %3328 = vmatprep.subr.mxu0 0.0
        %3329 = vmatpush1.xpose.msra.mxu0 0.0
        %3330 = vmatprep.subr.mxu0 0.0
        %3331 = vmatpush1.xpose.msra.mxu0 0.0
        %3332 = vmatprep.subr.mxu0 0.0
        %3333 = vmatpush1.xpose.msra.mxu0 0.0
        %3334 = vmatprep.subr.mxu0 0.0
        %3335 = vmatpush1.xpose.msra.mxu0 0.0
        %3336 = vmatprep.subr.mxu0 0.0
        %3337 = vmatpush1.xpose.msra.mxu0 0.0
        %3338 = vmatprep.subr.mxu0 0.0
        %3339 = vmatpush1.xpose.msra.mxu0 0.0
        %3340 = vmatprep.subr.mxu0 0.0
        %3341 = vmatpush1.xpose.msra.mxu0 0.0
        %3342 = vmatprep.mubr.f32.mxu0 0.0
        %3343 = vmatmul.mubr.f32.gmra.mrb[0].mxu0 %v3266
        %v3344 = vpop.f32.mrb[0].mxu0
        %v3345 = vadd.f32 0.0, %v3344
        %v3346 = vpop.f32.mrb[0].mxu0
        %3347 = vmatprep.mubr.f32.mxu0 0.0
        %3348 = vmatmul.mubr.f32.gmra.mrb[0].mxu0 %v3268
        %v3349 = vpop.f32.mrb[0].mxu0
        %v3350 = vadd.f32 0.0, %v3349
        %v3351 = vpop.f32.mrb[0].mxu0
        %3352 = vdwg.mxu0
        %3353 = vrot.lane.b32.xlu0 %v855, 96
        %v3354 = vpop.permute.xlu0 %3353
        %3355 = vrot.lane.b32.xlu0 %v860, 96
        %v3356 = vpop.permute.xlu0 %3355
        %3357 = vrot.lane.b32.xlu0 %v1128, 96
        %v3358 = vpop.permute.xlu0 %3357
        %3359 = vrot.lane.b32.xlu0 %v1134, 96
        %v3360 = vpop.permute.xlu0 %3359
        %3361 = vrot.lane.b32.xlu0 %v1140, 96
        %v3362 = vpop.permute.xlu0 %3361
        %3363 = vrot.lane.b32.xlu0 %v1146, 96
        %v3364 = vpop.permute.xlu0 %3363
        %v3365 = vsel %vm1174, %v3354, 0
        %v3367 = vsel %vm1174, %v3356, 0
        %v3369 = vsel %vm1174, %v3358, 0
        %v3371 = vsel %vm1174, %v3360, 0
        %v3373 = vsel %vm1174, %v3362, 0
        %v3375 = vsel %vm1174, %v3364, 0
        %3377 = vmatprep.subr.mxu0 0.0
        %3378 = vmatpush1.xpose.msra.mxu0 %v3369
        %3379 = vmatprep.subr.mxu0 0.0
        %3380 = vmatpush1.xpose.msra.mxu0 %v3371
        %3381 = vmatprep.subr.mxu0 0.0
        %3382 = vmatpush1.xpose.msra.mxu0 %v3373
        %3383 = vmatprep.subr.mxu0 0.0
        %3384 = vmatpush1.xpose.msra.mxu0 %v3375
        %3385 = vmatprep.subr.mxu0 0.0
        %3386 = vmatpush1.xpose.msra.mxu0 0.0
        %3387 = vmatprep.subr.mxu0 0.0
        %3388 = vmatpush1.xpose.msra.mxu0 0.0
        %3389 = vmatprep.subr.mxu0 0.0
        %3390 = vmatpush1.xpose.msra.mxu0 0.0
        %3391 = vmatprep.subr.mxu0 0.0
        %3392 = vmatpush1.xpose.msra.mxu0 0.0
        %3393 = vmatprep.subr.mxu0 0.0
        %3394 = vmatpush1.xpose.msra.mxu0 0.0
        %3395 = vmatprep.subr.mxu0 0.0
        %3396 = vmatpush1.xpose.msra.mxu0 0.0
        %3397 = vmatprep.subr.mxu0 0.0
        %3398 = vmatpush1.xpose.msra.mxu0 0.0
        %3399 = vmatprep.subr.mxu0 0.0
        %3400 = vmatpush1.xpose.msra.mxu0 0.0
        %3401 = vmatprep.subr.mxu0 0.0
        %3402 = vmatpush1.xpose.msra.mxu0 0.0
        %3403 = vmatprep.subr.mxu0 0.0
        %3404 = vmatpush1.xpose.msra.mxu0 0.0
        %3405 = vmatprep.subr.mxu0 0.0
        %3406 = vmatpush1.xpose.msra.mxu0 0.0
        %3407 = vmatprep.subr.mxu0 0.0
        %3408 = vmatpush1.xpose.msra.mxu0 0.0
        %3409 = vmatprep.subr.mxu0 0.0
        %3410 = vmatpush1.xpose.msra.mxu0 0.0
        %3411 = vmatprep.subr.mxu0 0.0
        %3412 = vmatpush1.xpose.msra.mxu0 0.0
        %3413 = vmatprep.subr.mxu0 0.0
        %3414 = vmatpush1.xpose.msra.mxu0 0.0
        %3415 = vmatprep.subr.mxu0 0.0
        %3416 = vmatpush1.xpose.msra.mxu0 0.0
        %3417 = vmatprep.subr.mxu0 0.0
        %3418 = vmatpush1.xpose.msra.mxu0 0.0
        %3419 = vmatprep.subr.mxu0 0.0
        %3420 = vmatpush1.xpose.msra.mxu0 0.0
        %3421 = vmatprep.subr.mxu0 0.0
        %3422 = vmatpush1.xpose.msra.mxu0 0.0
        %3423 = vmatprep.subr.mxu0 0.0
        %3424 = vmatpush1.xpose.msra.mxu0 0.0
        %3425 = vmatprep.subr.mxu0 0.0
        %3426 = vmatpush1.xpose.msra.mxu0 0.0
        %3427 = vmatprep.subr.mxu0 0.0
        %3428 = vmatpush1.xpose.msra.mxu0 0.0
        %3429 = vmatprep.subr.mxu0 0.0
        %3430 = vmatpush1.xpose.msra.mxu0 0.0
        %3431 = vmatprep.subr.mxu0 0.0
        %3432 = vmatpush1.xpose.msra.mxu0 0.0
        %3433 = vmatprep.subr.mxu0 0.0
        %3434 = vmatpush1.xpose.msra.mxu0 0.0
        %3435 = vmatprep.subr.mxu0 0.0
        %3436 = vmatpush1.xpose.msra.mxu0 0.0
        %3437 = vmatprep.subr.mxu0 0.0
        %3438 = vmatpush1.xpose.msra.mxu0 0.0
        %3439 = vmatprep.subr.mxu0 0.0
        %3440 = vmatpush1.xpose.msra.mxu0 0.0
        %3441 = vmatprep.mubr.f32.mxu0 0.0
        %3442 = vmatmul.mubr.f32.gmra.mrb[0].mxu0 %v3365
        %v3443 = vpop.f32.mrb[0].mxu0
        %v3444 = vadd.f32 0.0, %v3443
        %v3445 = vpop.f32.mrb[0].mxu0
        %3446 = vmatprep.mubr.f32.mxu0 0.0
        %3447 = vmatmul.mubr.f32.gmra.mrb[0].mxu0 %v3367
        %v3448 = vpop.f32.mrb[0].mxu0
        %v3449 = vadd.f32 0.0, %v3448
        %v3450 = vpop.f32.mrb[0].mxu0
        %3451 = vdwg.mxu0
        %3452 = vrot.lane.b32.xlu0 %v865, 96
        %v3453 = vpop.permute.xlu0 %3452
        %3454 = vrot.lane.b32.xlu0 %v870, 96
        %v3455 = vpop.permute.xlu0 %3454
        %3456 = vrot.lane.b32.xlu0 %v1152, 96
        %v3457 = vpop.permute.xlu0 %3456
        %3458 = vrot.lane.b32.xlu0 %v1158, 96
        %v3459 = vpop.permute.xlu0 %3458
        %3460 = vrot.lane.b32.xlu0 %v1164, 96
        %v3461 = vpop.permute.xlu0 %3460
        %3462 = vrot.lane.b32.xlu0 %v1170, 96
        %v3463 = vpop.permute.xlu0 %3462
        %v3464 = vsel %vm1174, %v3453, 0
        %v3466 = vsel %vm1174, %v3455, 0
        %v3468 = vsel %vm1174, %v3457, 0
        %v3470 = vsel %vm1174, %v3459, 0
        %v3472 = vsel %vm1174, %v3461, 0
        %v3474 = vsel %vm1174, %v3463, 0
        %3476 = vmatprep.subr.mxu0 0.0
        %3477 = vmatpush1.xpose.msra.mxu0 %v3468
        %3478 = vmatprep.subr.mxu0 0.0
        %3479 = vmatpush1.xpose.msra.mxu0 %v3470
        %3480 = vmatprep.subr.mxu0 0.0
        %3481 = vmatpush1.xpose.msra.mxu0 %v3472
        %3482 = vmatprep.subr.mxu0 0.0
        %3483 = vmatpush1.xpose.msra.mxu0 %v3474
        %3484 = vmatprep.subr.mxu0 0.0
        %3485 = vmatpush1.xpose.msra.mxu0 0.0
        %3486 = vmatprep.subr.mxu0 0.0
        %3487 = vmatpush1.xpose.msra.mxu0 0.0
        %3488 = vmatprep.subr.mxu0 0.0
        %3489 = vmatpush1.xpose.msra.mxu0 0.0
        %3490 = vmatprep.subr.mxu0 0.0
        %3491 = vmatpush1.xpose.msra.mxu0 0.0
        %3492 = vmatprep.subr.mxu0 0.0
        %3493 = vmatpush1.xpose.msra.mxu0 0.0
        %3494 = vmatprep.subr.mxu0 0.0
        %3495 = vmatpush1.xpose.msra.mxu0 0.0
        %3496 = vmatprep.subr.mxu0 0.0
        %3497 = vmatpush1.xpose.msra.mxu0 0.0
        %3498 = vmatprep.subr.mxu0 0.0
        %3499 = vmatpush1.xpose.msra.mxu0 0.0
        %3500 = vmatprep.subr.mxu0 0.0
        %3501 = vmatpush1.xpose.msra.mxu0 0.0
        %3502 = vmatprep.subr.mxu0 0.0
        %3503 = vmatpush1.xpose.msra.mxu0 0.0
        %3504 = vmatprep.subr.mxu0 0.0
        %3505 = vmatpush1.xpose.msra.mxu0 0.0
        %3506 = vmatprep.subr.mxu0 0.0
        %3507 = vmatpush1.xpose.msra.mxu0 0.0
        %3508 = vmatprep.subr.mxu0 0.0
        %3509 = vmatpush1.xpose.msra.mxu0 0.0
        %3510 = vmatprep.subr.mxu0 0.0
        %3511 = vmatpush1.xpose.msra.mxu0 0.0
        %3512 = vmatprep.subr.mxu0 0.0
        %3513 = vmatpush1.xpose.msra.mxu0 0.0
        %3514 = vmatprep.subr.mxu0 0.0
        %3515 = vmatpush1.xpose.msra.mxu0 0.0
        %3516 = vmatprep.subr.mxu0 0.0
        %3517 = vmatpush1.xpose.msra.mxu0 0.0
        %3518 = vmatprep.subr.mxu0 0.0
        %3519 = vmatpush1.xpose.msra.mxu0 0.0
        %3520 = vmatprep.subr.mxu0 0.0
        %3521 = vmatpush1.xpose.msra.mxu0 0.0
        %3522 = vmatprep.subr.mxu0 0.0
        %3523 = vmatpush1.xpose.msra.mxu0 0.0
        %3524 = vmatprep.subr.mxu0 0.0
        %3525 = vmatpush1.xpose.msra.mxu0 0.0
        %3526 = vmatprep.subr.mxu0 0.0
        %3527 = vmatpush1.xpose.msra.mxu0 0.0
        %3528 = vmatprep.subr.mxu0 0.0
        %3529 = vmatpush1.xpose.msra.mxu0 0.0
        %3530 = vmatprep.subr.mxu0 0.0
        %3531 = vmatpush1.xpose.msra.mxu0 0.0
        %3532 = vmatprep.subr.mxu0 0.0
        %3533 = vmatpush1.xpose.msra.mxu0 0.0
        %3534 = vmatprep.subr.mxu0 0.0
        %3535 = vmatpush1.xpose.msra.mxu0 0.0
        %3536 = vmatprep.subr.mxu0 0.0
        %3537 = vmatpush1.xpose.msra.mxu0 0.0
        %3538 = vmatprep.subr.mxu0 0.0
        %3539 = vmatpush1.xpose.msra.mxu0 0.0
        %3540 = vmatprep.mubr.f32.mxu0 0.0
        %3541 = vmatmul.mubr.f32.gmra.mrb[0].mxu0 %v3464
        %v3542 = vpop.f32.mrb[0].mxu0
        %v3543 = vadd.f32 0.0, %v3542
        %v3544 = vpop.f32.mrb[0].mxu0
        %3545 = vmatprep.mubr.f32.mxu0 0.0
        %3546 = vmatmul.mubr.f32.gmra.mrb[0].mxu0 %v3466
        %v3547 = vpop.f32.mrb[0].mxu0
        %v3548 = vadd.f32 0.0, %v3547
        %v3549 = vpop.f32.mrb[0].mxu0
        %3550 = vdwg.mxu0
        %v3551 = vsel %vm1174, %v2850, -inf
        %3552 = vmax.xlane.f32.xlu0 %v3551
        %v3553 = vpop.xlane.xlu0 %3552
        %v3554 = vsel %vm1174, %v2855, -inf
        %3555 = vmax.xlane.f32.xlu0 %v3554
        %v3556 = vpop.xlane.xlu0 %3555
        %v3557 = vsel %vm1174, %v2949, -inf
        %3558 = vmax.xlane.f32.xlu0 %v3557
        %v3559 = vpop.xlane.xlu0 %3558
        %v3560 = vsel %vm1174, %v2954, -inf
        %3561 = vmax.xlane.f32.xlu0 %v3560
        %v3562 = vpop.xlane.xlu0 %3561
        %v3563 = vsel %vm1174, %v3048, -inf
        %3564 = vmax.xlane.f32.xlu0 %v3563
        %v3565 = vpop.xlane.xlu0 %3564
        %v3566 = vsel %vm1174, %v3053, -inf
        %3567 = vmax.xlane.f32.xlu0 %v3566
        %v3568 = vpop.xlane.xlu0 %3567
        %v3569 = vsel %vm1174, %v3147, -inf
        %3570 = vmax.xlane.f32.xlu0 %v3569
        %v3571 = vpop.xlane.xlu0 %3570
        %v3572 = vsel %vm1174, %v3152, -inf
        %3573 = vmax.xlane.f32.xlu0 %v3572
        %v3574 = vpop.xlane.xlu0 %3573
        %v3575 = vsel %vm1174, %v3246, -inf
        %3576 = vmax.xlane.f32.xlu0 %v3575
        %v3577 = vpop.xlane.xlu0 %3576
        %v3578 = vsel %vm1174, %v3251, -inf
        %3579 = vmax.xlane.f32.xlu0 %v3578
        %v3580 = vpop.xlane.xlu0 %3579
        %v3581 = vsel %vm1174, %v3345, -inf
        %3582 = vmax.xlane.f32.xlu0 %v3581
        %v3583 = vpop.xlane.xlu0 %3582
        %v3584 = vsel %vm1174, %v3350, -inf
        %3585 = vmax.xlane.f32.xlu0 %v3584
        %v3586 = vpop.xlane.xlu0 %3585
        %v3587 = vsel %vm1174, %v3444, -inf
        %3588 = vmax.xlane.f32.xlu0 %v3587
        %v3589 = vpop.xlane.xlu0 %3588
        %v3590 = vsel %vm1174, %v3449, -inf
        %3591 = vmax.xlane.f32.xlu0 %v3590
        %v3592 = vpop.xlane.xlu0 %3591
        %v3593 = vsel %vm1174, %v3543, -inf
        %3594 = vmax.xlane.f32.xlu0 %v3593
        %v3595 = vpop.xlane.xlu0 %3594
        %v3596 = vsel %vm1174, %v3548, -inf
        %3597 = vmax.xlane.f32.xlu0 %v3596
        %v3598 = vpop.xlane.xlu0 %3597
        %v3599 = vsub.f32 %v2850, %v3553
        %v3600 = vsub.f32 %v2855, %v3556
        %v3601 = vsub.f32 %v2949, %v3559
        %v3602 = vsub.f32 %v2954, %v3562
        %v3603 = vsub.f32 %v3048, %v3565
        %v3604 = vsub.f32 %v3053, %v3568
        %v3605 = vsub.f32 %v3147, %v3571
        %v3606 = vsub.f32 %v3152, %v3574
        %v3607 = vsub.f32 %v3246, %v3577
        %v3608 = vsub.f32 %v3251, %v3580
        %v3609 = vsub.f32 %v3345, %v3583
        %v3610 = vsub.f32 %v3350, %v3586
        %v3611 = vsub.f32 %v3444, %v3589
        %v3612 = vsub.f32 %v3449, %v3592
        %v3613 = vsub.f32 %v3543, %v3595
        %v3614 = vsub.f32 %v3548, %v3598
        %v3615 = vmul.f32 %v3599, 1.442695
        %v3616 = vpow.pop %v3615
        %v3617 = vmul.f32 %v3600, 1.442695
        %v3618 = vpow.pop %v3617
        %v3619 = vmul.f32 %v3601, 1.442695
        %v3620 = vpow.pop %v3619
        %v3621 = vmul.f32 %v3602, 1.442695
        %v3622 = vpow.pop %v3621
        %v3623 = vmul.f32 %v3603, 1.442695
        %v3624 = vpow.pop %v3623
        %v3625 = vmul.f32 %v3604, 1.442695
        %v3626 = vpow.pop %v3625
        %v3627 = vmul.f32 %v3605, 1.442695
        %v3628 = vpow.pop %v3627
        %v3629 = vmul.f32 %v3606, 1.442695
        %v3630 = vpow.pop %v3629
        %v3631 = vmul.f32 %v3607, 1.442695
        %v3632 = vpow.pop %v3631
        %v3633 = vmul.f32 %v3608, 1.442695
        %v3634 = vpow.pop %v3633
        %v3635 = vmul.f32 %v3609, 1.442695
        %v3636 = vpow.pop %v3635
        %v3637 = vmul.f32 %v3610, 1.442695
        %v3638 = vpow.pop %v3637
        %v3639 = vmul.f32 %v3611, 1.442695
        %v3640 = vpow.pop %v3639
        %v3641 = vmul.f32 %v3612, 1.442695
        %v3642 = vpow.pop %v3641
        %v3643 = vmul.f32 %v3613, 1.442695
        %v3644 = vpow.pop %v3643
        %v3645 = vmul.f32 %v3614, 1.442695
        %v3646 = vpow.pop %v3645
        %v3647 = vsel %vm1174, %v3616, 0.0
        %3648 = vadd.xlane.f32.xlu0 %v3647
        %v3649 = vpop.xlane.xlu0 %3648
        %v3650 = vsel %vm1174, %v3618, 0.0
        %3651 = vadd.xlane.f32.xlu0 %v3650
        %v3652 = vpop.xlane.xlu0 %3651
        %v3653 = vsel %vm1174, %v3620, 0.0
        %3654 = vadd.xlane.f32.xlu0 %v3653
        %v3655 = vpop.xlane.xlu0 %3654
        %v3656 = vsel %vm1174, %v3622, 0.0
        %3657 = vadd.xlane.f32.xlu0 %v3656
        %v3658 = vpop.xlane.xlu0 %3657
        %v3659 = vsel %vm1174, %v3624, 0.0
        %3660 = vadd.xlane.f32.xlu0 %v3659
        %v3661 = vpop.xlane.xlu0 %3660
        %v3662 = vsel %vm1174, %v3626, 0.0
        %3663 = vadd.xlane.f32.xlu0 %v3662
        %v3664 = vpop.xlane.xlu0 %3663
        %v3665 = vsel %vm1174, %v3628, 0.0
        %3666 = vadd.xlane.f32.xlu0 %v3665
        %v3667 = vpop.xlane.xlu0 %3666
        %v3668 = vsel %vm1174, %v3630, 0.0
        %3669 = vadd.xlane.f32.xlu0 %v3668
        %v3670 = vpop.xlane.xlu0 %3669
        %v3671 = vsel %vm1174, %v3632, 0.0
        %3672 = vadd.xlane.f32.xlu0 %v3671
        %v3673 = vpop.xlane.xlu0 %3672
        %v3674 = vsel %vm1174, %v3634, 0.0
        %3675 = vadd.xlane.f32.xlu0 %v3674
        %v3676 = vpop.xlane.xlu0 %3675
        %v3677 = vsel %vm1174, %v3636, 0.0
        %3678 = vadd.xlane.f32.xlu0 %v3677
        %v3679 = vpop.xlane.xlu0 %3678
        %v3680 = vsel %vm1174, %v3638, 0.0
        %3681 = vadd.xlane.f32.xlu0 %v3680
        %v3682 = vpop.xlane.xlu0 %3681
        %v3683 = vsel %vm1174, %v3640, 0.0
        %3684 = vadd.xlane.f32.xlu0 %v3683
        %v3685 = vpop.xlane.xlu0 %3684
        %v3686 = vsel %vm1174, %v3642, 0.0
        %3687 = vadd.xlane.f32.xlu0 %v3686
        %v3688 = vpop.xlane.xlu0 %3687
        %v3689 = vsel %vm1174, %v3644, 0.0
        %3690 = vadd.xlane.f32.xlu0 %v3689
        %v3691 = vpop.xlane.xlu0 %3690
        %v3692 = vsel %vm1174, %v3646, 0.0
        %3693 = vadd.xlane.f32.xlu0 %v3692
        %v3694 = vpop.xlane.xlu0 %3693
        %v3695 = vrcp.pop %v3649
        %v3696 = vmul.f32 1.0, %v3695
        %v3697 = vrcp.pop %v3652
        %v3698 = vmul.f32 1.0, %v3697
        %v3699 = vrcp.pop %v3655
        %v3700 = vmul.f32 1.0, %v3699
        %v3701 = vrcp.pop %v3658
        %v3702 = vmul.f32 1.0, %v3701
        %v3703 = vrcp.pop %v3661
        %v3704 = vmul.f32 1.0, %v3703
        %v3705 = vrcp.pop %v3664
        %v3706 = vmul.f32 1.0, %v3705
        %v3707 = vrcp.pop %v3667
        %v3708 = vmul.f32 1.0, %v3707
        %v3709 = vrcp.pop %v3670
        %v3710 = vmul.f32 1.0, %v3709
        %v3711 = vrcp.pop %v3673
        %v3712 = vmul.f32 1.0, %v3711
        %v3713 = vrcp.pop %v3676
        %v3714 = vmul.f32 1.0, %v3713
        %v3715 = vrcp.pop %v3679
        %v3716 = vmul.f32 1.0, %v3715
        %v3717 = vrcp.pop %v3682
        %v3718 = vmul.f32 1.0, %v3717
        %v3719 = vrcp.pop %v3685
        %v3720 = vmul.f32 1.0, %v3719
        %v3721 = vrcp.pop %v3688
        %v3722 = vmul.f32 1.0, %v3721
        %v3723 = vrcp.pop %v3691
        %v3724 = vmul.f32 1.0, %v3723
        %v3725 = vrcp.pop %v3694
        %v3726 = vmul.f32 1.0, %v3725
        %3731 = vrot.lane.b32.xlu0 %v986, 96
        %v3732 = vpop.permute.xlu0 %3731
        %3733 = vrot.lane.b32.xlu0 %v992, 96
        %v3734 = vpop.permute.xlu0 %3733
        %3735 = vrot.lane.b32.xlu0 %v998, 96
        %v3736 = vpop.permute.xlu0 %3735
        %3737 = vrot.lane.b32.xlu0 %v1004, 96
        %v3738 = vpop.permute.xlu0 %3737
        %v3744 = vsel %vm1174, %v3616, 0
        %v3747 = vsel %vm1174, %v3618, 0
        %3749 = vmatprep.subr.mxu0 0.0
        %3750 = vmatpush1.msra.mxu0 %v3732
        %3751 = vmatprep.subr.mxu0 0.0
        %3752 = vmatpush1.msra.mxu0 %v3734
        %3753 = vmatprep.subr.mxu0 0.0
        %3754 = vmatpush1.msra.mxu0 %v3736
        %3755 = vmatprep.subr.mxu0 0.0
        %3756 = vmatpush1.msra.mxu0 %v3738
        %3757 = vmatprep.subr.mxu0 0.0
        %3758 = vmatpush1.msra.mxu0 0.0
        %3759 = vmatprep.subr.mxu0 0.0
        %3760 = vmatpush1.msra.mxu0 0.0
        %3761 = vmatprep.subr.mxu0 0.0
        %3762 = vmatpush1.msra.mxu0 0.0
        %3763 = vmatprep.subr.mxu0 0.0
        %3764 = vmatpush1.msra.mxu0 0.0
        %3765 = vmatprep.subr.mxu0 0.0
        %3766 = vmatpush1.msra.mxu0 0.0
        %3767 = vmatprep.subr.mxu0 0.0
        %3768 = vmatpush1.msra.mxu0 0.0
        %3769 = vmatprep.subr.mxu0 0.0
        %3770 = vmatpush1.msra.mxu0 0.0
        %3771 = vmatprep.subr.mxu0 0.0
        %3772 = vmatpush1.msra.mxu0 0.0
        %3773 = vmatprep.subr.mxu0 0.0
        %3774 = vmatpush1.msra.mxu0 0.0
        %3775 = vmatprep.subr.mxu0 0.0
        %3776 = vmatpush1.msra.mxu0 0.0
        %3777 = vmatprep.subr.mxu0 0.0
        %3778 = vmatpush1.msra.mxu0 0.0
        %3779 = vmatprep.subr.mxu0 0.0
        %3780 = vmatpush1.msra.mxu0 0.0
        %3781 = vmatprep.subr.mxu0 0.0
        %3782 = vmatpush1.msra.mxu0 0.0
        %3783 = vmatprep.subr.mxu0 0.0
        %3784 = vmatpush1.msra.mxu0 0.0
        %3785 = vmatprep.subr.mxu0 0.0
        %3786 = vmatpush1.msra.mxu0 0.0
        %3787 = vmatprep.subr.mxu0 0.0
        %3788 = vmatpush1.msra.mxu0 0.0
        %3789 = vmatprep.subr.mxu0 0.0
        %3790 = vmatpush1.msra.mxu0 0.0
        %3791 = vmatprep.subr.mxu0 0.0
        %3792 = vmatpush1.msra.mxu0 0.0
        %3793 = vmatprep.subr.mxu0 0.0
        %3794 = vmatpush1.msra.mxu0 0.0
        %3795 = vmatprep.subr.mxu0 0.0
        %3796 = vmatpush1.msra.mxu0 0.0
        %3797 = vmatprep.subr.mxu0 0.0
        %3798 = vmatpush1.msra.mxu0 0.0
        %3799 = vmatprep.subr.mxu0 0.0
        %3800 = vmatpush1.msra.mxu0 0.0
        %3801 = vmatprep.subr.mxu0 0.0
        %3802 = vmatpush1.msra.mxu0 0.0
        %3803 = vmatprep.subr.mxu0 0.0
        %3804 = vmatpush1.msra.mxu0 0.0
        %3805 = vmatprep.subr.mxu0 0.0
        %3806 = vmatpush1.msra.mxu0 0.0
        %3807 = vmatprep.subr.mxu0 0.0
        %3808 = vmatpush1.msra.mxu0 0.0
        %3809 = vmatprep.subr.mxu0 0.0
        %3810 = vmatpush1.msra.mxu0 0.0
        %3811 = vmatprep.subr.mxu0 0.0
        %3812 = vmatpush1.msra.mxu0 0.0
        %3813 = vmatprep.mubr.f32.mxu0 0.0
        %3814 = vmatmul.mubr.f32.gmra.mrb[0].mxu0 %v3744
        %v3815 = vpop.f32.mrb[0].mxu0
        %v3816 = vadd.f32 0.0, %v3815
        %v3817 = vpop.f32.mrb[0].mxu0
        %3818 = vmatprep.mubr.f32.mxu0 0.0
        %3819 = vmatmul.mubr.f32.gmra.mrb[0].mxu0 %v3747
        %v3820 = vpop.f32.mrb[0].mxu0
        %v3821 = vadd.f32 0.0, %v3820
        %v3822 = vpop.f32.mrb[0].mxu0
        %3823 = vdwg.mxu0
        %3828 = vrot.lane.b32.xlu0 %v1010, 96
        %v3829 = vpop.permute.xlu0 %3828
        %3830 = vrot.lane.b32.xlu0 %v1016, 96
        %v3831 = vpop.permute.xlu0 %3830
        %3832 = vrot.lane.b32.xlu0 %v1022, 96
        %v3833 = vpop.permute.xlu0 %3832
        %3834 = vrot.lane.b32.xlu0 %v1028, 96
        %v3835 = vpop.permute.xlu0 %3834
        %v3841 = vsel %vm1174, %v3620, 0
        %v3844 = vsel %vm1174, %v3622, 0
        %3846 = vmatprep.subr.mxu0 0.0
        %3847 = vmatpush1.msra.mxu0 %v3829
        %3848 = vmatprep.subr.mxu0 0.0
        %3849 = vmatpush1.msra.mxu0 %v3831
        %3850 = vmatprep.subr.mxu0 0.0
        %3851 = vmatpush1.msra.mxu0 %v3833
        %3852 = vmatprep.subr.mxu0 0.0
        %3853 = vmatpush1.msra.mxu0 %v3835
        %3854 = vmatprep.subr.mxu0 0.0
        %3855 = vmatpush1.msra.mxu0 0.0
        %3856 = vmatprep.subr.mxu0 0.0
        %3857 = vmatpush1.msra.mxu0 0.0
        %3858 = vmatprep.subr.mxu0 0.0
        %3859 = vmatpush1.msra.mxu0 0.0
        %3860 = vmatprep.subr.mxu0 0.0
        %3861 = vmatpush1.msra.mxu0 0.0
        %3862 = vmatprep.subr.mxu0 0.0
        %3863 = vmatpush1.msra.mxu0 0.0
        %3864 = vmatprep.subr.mxu0 0.0
        %3865 = vmatpush1.msra.mxu0 0.0
        %3866 = vmatprep.subr.mxu0 0.0
        %3867 = vmatpush1.msra.mxu0 0.0
        %3868 = vmatprep.subr.mxu0 0.0
        %3869 = vmatpush1.msra.mxu0 0.0
        %3870 = vmatprep.subr.mxu0 0.0
        %3871 = vmatpush1.msra.mxu0 0.0
        %3872 = vmatprep.subr.mxu0 0.0
        %3873 = vmatpush1.msra.mxu0 0.0
        %3874 = vmatprep.subr.mxu0 0.0
        %3875 = vmatpush1.msra.mxu0 0.0
        %3876 = vmatprep.subr.mxu0 0.0
        %3877 = vmatpush1.msra.mxu0 0.0
        %3878 = vmatprep.subr.mxu0 0.0
        %3879 = vmatpush1.msra.mxu0 0.0
        %3880 = vmatprep.subr.mxu0 0.0
        %3881 = vmatpush1.msra.mxu0 0.0
        %3882 = vmatprep.subr.mxu0 0.0
        %3883 = vmatpush1.msra.mxu0 0.0
        %3884 = vmatprep.subr.mxu0 0.0
        %3885 = vmatpush1.msra.mxu0 0.0
        %3886 = vmatprep.subr.mxu0 0.0
        %3887 = vmatpush1.msra.mxu0 0.0
        %3888 = vmatprep.subr.mxu0 0.0
        %3889 = vmatpush1.msra.mxu0 0.0
        %3890 = vmatprep.subr.mxu0 0.0
        %3891 = vmatpush1.msra.mxu0 0.0
        %3892 = vmatprep.subr.mxu0 0.0
        %3893 = vmatpush1.msra.mxu0 0.0
        %3894 = vmatprep.subr.mxu0 0.0
        %3895 = vmatpush1.msra.mxu0 0.0
        %3896 = vmatprep.subr.mxu0 0.0
        %3897 = vmatpush1.msra.mxu0 0.0
        %3898 = vmatprep.subr.mxu0 0.0
        %3899 = vmatpush1.msra.mxu0 0.0
        %3900 = vmatprep.subr.mxu0 0.0
        %3901 = vmatpush1.msra.mxu0 0.0
        %3902 = vmatprep.subr.mxu0 0.0
        %3903 = vmatpush1.msra.mxu0 0.0
        %3904 = vmatprep.subr.mxu0 0.0
        %3905 = vmatpush1.msra.mxu0 0.0
        %3906 = vmatprep.subr.mxu0 0.0
        %3907 = vmatpush1.msra.mxu0 0.0
        %3908 = vmatprep.subr.mxu0 0.0
        %3909 = vmatpush1.msra.mxu0 0.0
        %3910 = vmatprep.mubr.f32.mxu0 0.0
        %3911 = vmatmul.mubr.f32.gmra.mrb[0].mxu0 %v3841
        %v3912 = vpop.f32.mrb[0].mxu0
        %v3913 = vadd.f32 0.0, %v3912
        %v3914 = vpop.f32.mrb[0].mxu0
        %3915 = vmatprep.mubr.f32.mxu0 0.0
        %3916 = vmatmul.mubr.f32.gmra.mrb[0].mxu0 %v3844
        %v3917 = vpop.f32.mrb[0].mxu0
        %v3918 = vadd.f32 0.0, %v3917
        %v3919 = vpop.f32.mrb[0].mxu0
        %3920 = vdwg.mxu0
        %3925 = vrot.lane.b32.xlu0 %v1034, 96
        %v3926 = vpop.permute.xlu0 %3925
        %3927 = vrot.lane.b32.xlu0 %v1040, 96
        %v3928 = vpop.permute.xlu0 %3927
        %3929 = vrot.lane.b32.xlu0 %v1046, 96
        %v3930 = vpop.permute.xlu0 %3929
        %3931 = vrot.lane.b32.xlu0 %v1052, 96
        %v3932 = vpop.permute.xlu0 %3931
        %v3938 = vsel %vm1174, %v3624, 0
        %v3941 = vsel %vm1174, %v3626, 0
        %3943 = vmatprep.subr.mxu0 0.0
        %3944 = vmatpush1.msra.mxu0 %v3926
        %3945 = vmatprep.subr.mxu0 0.0
        %3946 = vmatpush1.msra.mxu0 %v3928
        %3947 = vmatprep.subr.mxu0 0.0
        %3948 = vmatpush1.msra.mxu0 %v3930
        %3949 = vmatprep.subr.mxu0 0.0
        %3950 = vmatpush1.msra.mxu0 %v3932
        %3951 = vmatprep.subr.mxu0 0.0
        %3952 = vmatpush1.msra.mxu0 0.0
        %3953 = vmatprep.subr.mxu0 0.0
        %3954 = vmatpush1.msra.mxu0 0.0
        %3955 = vmatprep.subr.mxu0 0.0
        %3956 = vmatpush1.msra.mxu0 0.0
        %3957 = vmatprep.subr.mxu0 0.0
        %3958 = vmatpush1.msra.mxu0 0.0
        %3959 = vmatprep.subr.mxu0 0.0
        %3960 = vmatpush1.msra.mxu0 0.0
        %3961 = vmatprep.subr.mxu0 0.0
        %3962 = vmatpush1.msra.mxu0 0.0
        %3963 = vmatprep.subr.mxu0 0.0
        %3964 = vmatpush1.msra.mxu0 0.0
        %3965 = vmatprep.subr.mxu0 0.0
        %3966 = vmatpush1.msra.mxu0 0.0
        %3967 = vmatprep.subr.mxu0 0.0
        %3968 = vmatpush1.msra.mxu0 0.0
        %3969 = vmatprep.subr.mxu0 0.0
        %3970 = vmatpush1.msra.mxu0 0.0
        %3971 = vmatprep.subr.mxu0 0.0
        %3972 = vmatpush1.msra.mxu0 0.0
        %3973 = vmatprep.subr.mxu0 0.0
        %3974 = vmatpush1.msra.mxu0 0.0
        %3975 = vmatprep.subr.mxu0 0.0
        %3976 = vmatpush1.msra.mxu0 0.0
        %3977 = vmatprep.subr.mxu0 0.0
        %3978 = vmatpush1.msra.mxu0 0.0
        %3979 = vmatprep.subr.mxu0 0.0
        %3980 = vmatpush1.msra.mxu0 0.0
        %3981 = vmatprep.subr.mxu0 0.0
        %3982 = vmatpush1.msra.mxu0 0.0
        %3983 = vmatprep.subr.mxu0 0.0
        %3984 = vmatpush1.msra.mxu0 0.0
        %3985 = vmatprep.subr.mxu0 0.0
        %3986 = vmatpush1.msra.mxu0 0.0
        %3987 = vmatprep.subr.mxu0 0.0
        %3988 = vmatpush1.msra.mxu0 0.0
        %3989 = vmatprep.subr.mxu0 0.0
        %3990 = vmatpush1.msra.mxu0 0.0
        %3991 = vmatprep.subr.mxu0 0.0
        %3992 = vmatpush1.msra.mxu0 0.0
        %3993 = vmatprep.subr.mxu0 0.0
        %3994 = vmatpush1.msra.mxu0 0.0
        %3995 = vmatprep.subr.mxu0 0.0
        %3996 = vmatpush1.msra.mxu0 0.0
        %3997 = vmatprep.subr.mxu0 0.0
        %3998 = vmatpush1.msra.mxu0 0.0
        %3999 = vmatprep.subr.mxu0 0.0
        %4000 = vmatpush1.msra.mxu0 0.0
        %4001 = vmatprep.subr.mxu0 0.0
        %4002 = vmatpush1.msra.mxu0 0.0
        %4003 = vmatprep.subr.mxu0 0.0
        %4004 = vmatpush1.msra.mxu0 0.0
        %4005 = vmatprep.subr.mxu0 0.0
        %4006 = vmatpush1.msra.mxu0 0.0
        %4007 = vmatprep.mubr.f32.mxu0 0.0
        %4008 = vmatmul.mubr.f32.gmra.mrb[0].mxu0 %v3938
        %v4009 = vpop.f32.mrb[0].mxu0
        %v4010 = vadd.f32 0.0, %v4009
        %v4011 = vpop.f32.mrb[0].mxu0
        %4012 = vmatprep.mubr.f32.mxu0 0.0
        %4013 = vmatmul.mubr.f32.gmra.mrb[0].mxu0 %v3941
        %v4014 = vpop.f32.mrb[0].mxu0
        %v4015 = vadd.f32 0.0, %v4014
        %v4016 = vpop.f32.mrb[0].mxu0
        %4017 = vdwg.mxu0
        %4022 = vrot.lane.b32.xlu0 %v1058, 96
        %v4023 = vpop.permute.xlu0 %4022
        %4024 = vrot.lane.b32.xlu0 %v1064, 96
        %v4025 = vpop.permute.xlu0 %4024
        %4026 = vrot.lane.b32.xlu0 %v1070, 96
        %v4027 = vpop.permute.xlu0 %4026
        %4028 = vrot.lane.b32.xlu0 %v1076, 96
        %v4029 = vpop.permute.xlu0 %4028
        %v4035 = vsel %vm1174, %v3628, 0
        %v4038 = vsel %vm1174, %v3630, 0
        %4040 = vmatprep.subr.mxu0 0.0
        %4041 = vmatpush1.msra.mxu0 %v4023
        %4042 = vmatprep.subr.mxu0 0.0
        %4043 = vmatpush1.msra.mxu0 %v4025
        %4044 = vmatprep.subr.mxu0 0.0
        %4045 = vmatpush1.msra.mxu0 %v4027
        %4046 = vmatprep.subr.mxu0 0.0
        %4047 = vmatpush1.msra.mxu0 %v4029
        %4048 = vmatprep.subr.mxu0 0.0
        %4049 = vmatpush1.msra.mxu0 0.0
        %4050 = vmatprep.subr.mxu0 0.0
        %4051 = vmatpush1.msra.mxu0 0.0
        %4052 = vmatprep.subr.mxu0 0.0
        %4053 = vmatpush1.msra.mxu0 0.0
        %4054 = vmatprep.subr.mxu0 0.0
        %4055 = vmatpush1.msra.mxu0 0.0
        %4056 = vmatprep.subr.mxu0 0.0
        %4057 = vmatpush1.msra.mxu0 0.0
        %4058 = vmatprep.subr.mxu0 0.0
        %4059 = vmatpush1.msra.mxu0 0.0
        %4060 = vmatprep.subr.mxu0 0.0
        %4061 = vmatpush1.msra.mxu0 0.0
        %4062 = vmatprep.subr.mxu0 0.0
        %4063 = vmatpush1.msra.mxu0 0.0
        %4064 = vmatprep.subr.mxu0 0.0
        %4065 = vmatpush1.msra.mxu0 0.0
        %4066 = vmatprep.subr.mxu0 0.0
        %4067 = vmatpush1.msra.mxu0 0.0
        %4068 = vmatprep.subr.mxu0 0.0
        %4069 = vmatpush1.msra.mxu0 0.0
        %4070 = vmatprep.subr.mxu0 0.0
        %4071 = vmatpush1.msra.mxu0 0.0
        %4072 = vmatprep.subr.mxu0 0.0
        %4073 = vmatpush1.msra.mxu0 0.0
        %4074 = vmatprep.subr.mxu0 0.0
        %4075 = vmatpush1.msra.mxu0 0.0
        %4076 = vmatprep.subr.mxu0 0.0
        %4077 = vmatpush1.msra.mxu0 0.0
        %4078 = vmatprep.subr.mxu0 0.0
        %4079 = vmatpush1.msra.mxu0 0.0
        %4080 = vmatprep.subr.mxu0 0.0
        %4081 = vmatpush1.msra.mxu0 0.0
        %4082 = vmatprep.subr.mxu0 0.0
        %4083 = vmatpush1.msra.mxu0 0.0
        %4084 = vmatprep.subr.mxu0 0.0
        %4085 = vmatpush1.msra.mxu0 0.0
        %4086 = vmatprep.subr.mxu0 0.0
        %4087 = vmatpush1.msra.mxu0 0.0
        %4088 = vmatprep.subr.mxu0 0.0
        %4089 = vmatpush1.msra.mxu0 0.0
        %4090 = vmatprep.subr.mxu0 0.0
        %4091 = vmatpush1.msra.mxu0 0.0
        %4092 = vmatprep.subr.mxu0 0.0
        %4093 = vmatpush1.msra.mxu0 0.0
        %4094 = vmatprep.subr.mxu0 0.0
        %4095 = vmatpush1.msra.mxu0 0.0
        %4096 = vmatprep.subr.mxu0 0.0
        %4097 = vmatpush1.msra.mxu0 0.0
        %4098 = vmatprep.subr.mxu0 0.0
        %4099 = vmatpush1.msra.mxu0 0.0
        %4100 = vmatprep.subr.mxu0 0.0
        %4101 = vmatpush1.msra.mxu0 0.0
        %4102 = vmatprep.subr.mxu0 0.0
        %4103 = vmatpush1.msra.mxu0 0.0
        %4104 = vmatprep.mubr.f32.mxu0 0.0
        %4105 = vmatmul.mubr.f32.gmra.mrb[0].mxu0 %v4035
        %v4106 = vpop.f32.mrb[0].mxu0
        %v4107 = vadd.f32 0.0, %v4106
        %v4108 = vpop.f32.mrb[0].mxu0
        %4109 = vmatprep.mubr.f32.mxu0 0.0
        %4110 = vmatmul.mubr.f32.gmra.mrb[0].mxu0 %v4038
        %v4111 = vpop.f32.mrb[0].mxu0
        %v4112 = vadd.f32 0.0, %v4111
        %v4113 = vpop.f32.mrb[0].mxu0
        %4114 = vdwg.mxu0
        %4119 = vrot.lane.b32.xlu0 %v1082, 96
        %v4120 = vpop.permute.xlu0 %4119
        %4121 = vrot.lane.b32.xlu0 %v1088, 96
        %v4122 = vpop.permute.xlu0 %4121
        %4123 = vrot.lane.b32.xlu0 %v1094, 96
        %v4124 = vpop.permute.xlu0 %4123
        %4125 = vrot.lane.b32.xlu0 %v1100, 96
        %v4126 = vpop.permute.xlu0 %4125
        %v4132 = vsel %vm1174, %v3632, 0
        %v4135 = vsel %vm1174, %v3634, 0
        %4137 = vmatprep.subr.mxu0 0.0
        %4138 = vmatpush1.msra.mxu0 %v4120
        %4139 = vmatprep.subr.mxu0 0.0
        %4140 = vmatpush1.msra.mxu0 %v4122
        %4141 = vmatprep.subr.mxu0 0.0
        %4142 = vmatpush1.msra.mxu0 %v4124
        %4143 = vmatprep.subr.mxu0 0.0
        %4144 = vmatpush1.msra.mxu0 %v4126
        %4145 = vmatprep.subr.mxu0 0.0
        %4146 = vmatpush1.msra.mxu0 0.0
        %4147 = vmatprep.subr.mxu0 0.0
        %4148 = vmatpush1.msra.mxu0 0.0
        %4149 = vmatprep.subr.mxu0 0.0
        %4150 = vmatpush1.msra.mxu0 0.0
        %4151 = vmatprep.subr.mxu0 0.0
        %4152 = vmatpush1.msra.mxu0 0.0
        %4153 = vmatprep.subr.mxu0 0.0
        %4154 = vmatpush1.msra.mxu0 0.0
        %4155 = vmatprep.subr.mxu0 0.0
        %4156 = vmatpush1.msra.mxu0 0.0
        %4157 = vmatprep.subr.mxu0 0.0
        %4158 = vmatpush1.msra.mxu0 0.0
        %4159 = vmatprep.subr.mxu0 0.0
        %4160 = vmatpush1.msra.mxu0 0.0
        %4161 = vmatprep.subr.mxu0 0.0
        %4162 = vmatpush1.msra.mxu0 0.0
        %4163 = vmatprep.subr.mxu0 0.0
        %4164 = vmatpush1.msra.mxu0 0.0
        %4165 = vmatprep.subr.mxu0 0.0
        %4166 = vmatpush1.msra.mxu0 0.0
        %4167 = vmatprep.subr.mxu0 0.0
        %4168 = vmatpush1.msra.mxu0 0.0
        %4169 = vmatprep.subr.mxu0 0.0
        %4170 = vmatpush1.msra.mxu0 0.0
        %4171 = vmatprep.subr.mxu0 0.0
        %4172 = vmatpush1.msra.mxu0 0.0
        %4173 = vmatprep.subr.mxu0 0.0
        %4174 = vmatpush1.msra.mxu0 0.0
        %4175 = vmatprep.subr.mxu0 0.0
        %4176 = vmatpush1.msra.mxu0 0.0
        %4177 = vmatprep.subr.mxu0 0.0
        %4178 = vmatpush1.msra.mxu0 0.0
        %4179 = vmatprep.subr.mxu0 0.0
        %4180 = vmatpush1.msra.mxu0 0.0
        %4181 = vmatprep.subr.mxu0 0.0
        %4182 = vmatpush1.msra.mxu0 0.0
        %4183 = vmatprep.subr.mxu0 0.0
        %4184 = vmatpush1.msra.mxu0 0.0
        %4185 = vmatprep.subr.mxu0 0.0
        %4186 = vmatpush1.msra.mxu0 0.0
        %4187 = vmatprep.subr.mxu0 0.0
        %4188 = vmatpush1.msra.mxu0 0.0
        %4189 = vmatprep.subr.mxu0 0.0
        %4190 = vmatpush1.msra.mxu0 0.0
        %4191 = vmatprep.subr.mxu0 0.0
        %4192 = vmatpush1.msra.mxu0 0.0
        %4193 = vmatprep.subr.mxu0 0.0
        %4194 = vmatpush1.msra.mxu0 0.0
        %4195 = vmatprep.subr.mxu0 0.0
        %4196 = vmatpush1.msra.mxu0 0.0
        %4197 = vmatprep.subr.mxu0 0.0
        %4198 = vmatpush1.msra.mxu0 0.0
        %4199 = vmatprep.subr.mxu0 0.0
        %4200 = vmatpush1.msra.mxu0 0.0
        %4201 = vmatprep.mubr.f32.mxu0 0.0
        %4202 = vmatmul.mubr.f32.gmra.mrb[0].mxu0 %v4132
        %v4203 = vpop.f32.mrb[0].mxu0
        %v4204 = vadd.f32 0.0, %v4203
        %v4205 = vpop.f32.mrb[0].mxu0
        %4206 = vmatprep.mubr.f32.mxu0 0.0
        %4207 = vmatmul.mubr.f32.gmra.mrb[0].mxu0 %v4135
        %v4208 = vpop.f32.mrb[0].mxu0
        %v4209 = vadd.f32 0.0, %v4208
        %v4210 = vpop.f32.mrb[0].mxu0
        %4211 = vdwg.mxu0
        %4216 = vrot.lane.b32.xlu0 %v1106, 96
        %v4217 = vpop.permute.xlu0 %4216
        %4218 = vrot.lane.b32.xlu0 %v1112, 96
        %v4219 = vpop.permute.xlu0 %4218
        %4220 = vrot.lane.b32.xlu0 %v1118, 96
        %v4221 = vpop.permute.xlu0 %4220
        %4222 = vrot.lane.b32.xlu0 %v1124, 96
        %v4223 = vpop.permute.xlu0 %4222
        %v4229 = vsel %vm1174, %v3636, 0
        %v4232 = vsel %vm1174, %v3638, 0
        %4234 = vmatprep.subr.mxu0 0.0
        %4235 = vmatpush1.msra.mxu0 %v4217
        %4236 = vmatprep.subr.mxu0 0.0
        %4237 = vmatpush1.msra.mxu0 %v4219
        %4238 = vmatprep.subr.mxu0 0.0
        %4239 = vmatpush1.msra.mxu0 %v4221
        %4240 = vmatprep.subr.mxu0 0.0
        %4241 = vmatpush1.msra.mxu0 %v4223
        %4242 = vmatprep.subr.mxu0 0.0
        %4243 = vmatpush1.msra.mxu0 0.0
        %4244 = vmatprep.subr.mxu0 0.0
        %4245 = vmatpush1.msra.mxu0 0.0
        %4246 = vmatprep.subr.mxu0 0.0
        %4247 = vmatpush1.msra.mxu0 0.0
        %4248 = vmatprep.subr.mxu0 0.0
        %4249 = vmatpush1.msra.mxu0 0.0
        %4250 = vmatprep.subr.mxu0 0.0
        %4251 = vmatpush1.msra.mxu0 0.0
        %4252 = vmatprep.subr.mxu0 0.0
        %4253 = vmatpush1.msra.mxu0 0.0
        %4254 = vmatprep.subr.mxu0 0.0
        %4255 = vmatpush1.msra.mxu0 0.0
        %4256 = vmatprep.subr.mxu0 0.0
        %4257 = vmatpush1.msra.mxu0 0.0
        %4258 = vmatprep.subr.mxu0 0.0
        %4259 = vmatpush1.msra.mxu0 0.0
        %4260 = vmatprep.subr.mxu0 0.0
        %4261 = vmatpush1.msra.mxu0 0.0
        %4262 = vmatprep.subr.mxu0 0.0
        %4263 = vmatpush1.msra.mxu0 0.0
        %4264 = vmatprep.subr.mxu0 0.0
        %4265 = vmatpush1.msra.mxu0 0.0
        %4266 = vmatprep.subr.mxu0 0.0
        %4267 = vmatpush1.msra.mxu0 0.0
        %4268 = vmatprep.subr.mxu0 0.0
        %4269 = vmatpush1.msra.mxu0 0.0
        %4270 = vmatprep.subr.mxu0 0.0
        %4271 = vmatpush1.msra.mxu0 0.0
        %4272 = vmatprep.subr.mxu0 0.0
        %4273 = vmatpush1.msra.mxu0 0.0
        %4274 = vmatprep.subr.mxu0 0.0
        %4275 = vmatpush1.msra.mxu0 0.0
        %4276 = vmatprep.subr.mxu0 0.0
        %4277 = vmatpush1.msra.mxu0 0.0
        %4278 = vmatprep.subr.mxu0 0.0
        %4279 = vmatpush1.msra.mxu0 0.0
        %4280 = vmatprep.subr.mxu0 0.0
        %4281 = vmatpush1.msra.mxu0 0.0
        %4282 = vmatprep.subr.mxu0 0.0
        %4283 = vmatpush1.msra.mxu0 0.0
        %4284 = vmatprep.subr.mxu0 0.0
        %4285 = vmatpush1.msra.mxu0 0.0
        %4286 = vmatprep.subr.mxu0 0.0
        %4287 = vmatpush1.msra.mxu0 0.0
        %4288 = vmatprep.subr.mxu0 0.0
        %4289 = vmatpush1.msra.mxu0 0.0
        %4290 = vmatprep.subr.mxu0 0.0
        %4291 = vmatpush1.msra.mxu0 0.0
        %4292 = vmatprep.subr.mxu0 0.0
        %4293 = vmatpush1.msra.mxu0 0.0
        %4294 = vmatprep.subr.mxu0 0.0
        %4295 = vmatpush1.msra.mxu0 0.0
        %4296 = vmatprep.subr.mxu0 0.0
        %4297 = vmatpush1.msra.mxu0 0.0
        %4298 = vmatprep.mubr.f32.mxu0 0.0
        %4299 = vmatmul.mubr.f32.gmra.mrb[0].mxu0 %v4229
        %v4300 = vpop.f32.mrb[0].mxu0
        %v4301 = vadd.f32 0.0, %v4300
        %v4302 = vpop.f32.mrb[0].mxu0
        %4303 = vmatprep.mubr.f32.mxu0 0.0
        %4304 = vmatmul.mubr.f32.gmra.mrb[0].mxu0 %v4232
        %v4305 = vpop.f32.mrb[0].mxu0
        %v4306 = vadd.f32 0.0, %v4305
        %v4307 = vpop.f32.mrb[0].mxu0
        %4308 = vdwg.mxu0
        %4313 = vrot.lane.b32.xlu0 %v1130, 96
        %v4314 = vpop.permute.xlu0 %4313
        %4315 = vrot.lane.b32.xlu0 %v1136, 96
        %v4316 = vpop.permute.xlu0 %4315
        %4317 = vrot.lane.b32.xlu0 %v1142, 96
        %v4318 = vpop.permute.xlu0 %4317
        %4319 = vrot.lane.b32.xlu0 %v1148, 96
        %v4320 = vpop.permute.xlu0 %4319
        %v4326 = vsel %vm1174, %v3640, 0
        %v4329 = vsel %vm1174, %v3642, 0
        %4331 = vmatprep.subr.mxu0 0.0
        %4332 = vmatpush1.msra.mxu0 %v4314
        %4333 = vmatprep.subr.mxu0 0.0
        %4334 = vmatpush1.msra.mxu0 %v4316
        %4335 = vmatprep.subr.mxu0 0.0
        %4336 = vmatpush1.msra.mxu0 %v4318
        %4337 = vmatprep.subr.mxu0 0.0
        %4338 = vmatpush1.msra.mxu0 %v4320
        %4339 = vmatprep.subr.mxu0 0.0
        %4340 = vmatpush1.msra.mxu0 0.0
        %4341 = vmatprep.subr.mxu0 0.0
        %4342 = vmatpush1.msra.mxu0 0.0
        %4343 = vmatprep.subr.mxu0 0.0
        %4344 = vmatpush1.msra.mxu0 0.0
        %4345 = vmatprep.subr.mxu0 0.0
        %4346 = vmatpush1.msra.mxu0 0.0
        %4347 = vmatprep.subr.mxu0 0.0
        %4348 = vmatpush1.msra.mxu0 0.0
        %4349 = vmatprep.subr.mxu0 0.0
        %4350 = vmatpush1.msra.mxu0 0.0
        %4351 = vmatprep.subr.mxu0 0.0
        %4352 = vmatpush1.msra.mxu0 0.0
        %4353 = vmatprep.subr.mxu0 0.0
        %4354 = vmatpush1.msra.mxu0 0.0
        %4355 = vmatprep.subr.mxu0 0.0
        %4356 = vmatpush1.msra.mxu0 0.0
        %4357 = vmatprep.subr.mxu0 0.0
        %4358 = vmatpush1.msra.mxu0 0.0
        %4359 = vmatprep.subr.mxu0 0.0
        %4360 = vmatpush1.msra.mxu0 0.0
        %4361 = vmatprep.subr.mxu0 0.0
        %4362 = vmatpush1.msra.mxu0 0.0
        %4363 = vmatprep.subr.mxu0 0.0
        %4364 = vmatpush1.msra.mxu0 0.0
        %4365 = vmatprep.subr.mxu0 0.0
        %4366 = vmatpush1.msra.mxu0 0.0
        %4367 = vmatprep.subr.mxu0 0.0
        %4368 = vmatpush1.msra.mxu0 0.0
        %4369 = vmatprep.subr.mxu0 0.0
        %4370 = vmatpush1.msra.mxu0 0.0
        %4371 = vmatprep.subr.mxu0 0.0
        %4372 = vmatpush1.msra.mxu0 0.0
        %4373 = vmatprep.subr.mxu0 0.0
        %4374 = vmatpush1.msra.mxu0 0.0
        %4375 = vmatprep.subr.mxu0 0.0
        %4376 = vmatpush1.msra.mxu0 0.0
        %4377 = vmatprep.subr.mxu0 0.0
        %4378 = vmatpush1.msra.mxu0 0.0
        %4379 = vmatprep.subr.mxu0 0.0
        %4380 = vmatpush1.msra.mxu0 0.0
        %4381 = vmatprep.subr.mxu0 0.0
        %4382 = vmatpush1.msra.mxu0 0.0
        %4383 = vmatprep.subr.mxu0 0.0
        %4384 = vmatpush1.msra.mxu0 0.0
        %4385 = vmatprep.subr.mxu0 0.0
        %4386 = vmatpush1.msra.mxu0 0.0
        %4387 = vmatprep.subr.mxu0 0.0
        %4388 = vmatpush1.msra.mxu0 0.0
        %4389 = vmatprep.subr.mxu0 0.0
        %4390 = vmatpush1.msra.mxu0 0.0
        %4391 = vmatprep.subr.mxu0 0.0
        %4392 = vmatpush1.msra.mxu0 0.0
        %4393 = vmatprep.subr.mxu0 0.0
        %4394 = vmatpush1.msra.mxu0 0.0
        %4395 = vmatprep.mubr.f32.mxu0 0.0
        %4396 = vmatmul.mubr.f32.gmra.mrb[0].mxu0 %v4326
        %v4397 = vpop.f32.mrb[0].mxu0
        %v4398 = vadd.f32 0.0, %v4397
        %v4399 = vpop.f32.mrb[0].mxu0
        %4400 = vmatprep.mubr.f32.mxu0 0.0
        %4401 = vmatmul.mubr.f32.gmra.mrb[0].mxu0 %v4329
        %v4402 = vpop.f32.mrb[0].mxu0
        %v4403 = vadd.f32 0.0, %v4402
        %v4404 = vpop.f32.mrb[0].mxu0
        %4405 = vdwg.mxu0
        %4410 = vrot.lane.b32.xlu0 %v1154, 96
        %v4411 = vpop.permute.xlu0 %4410
        %4412 = vrot.lane.b32.xlu0 %v1160, 96
        %v4413 = vpop.permute.xlu0 %4412
        %4414 = vrot.lane.b32.xlu0 %v1166, 96
        %v4415 = vpop.permute.xlu0 %4414
        %4416 = vrot.lane.b32.xlu0 %v1172, 96
        %v4417 = vpop.permute.xlu0 %4416
        %v4423 = vsel %vm1174, %v3644, 0
        %v4426 = vsel %vm1174, %v3646, 0
        %4428 = vmatprep.subr.mxu0 0.0
        %4429 = vmatpush1.msra.mxu0 %v4411
        %4430 = vmatprep.subr.mxu0 0.0
        %4431 = vmatpush1.msra.mxu0 %v4413
        %4432 = vmatprep.subr.mxu0 0.0
        %4433 = vmatpush1.msra.mxu0 %v4415
        %4434 = vmatprep.subr.mxu0 0.0
        %4435 = vmatpush1.msra.mxu0 %v4417
        %4436 = vmatprep.subr.mxu0 0.0
        %4437 = vmatpush1.msra.mxu0 0.0
        %4438 = vmatprep.subr.mxu0 0.0
        %4439 = vmatpush1.msra.mxu0 0.0
        %4440 = vmatprep.subr.mxu0 0.0
        %4441 = vmatpush1.msra.mxu0 0.0
        %4442 = vmatprep.subr.mxu0 0.0
        %4443 = vmatpush1.msra.mxu0 0.0
        %4444 = vmatprep.subr.mxu0 0.0
        %4445 = vmatpush1.msra.mxu0 0.0
        %4446 = vmatprep.subr.mxu0 0.0
        %4447 = vmatpush1.msra.mxu0 0.0
        %4448 = vmatprep.subr.mxu0 0.0
        %4449 = vmatpush1.msra.mxu0 0.0
        %4450 = vmatprep.subr.mxu0 0.0
        %4451 = vmatpush1.msra.mxu0 0.0
        %4452 = vmatprep.subr.mxu0 0.0
        %4453 = vmatpush1.msra.mxu0 0.0
        %4454 = vmatprep.subr.mxu0 0.0
        %4455 = vmatpush1.msra.mxu0 0.0
        %4456 = vmatprep.subr.mxu0 0.0
        %4457 = vmatpush1.msra.mxu0 0.0
        %4458 = vmatprep.subr.mxu0 0.0
        %4459 = vmatpush1.msra.mxu0 0.0
        %4460 = vmatprep.subr.mxu0 0.0
        %4461 = vmatpush1.msra.mxu0 0.0
        %4462 = vmatprep.subr.mxu0 0.0
        %4463 = vmatpush1.msra.mxu0 0.0
        %4464 = vmatprep.subr.mxu0 0.0
        %4465 = vmatpush1.msra.mxu0 0.0
        %4466 = vmatprep.subr.mxu0 0.0
        %4467 = vmatpush1.msra.mxu0 0.0
        %4468 = vmatprep.subr.mxu0 0.0
        %4469 = vmatpush1.msra.mxu0 0.0
        %4470 = vmatprep.subr.mxu0 0.0
        %4471 = vmatpush1.msra.mxu0 0.0
        %4472 = vmatprep.subr.mxu0 0.0
        %4473 = vmatpush1.msra.mxu0 0.0
        %4474 = vmatprep.subr.mxu0 0.0
        %4475 = vmatpush1.msra.mxu0 0.0
        %4476 = vmatprep.subr.mxu0 0.0
        %4477 = vmatpush1.msra.mxu0 0.0
        %4478 = vmatprep.subr.mxu0 0.0
        %4479 = vmatpush1.msra.mxu0 0.0
        %4480 = vmatprep.subr.mxu0 0.0
        %4481 = vmatpush1.msra.mxu0 0.0
        %4482 = vmatprep.subr.mxu0 0.0
        %4483 = vmatpush1.msra.mxu0 0.0
        %4484 = vmatprep.subr.mxu0 0.0
        %4485 = vmatpush1.msra.mxu0 0.0
        %4486 = vmatprep.subr.mxu0 0.0
        %4487 = vmatpush1.msra.mxu0 0.0
        %4488 = vmatprep.subr.mxu0 0.0
        %4489 = vmatpush1.msra.mxu0 0.0
        %4490 = vmatprep.subr.mxu0 0.0
        %4491 = vmatpush1.msra.mxu0 0.0
        %4492 = vmatprep.mubr.f32.mxu0 0.0
        %4493 = vmatmul.mubr.f32.gmra.mrb[0].mxu0 %v4423
        %v4494 = vpop.f32.mrb[0].mxu0
        %v4495 = vadd.f32 0.0, %v4494
        %v4496 = vpop.f32.mrb[0].mxu0
        %4497 = vmatprep.mubr.f32.mxu0 0.0
        %4498 = vmatmul.mubr.f32.gmra.mrb[0].mxu0 %v4426
        %v4499 = vpop.f32.mrb[0].mxu0
        %v4500 = vadd.f32 0.0, %v4499
        %v4501 = vpop.f32.mrb[0].mxu0
        %4502 = vdwg.mxu0
        %v4503 = vmul.f32 %v3816, %v3696
        %v4504 = vmul.f32 %v3821, %v3698
        %v4505 = vmul.f32 %v3913, %v3700
        %v4506 = vmul.f32 %v3918, %v3702
        %v4507 = vmul.f32 %v4010, %v3704
        %v4508 = vmul.f32 %v4015, %v3706
        %v4509 = vmul.f32 %v4107, %v3708
        %v4510 = vmul.f32 %v4112, %v3710
        %v4511 = vmul.f32 %v4204, %v3712
        %v4512 = vmul.f32 %v4209, %v3714
        %v4513 = vmul.f32 %v4301, %v3716
        %v4514 = vmul.f32 %v4306, %v3718
        %v4515 = vmul.f32 %v4398, %v3720
        %v4516 = vmul.f32 %v4403, %v3722
        %v4517 = vmul.f32 %v4495, %v3724
        %v4518 = vmul.f32 %v4500, %v3726
        %4519 = vrot.lane.b32.xlu0 %v795, 64
        %v4520 = vpop.permute.xlu0 %4519
        %4521 = vrot.lane.b32.xlu0 %v800, 64
        %v4522 = vpop.permute.xlu0 %4521
        %4523 = vrot.lane.b32.xlu0 %v984, 64
        %v4524 = vpop.permute.xlu0 %4523
        %4525 = vrot.lane.b32.xlu0 %v990, 64
        %v4526 = vpop.permute.xlu0 %4525
        %4527 = vrot.lane.b32.xlu0 %v996, 64
        %v4528 = vpop.permute.xlu0 %4527
        %4529 = vrot.lane.b32.xlu0 %v1002, 64
        %v4530 = vpop.permute.xlu0 %4529
        %v4531 = vsel %vm1174, %v4520, 0
        %v4533 = vsel %vm1174, %v4522, 0
        %v4535 = vsel %vm1174, %v4524, 0
        %v4537 = vsel %vm1174, %v4526, 0
        %v4539 = vsel %vm1174, %v4528, 0
        %v4541 = vsel %vm1174, %v4530, 0
        %4543 = vmatprep.subr.mxu0 0.0
        %4544 = vmatpush1.xpose.msra.mxu0 %v4535
        %4545 = vmatprep.subr.mxu0 0.0
        %4546 = vmatpush1.xpose.msra.mxu0 %v4537
        %4547 = vmatprep.subr.mxu0 0.0
        %4548 = vmatpush1.xpose.msra.mxu0 %v4539
        %4549 = vmatprep.subr.mxu0 0.0
        %4550 = vmatpush1.xpose.msra.mxu0 %v4541
        %4551 = vmatprep.subr.mxu0 0.0
        %4552 = vmatpush1.xpose.msra.mxu0 0.0
        %4553 = vmatprep.subr.mxu0 0.0
        %4554 = vmatpush1.xpose.msra.mxu0 0.0
        %4555 = vmatprep.subr.mxu0 0.0
        %4556 = vmatpush1.xpose.msra.mxu0 0.0
        %4557 = vmatprep.subr.mxu0 0.0
        %4558 = vmatpush1.xpose.msra.mxu0 0.0
        %4559 = vmatprep.subr.mxu0 0.0
        %4560 = vmatpush1.xpose.msra.mxu0 0.0
        %4561 = vmatprep.subr.mxu0 0.0
        %4562 = vmatpush1.xpose.msra.mxu0 0.0
        %4563 = vmatprep.subr.mxu0 0.0
        %4564 = vmatpush1.xpose.msra.mxu0 0.0
        %4565 = vmatprep.subr.mxu0 0.0
        %4566 = vmatpush1.xpose.msra.mxu0 0.0
        %4567 = vmatprep.subr.mxu0 0.0
        %4568 = vmatpush1.xpose.msra.mxu0 0.0
        %4569 = vmatprep.subr.mxu0 0.0
        %4570 = vmatpush1.xpose.msra.mxu0 0.0
        %4571 = vmatprep.subr.mxu0 0.0
        %4572 = vmatpush1.xpose.msra.mxu0 0.0
        %4573 = vmatprep.subr.mxu0 0.0
        %4574 = vmatpush1.xpose.msra.mxu0 0.0
        %4575 = vmatprep.subr.mxu0 0.0
        %4576 = vmatpush1.xpose.msra.mxu0 0.0
        %4577 = vmatprep.subr.mxu0 0.0
        %4578 = vmatpush1.xpose.msra.mxu0 0.0
        %4579 = vmatprep.subr.mxu0 0.0
        %4580 = vmatpush1.xpose.msra.mxu0 0.0
        %4581 = vmatprep.subr.mxu0 0.0
        %4582 = vmatpush1.xpose.msra.mxu0 0.0
        %4583 = vmatprep.subr.mxu0 0.0
        %4584 = vmatpush1.xpose.msra.mxu0 0.0
        %4585 = vmatprep.subr.mxu0 0.0
        %4586 = vmatpush1.xpose.msra.mxu0 0.0
        %4587 = vmatprep.subr.mxu0 0.0
        %4588 = vmatpush1.xpose.msra.mxu0 0.0
        %4589 = vmatprep.subr.mxu0 0.0
        %4590 = vmatpush1.xpose.msra.mxu0 0.0
        %4591 = vmatprep.subr.mxu0 0.0
        %4592 = vmatpush1.xpose.msra.mxu0 0.0
        %4593 = vmatprep.subr.mxu0 0.0
        %4594 = vmatpush1.xpose.msra.mxu0 0.0
        %4595 = vmatprep.subr.mxu0 0.0
        %4596 = vmatpush1.xpose.msra.mxu0 0.0
        %4597 = vmatprep.subr.mxu0 0.0
        %4598 = vmatpush1.xpose.msra.mxu0 0.0
        %4599 = vmatprep.subr.mxu0 0.0
        %4600 = vmatpush1.xpose.msra.mxu0 0.0
        %4601 = vmatprep.subr.mxu0 0.0
        %4602 = vmatpush1.xpose.msra.mxu0 0.0
        %4603 = vmatprep.subr.mxu0 0.0
        %4604 = vmatpush1.xpose.msra.mxu0 0.0
        %4605 = vmatprep.subr.mxu0 0.0
        %4606 = vmatpush1.xpose.msra.mxu0 0.0
        %4607 = vmatprep.mubr.f32.mxu0 0.0
        %4608 = vmatmul.mubr.f32.gmra.mrb[0].mxu0 %v4531
        %v4609 = vpop.f32.mrb[0].mxu0
        %v4610 = vadd.f32 0.0, %v4609
        %v4611 = vpop.f32.mrb[0].mxu0
        %4612 = vmatprep.mubr.f32.mxu0 0.0
        %4613 = vmatmul.mubr.f32.gmra.mrb[0].mxu0 %v4533
        %v4614 = vpop.f32.mrb[0].mxu0
        %v4615 = vadd.f32 0.0, %v4614
        %v4616 = vpop.f32.mrb[0].mxu0
        %4617 = vdwg.mxu0
        %4618 = vrot.lane.b32.xlu0 %v805, 64
        %v4619 = vpop.permute.xlu0 %4618
        %4620 = vrot.lane.b32.xlu0 %v810, 64
        %v4621 = vpop.permute.xlu0 %4620
        %4622 = vrot.lane.b32.xlu0 %v1008, 64
        %v4623 = vpop.permute.xlu0 %4622
        %4624 = vrot.lane.b32.xlu0 %v1014, 64
        %v4625 = vpop.permute.xlu0 %4624
        %4626 = vrot.lane.b32.xlu0 %v1020, 64
        %v4627 = vpop.permute.xlu0 %4626
        %4628 = vrot.lane.b32.xlu0 %v1026, 64
        %v4629 = vpop.permute.xlu0 %4628
        %v4630 = vsel %vm1174, %v4619, 0
        %v4632 = vsel %vm1174, %v4621, 0
        %v4634 = vsel %vm1174, %v4623, 0
        %v4636 = vsel %vm1174, %v4625, 0
        %v4638 = vsel %vm1174, %v4627, 0
        %v4640 = vsel %vm1174, %v4629, 0
        %4642 = vmatprep.subr.mxu0 0.0
        %4643 = vmatpush1.xpose.msra.mxu0 %v4634
        %4644 = vmatprep.subr.mxu0 0.0
        %4645 = vmatpush1.xpose.msra.mxu0 %v4636
        %4646 = vmatprep.subr.mxu0 0.0
        %4647 = vmatpush1.xpose.msra.mxu0 %v4638
        %4648 = vmatprep.subr.mxu0 0.0
        %4649 = vmatpush1.xpose.msra.mxu0 %v4640
        %4650 = vmatprep.subr.mxu0 0.0
        %4651 = vmatpush1.xpose.msra.mxu0 0.0
        %4652 = vmatprep.subr.mxu0 0.0
        %4653 = vmatpush1.xpose.msra.mxu0 0.0
        %4654 = vmatprep.subr.mxu0 0.0
        %4655 = vmatpush1.xpose.msra.mxu0 0.0
        %4656 = vmatprep.subr.mxu0 0.0
        %4657 = vmatpush1.xpose.msra.mxu0 0.0
        %4658 = vmatprep.subr.mxu0 0.0
        %4659 = vmatpush1.xpose.msra.mxu0 0.0
        %4660 = vmatprep.subr.mxu0 0.0
        %4661 = vmatpush1.xpose.msra.mxu0 0.0
        %4662 = vmatprep.subr.mxu0 0.0
        %4663 = vmatpush1.xpose.msra.mxu0 0.0
        %4664 = vmatprep.subr.mxu0 0.0
        %4665 = vmatpush1.xpose.msra.mxu0 0.0
        %4666 = vmatprep.subr.mxu0 0.0
        %4667 = vmatpush1.xpose.msra.mxu0 0.0
        %4668 = vmatprep.subr.mxu0 0.0
        %4669 = vmatpush1.xpose.msra.mxu0 0.0
        %4670 = vmatprep.subr.mxu0 0.0
        %4671 = vmatpush1.xpose.msra.mxu0 0.0
        %4672 = vmatprep.subr.mxu0 0.0
        %4673 = vmatpush1.xpose.msra.mxu0 0.0
        %4674 = vmatprep.subr.mxu0 0.0
        %4675 = vmatpush1.xpose.msra.mxu0 0.0
        %4676 = vmatprep.subr.mxu0 0.0
        %4677 = vmatpush1.xpose.msra.mxu0 0.0
        %4678 = vmatprep.subr.mxu0 0.0
        %4679 = vmatpush1.xpose.msra.mxu0 0.0
        %4680 = vmatprep.subr.mxu0 0.0
        %4681 = vmatpush1.xpose.msra.mxu0 0.0
        %4682 = vmatprep.subr.mxu0 0.0
        %4683 = vmatpush1.xpose.msra.mxu0 0.0
        %4684 = vmatprep.subr.mxu0 0.0
        %4685 = vmatpush1.xpose.msra.mxu0 0.0
        %4686 = vmatprep.subr.mxu0 0.0
        %4687 = vmatpush1.xpose.msra.mxu0 0.0
        %4688 = vmatprep.subr.mxu0 0.0
        %4689 = vmatpush1.xpose.msra.mxu0 0.0
        %4690 = vmatprep.subr.mxu0 0.0
        %4691 = vmatpush1.xpose.msra.mxu0 0.0
        %4692 = vmatprep.subr.mxu0 0.0
        %4693 = vmatpush1.xpose.msra.mxu0 0.0
        %4694 = vmatprep.subr.mxu0 0.0
        %4695 = vmatpush1.xpose.msra.mxu0 0.0
        %4696 = vmatprep.subr.mxu0 0.0
        %4697 = vmatpush1.xpose.msra.mxu0 0.0
        %4698 = vmatprep.subr.mxu0 0.0
        %4699 = vmatpush1.xpose.msra.mxu0 0.0
        %4700 = vmatprep.subr.mxu0 0.0
        %4701 = vmatpush1.xpose.msra.mxu0 0.0
        %4702 = vmatprep.subr.mxu0 0.0
        %4703 = vmatpush1.xpose.msra.mxu0 0.0
        %4704 = vmatprep.subr.mxu0 0.0
        %4705 = vmatpush1.xpose.msra.mxu0 0.0
        %4706 = vmatprep.mubr.f32.mxu0 0.0
        %4707 = vmatmul.mubr.f32.gmra.mrb[0].mxu0 %v4630
        %v4708 = vpop.f32.mrb[0].mxu0
        %v4709 = vadd.f32 0.0, %v4708
        %v4710 = vpop.f32.mrb[0].mxu0
        %4711 = vmatprep.mubr.f32.mxu0 0.0
        %4712 = vmatmul.mubr.f32.gmra.mrb[0].mxu0 %v4632
        %v4713 = vpop.f32.mrb[0].mxu0
        %v4714 = vadd.f32 0.0, %v4713
        %v4715 = vpop.f32.mrb[0].mxu0
        %4716 = vdwg.mxu0
        %4717 = vrot.lane.b32.xlu0 %v815, 64
        %v4718 = vpop.permute.xlu0 %4717
        %4719 = vrot.lane.b32.xlu0 %v820, 64
        %v4720 = vpop.permute.xlu0 %4719
        %4721 = vrot.lane.b32.xlu0 %v1032, 64
        %v4722 = vpop.permute.xlu0 %4721
        %4723 = vrot.lane.b32.xlu0 %v1038, 64
        %v4724 = vpop.permute.xlu0 %4723
        %4725 = vrot.lane.b32.xlu0 %v1044, 64
        %v4726 = vpop.permute.xlu0 %4725
        %4727 = vrot.lane.b32.xlu0 %v1050, 64
        %v4728 = vpop.permute.xlu0 %4727
        %v4729 = vsel %vm1174, %v4718, 0
        %v4731 = vsel %vm1174, %v4720, 0
        %v4733 = vsel %vm1174, %v4722, 0
        %v4735 = vsel %vm1174, %v4724, 0
        %v4737 = vsel %vm1174, %v4726, 0
        %v4739 = vsel %vm1174, %v4728, 0
        %4741 = vmatprep.subr.mxu0 0.0
        %4742 = vmatpush1.xpose.msra.mxu0 %v4733
        %4743 = vmatprep.subr.mxu0 0.0
        %4744 = vmatpush1.xpose.msra.mxu0 %v4735
        %4745 = vmatprep.subr.mxu0 0.0
        %4746 = vmatpush1.xpose.msra.mxu0 %v4737
        %4747 = vmatprep.subr.mxu0 0.0
        %4748 = vmatpush1.xpose.msra.mxu0 %v4739
        %4749 = vmatprep.subr.mxu0 0.0
        %4750 = vmatpush1.xpose.msra.mxu0 0.0
        %4751 = vmatprep.subr.mxu0 0.0
        %4752 = vmatpush1.xpose.msra.mxu0 0.0
        %4753 = vmatprep.subr.mxu0 0.0
        %4754 = vmatpush1.xpose.msra.mxu0 0.0
        %4755 = vmatprep.subr.mxu0 0.0
        %4756 = vmatpush1.xpose.msra.mxu0 0.0
        %4757 = vmatprep.subr.mxu0 0.0
        %4758 = vmatpush1.xpose.msra.mxu0 0.0
        %4759 = vmatprep.subr.mxu0 0.0
        %4760 = vmatpush1.xpose.msra.mxu0 0.0
        %4761 = vmatprep.subr.mxu0 0.0
        %4762 = vmatpush1.xpose.msra.mxu0 0.0
        %4763 = vmatprep.subr.mxu0 0.0
        %4764 = vmatpush1.xpose.msra.mxu0 0.0
        %4765 = vmatprep.subr.mxu0 0.0
        %4766 = vmatpush1.xpose.msra.mxu0 0.0
        %4767 = vmatprep.subr.mxu0 0.0
        %4768 = vmatpush1.xpose.msra.mxu0 0.0
        %4769 = vmatprep.subr.mxu0 0.0
        %4770 = vmatpush1.xpose.msra.mxu0 0.0
        %4771 = vmatprep.subr.mxu0 0.0
        %4772 = vmatpush1.xpose.msra.mxu0 0.0
        %4773 = vmatprep.subr.mxu0 0.0
        %4774 = vmatpush1.xpose.msra.mxu0 0.0
        %4775 = vmatprep.subr.mxu0 0.0
        %4776 = vmatpush1.xpose.msra.mxu0 0.0
        %4777 = vmatprep.subr.mxu0 0.0
        %4778 = vmatpush1.xpose.msra.mxu0 0.0
        %4779 = vmatprep.subr.mxu0 0.0
        %4780 = vmatpush1.xpose.msra.mxu0 0.0
        %4781 = vmatprep.subr.mxu0 0.0
        %4782 = vmatpush1.xpose.msra.mxu0 0.0
        %4783 = vmatprep.subr.mxu0 0.0
        %4784 = vmatpush1.xpose.msra.mxu0 0.0
        %4785 = vmatprep.subr.mxu0 0.0
        %4786 = vmatpush1.xpose.msra.mxu0 0.0
        %4787 = vmatprep.subr.mxu0 0.0
        %4788 = vmatpush1.xpose.msra.mxu0 0.0
        %4789 = vmatprep.subr.mxu0 0.0
        %4790 = vmatpush1.xpose.msra.mxu0 0.0
        %4791 = vmatprep.subr.mxu0 0.0
        %4792 = vmatpush1.xpose.msra.mxu0 0.0
        %4793 = vmatprep.subr.mxu0 0.0
        %4794 = vmatpush1.xpose.msra.mxu0 0.0
        %4795 = vmatprep.subr.mxu0 0.0
        %4796 = vmatpush1.xpose.msra.mxu0 0.0
        %4797 = vmatprep.subr.mxu0 0.0
        %4798 = vmatpush1.xpose.msra.mxu0 0.0
        %4799 = vmatprep.subr.mxu0 0.0
        %4800 = vmatpush1.xpose.msra.mxu0 0.0
        %4801 = vmatprep.subr.mxu0 0.0
        %4802 = vmatpush1.xpose.msra.mxu0 0.0
        %4803 = vmatprep.subr.mxu0 0.0
        %4804 = vmatpush1.xpose.msra.mxu0 0.0
        %4805 = vmatprep.mubr.f32.mxu0 0.0
        %4806 = vmatmul.mubr.f32.gmra.mrb[0].mxu0 %v4729
        %v4807 = vpop.f32.mrb[0].mxu0
        %v4808 = vadd.f32 0.0, %v4807
        %v4809 = vpop.f32.mrb[0].mxu0
        %4810 = vmatprep.mubr.f32.mxu0 0.0
        %4811 = vmatmul.mubr.f32.gmra.mrb[0].mxu0 %v4731
        %v4812 = vpop.f32.mrb[0].mxu0
        %v4813 = vadd.f32 0.0, %v4812
        %v4814 = vpop.f32.mrb[0].mxu0
        %4815 = vdwg.mxu0
        %4816 = vrot.lane.b32.xlu0 %v825, 64
        %v4817 = vpop.permute.xlu0 %4816
        %4818 = vrot.lane.b32.xlu0 %v830, 64
        %v4819 = vpop.permute.xlu0 %4818
        %4820 = vrot.lane.b32.xlu0 %v1056, 64
        %v4821 = vpop.permute.xlu0 %4820
        %4822 = vrot.lane.b32.xlu0 %v1062, 64
        %v4823 = vpop.permute.xlu0 %4822
        %4824 = vrot.lane.b32.xlu0 %v1068, 64
        %v4825 = vpop.permute.xlu0 %4824
        %4826 = vrot.lane.b32.xlu0 %v1074, 64
        %v4827 = vpop.permute.xlu0 %4826
        %v4828 = vsel %vm1174, %v4817, 0
        %v4830 = vsel %vm1174, %v4819, 0
        %v4832 = vsel %vm1174, %v4821, 0
        %v4834 = vsel %vm1174, %v4823, 0
        %v4836 = vsel %vm1174, %v4825, 0
        %v4838 = vsel %vm1174, %v4827, 0
        %4840 = vmatprep.subr.mxu0 0.0
        %4841 = vmatpush1.xpose.msra.mxu0 %v4832
        %4842 = vmatprep.subr.mxu0 0.0
        %4843 = vmatpush1.xpose.msra.mxu0 %v4834
        %4844 = vmatprep.subr.mxu0 0.0
        %4845 = vmatpush1.xpose.msra.mxu0 %v4836
        %4846 = vmatprep.subr.mxu0 0.0
        %4847 = vmatpush1.xpose.msra.mxu0 %v4838
        %4848 = vmatprep.subr.mxu0 0.0
        %4849 = vmatpush1.xpose.msra.mxu0 0.0
        %4850 = vmatprep.subr.mxu0 0.0
        %4851 = vmatpush1.xpose.msra.mxu0 0.0
        %4852 = vmatprep.subr.mxu0 0.0
        %4853 = vmatpush1.xpose.msra.mxu0 0.0
        %4854 = vmatprep.subr.mxu0 0.0
        %4855 = vmatpush1.xpose.msra.mxu0 0.0
        %4856 = vmatprep.subr.mxu0 0.0
        %4857 = vmatpush1.xpose.msra.mxu0 0.0
        %4858 = vmatprep.subr.mxu0 0.0
        %4859 = vmatpush1.xpose.msra.mxu0 0.0
        %4860 = vmatprep.subr.mxu0 0.0
        %4861 = vmatpush1.xpose.msra.mxu0 0.0
        %4862 = vmatprep.subr.mxu0 0.0
        %4863 = vmatpush1.xpose.msra.mxu0 0.0
        %4864 = vmatprep.subr.mxu0 0.0
        %4865 = vmatpush1.xpose.msra.mxu0 0.0
        %4866 = vmatprep.subr.mxu0 0.0
        %4867 = vmatpush1.xpose.msra.mxu0 0.0
        %4868 = vmatprep.subr.mxu0 0.0
        %4869 = vmatpush1.xpose.msra.mxu0 0.0
        %4870 = vmatprep.subr.mxu0 0.0
        %4871 = vmatpush1.xpose.msra.mxu0 0.0
        %4872 = vmatprep.subr.mxu0 0.0
        %4873 = vmatpush1.xpose.msra.mxu0 0.0
        %4874 = vmatprep.subr.mxu0 0.0
        %4875 = vmatpush1.xpose.msra.mxu0 0.0
        %4876 = vmatprep.subr.mxu0 0.0
        %4877 = vmatpush1.xpose.msra.mxu0 0.0
        %4878 = vmatprep.subr.mxu0 0.0
        %4879 = vmatpush1.xpose.msra.mxu0 0.0
        %4880 = vmatprep.subr.mxu0 0.0
        %4881 = vmatpush1.xpose.msra.mxu0 0.0
        %4882 = vmatprep.subr.mxu0 0.0
        %4883 = vmatpush1.xpose.msra.mxu0 0.0
        %4884 = vmatprep.subr.mxu0 0.0
        %4885 = vmatpush1.xpose.msra.mxu0 0.0
        %4886 = vmatprep.subr.mxu0 0.0
        %4887 = vmatpush1.xpose.msra.mxu0 0.0
        %4888 = vmatprep.subr.mxu0 0.0
        %4889 = vmatpush1.xpose.msra.mxu0 0.0
        %4890 = vmatprep.subr.mxu0 0.0
        %4891 = vmatpush1.xpose.msra.mxu0 0.0
        %4892 = vmatprep.subr.mxu0 0.0
        %4893 = vmatpush1.xpose.msra.mxu0 0.0
        %4894 = vmatprep.subr.mxu0 0.0
        %4895 = vmatpush1.xpose.msra.mxu0 0.0
        %4896 = vmatprep.subr.mxu0 0.0
        %4897 = vmatpush1.xpose.msra.mxu0 0.0
        %4898 = vmatprep.subr.mxu0 0.0
        %4899 = vmatpush1.xpose.msra.mxu0 0.0
        %4900 = vmatprep.subr.mxu0 0.0
        %4901 = vmatpush1.xpose.msra.mxu0 0.0
        %4902 = vmatprep.subr.mxu0 0.0
        %4903 = vmatpush1.xpose.msra.mxu0 0.0
        %4904 = vmatprep.mubr.f32.mxu0 0.0
        %4905 = vmatmul.mubr.f32.gmra.mrb[0].mxu0 %v4828
        %v4906 = vpop.f32.mrb[0].mxu0
        %v4907 = vadd.f32 0.0, %v4906
        %v4908 = vpop.f32.mrb[0].mxu0
        %4909 = vmatprep.mubr.f32.mxu0 0.0
        %4910 = vmatmul.mubr.f32.gmra.mrb[0].mxu0 %v4830
        %v4911 = vpop.f32.mrb[0].mxu0
        %v4912 = vadd.f32 0.0, %v4911
        %v4913 = vpop.f32.mrb[0].mxu0
        %4914 = vdwg.mxu0
        %4915 = vrot.lane.b32.xlu0 %v835, 64
        %v4916 = vpop.permute.xlu0 %4915
        %4917 = vrot.lane.b32.xlu0 %v840, 64
        %v4918 = vpop.permute.xlu0 %4917
        %4919 = vrot.lane.b32.xlu0 %v1080, 64
        %v4920 = vpop.permute.xlu0 %4919
        %4921 = vrot.lane.b32.xlu0 %v1086, 64
        %v4922 = vpop.permute.xlu0 %4921
        %4923 = vrot.lane.b32.xlu0 %v1092, 64
        %v4924 = vpop.permute.xlu0 %4923
        %4925 = vrot.lane.b32.xlu0 %v1098, 64
        %v4926 = vpop.permute.xlu0 %4925
        %v4927 = vsel %vm1174, %v4916, 0
        %v4929 = vsel %vm1174, %v4918, 0
        %v4931 = vsel %vm1174, %v4920, 0
        %v4933 = vsel %vm1174, %v4922, 0
        %v4935 = vsel %vm1174, %v4924, 0
        %v4937 = vsel %vm1174, %v4926, 0
        %4939 = vmatprep.subr.mxu0 0.0
        %4940 = vmatpush1.xpose.msra.mxu0 %v4931
        %4941 = vmatprep.subr.mxu0 0.0
        %4942 = vmatpush1.xpose.msra.mxu0 %v4933
        %4943 = vmatprep.subr.mxu0 0.0
        %4944 = vmatpush1.xpose.msra.mxu0 %v4935
        %4945 = vmatprep.subr.mxu0 0.0
        %4946 = vmatpush1.xpose.msra.mxu0 %v4937
        %4947 = vmatprep.subr.mxu0 0.0
        %4948 = vmatpush1.xpose.msra.mxu0 0.0
        %4949 = vmatprep.subr.mxu0 0.0
        %4950 = vmatpush1.xpose.msra.mxu0 0.0
        %4951 = vmatprep.subr.mxu0 0.0
        %4952 = vmatpush1.xpose.msra.mxu0 0.0
        %4953 = vmatprep.subr.mxu0 0.0
        %4954 = vmatpush1.xpose.msra.mxu0 0.0
        %4955 = vmatprep.subr.mxu0 0.0
        %4956 = vmatpush1.xpose.msra.mxu0 0.0
        %4957 = vmatprep.subr.mxu0 0.0
        %4958 = vmatpush1.xpose.msra.mxu0 0.0
        %4959 = vmatprep.subr.mxu0 0.0
        %4960 = vmatpush1.xpose.msra.mxu0 0.0
        %4961 = vmatprep.subr.mxu0 0.0
        %4962 = vmatpush1.xpose.msra.mxu0 0.0
        %4963 = vmatprep.subr.mxu0 0.0
        %4964 = vmatpush1.xpose.msra.mxu0 0.0
        %4965 = vmatprep.subr.mxu0 0.0
        %4966 = vmatpush1.xpose.msra.mxu0 0.0
        %4967 = vmatprep.subr.mxu0 0.0
        %4968 = vmatpush1.xpose.msra.mxu0 0.0
        %4969 = vmatprep.subr.mxu0 0.0
        %4970 = vmatpush1.xpose.msra.mxu0 0.0
        %4971 = vmatprep.subr.mxu0 0.0
        %4972 = vmatpush1.xpose.msra.mxu0 0.0
        %4973 = vmatprep.subr.mxu0 0.0
        %4974 = vmatpush1.xpose.msra.mxu0 0.0
        %4975 = vmatprep.subr.mxu0 0.0
        %4976 = vmatpush1.xpose.msra.mxu0 0.0
        %4977 = vmatprep.subr.mxu0 0.0
        %4978 = vmatpush1.xpose.msra.mxu0 0.0
        %4979 = vmatprep.subr.mxu0 0.0
        %4980 = vmatpush1.xpose.msra.mxu0 0.0
        %4981 = vmatprep.subr.mxu0 0.0
        %4982 = vmatpush1.xpose.msra.mxu0 0.0
        %4983 = vmatprep.subr.mxu0 0.0
        %4984 = vmatpush1.xpose.msra.mxu0 0.0
        %4985 = vmatprep.subr.mxu0 0.0
        %4986 = vmatpush1.xpose.msra.mxu0 0.0
        %4987 = vmatprep.subr.mxu0 0.0
        %4988 = vmatpush1.xpose.msra.mxu0 0.0
        %4989 = vmatprep.subr.mxu0 0.0
        %4990 = vmatpush1.xpose.msra.mxu0 0.0
        %4991 = vmatprep.subr.mxu0 0.0
        %4992 = vmatpush1.xpose.msra.mxu0 0.0
        %4993 = vmatprep.subr.mxu0 0.0
        %4994 = vmatpush1.xpose.msra.mxu0 0.0
        %4995 = vmatprep.subr.mxu0 0.0
        %4996 = vmatpush1.xpose.msra.mxu0 0.0
        %4997 = vmatprep.subr.mxu0 0.0
        %4998 = vmatpush1.xpose.msra.mxu0 0.0
        %4999 = vmatprep.subr.mxu0 0.0
        %5000 = vmatpush1.xpose.msra.mxu0 0.0
        %5001 = vmatprep.subr.mxu0 0.0
        %5002 = vmatpush1.xpose.msra.mxu0 0.0
        %5003 = vmatprep.mubr.f32.mxu0 0.0
        %5004 = vmatmul.mubr.f32.gmra.mrb[0].mxu0 %v4927
        %v5005 = vpop.f32.mrb[0].mxu0
        %v5006 = vadd.f32 0.0, %v5005
        %v5007 = vpop.f32.mrb[0].mxu0
        %5008 = vmatprep.mubr.f32.mxu0 0.0
        %5009 = vmatmul.mubr.f32.gmra.mrb[0].mxu0 %v4929
        %v5010 = vpop.f32.mrb[0].mxu0
        %v5011 = vadd.f32 0.0, %v5010
        %v5012 = vpop.f32.mrb[0].mxu0
        %5013 = vdwg.mxu0
        %5014 = vrot.lane.b32.xlu0 %v845, 64
        %v5015 = vpop.permute.xlu0 %5014
        %5016 = vrot.lane.b32.xlu0 %v850, 64
        %v5017 = vpop.permute.xlu0 %5016
        %5018 = vrot.lane.b32.xlu0 %v1104, 64
        %v5019 = vpop.permute.xlu0 %5018
        %5020 = vrot.lane.b32.xlu0 %v1110, 64
        %v5021 = vpop.permute.xlu0 %5020
        %5022 = vrot.lane.b32.xlu0 %v1116, 64
        %v5023 = vpop.permute.xlu0 %5022
        %5024 = vrot.lane.b32.xlu0 %v1122, 64
        %v5025 = vpop.permute.xlu0 %5024
        %v5026 = vsel %vm1174, %v5015, 0
        %v5028 = vsel %vm1174, %v5017, 0
        %v5030 = vsel %vm1174, %v5019, 0
        %v5032 = vsel %vm1174, %v5021, 0
        %v5034 = vsel %vm1174, %v5023, 0
        %v5036 = vsel %vm1174, %v5025, 0
        %5038 = vmatprep.subr.mxu0 0.0
        %5039 = vmatpush1.xpose.msra.mxu0 %v5030
        %5040 = vmatprep.subr.mxu0 0.0
        %5041 = vmatpush1.xpose.msra.mxu0 %v5032
        %5042 = vmatprep.subr.mxu0 0.0
        %5043 = vmatpush1.xpose.msra.mxu0 %v5034
        %5044 = vmatprep.subr.mxu0 0.0
        %5045 = vmatpush1.xpose.msra.mxu0 %v5036
        %5046 = vmatprep.subr.mxu0 0.0
        %5047 = vmatpush1.xpose.msra.mxu0 0.0
        %5048 = vmatprep.subr.mxu0 0.0
        %5049 = vmatpush1.xpose.msra.mxu0 0.0
        %5050 = vmatprep.subr.mxu0 0.0
        %5051 = vmatpush1.xpose.msra.mxu0 0.0
        %5052 = vmatprep.subr.mxu0 0.0
        %5053 = vmatpush1.xpose.msra.mxu0 0.0
        %5054 = vmatprep.subr.mxu0 0.0
        %5055 = vmatpush1.xpose.msra.mxu0 0.0
        %5056 = vmatprep.subr.mxu0 0.0
        %5057 = vmatpush1.xpose.msra.mxu0 0.0
        %5058 = vmatprep.subr.mxu0 0.0
        %5059 = vmatpush1.xpose.msra.mxu0 0.0
        %5060 = vmatprep.subr.mxu0 0.0
        %5061 = vmatpush1.xpose.msra.mxu0 0.0
        %5062 = vmatprep.subr.mxu0 0.0
        %5063 = vmatpush1.xpose.msra.mxu0 0.0
        %5064 = vmatprep.subr.mxu0 0.0
        %5065 = vmatpush1.xpose.msra.mxu0 0.0
        %5066 = vmatprep.subr.mxu0 0.0
        %5067 = vmatpush1.xpose.msra.mxu0 0.0
        %5068 = vmatprep.subr.mxu0 0.0
        %5069 = vmatpush1.xpose.msra.mxu0 0.0
        %5070 = vmatprep.subr.mxu0 0.0
        %5071 = vmatpush1.xpose.msra.mxu0 0.0
        %5072 = vmatprep.subr.mxu0 0.0
        %5073 = vmatpush1.xpose.msra.mxu0 0.0
        %5074 = vmatprep.subr.mxu0 0.0
        %5075 = vmatpush1.xpose.msra.mxu0 0.0
        %5076 = vmatprep.subr.mxu0 0.0
        %5077 = vmatpush1.xpose.msra.mxu0 0.0
        %5078 = vmatprep.subr.mxu0 0.0
        %5079 = vmatpush1.xpose.msra.mxu0 0.0
        %5080 = vmatprep.subr.mxu0 0.0
        %5081 = vmatpush1.xpose.msra.mxu0 0.0
        %5082 = vmatprep.subr.mxu0 0.0
        %5083 = vmatpush1.xpose.msra.mxu0 0.0
        %5084 = vmatprep.subr.mxu0 0.0
        %5085 = vmatpush1.xpose.msra.mxu0 0.0
        %5086 = vmatprep.subr.mxu0 0.0
        %5087 = vmatpush1.xpose.msra.mxu0 0.0
        %5088 = vmatprep.subr.mxu0 0.0
        %5089 = vmatpush1.xpose.msra.mxu0 0.0
        %5090 = vmatprep.subr.mxu0 0.0
        %5091 = vmatpush1.xpose.msra.mxu0 0.0
        %5092 = vmatprep.subr.mxu0 0.0
        %5093 = vmatpush1.xpose.msra.mxu0 0.0
        %5094 = vmatprep.subr.mxu0 0.0
        %5095 = vmatpush1.xpose.msra.mxu0 0.0
        %5096 = vmatprep.subr.mxu0 0.0
        %5097 = vmatpush1.xpose.msra.mxu0 0.0
        %5098 = vmatprep.subr.mxu0 0.0
        %5099 = vmatpush1.xpose.msra.mxu0 0.0
        %5100 = vmatprep.subr.mxu0 0.0
        %5101 = vmatpush1.xpose.msra.mxu0 0.0
        %5102 = vmatprep.mubr.f32.mxu0 0.0
        %5103 = vmatmul.mubr.f32.gmra.mrb[0].mxu0 %v5026
        %v5104 = vpop.f32.mrb[0].mxu0
        %v5105 = vadd.f32 0.0, %v5104
        %v5106 = vpop.f32.mrb[0].mxu0
        %5107 = vmatprep.mubr.f32.mxu0 0.0
        %5108 = vmatmul.mubr.f32.gmra.mrb[0].mxu0 %v5028
        %v5109 = vpop.f32.mrb[0].mxu0
        %v5110 = vadd.f32 0.0, %v5109
        %v5111 = vpop.f32.mrb[0].mxu0
        %5112 = vdwg.mxu0
        %5113 = vrot.lane.b32.xlu0 %v855, 64
        %v5114 = vpop.permute.xlu0 %5113
        %5115 = vrot.lane.b32.xlu0 %v860, 64
        %v5116 = vpop.permute.xlu0 %5115
        %5117 = vrot.lane.b32.xlu0 %v1128, 64
        %v5118 = vpop.permute.xlu0 %5117
        %5119 = vrot.lane.b32.xlu0 %v1134, 64
        %v5120 = vpop.permute.xlu0 %5119
        %5121 = vrot.lane.b32.xlu0 %v1140, 64
        %v5122 = vpop.permute.xlu0 %5121
        %5123 = vrot.lane.b32.xlu0 %v1146, 64
        %v5124 = vpop.permute.xlu0 %5123
        %v5125 = vsel %vm1174, %v5114, 0
        %v5127 = vsel %vm1174, %v5116, 0
        %v5129 = vsel %vm1174, %v5118, 0
        %v5131 = vsel %vm1174, %v5120, 0
        %v5133 = vsel %vm1174, %v5122, 0
        %v5135 = vsel %vm1174, %v5124, 0
        %5137 = vmatprep.subr.mxu0 0.0
        %5138 = vmatpush1.xpose.msra.mxu0 %v5129
        %5139 = vmatprep.subr.mxu0 0.0
        %5140 = vmatpush1.xpose.msra.mxu0 %v5131
        %5141 = vmatprep.subr.mxu0 0.0
        %5142 = vmatpush1.xpose.msra.mxu0 %v5133
        %5143 = vmatprep.subr.mxu0 0.0
        %5144 = vmatpush1.xpose.msra.mxu0 %v5135
        %5145 = vmatprep.subr.mxu0 0.0
        %5146 = vmatpush1.xpose.msra.mxu0 0.0
        %5147 = vmatprep.subr.mxu0 0.0
        %5148 = vmatpush1.xpose.msra.mxu0 0.0
        %5149 = vmatprep.subr.mxu0 0.0
        %5150 = vmatpush1.xpose.msra.mxu0 0.0
        %5151 = vmatprep.subr.mxu0 0.0
        %5152 = vmatpush1.xpose.msra.mxu0 0.0
        %5153 = vmatprep.subr.mxu0 0.0
        %5154 = vmatpush1.xpose.msra.mxu0 0.0
        %5155 = vmatprep.subr.mxu0 0.0
        %5156 = vmatpush1.xpose.msra.mxu0 0.0
        %5157 = vmatprep.subr.mxu0 0.0
        %5158 = vmatpush1.xpose.msra.mxu0 0.0
        %5159 = vmatprep.subr.mxu0 0.0
        %5160 = vmatpush1.xpose.msra.mxu0 0.0
        %5161 = vmatprep.subr.mxu0 0.0
        %5162 = vmatpush1.xpose.msra.mxu0 0.0
        %5163 = vmatprep.subr.mxu0 0.0
        %5164 = vmatpush1.xpose.msra.mxu0 0.0
        %5165 = vmatprep.subr.mxu0 0.0
        %5166 = vmatpush1.xpose.msra.mxu0 0.0
        %5167 = vmatprep.subr.mxu0 0.0
        %5168 = vmatpush1.xpose.msra.mxu0 0.0
        %5169 = vmatprep.subr.mxu0 0.0
        %5170 = vmatpush1.xpose.msra.mxu0 0.0
        %5171 = vmatprep.subr.mxu0 0.0
        %5172 = vmatpush1.xpose.msra.mxu0 0.0
        %5173 = vmatprep.subr.mxu0 0.0
        %5174 = vmatpush1.xpose.msra.mxu0 0.0
        %5175 = vmatprep.subr.mxu0 0.0
        %5176 = vmatpush1.xpose.msra.mxu0 0.0
        %5177 = vmatprep.subr.mxu0 0.0
        %5178 = vmatpush1.xpose.msra.mxu0 0.0
        %5179 = vmatprep.subr.mxu0 0.0
        %5180 = vmatpush1.xpose.msra.mxu0 0.0
        %5181 = vmatprep.subr.mxu0 0.0
        %5182 = vmatpush1.xpose.msra.mxu0 0.0
        %5183 = vmatprep.subr.mxu0 0.0
        %5184 = vmatpush1.xpose.msra.mxu0 0.0
        %5185 = vmatprep.subr.mxu0 0.0
        %5186 = vmatpush1.xpose.msra.mxu0 0.0
        %5187 = vmatprep.subr.mxu0 0.0
        %5188 = vmatpush1.xpose.msra.mxu0 0.0
        %5189 = vmatprep.subr.mxu0 0.0
        %5190 = vmatpush1.xpose.msra.mxu0 0.0
        %5191 = vmatprep.subr.mxu0 0.0
        %5192 = vmatpush1.xpose.msra.mxu0 0.0
        %5193 = vmatprep.subr.mxu0 0.0
        %5194 = vmatpush1.xpose.msra.mxu0 0.0
        %5195 = vmatprep.subr.mxu0 0.0
        %5196 = vmatpush1.xpose.msra.mxu0 0.0
        %5197 = vmatprep.subr.mxu0 0.0
        %5198 = vmatpush1.xpose.msra.mxu0 0.0
        %5199 = vmatprep.subr.mxu0 0.0
        %5200 = vmatpush1.xpose.msra.mxu0 0.0
        %5201 = vmatprep.mubr.f32.mxu0 0.0
        %5202 = vmatmul.mubr.f32.gmra.mrb[0].mxu0 %v5125
        %v5203 = vpop.f32.mrb[0].mxu0
        %v5204 = vadd.f32 0.0, %v5203
        %v5205 = vpop.f32.mrb[0].mxu0
        %5206 = vmatprep.mubr.f32.mxu0 0.0
        %5207 = vmatmul.mubr.f32.gmra.mrb[0].mxu0 %v5127
        %v5208 = vpop.f32.mrb[0].mxu0
        %v5209 = vadd.f32 0.0, %v5208
        %v5210 = vpop.f32.mrb[0].mxu0
        %5211 = vdwg.mxu0
        %5212 = vrot.lane.b32.xlu0 %v865, 64
        %v5213 = vpop.permute.xlu0 %5212
        %5214 = vrot.lane.b32.xlu0 %v870, 64
        %v5215 = vpop.permute.xlu0 %5214
        %5216 = vrot.lane.b32.xlu0 %v1152, 64
        %v5217 = vpop.permute.xlu0 %5216
        %5218 = vrot.lane.b32.xlu0 %v1158, 64
        %v5219 = vpop.permute.xlu0 %5218
        %5220 = vrot.lane.b32.xlu0 %v1164, 64
        %v5221 = vpop.permute.xlu0 %5220
        %5222 = vrot.lane.b32.xlu0 %v1170, 64
        %v5223 = vpop.permute.xlu0 %5222
        %v5224 = vsel %vm1174, %v5213, 0
        %v5226 = vsel %vm1174, %v5215, 0
        %v5228 = vsel %vm1174, %v5217, 0
        %v5230 = vsel %vm1174, %v5219, 0
        %v5232 = vsel %vm1174, %v5221, 0
        %v5234 = vsel %vm1174, %v5223, 0
        %5236 = vmatprep.subr.mxu0 0.0
        %5237 = vmatpush1.xpose.msra.mxu0 %v5228
        %5238 = vmatprep.subr.mxu0 0.0
        %5239 = vmatpush1.xpose.msra.mxu0 %v5230
        %5240 = vmatprep.subr.mxu0 0.0
        %5241 = vmatpush1.xpose.msra.mxu0 %v5232
        %5242 = vmatprep.subr.mxu0 0.0
        %5243 = vmatpush1.xpose.msra.mxu0 %v5234
        %5244 = vmatprep.subr.mxu0 0.0
        %5245 = vmatpush1.xpose.msra.mxu0 0.0
        %5246 = vmatprep.subr.mxu0 0.0
        %5247 = vmatpush1.xpose.msra.mxu0 0.0
        %5248 = vmatprep.subr.mxu0 0.0
        %5249 = vmatpush1.xpose.msra.mxu0 0.0
        %5250 = vmatprep.subr.mxu0 0.0
        %5251 = vmatpush1.xpose.msra.mxu0 0.0
        %5252 = vmatprep.subr.mxu0 0.0
        %5253 = vmatpush1.xpose.msra.mxu0 0.0
        %5254 = vmatprep.subr.mxu0 0.0
        %5255 = vmatpush1.xpose.msra.mxu0 0.0
        %5256 = vmatprep.subr.mxu0 0.0
        %5257 = vmatpush1.xpose.msra.mxu0 0.0
        %5258 = vmatprep.subr.mxu0 0.0
        %5259 = vmatpush1.xpose.msra.mxu0 0.0
        %5260 = vmatprep.subr.mxu0 0.0
        %5261 = vmatpush1.xpose.msra.mxu0 0.0
        %5262 = vmatprep.subr.mxu0 0.0
        %5263 = vmatpush1.xpose.msra.mxu0 0.0
        %5264 = vmatprep.subr.mxu0 0.0
        %5265 = vmatpush1.xpose.msra.mxu0 0.0
        %5266 = vmatprep.subr.mxu0 0.0
        %5267 = vmatpush1.xpose.msra.mxu0 0.0
        %5268 = vmatprep.subr.mxu0 0.0
        %5269 = vmatpush1.xpose.msra.mxu0 0.0
        %5270 = vmatprep.subr.mxu0 0.0
        %5271 = vmatpush1.xpose.msra.mxu0 0.0
        %5272 = vmatprep.subr.mxu0 0.0
        %5273 = vmatpush1.xpose.msra.mxu0 0.0
        %5274 = vmatprep.subr.mxu0 0.0
        %5275 = vmatpush1.xpose.msra.mxu0 0.0
        %5276 = vmatprep.subr.mxu0 0.0
        %5277 = vmatpush1.xpose.msra.mxu0 0.0
        %5278 = vmatprep.subr.mxu0 0.0
        %5279 = vmatpush1.xpose.msra.mxu0 0.0
        %5280 = vmatprep.subr.mxu0 0.0
        %5281 = vmatpush1.xpose.msra.mxu0 0.0
        %5282 = vmatprep.subr.mxu0 0.0
        %5283 = vmatpush1.xpose.msra.mxu0 0.0
        %5284 = vmatprep.subr.mxu0 0.0
        %5285 = vmatpush1.xpose.msra.mxu0 0.0
        %5286 = vmatprep.subr.mxu0 0.0
        %5287 = vmatpush1.xpose.msra.mxu0 0.0
        %5288 = vmatprep.subr.mxu0 0.0
        %5289 = vmatpush1.xpose.msra.mxu0 0.0
        %5290 = vmatprep.subr.mxu0 0.0
        %5291 = vmatpush1.xpose.msra.mxu0 0.0
        %5292 = vmatprep.subr.mxu0 0.0
        %5293 = vmatpush1.xpose.msra.mxu0 0.0
        %5294 = vmatprep.subr.mxu0 0.0
        %5295 = vmatpush1.xpose.msra.mxu0 0.0
        %5296 = vmatprep.subr.mxu0 0.0
        %5297 = vmatpush1.xpose.msra.mxu0 0.0
        %5298 = vmatprep.subr.mxu0 0.0
        %5299 = vmatpush1.xpose.msra.mxu0 0.0
        %5300 = vmatprep.mubr.f32.mxu0 0.0
        %5301 = vmatmul.mubr.f32.gmra.mrb[0].mxu0 %v5224
        %v5302 = vpop.f32.mrb[0].mxu0
        %v5303 = vadd.f32 0.0, %v5302
        %v5304 = vpop.f32.mrb[0].mxu0
        %5305 = vmatprep.mubr.f32.mxu0 0.0
        %5306 = vmatmul.mubr.f32.gmra.mrb[0].mxu0 %v5226
        %v5307 = vpop.f32.mrb[0].mxu0
        %v5308 = vadd.f32 0.0, %v5307
        %v5309 = vpop.f32.mrb[0].mxu0
        %5310 = vdwg.mxu0
        %v5311 = vsel %vm1174, %v4610, -inf
        %5312 = vmax.xlane.f32.xlu0 %v5311
        %v5313 = vpop.xlane.xlu0 %5312
        %v5314 = vsel %vm1174, %v4615, -inf
        %5315 = vmax.xlane.f32.xlu0 %v5314
        %v5316 = vpop.xlane.xlu0 %5315
        %v5317 = vsel %vm1174, %v4709, -inf
        %5318 = vmax.xlane.f32.xlu0 %v5317
        %v5319 = vpop.xlane.xlu0 %5318
        %v5320 = vsel %vm1174, %v4714, -inf
        %5321 = vmax.xlane.f32.xlu0 %v5320
        %v5322 = vpop.xlane.xlu0 %5321
        %v5323 = vsel %vm1174, %v4808, -inf
        %5324 = vmax.xlane.f32.xlu0 %v5323
        %v5325 = vpop.xlane.xlu0 %5324
        %v5326 = vsel %vm1174, %v4813, -inf
        %5327 = vmax.xlane.f32.xlu0 %v5326
        %v5328 = vpop.xlane.xlu0 %5327
        %v5329 = vsel %vm1174, %v4907, -inf
        %5330 = vmax.xlane.f32.xlu0 %v5329
        %v5331 = vpop.xlane.xlu0 %5330
        %v5332 = vsel %vm1174, %v4912, -inf
        %5333 = vmax.xlane.f32.xlu0 %v5332
        %v5334 = vpop.xlane.xlu0 %5333
        %v5335 = vsel %vm1174, %v5006, -inf
        %5336 = vmax.xlane.f32.xlu0 %v5335
        %v5337 = vpop.xlane.xlu0 %5336
        %v5338 = vsel %vm1174, %v5011, -inf
        %5339 = vmax.xlane.f32.xlu0 %v5338
        %v5340 = vpop.xlane.xlu0 %5339
        %v5341 = vsel %vm1174, %v5105, -inf
        %5342 = vmax.xlane.f32.xlu0 %v5341
        %v5343 = vpop.xlane.xlu0 %5342
        %v5344 = vsel %vm1174, %v5110, -inf
        %5345 = vmax.xlane.f32.xlu0 %v5344
        %v5346 = vpop.xlane.xlu0 %5345
        %v5347 = vsel %vm1174, %v5204, -inf
        %5348 = vmax.xlane.f32.xlu0 %v5347
        %v5349 = vpop.xlane.xlu0 %5348
        %v5350 = vsel %vm1174, %v5209, -inf
        %5351 = vmax.xlane.f32.xlu0 %v5350
        %v5352 = vpop.xlane.xlu0 %5351
        %v5353 = vsel %vm1174, %v5303, -inf
        %5354 = vmax.xlane.f32.xlu0 %v5353
        %v5355 = vpop.xlane.xlu0 %5354
        %v5356 = vsel %vm1174, %v5308, -inf
        %5357 = vmax.xlane.f32.xlu0 %v5356
        %v5358 = vpop.xlane.xlu0 %5357
        %v5359 = vsub.f32 %v4610, %v5313
        %v5360 = vsub.f32 %v4615, %v5316
        %v5361 = vsub.f32 %v4709, %v5319
        %v5362 = vsub.f32 %v4714, %v5322
        %v5363 = vsub.f32 %v4808, %v5325
        %v5364 = vsub.f32 %v4813, %v5328
        %v5365 = vsub.f32 %v4907, %v5331
        %v5366 = vsub.f32 %v4912, %v5334
        %v5367 = vsub.f32 %v5006, %v5337
        %v5368 = vsub.f32 %v5011, %v5340
        %v5369 = vsub.f32 %v5105, %v5343
        %v5370 = vsub.f32 %v5110, %v5346
        %v5371 = vsub.f32 %v5204, %v5349
        %v5372 = vsub.f32 %v5209, %v5352
        %v5373 = vsub.f32 %v5303, %v5355
        %v5374 = vsub.f32 %v5308, %v5358
        %v5375 = vmul.f32 %v5359, 1.442695
        %v5376 = vpow.pop %v5375
        %v5377 = vmul.f32 %v5360, 1.442695
        %v5378 = vpow.pop %v5377
        %v5379 = vmul.f32 %v5361, 1.442695
        %v5380 = vpow.pop %v5379
        %v5381 = vmul.f32 %v5362, 1.442695
        %v5382 = vpow.pop %v5381
        %v5383 = vmul.f32 %v5363, 1.442695
        %v5384 = vpow.pop %v5383
        %v5385 = vmul.f32 %v5364, 1.442695
        %v5386 = vpow.pop %v5385
        %v5387 = vmul.f32 %v5365, 1.442695
        %v5388 = vpow.pop %v5387
        %v5389 = vmul.f32 %v5366, 1.442695
        %v5390 = vpow.pop %v5389
        %v5391 = vmul.f32 %v5367, 1.442695
        %v5392 = vpow.pop %v5391
        %v5393 = vmul.f32 %v5368, 1.442695
        %v5394 = vpow.pop %v5393
        %v5395 = vmul.f32 %v5369, 1.442695
        %v5396 = vpow.pop %v5395
        %v5397 = vmul.f32 %v5370, 1.442695
        %v5398 = vpow.pop %v5397
        %v5399 = vmul.f32 %v5371, 1.442695
        %v5400 = vpow.pop %v5399
        %v5401 = vmul.f32 %v5372, 1.442695
        %v5402 = vpow.pop %v5401
        %v5403 = vmul.f32 %v5373, 1.442695
        %v5404 = vpow.pop %v5403
        %v5405 = vmul.f32 %v5374, 1.442695
        %v5406 = vpow.pop %v5405
        %v5407 = vsel %vm1174, %v5376, 0.0
        %5408 = vadd.xlane.f32.xlu0 %v5407
        %v5409 = vpop.xlane.xlu0 %5408
        %v5410 = vsel %vm1174, %v5378, 0.0
        %5411 = vadd.xlane.f32.xlu0 %v5410
        %v5412 = vpop.xlane.xlu0 %5411
        %v5413 = vsel %vm1174, %v5380, 0.0
        %5414 = vadd.xlane.f32.xlu0 %v5413
        %v5415 = vpop.xlane.xlu0 %5414
        %v5416 = vsel %vm1174, %v5382, 0.0
        %5417 = vadd.xlane.f32.xlu0 %v5416
        %v5418 = vpop.xlane.xlu0 %5417
        %v5419 = vsel %vm1174, %v5384, 0.0
        %5420 = vadd.xlane.f32.xlu0 %v5419
        %v5421 = vpop.xlane.xlu0 %5420
        %v5422 = vsel %vm1174, %v5386, 0.0
        %5423 = vadd.xlane.f32.xlu0 %v5422
        %v5424 = vpop.xlane.xlu0 %5423
        %v5425 = vsel %vm1174, %v5388, 0.0
        %5426 = vadd.xlane.f32.xlu0 %v5425
        %v5427 = vpop.xlane.xlu0 %5426
        %v5428 = vsel %vm1174, %v5390, 0.0
        %5429 = vadd.xlane.f32.xlu0 %v5428
        %v5430 = vpop.xlane.xlu0 %5429
        %v5431 = vsel %vm1174, %v5392, 0.0
        %5432 = vadd.xlane.f32.xlu0 %v5431
        %v5433 = vpop.xlane.xlu0 %5432
        %v5434 = vsel %vm1174, %v5394, 0.0
        %5435 = vadd.xlane.f32.xlu0 %v5434
        %v5436 = vpop.xlane.xlu0 %5435
        %v5437 = vsel %vm1174, %v5396, 0.0
        %5438 = vadd.xlane.f32.xlu0 %v5437
        %v5439 = vpop.xlane.xlu0 %5438
        %v5440 = vsel %vm1174, %v5398, 0.0
        %5441 = vadd.xlane.f32.xlu0 %v5440
        %v5442 = vpop.xlane.xlu0 %5441
        %v5443 = vsel %vm1174, %v5400, 0.0
        %5444 = vadd.xlane.f32.xlu0 %v5443
        %v5445 = vpop.xlane.xlu0 %5444
        %v5446 = vsel %vm1174, %v5402, 0.0
        %5447 = vadd.xlane.f32.xlu0 %v5446
        %v5448 = vpop.xlane.xlu0 %5447
        %v5449 = vsel %vm1174, %v5404, 0.0
        %5450 = vadd.xlane.f32.xlu0 %v5449
        %v5451 = vpop.xlane.xlu0 %5450
        %v5452 = vsel %vm1174, %v5406, 0.0
        %5453 = vadd.xlane.f32.xlu0 %v5452
        %v5454 = vpop.xlane.xlu0 %5453
        %v5455 = vrcp.pop %v5409
        %v5456 = vmul.f32 1.0, %v5455
        %v5457 = vrcp.pop %v5412
        %v5458 = vmul.f32 1.0, %v5457
        %v5459 = vrcp.pop %v5415
        %v5460 = vmul.f32 1.0, %v5459
        %v5461 = vrcp.pop %v5418
        %v5462 = vmul.f32 1.0, %v5461
        %v5463 = vrcp.pop %v5421
        %v5464 = vmul.f32 1.0, %v5463
        %v5465 = vrcp.pop %v5424
        %v5466 = vmul.f32 1.0, %v5465
        %v5467 = vrcp.pop %v5427
        %v5468 = vmul.f32 1.0, %v5467
        %v5469 = vrcp.pop %v5430
        %v5470 = vmul.f32 1.0, %v5469
        %v5471 = vrcp.pop %v5433
        %v5472 = vmul.f32 1.0, %v5471
        %v5473 = vrcp.pop %v5436
        %v5474 = vmul.f32 1.0, %v5473
        %v5475 = vrcp.pop %v5439
        %v5476 = vmul.f32 1.0, %v5475
        %v5477 = vrcp.pop %v5442
        %v5478 = vmul.f32 1.0, %v5477
        %v5479 = vrcp.pop %v5445
        %v5480 = vmul.f32 1.0, %v5479
        %v5481 = vrcp.pop %v5448
        %v5482 = vmul.f32 1.0, %v5481
        %v5483 = vrcp.pop %v5451
        %v5484 = vmul.f32 1.0, %v5483
        %v5485 = vrcp.pop %v5454
        %v5486 = vmul.f32 1.0, %v5485
        %5487 = vrot.lane.b32.xlu0 %v986, 64
        %v5488 = vpop.permute.xlu0 %5487
        %5489 = vrot.lane.b32.xlu0 %v992, 64
        %v5490 = vpop.permute.xlu0 %5489
        %5491 = vrot.lane.b32.xlu0 %v998, 64
        %v5492 = vpop.permute.xlu0 %5491
        %5493 = vrot.lane.b32.xlu0 %v1004, 64
        %v5494 = vpop.permute.xlu0 %5493
        %v5500 = vsel %vm1174, %v5376, 0
        %v5503 = vsel %vm1174, %v5378, 0
        %5505 = vmatprep.subr.mxu0 0.0
        %5506 = vmatpush1.msra.mxu0 %v5488
        %5507 = vmatprep.subr.mxu0 0.0
        %5508 = vmatpush1.msra.mxu0 %v5490
        %5509 = vmatprep.subr.mxu0 0.0
        %5510 = vmatpush1.msra.mxu0 %v5492
        %5511 = vmatprep.subr.mxu0 0.0
        %5512 = vmatpush1.msra.mxu0 %v5494
        %5513 = vmatprep.subr.mxu0 0.0
        %5514 = vmatpush1.msra.mxu0 0.0
        %5515 = vmatprep.subr.mxu0 0.0
        %5516 = vmatpush1.msra.mxu0 0.0
        %5517 = vmatprep.subr.mxu0 0.0
        %5518 = vmatpush1.msra.mxu0 0.0
        %5519 = vmatprep.subr.mxu0 0.0
        %5520 = vmatpush1.msra.mxu0 0.0
        %5521 = vmatprep.subr.mxu0 0.0
        %5522 = vmatpush1.msra.mxu0 0.0
        %5523 = vmatprep.subr.mxu0 0.0
        %5524 = vmatpush1.msra.mxu0 0.0
        %5525 = vmatprep.subr.mxu0 0.0
        %5526 = vmatpush1.msra.mxu0 0.0
        %5527 = vmatprep.subr.mxu0 0.0
        %5528 = vmatpush1.msra.mxu0 0.0
        %5529 = vmatprep.subr.mxu0 0.0
        %5530 = vmatpush1.msra.mxu0 0.0
        %5531 = vmatprep.subr.mxu0 0.0
        %5532 = vmatpush1.msra.mxu0 0.0
        %5533 = vmatprep.subr.mxu0 0.0
        %5534 = vmatpush1.msra.mxu0 0.0
        %5535 = vmatprep.subr.mxu0 0.0
        %5536 = vmatpush1.msra.mxu0 0.0
        %5537 = vmatprep.subr.mxu0 0.0
        %5538 = vmatpush1.msra.mxu0 0.0
        %5539 = vmatprep.subr.mxu0 0.0
        %5540 = vmatpush1.msra.mxu0 0.0
        %5541 = vmatprep.subr.mxu0 0.0
        %5542 = vmatpush1.msra.mxu0 0.0
        %5543 = vmatprep.subr.mxu0 0.0
        %5544 = vmatpush1.msra.mxu0 0.0
        %5545 = vmatprep.subr.mxu0 0.0
        %5546 = vmatpush1.msra.mxu0 0.0
        %5547 = vmatprep.subr.mxu0 0.0
        %5548 = vmatpush1.msra.mxu0 0.0
        %5549 = vmatprep.subr.mxu0 0.0
        %5550 = vmatpush1.msra.mxu0 0.0
        %5551 = vmatprep.subr.mxu0 0.0
        %5552 = vmatpush1.msra.mxu0 0.0
        %5553 = vmatprep.subr.mxu0 0.0
        %5554 = vmatpush1.msra.mxu0 0.0
        %5555 = vmatprep.subr.mxu0 0.0
        %5556 = vmatpush1.msra.mxu0 0.0
        %5557 = vmatprep.subr.mxu0 0.0
        %5558 = vmatpush1.msra.mxu0 0.0
        %5559 = vmatprep.subr.mxu0 0.0
        %5560 = vmatpush1.msra.mxu0 0.0
        %5561 = vmatprep.subr.mxu0 0.0
        %5562 = vmatpush1.msra.mxu0 0.0
        %5563 = vmatprep.subr.mxu0 0.0
        %5564 = vmatpush1.msra.mxu0 0.0
        %5565 = vmatprep.subr.mxu0 0.0
        %5566 = vmatpush1.msra.mxu0 0.0
        %5567 = vmatprep.subr.mxu0 0.0
        %5568 = vmatpush1.msra.mxu0 0.0
        %5569 = vmatprep.mubr.f32.mxu0 0.0
        %5570 = vmatmul.mubr.f32.gmra.mrb[0].mxu0 %v5500
        %v5571 = vpop.f32.mrb[0].mxu0
        %v5572 = vadd.f32 0.0, %v5571
        %v5573 = vpop.f32.mrb[0].mxu0
        %5574 = vmatprep.mubr.f32.mxu0 0.0
        %5575 = vmatmul.mubr.f32.gmra.mrb[0].mxu0 %v5503
        %v5576 = vpop.f32.mrb[0].mxu0
        %v5577 = vadd.f32 0.0, %v5576
        %v5578 = vpop.f32.mrb[0].mxu0
        %5579 = vdwg.mxu0
        %5580 = vrot.lane.b32.xlu0 %v1010, 64
        %v5581 = vpop.permute.xlu0 %5580
        %5582 = vrot.lane.b32.xlu0 %v1016, 64
        %v5583 = vpop.permute.xlu0 %5582
        %5584 = vrot.lane.b32.xlu0 %v1022, 64
        %v5585 = vpop.permute.xlu0 %5584
        %5586 = vrot.lane.b32.xlu0 %v1028, 64
        %v5587 = vpop.permute.xlu0 %5586
        %v5593 = vsel %vm1174, %v5380, 0
        %v5596 = vsel %vm1174, %v5382, 0
        %5598 = vmatprep.subr.mxu0 0.0
        %5599 = vmatpush1.msra.mxu0 %v5581
        %5600 = vmatprep.subr.mxu0 0.0
        %5601 = vmatpush1.msra.mxu0 %v5583
        %5602 = vmatprep.subr.mxu0 0.0
        %5603 = vmatpush1.msra.mxu0 %v5585
        %5604 = vmatprep.subr.mxu0 0.0
        %5605 = vmatpush1.msra.mxu0 %v5587
        %5606 = vmatprep.subr.mxu0 0.0
        %5607 = vmatpush1.msra.mxu0 0.0
        %5608 = vmatprep.subr.mxu0 0.0
        %5609 = vmatpush1.msra.mxu0 0.0
        %5610 = vmatprep.subr.mxu0 0.0
        %5611 = vmatpush1.msra.mxu0 0.0
        %5612 = vmatprep.subr.mxu0 0.0
        %5613 = vmatpush1.msra.mxu0 0.0
        %5614 = vmatprep.subr.mxu0 0.0
        %5615 = vmatpush1.msra.mxu0 0.0
        %5616 = vmatprep.subr.mxu0 0.0
        %5617 = vmatpush1.msra.mxu0 0.0
        %5618 = vmatprep.subr.mxu0 0.0
        %5619 = vmatpush1.msra.mxu0 0.0
        %5620 = vmatprep.subr.mxu0 0.0
        %5621 = vmatpush1.msra.mxu0 0.0
        %5622 = vmatprep.subr.mxu0 0.0
        %5623 = vmatpush1.msra.mxu0 0.0
        %5624 = vmatprep.subr.mxu0 0.0
        %5625 = vmatpush1.msra.mxu0 0.0
        %5626 = vmatprep.subr.mxu0 0.0
        %5627 = vmatpush1.msra.mxu0 0.0
        %5628 = vmatprep.subr.mxu0 0.0
        %5629 = vmatpush1.msra.mxu0 0.0
        %5630 = vmatprep.subr.mxu0 0.0
        %5631 = vmatpush1.msra.mxu0 0.0
        %5632 = vmatprep.subr.mxu0 0.0
        %5633 = vmatpush1.msra.mxu0 0.0
        %5634 = vmatprep.subr.mxu0 0.0
        %5635 = vmatpush1.msra.mxu0 0.0
        %5636 = vmatprep.subr.mxu0 0.0
        %5637 = vmatpush1.msra.mxu0 0.0
        %5638 = vmatprep.subr.mxu0 0.0
        %5639 = vmatpush1.msra.mxu0 0.0
        %5640 = vmatprep.subr.mxu0 0.0
        %5641 = vmatpush1.msra.mxu0 0.0
        %5642 = vmatprep.subr.mxu0 0.0
        %5643 = vmatpush1.msra.mxu0 0.0
        %5644 = vmatprep.subr.mxu0 0.0
        %5645 = vmatpush1.msra.mxu0 0.0
        %5646 = vmatprep.subr.mxu0 0.0
        %5647 = vmatpush1.msra.mxu0 0.0
        %5648 = vmatprep.subr.mxu0 0.0
        %5649 = vmatpush1.msra.mxu0 0.0
        %5650 = vmatprep.subr.mxu0 0.0
        %5651 = vmatpush1.msra.mxu0 0.0
        %5652 = vmatprep.subr.mxu0 0.0
        %5653 = vmatpush1.msra.mxu0 0.0
        %5654 = vmatprep.subr.mxu0 0.0
        %5655 = vmatpush1.msra.mxu0 0.0
        %5656 = vmatprep.subr.mxu0 0.0
        %5657 = vmatpush1.msra.mxu0 0.0
        %5658 = vmatprep.subr.mxu0 0.0
        %5659 = vmatpush1.msra.mxu0 0.0
        %5660 = vmatprep.subr.mxu0 0.0
        %5661 = vmatpush1.msra.mxu0 0.0
        %5662 = vmatprep.mubr.f32.mxu0 0.0
        %5663 = vmatmul.mubr.f32.gmra.mrb[0].mxu0 %v5593
        %v5664 = vpop.f32.mrb[0].mxu0
        %v5665 = vadd.f32 0.0, %v5664
        %v5666 = vpop.f32.mrb[0].mxu0
        %5667 = vmatprep.mubr.f32.mxu0 0.0
        %5668 = vmatmul.mubr.f32.gmra.mrb[0].mxu0 %v5596
        %v5669 = vpop.f32.mrb[0].mxu0
        %v5670 = vadd.f32 0.0, %v5669
        %v5671 = vpop.f32.mrb[0].mxu0
        %5672 = vdwg.mxu0
        %5673 = vrot.lane.b32.xlu0 %v1034, 64
        %v5674 = vpop.permute.xlu0 %5673
        %5675 = vrot.lane.b32.xlu0 %v1040, 64
        %v5676 = vpop.permute.xlu0 %5675
        %5677 = vrot.lane.b32.xlu0 %v1046, 64
        %v5678 = vpop.permute.xlu0 %5677
        %5679 = vrot.lane.b32.xlu0 %v1052, 64
        %v5680 = vpop.permute.xlu0 %5679
        %v5686 = vsel %vm1174, %v5384, 0
        %v5689 = vsel %vm1174, %v5386, 0
        %5691 = vmatprep.subr.mxu0 0.0
        %5692 = vmatpush1.msra.mxu0 %v5674
        %5693 = vmatprep.subr.mxu0 0.0
        %5694 = vmatpush1.msra.mxu0 %v5676
        %5695 = vmatprep.subr.mxu0 0.0
        %5696 = vmatpush1.msra.mxu0 %v5678
        %5697 = vmatprep.subr.mxu0 0.0
        %5698 = vmatpush1.msra.mxu0 %v5680
        %5699 = vmatprep.subr.mxu0 0.0
        %5700 = vmatpush1.msra.mxu0 0.0
        %5701 = vmatprep.subr.mxu0 0.0
        %5702 = vmatpush1.msra.mxu0 0.0
        %5703 = vmatprep.subr.mxu0 0.0
        %5704 = vmatpush1.msra.mxu0 0.0
        %5705 = vmatprep.subr.mxu0 0.0
        %5706 = vmatpush1.msra.mxu0 0.0
        %5707 = vmatprep.subr.mxu0 0.0
        %5708 = vmatpush1.msra.mxu0 0.0
        %5709 = vmatprep.subr.mxu0 0.0
        %5710 = vmatpush1.msra.mxu0 0.0
        %5711 = vmatprep.subr.mxu0 0.0
        %5712 = vmatpush1.msra.mxu0 0.0
        %5713 = vmatprep.subr.mxu0 0.0
        %5714 = vmatpush1.msra.mxu0 0.0
        %5715 = vmatprep.subr.mxu0 0.0
        %5716 = vmatpush1.msra.mxu0 0.0
        %5717 = vmatprep.subr.mxu0 0.0
        %5718 = vmatpush1.msra.mxu0 0.0
        %5719 = vmatprep.subr.mxu0 0.0
        %5720 = vmatpush1.msra.mxu0 0.0
        %5721 = vmatprep.subr.mxu0 0.0
        %5722 = vmatpush1.msra.mxu0 0.0
        %5723 = vmatprep.subr.mxu0 0.0
        %5724 = vmatpush1.msra.mxu0 0.0
        %5725 = vmatprep.subr.mxu0 0.0
        %5726 = vmatpush1.msra.mxu0 0.0
        %5727 = vmatprep.subr.mxu0 0.0
        %5728 = vmatpush1.msra.mxu0 0.0
        %5729 = vmatprep.subr.mxu0 0.0
        %5730 = vmatpush1.msra.mxu0 0.0
        %5731 = vmatprep.subr.mxu0 0.0
        %5732 = vmatpush1.msra.mxu0 0.0
        %5733 = vmatprep.subr.mxu0 0.0
        %5734 = vmatpush1.msra.mxu0 0.0
        %5735 = vmatprep.subr.mxu0 0.0
        %5736 = vmatpush1.msra.mxu0 0.0
        %5737 = vmatprep.subr.mxu0 0.0
        %5738 = vmatpush1.msra.mxu0 0.0
        %5739 = vmatprep.subr.mxu0 0.0
        %5740 = vmatpush1.msra.mxu0 0.0
        %5741 = vmatprep.subr.mxu0 0.0
        %5742 = vmatpush1.msra.mxu0 0.0
        %5743 = vmatprep.subr.mxu0 0.0
        %5744 = vmatpush1.msra.mxu0 0.0
        %5745 = vmatprep.subr.mxu0 0.0
        %5746 = vmatpush1.msra.mxu0 0.0
        %5747 = vmatprep.subr.mxu0 0.0
        %5748 = vmatpush1.msra.mxu0 0.0
        %5749 = vmatprep.subr.mxu0 0.0
        %5750 = vmatpush1.msra.mxu0 0.0
        %5751 = vmatprep.subr.mxu0 0.0
        %5752 = vmatpush1.msra.mxu0 0.0
        %5753 = vmatprep.subr.mxu0 0.0
        %5754 = vmatpush1.msra.mxu0 0.0
        %5755 = vmatprep.mubr.f32.mxu0 0.0
        %5756 = vmatmul.mubr.f32.gmra.mrb[0].mxu0 %v5686
        %v5757 = vpop.f32.mrb[0].mxu0
        %v5758 = vadd.f32 0.0, %v5757
        %v5759 = vpop.f32.mrb[0].mxu0
        %5760 = vmatprep.mubr.f32.mxu0 0.0
        %5761 = vmatmul.mubr.f32.gmra.mrb[0].mxu0 %v5689
        %v5762 = vpop.f32.mrb[0].mxu0
        %v5763 = vadd.f32 0.0, %v5762
        %v5764 = vpop.f32.mrb[0].mxu0
        %5765 = vdwg.mxu0
        %5766 = vrot.lane.b32.xlu0 %v1058, 64
        %v5767 = vpop.permute.xlu0 %5766
        %5768 = vrot.lane.b32.xlu0 %v1064, 64
        %v5769 = vpop.permute.xlu0 %5768
        %5770 = vrot.lane.b32.xlu0 %v1070, 64
        %v5771 = vpop.permute.xlu0 %5770
        %5772 = vrot.lane.b32.xlu0 %v1076, 64
        %v5773 = vpop.permute.xlu0 %5772
        %v5779 = vsel %vm1174, %v5388, 0
        %v5782 = vsel %vm1174, %v5390, 0
        %5784 = vmatprep.subr.mxu0 0.0
        %5785 = vmatpush1.msra.mxu0 %v5767
        %5786 = vmatprep.subr.mxu0 0.0
        %5787 = vmatpush1.msra.mxu0 %v5769
        %5788 = vmatprep.subr.mxu0 0.0
        %5789 = vmatpush1.msra.mxu0 %v5771
        %5790 = vmatprep.subr.mxu0 0.0
        %5791 = vmatpush1.msra.mxu0 %v5773
        %5792 = vmatprep.subr.mxu0 0.0
        %5793 = vmatpush1.msra.mxu0 0.0
        %5794 = vmatprep.subr.mxu0 0.0
        %5795 = vmatpush1.msra.mxu0 0.0
        %5796 = vmatprep.subr.mxu0 0.0
        %5797 = vmatpush1.msra.mxu0 0.0
        %5798 = vmatprep.subr.mxu0 0.0
        %5799 = vmatpush1.msra.mxu0 0.0
        %5800 = vmatprep.subr.mxu0 0.0
        %5801 = vmatpush1.msra.mxu0 0.0
        %5802 = vmatprep.subr.mxu0 0.0
        %5803 = vmatpush1.msra.mxu0 0.0
        %5804 = vmatprep.subr.mxu0 0.0
        %5805 = vmatpush1.msra.mxu0 0.0
        %5806 = vmatprep.subr.mxu0 0.0
        %5807 = vmatpush1.msra.mxu0 0.0
        %5808 = vmatprep.subr.mxu0 0.0
        %5809 = vmatpush1.msra.mxu0 0.0
        %5810 = vmatprep.subr.mxu0 0.0
        %5811 = vmatpush1.msra.mxu0 0.0
        %5812 = vmatprep.subr.mxu0 0.0
        %5813 = vmatpush1.msra.mxu0 0.0
        %5814 = vmatprep.subr.mxu0 0.0
        %5815 = vmatpush1.msra.mxu0 0.0
        %5816 = vmatprep.subr.mxu0 0.0
        %5817 = vmatpush1.msra.mxu0 0.0
        %5818 = vmatprep.subr.mxu0 0.0
        %5819 = vmatpush1.msra.mxu0 0.0
        %5820 = vmatprep.subr.mxu0 0.0
        %5821 = vmatpush1.msra.mxu0 0.0
        %5822 = vmatprep.subr.mxu0 0.0
        %5823 = vmatpush1.msra.mxu0 0.0
        %5824 = vmatprep.subr.mxu0 0.0
        %5825 = vmatpush1.msra.mxu0 0.0
        %5826 = vmatprep.subr.mxu0 0.0
        %5827 = vmatpush1.msra.mxu0 0.0
        %5828 = vmatprep.subr.mxu0 0.0
        %5829 = vmatpush1.msra.mxu0 0.0
        %5830 = vmatprep.subr.mxu0 0.0
        %5831 = vmatpush1.msra.mxu0 0.0
        %5832 = vmatprep.subr.mxu0 0.0
        %5833 = vmatpush1.msra.mxu0 0.0
        %5834 = vmatprep.subr.mxu0 0.0
        %5835 = vmatpush1.msra.mxu0 0.0
        %5836 = vmatprep.subr.mxu0 0.0
        %5837 = vmatpush1.msra.mxu0 0.0
        %5838 = vmatprep.subr.mxu0 0.0
        %5839 = vmatpush1.msra.mxu0 0.0
        %5840 = vmatprep.subr.mxu0 0.0
        %5841 = vmatpush1.msra.mxu0 0.0
        %5842 = vmatprep.subr.mxu0 0.0
        %5843 = vmatpush1.msra.mxu0 0.0
        %5844 = vmatprep.subr.mxu0 0.0
        %5845 = vmatpush1.msra.mxu0 0.0
        %5846 = vmatprep.subr.mxu0 0.0
        %5847 = vmatpush1.msra.mxu0 0.0
        %5848 = vmatprep.mubr.f32.mxu0 0.0
        %5849 = vmatmul.mubr.f32.gmra.mrb[0].mxu0 %v5779
        %v5850 = vpop.f32.mrb[0].mxu0
        %v5851 = vadd.f32 0.0, %v5850
        %v5852 = vpop.f32.mrb[0].mxu0
        %5853 = vmatprep.mubr.f32.mxu0 0.0
        %5854 = vmatmul.mubr.f32.gmra.mrb[0].mxu0 %v5782
        %v5855 = vpop.f32.mrb[0].mxu0
        %v5856 = vadd.f32 0.0, %v5855
        %v5857 = vpop.f32.mrb[0].mxu0
        %5858 = vdwg.mxu0
        %5859 = vrot.lane.b32.xlu0 %v1082, 64
        %v5860 = vpop.permute.xlu0 %5859
        %5861 = vrot.lane.b32.xlu0 %v1088, 64
        %v5862 = vpop.permute.xlu0 %5861
        %5863 = vrot.lane.b32.xlu0 %v1094, 64
        %v5864 = vpop.permute.xlu0 %5863
        %5865 = vrot.lane.b32.xlu0 %v1100, 64
        %v5866 = vpop.permute.xlu0 %5865
        %v5872 = vsel %vm1174, %v5392, 0
        %v5875 = vsel %vm1174, %v5394, 0
        %5877 = vmatprep.subr.mxu0 0.0
        %5878 = vmatpush1.msra.mxu0 %v5860
        %5879 = vmatprep.subr.mxu0 0.0
        %5880 = vmatpush1.msra.mxu0 %v5862
        %5881 = vmatprep.subr.mxu0 0.0
        %5882 = vmatpush1.msra.mxu0 %v5864
        %5883 = vmatprep.subr.mxu0 0.0
        %5884 = vmatpush1.msra.mxu0 %v5866
        %5885 = vmatprep.subr.mxu0 0.0
        %5886 = vmatpush1.msra.mxu0 0.0
        %5887 = vmatprep.subr.mxu0 0.0
        %5888 = vmatpush1.msra.mxu0 0.0
        %5889 = vmatprep.subr.mxu0 0.0
        %5890 = vmatpush1.msra.mxu0 0.0
        %5891 = vmatprep.subr.mxu0 0.0
        %5892 = vmatpush1.msra.mxu0 0.0
        %5893 = vmatprep.subr.mxu0 0.0
        %5894 = vmatpush1.msra.mxu0 0.0
        %5895 = vmatprep.subr.mxu0 0.0
        %5896 = vmatpush1.msra.mxu0 0.0
        %5897 = vmatprep.subr.mxu0 0.0
        %5898 = vmatpush1.msra.mxu0 0.0
        %5899 = vmatprep.subr.mxu0 0.0
        %5900 = vmatpush1.msra.mxu0 0.0
        %5901 = vmatprep.subr.mxu0 0.0
        %5902 = vmatpush1.msra.mxu0 0.0
        %5903 = vmatprep.subr.mxu0 0.0
        %5904 = vmatpush1.msra.mxu0 0.0
        %5905 = vmatprep.subr.mxu0 0.0
        %5906 = vmatpush1.msra.mxu0 0.0
        %5907 = vmatprep.subr.mxu0 0.0
        %5908 = vmatpush1.msra.mxu0 0.0
        %5909 = vmatprep.subr.mxu0 0.0
        %5910 = vmatpush1.msra.mxu0 0.0
        %5911 = vmatprep.subr.mxu0 0.0
        %5912 = vmatpush1.msra.mxu0 0.0
        %5913 = vmatprep.subr.mxu0 0.0
        %5914 = vmatpush1.msra.mxu0 0.0
        %5915 = vmatprep.subr.mxu0 0.0
        %5916 = vmatpush1.msra.mxu0 0.0
        %5917 = vmatprep.subr.mxu0 0.0
        %5918 = vmatpush1.msra.mxu0 0.0
        %5919 = vmatprep.subr.mxu0 0.0
        %5920 = vmatpush1.msra.mxu0 0.0
        %5921 = vmatprep.subr.mxu0 0.0
        %5922 = vmatpush1.msra.mxu0 0.0
        %5923 = vmatprep.subr.mxu0 0.0
        %5924 = vmatpush1.msra.mxu0 0.0
        %5925 = vmatprep.subr.mxu0 0.0
        %5926 = vmatpush1.msra.mxu0 0.0
        %5927 = vmatprep.subr.mxu0 0.0
        %5928 = vmatpush1.msra.mxu0 0.0
        %5929 = vmatprep.subr.mxu0 0.0
        %5930 = vmatpush1.msra.mxu0 0.0
        %5931 = vmatprep.subr.mxu0 0.0
        %5932 = vmatpush1.msra.mxu0 0.0
        %5933 = vmatprep.subr.mxu0 0.0
        %5934 = vmatpush1.msra.mxu0 0.0
        %5935 = vmatprep.subr.mxu0 0.0
        %5936 = vmatpush1.msra.mxu0 0.0
        %5937 = vmatprep.subr.mxu0 0.0
        %5938 = vmatpush1.msra.mxu0 0.0
        %5939 = vmatprep.subr.mxu0 0.0
        %5940 = vmatpush1.msra.mxu0 0.0
        %5941 = vmatprep.mubr.f32.mxu0 0.0
        %5942 = vmatmul.mubr.f32.gmra.mrb[0].mxu0 %v5872
        %v5943 = vpop.f32.mrb[0].mxu0
        %v5944 = vadd.f32 0.0, %v5943
        %v5945 = vpop.f32.mrb[0].mxu0
        %5946 = vmatprep.mubr.f32.mxu0 0.0
        %5947 = vmatmul.mubr.f32.gmra.mrb[0].mxu0 %v5875
        %v5948 = vpop.f32.mrb[0].mxu0
        %v5949 = vadd.f32 0.0, %v5948
        %v5950 = vpop.f32.mrb[0].mxu0
        %5951 = vdwg.mxu0
        %5952 = vrot.lane.b32.xlu0 %v1106, 64
        %v5953 = vpop.permute.xlu0 %5952
        %5954 = vrot.lane.b32.xlu0 %v1112, 64
        %v5955 = vpop.permute.xlu0 %5954
        %5956 = vrot.lane.b32.xlu0 %v1118, 64
        %v5957 = vpop.permute.xlu0 %5956
        %5958 = vrot.lane.b32.xlu0 %v1124, 64
        %v5959 = vpop.permute.xlu0 %5958
        %v5965 = vsel %vm1174, %v5396, 0
        %v5968 = vsel %vm1174, %v5398, 0
        %5970 = vmatprep.subr.mxu0 0.0
        %5971 = vmatpush1.msra.mxu0 %v5953
        %5972 = vmatprep.subr.mxu0 0.0
        %5973 = vmatpush1.msra.mxu0 %v5955
        %5974 = vmatprep.subr.mxu0 0.0
        %5975 = vmatpush1.msra.mxu0 %v5957
        %5976 = vmatprep.subr.mxu0 0.0
        %5977 = vmatpush1.msra.mxu0 %v5959
        %5978 = vmatprep.subr.mxu0 0.0
        %5979 = vmatpush1.msra.mxu0 0.0
        %5980 = vmatprep.subr.mxu0 0.0
        %5981 = vmatpush1.msra.mxu0 0.0
        %5982 = vmatprep.subr.mxu0 0.0
        %5983 = vmatpush1.msra.mxu0 0.0
        %5984 = vmatprep.subr.mxu0 0.0
        %5985 = vmatpush1.msra.mxu0 0.0
        %5986 = vmatprep.subr.mxu0 0.0
        %5987 = vmatpush1.msra.mxu0 0.0
        %5988 = vmatprep.subr.mxu0 0.0
        %5989 = vmatpush1.msra.mxu0 0.0
        %5990 = vmatprep.subr.mxu0 0.0
        %5991 = vmatpush1.msra.mxu0 0.0
        %5992 = vmatprep.subr.mxu0 0.0
        %5993 = vmatpush1.msra.mxu0 0.0
        %5994 = vmatprep.subr.mxu0 0.0
        %5995 = vmatpush1.msra.mxu0 0.0
        %5996 = vmatprep.subr.mxu0 0.0
        %5997 = vmatpush1.msra.mxu0 0.0
        %5998 = vmatprep.subr.mxu0 0.0
        %5999 = vmatpush1.msra.mxu0 0.0
        %6000 = vmatprep.subr.mxu0 0.0
        %6001 = vmatpush1.msra.mxu0 0.0
        %6002 = vmatprep.subr.mxu0 0.0
        %6003 = vmatpush1.msra.mxu0 0.0
        %6004 = vmatprep.subr.mxu0 0.0
        %6005 = vmatpush1.msra.mxu0 0.0
        %6006 = vmatprep.subr.mxu0 0.0
        %6007 = vmatpush1.msra.mxu0 0.0
        %6008 = vmatprep.subr.mxu0 0.0
        %6009 = vmatpush1.msra.mxu0 0.0
        %6010 = vmatprep.subr.mxu0 0.0
        %6011 = vmatpush1.msra.mxu0 0.0
        %6012 = vmatprep.subr.mxu0 0.0
        %6013 = vmatpush1.msra.mxu0 0.0
        %6014 = vmatprep.subr.mxu0 0.0
        %6015 = vmatpush1.msra.mxu0 0.0
        %6016 = vmatprep.subr.mxu0 0.0
        %6017 = vmatpush1.msra.mxu0 0.0
        %6018 = vmatprep.subr.mxu0 0.0
        %6019 = vmatpush1.msra.mxu0 0.0
        %6020 = vmatprep.subr.mxu0 0.0
        %6021 = vmatpush1.msra.mxu0 0.0
        %6022 = vmatprep.subr.mxu0 0.0
        %6023 = vmatpush1.msra.mxu0 0.0
        %6024 = vmatprep.subr.mxu0 0.0
        %6025 = vmatpush1.msra.mxu0 0.0
        %6026 = vmatprep.subr.mxu0 0.0
        %6027 = vmatpush1.msra.mxu0 0.0
        %6028 = vmatprep.subr.mxu0 0.0
        %6029 = vmatpush1.msra.mxu0 0.0
        %6030 = vmatprep.subr.mxu0 0.0
        %6031 = vmatpush1.msra.mxu0 0.0
        %6032 = vmatprep.subr.mxu0 0.0
        %6033 = vmatpush1.msra.mxu0 0.0
        %6034 = vmatprep.mubr.f32.mxu0 0.0
        %6035 = vmatmul.mubr.f32.gmra.mrb[0].mxu0 %v5965
        %v6036 = vpop.f32.mrb[0].mxu0
        %v6037 = vadd.f32 0.0, %v6036
        %v6038 = vpop.f32.mrb[0].mxu0
        %6039 = vmatprep.mubr.f32.mxu0 0.0
        %6040 = vmatmul.mubr.f32.gmra.mrb[0].mxu0 %v5968
        %v6041 = vpop.f32.mrb[0].mxu0
        %v6042 = vadd.f32 0.0, %v6041
        %v6043 = vpop.f32.mrb[0].mxu0
        %6044 = vdwg.mxu0
        %6045 = vrot.lane.b32.xlu0 %v1130, 64
        %v6046 = vpop.permute.xlu0 %6045
        %6047 = vrot.lane.b32.xlu0 %v1136, 64
        %v6048 = vpop.permute.xlu0 %6047
        %6049 = vrot.lane.b32.xlu0 %v1142, 64
        %v6050 = vpop.permute.xlu0 %6049
        %6051 = vrot.lane.b32.xlu0 %v1148, 64
        %v6052 = vpop.permute.xlu0 %6051
        %v6058 = vsel %vm1174, %v5400, 0
        %v6061 = vsel %vm1174, %v5402, 0
        %6063 = vmatprep.subr.mxu0 0.0
        %6064 = vmatpush1.msra.mxu0 %v6046
        %6065 = vmatprep.subr.mxu0 0.0
        %6066 = vmatpush1.msra.mxu0 %v6048
        %6067 = vmatprep.subr.mxu0 0.0
        %6068 = vmatpush1.msra.mxu0 %v6050
        %6069 = vmatprep.subr.mxu0 0.0
        %6070 = vmatpush1.msra.mxu0 %v6052
        %6071 = vmatprep.subr.mxu0 0.0
        %6072 = vmatpush1.msra.mxu0 0.0
        %6073 = vmatprep.subr.mxu0 0.0
        %6074 = vmatpush1.msra.mxu0 0.0
        %6075 = vmatprep.subr.mxu0 0.0
        %6076 = vmatpush1.msra.mxu0 0.0
        %6077 = vmatprep.subr.mxu0 0.0
        %6078 = vmatpush1.msra.mxu0 0.0
        %6079 = vmatprep.subr.mxu0 0.0
        %6080 = vmatpush1.msra.mxu0 0.0
        %6081 = vmatprep.subr.mxu0 0.0
        %6082 = vmatpush1.msra.mxu0 0.0
        %6083 = vmatprep.subr.mxu0 0.0
        %6084 = vmatpush1.msra.mxu0 0.0
        %6085 = vmatprep.subr.mxu0 0.0
        %6086 = vmatpush1.msra.mxu0 0.0
        %6087 = vmatprep.subr.mxu0 0.0
        %6088 = vmatpush1.msra.mxu0 0.0
        %6089 = vmatprep.subr.mxu0 0.0
        %6090 = vmatpush1.msra.mxu0 0.0
        %6091 = vmatprep.subr.mxu0 0.0
        %6092 = vmatpush1.msra.mxu0 0.0
        %6093 = vmatprep.subr.mxu0 0.0
        %6094 = vmatpush1.msra.mxu0 0.0
        %6095 = vmatprep.subr.mxu0 0.0
        %6096 = vmatpush1.msra.mxu0 0.0
        %6097 = vmatprep.subr.mxu0 0.0
        %6098 = vmatpush1.msra.mxu0 0.0
        %6099 = vmatprep.subr.mxu0 0.0
        %6100 = vmatpush1.msra.mxu0 0.0
        %6101 = vmatprep.subr.mxu0 0.0
        %6102 = vmatpush1.msra.mxu0 0.0
        %6103 = vmatprep.subr.mxu0 0.0
        %6104 = vmatpush1.msra.mxu0 0.0
        %6105 = vmatprep.subr.mxu0 0.0
        %6106 = vmatpush1.msra.mxu0 0.0
        %6107 = vmatprep.subr.mxu0 0.0
        %6108 = vmatpush1.msra.mxu0 0.0
        %6109 = vmatprep.subr.mxu0 0.0
        %6110 = vmatpush1.msra.mxu0 0.0
        %6111 = vmatprep.subr.mxu0 0.0
        %6112 = vmatpush1.msra.mxu0 0.0
        %6113 = vmatprep.subr.mxu0 0.0
        %6114 = vmatpush1.msra.mxu0 0.0
        %6115 = vmatprep.subr.mxu0 0.0
        %6116 = vmatpush1.msra.mxu0 0.0
        %6117 = vmatprep.subr.mxu0 0.0
        %6118 = vmatpush1.msra.mxu0 0.0
        %6119 = vmatprep.subr.mxu0 0.0
        %6120 = vmatpush1.msra.mxu0 0.0
        %6121 = vmatprep.subr.mxu0 0.0
        %6122 = vmatpush1.msra.mxu0 0.0
        %6123 = vmatprep.subr.mxu0 0.0
        %6124 = vmatpush1.msra.mxu0 0.0
        %6125 = vmatprep.subr.mxu0 0.0
        %6126 = vmatpush1.msra.mxu0 0.0
        %6127 = vmatprep.mubr.f32.mxu0 0.0
        %6128 = vmatmul.mubr.f32.gmra.mrb[0].mxu0 %v6058
        %v6129 = vpop.f32.mrb[0].mxu0
        %v6130 = vadd.f32 0.0, %v6129
        %v6131 = vpop.f32.mrb[0].mxu0
        %6132 = vmatprep.mubr.f32.mxu0 0.0
        %6133 = vmatmul.mubr.f32.gmra.mrb[0].mxu0 %v6061
        %v6134 = vpop.f32.mrb[0].mxu0
        %v6135 = vadd.f32 0.0, %v6134
        %v6136 = vpop.f32.mrb[0].mxu0
        %6137 = vdwg.mxu0
        %6138 = vrot.lane.b32.xlu0 %v1154, 64
        %v6139 = vpop.permute.xlu0 %6138
        %6140 = vrot.lane.b32.xlu0 %v1160, 64
        %v6141 = vpop.permute.xlu0 %6140
        %6142 = vrot.lane.b32.xlu0 %v1166, 64
        %v6143 = vpop.permute.xlu0 %6142
        %6144 = vrot.lane.b32.xlu0 %v1172, 64
        %v6145 = vpop.permute.xlu0 %6144
        %v6151 = vsel %vm1174, %v5404, 0
        %v6154 = vsel %vm1174, %v5406, 0
        %6156 = vmatprep.subr.mxu0 0.0
        %6157 = vmatpush1.msra.mxu0 %v6139
        %6158 = vmatprep.subr.mxu0 0.0
        %6159 = vmatpush1.msra.mxu0 %v6141
        %6160 = vmatprep.subr.mxu0 0.0
        %6161 = vmatpush1.msra.mxu0 %v6143
        %6162 = vmatprep.subr.mxu0 0.0
        %6163 = vmatpush1.msra.mxu0 %v6145
        %6164 = vmatprep.subr.mxu0 0.0
        %6165 = vmatpush1.msra.mxu0 0.0
        %6166 = vmatprep.subr.mxu0 0.0
        %6167 = vmatpush1.msra.mxu0 0.0
        %6168 = vmatprep.subr.mxu0 0.0
        %6169 = vmatpush1.msra.mxu0 0.0
        %6170 = vmatprep.subr.mxu0 0.0
        %6171 = vmatpush1.msra.mxu0 0.0
        %6172 = vmatprep.subr.mxu0 0.0
        %6173 = vmatpush1.msra.mxu0 0.0
        %6174 = vmatprep.subr.mxu0 0.0
        %6175 = vmatpush1.msra.mxu0 0.0
        %6176 = vmatprep.subr.mxu0 0.0
        %6177 = vmatpush1.msra.mxu0 0.0
        %6178 = vmatprep.subr.mxu0 0.0
        %6179 = vmatpush1.msra.mxu0 0.0
        %6180 = vmatprep.subr.mxu0 0.0
        %6181 = vmatpush1.msra.mxu0 0.0
        %6182 = vmatprep.subr.mxu0 0.0
        %6183 = vmatpush1.msra.mxu0 0.0
        %6184 = vmatprep.subr.mxu0 0.0
        %6185 = vmatpush1.msra.mxu0 0.0
        %6186 = vmatprep.subr.mxu0 0.0
        %6187 = vmatpush1.msra.mxu0 0.0
        %6188 = vmatprep.subr.mxu0 0.0
        %6189 = vmatpush1.msra.mxu0 0.0
        %6190 = vmatprep.subr.mxu0 0.0
        %6191 = vmatpush1.msra.mxu0 0.0
        %6192 = vmatprep.subr.mxu0 0.0
        %6193 = vmatpush1.msra.mxu0 0.0
        %6194 = vmatprep.subr.mxu0 0.0
        %6195 = vmatpush1.msra.mxu0 0.0
        %6196 = vmatprep.subr.mxu0 0.0
        %6197 = vmatpush1.msra.mxu0 0.0
        %6198 = vmatprep.subr.mxu0 0.0
        %6199 = vmatpush1.msra.mxu0 0.0
        %6200 = vmatprep.subr.mxu0 0.0
        %6201 = vmatpush1.msra.mxu0 0.0
        %6202 = vmatprep.subr.mxu0 0.0
        %6203 = vmatpush1.msra.mxu0 0.0
        %6204 = vmatprep.subr.mxu0 0.0
        %6205 = vmatpush1.msra.mxu0 0.0
        %6206 = vmatprep.subr.mxu0 0.0
        %6207 = vmatpush1.msra.mxu0 0.0
        %6208 = vmatprep.subr.mxu0 0.0
        %6209 = vmatpush1.msra.mxu0 0.0
        %6210 = vmatprep.subr.mxu0 0.0
        %6211 = vmatpush1.msra.mxu0 0.0
        %6212 = vmatprep.subr.mxu0 0.0
        %6213 = vmatpush1.msra.mxu0 0.0
        %6214 = vmatprep.subr.mxu0 0.0
        %6215 = vmatpush1.msra.mxu0 0.0
        %6216 = vmatprep.subr.mxu0 0.0
        %6217 = vmatpush1.msra.mxu0 0.0
        %6218 = vmatprep.subr.mxu0 0.0
        %6219 = vmatpush1.msra.mxu0 0.0
        %6220 = vmatprep.mubr.f32.mxu0 0.0
        %6221 = vmatmul.mubr.f32.gmra.mrb[0].mxu0 %v6151
        %v6222 = vpop.f32.mrb[0].mxu0
        %v6223 = vadd.f32 0.0, %v6222
        %v6224 = vpop.f32.mrb[0].mxu0
        %6225 = vmatprep.mubr.f32.mxu0 0.0
        %6226 = vmatmul.mubr.f32.gmra.mrb[0].mxu0 %v6154
        %v6227 = vpop.f32.mrb[0].mxu0
        %v6228 = vadd.f32 0.0, %v6227
        %v6229 = vpop.f32.mrb[0].mxu0
        %6230 = vdwg.mxu0
        %v6231 = vmul.f32 %v5572, %v5456
        %v6232 = vmul.f32 %v5577, %v5458
        %v6233 = vmul.f32 %v5665, %v5460
        %v6234 = vmul.f32 %v5670, %v5462
        %v6235 = vmul.f32 %v5758, %v5464
        %v6236 = vmul.f32 %v5763, %v5466
        %v6237 = vmul.f32 %v5851, %v5468
        %v6238 = vmul.f32 %v5856, %v5470
        %v6239 = vmul.f32 %v5944, %v5472
        %v6240 = vmul.f32 %v5949, %v5474
        %v6241 = vmul.f32 %v6037, %v5476
        %v6242 = vmul.f32 %v6042, %v5478
        %v6243 = vmul.f32 %v6130, %v5480
        %v6244 = vmul.f32 %v6135, %v5482
        %v6245 = vmul.f32 %v6223, %v5484
        %v6246 = vmul.f32 %v6228, %v5486
        %6247 = vrot.lane.b32.xlu0 %v795, 32
        %v6248 = vpop.permute.xlu0 %6247
        %6249 = vrot.lane.b32.xlu0 %v800, 32
        %v6250 = vpop.permute.xlu0 %6249
        %6251 = vrot.lane.b32.xlu0 %v984, 32
        %v6252 = vpop.permute.xlu0 %6251
        %6253 = vrot.lane.b32.xlu0 %v990, 32
        %v6254 = vpop.permute.xlu0 %6253
        %6255 = vrot.lane.b32.xlu0 %v996, 32
        %v6256 = vpop.permute.xlu0 %6255
        %6257 = vrot.lane.b32.xlu0 %v1002, 32
        %v6258 = vpop.permute.xlu0 %6257
        %v6259 = vsel %vm1174, %v6248, 0
        %v6261 = vsel %vm1174, %v6250, 0
        %v6263 = vsel %vm1174, %v6252, 0
        %v6265 = vsel %vm1174, %v6254, 0
        %v6267 = vsel %vm1174, %v6256, 0
        %v6269 = vsel %vm1174, %v6258, 0
        %6271 = vmatprep.subr.mxu0 0.0
        %6272 = vmatpush1.xpose.msra.mxu0 %v6263
        %6273 = vmatprep.subr.mxu0 0.0
        %6274 = vmatpush1.xpose.msra.mxu0 %v6265
        %6275 = vmatprep.subr.mxu0 0.0
        %6276 = vmatpush1.xpose.msra.mxu0 %v6267
        %6277 = vmatprep.subr.mxu0 0.0
        %6278 = vmatpush1.xpose.msra.mxu0 %v6269
        %6279 = vmatprep.subr.mxu0 0.0
        %6280 = vmatpush1.xpose.msra.mxu0 0.0
        %6281 = vmatprep.subr.mxu0 0.0
        %6282 = vmatpush1.xpose.msra.mxu0 0.0
        %6283 = vmatprep.subr.mxu0 0.0
        %6284 = vmatpush1.xpose.msra.mxu0 0.0
        %6285 = vmatprep.subr.mxu0 0.0
        %6286 = vmatpush1.xpose.msra.mxu0 0.0
        %6287 = vmatprep.subr.mxu0 0.0
        %6288 = vmatpush1.xpose.msra.mxu0 0.0
        %6289 = vmatprep.subr.mxu0 0.0
        %6290 = vmatpush1.xpose.msra.mxu0 0.0
        %6291 = vmatprep.subr.mxu0 0.0
        %6292 = vmatpush1.xpose.msra.mxu0 0.0
        %6293 = vmatprep.subr.mxu0 0.0
        %6294 = vmatpush1.xpose.msra.mxu0 0.0
        %6295 = vmatprep.subr.mxu0 0.0
        %6296 = vmatpush1.xpose.msra.mxu0 0.0
        %6297 = vmatprep.subr.mxu0 0.0
        %6298 = vmatpush1.xpose.msra.mxu0 0.0
        %6299 = vmatprep.subr.mxu0 0.0
        %6300 = vmatpush1.xpose.msra.mxu0 0.0
        %6301 = vmatprep.subr.mxu0 0.0
        %6302 = vmatpush1.xpose.msra.mxu0 0.0
        %6303 = vmatprep.subr.mxu0 0.0
        %6304 = vmatpush1.xpose.msra.mxu0 0.0
        %6305 = vmatprep.subr.mxu0 0.0
        %6306 = vmatpush1.xpose.msra.mxu0 0.0
        %6307 = vmatprep.subr.mxu0 0.0
        %6308 = vmatpush1.xpose.msra.mxu0 0.0
        %6309 = vmatprep.subr.mxu0 0.0
        %6310 = vmatpush1.xpose.msra.mxu0 0.0
        %6311 = vmatprep.subr.mxu0 0.0
        %6312 = vmatpush1.xpose.msra.mxu0 0.0
        %6313 = vmatprep.subr.mxu0 0.0
        %6314 = vmatpush1.xpose.msra.mxu0 0.0
        %6315 = vmatprep.subr.mxu0 0.0
        %6316 = vmatpush1.xpose.msra.mxu0 0.0
        %6317 = vmatprep.subr.mxu0 0.0
        %6318 = vmatpush1.xpose.msra.mxu0 0.0
        %6319 = vmatprep.subr.mxu0 0.0
        %6320 = vmatpush1.xpose.msra.mxu0 0.0
        %6321 = vmatprep.subr.mxu0 0.0
        %6322 = vmatpush1.xpose.msra.mxu0 0.0
        %6323 = vmatprep.subr.mxu0 0.0
        %6324 = vmatpush1.xpose.msra.mxu0 0.0
        %6325 = vmatprep.subr.mxu0 0.0
        %6326 = vmatpush1.xpose.msra.mxu0 0.0
        %6327 = vmatprep.subr.mxu0 0.0
        %6328 = vmatpush1.xpose.msra.mxu0 0.0
        %6329 = vmatprep.subr.mxu0 0.0
        %6330 = vmatpush1.xpose.msra.mxu0 0.0
        %6331 = vmatprep.subr.mxu0 0.0
        %6332 = vmatpush1.xpose.msra.mxu0 0.0
        %6333 = vmatprep.subr.mxu0 0.0
        %6334 = vmatpush1.xpose.msra.mxu0 0.0
        %6335 = vmatprep.mubr.f32.mxu0 0.0
        %6336 = vmatmul.mubr.f32.gmra.mrb[0].mxu0 %v6259
        %v6337 = vpop.f32.mrb[0].mxu0
        %v6338 = vadd.f32 0.0, %v6337
        %v6339 = vpop.f32.mrb[0].mxu0
        %6340 = vmatprep.mubr.f32.mxu0 0.0
        %6341 = vmatmul.mubr.f32.gmra.mrb[0].mxu0 %v6261
        %v6342 = vpop.f32.mrb[0].mxu0
        %v6343 = vadd.f32 0.0, %v6342
        %v6344 = vpop.f32.mrb[0].mxu0
        %6345 = vdwg.mxu0
        %6346 = vrot.lane.b32.xlu0 %v805, 32
        %v6347 = vpop.permute.xlu0 %6346
        %6348 = vrot.lane.b32.xlu0 %v810, 32
        %v6349 = vpop.permute.xlu0 %6348
        %6350 = vrot.lane.b32.xlu0 %v1008, 32
        %v6351 = vpop.permute.xlu0 %6350
        %6352 = vrot.lane.b32.xlu0 %v1014, 32
        %v6353 = vpop.permute.xlu0 %6352
        %6354 = vrot.lane.b32.xlu0 %v1020, 32
        %v6355 = vpop.permute.xlu0 %6354
        %6356 = vrot.lane.b32.xlu0 %v1026, 32
        %v6357 = vpop.permute.xlu0 %6356
        %v6358 = vsel %vm1174, %v6347, 0
        %v6360 = vsel %vm1174, %v6349, 0
        %v6362 = vsel %vm1174, %v6351, 0
        %v6364 = vsel %vm1174, %v6353, 0
        %v6366 = vsel %vm1174, %v6355, 0
        %v6368 = vsel %vm1174, %v6357, 0
        %6370 = vmatprep.subr.mxu0 0.0
        %6371 = vmatpush1.xpose.msra.mxu0 %v6362
        %6372 = vmatprep.subr.mxu0 0.0
        %6373 = vmatpush1.xpose.msra.mxu0 %v6364
        %6374 = vmatprep.subr.mxu0 0.0
        %6375 = vmatpush1.xpose.msra.mxu0 %v6366
        %6376 = vmatprep.subr.mxu0 0.0
        %6377 = vmatpush1.xpose.msra.mxu0 %v6368
        %6378 = vmatprep.subr.mxu0 0.0
        %6379 = vmatpush1.xpose.msra.mxu0 0.0
        %6380 = vmatprep.subr.mxu0 0.0
        %6381 = vmatpush1.xpose.msra.mxu0 0.0
        %6382 = vmatprep.subr.mxu0 0.0
        %6383 = vmatpush1.xpose.msra.mxu0 0.0
        %6384 = vmatprep.subr.mxu0 0.0
        %6385 = vmatpush1.xpose.msra.mxu0 0.0
        %6386 = vmatprep.subr.mxu0 0.0
        %6387 = vmatpush1.xpose.msra.mxu0 0.0
        %6388 = vmatprep.subr.mxu0 0.0
        %6389 = vmatpush1.xpose.msra.mxu0 0.0
        %6390 = vmatprep.subr.mxu0 0.0
        %6391 = vmatpush1.xpose.msra.mxu0 0.0
        %6392 = vmatprep.subr.mxu0 0.0
        %6393 = vmatpush1.xpose.msra.mxu0 0.0
        %6394 = vmatprep.subr.mxu0 0.0
        %6395 = vmatpush1.xpose.msra.mxu0 0.0
        %6396 = vmatprep.subr.mxu0 0.0
        %6397 = vmatpush1.xpose.msra.mxu0 0.0
        %6398 = vmatprep.subr.mxu0 0.0
        %6399 = vmatpush1.xpose.msra.mxu0 0.0
        %6400 = vmatprep.subr.mxu0 0.0
        %6401 = vmatpush1.xpose.msra.mxu0 0.0
        %6402 = vmatprep.subr.mxu0 0.0
        %6403 = vmatpush1.xpose.msra.mxu0 0.0
        %6404 = vmatprep.subr.mxu0 0.0
        %6405 = vmatpush1.xpose.msra.mxu0 0.0
        %6406 = vmatprep.subr.mxu0 0.0
        %6407 = vmatpush1.xpose.msra.mxu0 0.0
        %6408 = vmatprep.subr.mxu0 0.0
        %6409 = vmatpush1.xpose.msra.mxu0 0.0
        %6410 = vmatprep.subr.mxu0 0.0
        %6411 = vmatpush1.xpose.msra.mxu0 0.0
        %6412 = vmatprep.subr.mxu0 0.0
        %6413 = vmatpush1.xpose.msra.mxu0 0.0
        %6414 = vmatprep.subr.mxu0 0.0
        %6415 = vmatpush1.xpose.msra.mxu0 0.0
        %6416 = vmatprep.subr.mxu0 0.0
        %6417 = vmatpush1.xpose.msra.mxu0 0.0
        %6418 = vmatprep.subr.mxu0 0.0
        %6419 = vmatpush1.xpose.msra.mxu0 0.0
        %6420 = vmatprep.subr.mxu0 0.0
        %6421 = vmatpush1.xpose.msra.mxu0 0.0
        %6422 = vmatprep.subr.mxu0 0.0
        %6423 = vmatpush1.xpose.msra.mxu0 0.0
        %6424 = vmatprep.subr.mxu0 0.0
        %6425 = vmatpush1.xpose.msra.mxu0 0.0
        %6426 = vmatprep.subr.mxu0 0.0
        %6427 = vmatpush1.xpose.msra.mxu0 0.0
        %6428 = vmatprep.subr.mxu0 0.0
        %6429 = vmatpush1.xpose.msra.mxu0 0.0
        %6430 = vmatprep.subr.mxu0 0.0
        %6431 = vmatpush1.xpose.msra.mxu0 0.0
        %6432 = vmatprep.subr.mxu0 0.0
        %6433 = vmatpush1.xpose.msra.mxu0 0.0
        %6434 = vmatprep.mubr.f32.mxu0 0.0
        %6435 = vmatmul.mubr.f32.gmra.mrb[0].mxu0 %v6358
        %v6436 = vpop.f32.mrb[0].mxu0
        %v6437 = vadd.f32 0.0, %v6436
        %v6438 = vpop.f32.mrb[0].mxu0
        %6439 = vmatprep.mubr.f32.mxu0 0.0
        %6440 = vmatmul.mubr.f32.gmra.mrb[0].mxu0 %v6360
        %v6441 = vpop.f32.mrb[0].mxu0
        %v6442 = vadd.f32 0.0, %v6441
        %v6443 = vpop.f32.mrb[0].mxu0
        %6444 = vdwg.mxu0
        %6445 = vrot.lane.b32.xlu0 %v815, 32
        %v6446 = vpop.permute.xlu0 %6445
        %6447 = vrot.lane.b32.xlu0 %v820, 32
        %v6448 = vpop.permute.xlu0 %6447
        %6449 = vrot.lane.b32.xlu0 %v1032, 32
        %v6450 = vpop.permute.xlu0 %6449
        %6451 = vrot.lane.b32.xlu0 %v1038, 32
        %v6452 = vpop.permute.xlu0 %6451
        %6453 = vrot.lane.b32.xlu0 %v1044, 32
        %v6454 = vpop.permute.xlu0 %6453
        %6455 = vrot.lane.b32.xlu0 %v1050, 32
        %v6456 = vpop.permute.xlu0 %6455
        %v6457 = vsel %vm1174, %v6446, 0
        %v6459 = vsel %vm1174, %v6448, 0
        %v6461 = vsel %vm1174, %v6450, 0
        %v6463 = vsel %vm1174, %v6452, 0
        %v6465 = vsel %vm1174, %v6454, 0
        %v6467 = vsel %vm1174, %v6456, 0
        %6469 = vmatprep.subr.mxu0 0.0
        %6470 = vmatpush1.xpose.msra.mxu0 %v6461
        %6471 = vmatprep.subr.mxu0 0.0
        %6472 = vmatpush1.xpose.msra.mxu0 %v6463
        %6473 = vmatprep.subr.mxu0 0.0
        %6474 = vmatpush1.xpose.msra.mxu0 %v6465
        %6475 = vmatprep.subr.mxu0 0.0
        %6476 = vmatpush1.xpose.msra.mxu0 %v6467
        %6477 = vmatprep.subr.mxu0 0.0
        %6478 = vmatpush1.xpose.msra.mxu0 0.0
        %6479 = vmatprep.subr.mxu0 0.0
        %6480 = vmatpush1.xpose.msra.mxu0 0.0
        %6481 = vmatprep.subr.mxu0 0.0
        %6482 = vmatpush1.xpose.msra.mxu0 0.0
        %6483 = vmatprep.subr.mxu0 0.0
        %6484 = vmatpush1.xpose.msra.mxu0 0.0
        %6485 = vmatprep.subr.mxu0 0.0
        %6486 = vmatpush1.xpose.msra.mxu0 0.0
        %6487 = vmatprep.subr.mxu0 0.0
        %6488 = vmatpush1.xpose.msra.mxu0 0.0
        %6489 = vmatprep.subr.mxu0 0.0
        %6490 = vmatpush1.xpose.msra.mxu0 0.0
        %6491 = vmatprep.subr.mxu0 0.0
        %6492 = vmatpush1.xpose.msra.mxu0 0.0
        %6493 = vmatprep.subr.mxu0 0.0
        %6494 = vmatpush1.xpose.msra.mxu0 0.0
        %6495 = vmatprep.subr.mxu0 0.0
        %6496 = vmatpush1.xpose.msra.mxu0 0.0
        %6497 = vmatprep.subr.mxu0 0.0
        %6498 = vmatpush1.xpose.msra.mxu0 0.0
        %6499 = vmatprep.subr.mxu0 0.0
        %6500 = vmatpush1.xpose.msra.mxu0 0.0
        %6501 = vmatprep.subr.mxu0 0.0
        %6502 = vmatpush1.xpose.msra.mxu0 0.0
        %6503 = vmatprep.subr.mxu0 0.0
        %6504 = vmatpush1.xpose.msra.mxu0 0.0
        %6505 = vmatprep.subr.mxu0 0.0
        %6506 = vmatpush1.xpose.msra.mxu0 0.0
        %6507 = vmatprep.subr.mxu0 0.0
        %6508 = vmatpush1.xpose.msra.mxu0 0.0
        %6509 = vmatprep.subr.mxu0 0.0
        %6510 = vmatpush1.xpose.msra.mxu0 0.0
        %6511 = vmatprep.subr.mxu0 0.0
        %6512 = vmatpush1.xpose.msra.mxu0 0.0
        %6513 = vmatprep.subr.mxu0 0.0
        %6514 = vmatpush1.xpose.msra.mxu0 0.0
        %6515 = vmatprep.subr.mxu0 0.0
        %6516 = vmatpush1.xpose.msra.mxu0 0.0
        %6517 = vmatprep.subr.mxu0 0.0
        %6518 = vmatpush1.xpose.msra.mxu0 0.0
        %6519 = vmatprep.subr.mxu0 0.0
        %6520 = vmatpush1.xpose.msra.mxu0 0.0
        %6521 = vmatprep.subr.mxu0 0.0
        %6522 = vmatpush1.xpose.msra.mxu0 0.0
        %6523 = vmatprep.subr.mxu0 0.0
        %6524 = vmatpush1.xpose.msra.mxu0 0.0
        %6525 = vmatprep.subr.mxu0 0.0
        %6526 = vmatpush1.xpose.msra.mxu0 0.0
        %6527 = vmatprep.subr.mxu0 0.0
        %6528 = vmatpush1.xpose.msra.mxu0 0.0
        %6529 = vmatprep.subr.mxu0 0.0
        %6530 = vmatpush1.xpose.msra.mxu0 0.0
        %6531 = vmatprep.subr.mxu0 0.0
        %6532 = vmatpush1.xpose.msra.mxu0 0.0
        %6533 = vmatprep.mubr.f32.mxu0 0.0
        %6534 = vmatmul.mubr.f32.gmra.mrb[0].mxu0 %v6457
        %v6535 = vpop.f32.mrb[0].mxu0
        %v6536 = vadd.f32 0.0, %v6535
        %v6537 = vpop.f32.mrb[0].mxu0
        %6538 = vmatprep.mubr.f32.mxu0 0.0
        %6539 = vmatmul.mubr.f32.gmra.mrb[0].mxu0 %v6459
        %v6540 = vpop.f32.mrb[0].mxu0
        %v6541 = vadd.f32 0.0, %v6540
        %v6542 = vpop.f32.mrb[0].mxu0
        %6543 = vdwg.mxu0
        %6544 = vrot.lane.b32.xlu0 %v825, 32
        %v6545 = vpop.permute.xlu0 %6544
        %6546 = vrot.lane.b32.xlu0 %v830, 32
        %v6547 = vpop.permute.xlu0 %6546
        %6548 = vrot.lane.b32.xlu0 %v1056, 32
        %v6549 = vpop.permute.xlu0 %6548
        %6550 = vrot.lane.b32.xlu0 %v1062, 32
        %v6551 = vpop.permute.xlu0 %6550
        %6552 = vrot.lane.b32.xlu0 %v1068, 32
        %v6553 = vpop.permute.xlu0 %6552
        %6554 = vrot.lane.b32.xlu0 %v1074, 32
        %v6555 = vpop.permute.xlu0 %6554
        %v6556 = vsel %vm1174, %v6545, 0
        %v6558 = vsel %vm1174, %v6547, 0
        %v6560 = vsel %vm1174, %v6549, 0
        %v6562 = vsel %vm1174, %v6551, 0
        %v6564 = vsel %vm1174, %v6553, 0
        %v6566 = vsel %vm1174, %v6555, 0
        %6568 = vmatprep.subr.mxu0 0.0
        %6569 = vmatpush1.xpose.msra.mxu0 %v6560
        %6570 = vmatprep.subr.mxu0 0.0
        %6571 = vmatpush1.xpose.msra.mxu0 %v6562
        %6572 = vmatprep.subr.mxu0 0.0
        %6573 = vmatpush1.xpose.msra.mxu0 %v6564
        %6574 = vmatprep.subr.mxu0 0.0
        %6575 = vmatpush1.xpose.msra.mxu0 %v6566
        %6576 = vmatprep.subr.mxu0 0.0
        %6577 = vmatpush1.xpose.msra.mxu0 0.0
        %6578 = vmatprep.subr.mxu0 0.0
        %6579 = vmatpush1.xpose.msra.mxu0 0.0
        %6580 = vmatprep.subr.mxu0 0.0
        %6581 = vmatpush1.xpose.msra.mxu0 0.0
        %6582 = vmatprep.subr.mxu0 0.0
        %6583 = vmatpush1.xpose.msra.mxu0 0.0
        %6584 = vmatprep.subr.mxu0 0.0
        %6585 = vmatpush1.xpose.msra.mxu0 0.0
        %6586 = vmatprep.subr.mxu0 0.0
        %6587 = vmatpush1.xpose.msra.mxu0 0.0
        %6588 = vmatprep.subr.mxu0 0.0
        %6589 = vmatpush1.xpose.msra.mxu0 0.0
        %6590 = vmatprep.subr.mxu0 0.0
        %6591 = vmatpush1.xpose.msra.mxu0 0.0
        %6592 = vmatprep.subr.mxu0 0.0
        %6593 = vmatpush1.xpose.msra.mxu0 0.0
        %6594 = vmatprep.subr.mxu0 0.0
        %6595 = vmatpush1.xpose.msra.mxu0 0.0
        %6596 = vmatprep.subr.mxu0 0.0
        %6597 = vmatpush1.xpose.msra.mxu0 0.0
        %6598 = vmatprep.subr.mxu0 0.0
        %6599 = vmatpush1.xpose.msra.mxu0 0.0
        %6600 = vmatprep.subr.mxu0 0.0
        %6601 = vmatpush1.xpose.msra.mxu0 0.0
        %6602 = vmatprep.subr.mxu0 0.0
        %6603 = vmatpush1.xpose.msra.mxu0 0.0
        %6604 = vmatprep.subr.mxu0 0.0
        %6605 = vmatpush1.xpose.msra.mxu0 0.0
        %6606 = vmatprep.subr.mxu0 0.0
        %6607 = vmatpush1.xpose.msra.mxu0 0.0
        %6608 = vmatprep.subr.mxu0 0.0
        %6609 = vmatpush1.xpose.msra.mxu0 0.0
        %6610 = vmatprep.subr.mxu0 0.0
        %6611 = vmatpush1.xpose.msra.mxu0 0.0
        %6612 = vmatprep.subr.mxu0 0.0
        %6613 = vmatpush1.xpose.msra.mxu0 0.0
        %6614 = vmatprep.subr.mxu0 0.0
        %6615 = vmatpush1.xpose.msra.mxu0 0.0
        %6616 = vmatprep.subr.mxu0 0.0
        %6617 = vmatpush1.xpose.msra.mxu0 0.0
        %6618 = vmatprep.subr.mxu0 0.0
        %6619 = vmatpush1.xpose.msra.mxu0 0.0
        %6620 = vmatprep.subr.mxu0 0.0
        %6621 = vmatpush1.xpose.msra.mxu0 0.0
        %6622 = vmatprep.subr.mxu0 0.0
        %6623 = vmatpush1.xpose.msra.mxu0 0.0
        %6624 = vmatprep.subr.mxu0 0.0
        %6625 = vmatpush1.xpose.msra.mxu0 0.0
        %6626 = vmatprep.subr.mxu0 0.0
        %6627 = vmatpush1.xpose.msra.mxu0 0.0
        %6628 = vmatprep.subr.mxu0 0.0
        %6629 = vmatpush1.xpose.msra.mxu0 0.0
        %6630 = vmatprep.subr.mxu0 0.0
        %6631 = vmatpush1.xpose.msra.mxu0 0.0
        %6632 = vmatprep.mubr.f32.mxu0 0.0
        %6633 = vmatmul.mubr.f32.gmra.mrb[0].mxu0 %v6556
        %v6634 = vpop.f32.mrb[0].mxu0
        %v6635 = vadd.f32 0.0, %v6634
        %v6636 = vpop.f32.mrb[0].mxu0
        %6637 = vmatprep.mubr.f32.mxu0 0.0
        %6638 = vmatmul.mubr.f32.gmra.mrb[0].mxu0 %v6558
        %v6639 = vpop.f32.mrb[0].mxu0
        %v6640 = vadd.f32 0.0, %v6639
        %v6641 = vpop.f32.mrb[0].mxu0
        %6642 = vdwg.mxu0
        %6643 = vrot.lane.b32.xlu0 %v835, 32
        %v6644 = vpop.permute.xlu0 %6643
        %6645 = vrot.lane.b32.xlu0 %v840, 32
        %v6646 = vpop.permute.xlu0 %6645
        %6647 = vrot.lane.b32.xlu0 %v1080, 32
        %v6648 = vpop.permute.xlu0 %6647
        %6649 = vrot.lane.b32.xlu0 %v1086, 32
        %v6650 = vpop.permute.xlu0 %6649
        %6651 = vrot.lane.b32.xlu0 %v1092, 32
        %v6652 = vpop.permute.xlu0 %6651
        %6653 = vrot.lane.b32.xlu0 %v1098, 32
        %v6654 = vpop.permute.xlu0 %6653
        %v6655 = vsel %vm1174, %v6644, 0
        %v6657 = vsel %vm1174, %v6646, 0
        %v6659 = vsel %vm1174, %v6648, 0
        %v6661 = vsel %vm1174, %v6650, 0
        %v6663 = vsel %vm1174, %v6652, 0
        %v6665 = vsel %vm1174, %v6654, 0
        %6667 = vmatprep.subr.mxu0 0.0
        %6668 = vmatpush1.xpose.msra.mxu0 %v6659
        %6669 = vmatprep.subr.mxu0 0.0
        %6670 = vmatpush1.xpose.msra.mxu0 %v6661
        %6671 = vmatprep.subr.mxu0 0.0
        %6672 = vmatpush1.xpose.msra.mxu0 %v6663
        %6673 = vmatprep.subr.mxu0 0.0
        %6674 = vmatpush1.xpose.msra.mxu0 %v6665
        %6675 = vmatprep.subr.mxu0 0.0
        %6676 = vmatpush1.xpose.msra.mxu0 0.0
        %6677 = vmatprep.subr.mxu0 0.0
        %6678 = vmatpush1.xpose.msra.mxu0 0.0
        %6679 = vmatprep.subr.mxu0 0.0
        %6680 = vmatpush1.xpose.msra.mxu0 0.0
        %6681 = vmatprep.subr.mxu0 0.0
        %6682 = vmatpush1.xpose.msra.mxu0 0.0
        %6683 = vmatprep.subr.mxu0 0.0
        %6684 = vmatpush1.xpose.msra.mxu0 0.0
        %6685 = vmatprep.subr.mxu0 0.0
        %6686 = vmatpush1.xpose.msra.mxu0 0.0
        %6687 = vmatprep.subr.mxu0 0.0
        %6688 = vmatpush1.xpose.msra.mxu0 0.0
        %6689 = vmatprep.subr.mxu0 0.0
        %6690 = vmatpush1.xpose.msra.mxu0 0.0
        %6691 = vmatprep.subr.mxu0 0.0
        %6692 = vmatpush1.xpose.msra.mxu0 0.0
        %6693 = vmatprep.subr.mxu0 0.0
        %6694 = vmatpush1.xpose.msra.mxu0 0.0
        %6695 = vmatprep.subr.mxu0 0.0
        %6696 = vmatpush1.xpose.msra.mxu0 0.0
        %6697 = vmatprep.subr.mxu0 0.0
        %6698 = vmatpush1.xpose.msra.mxu0 0.0
        %6699 = vmatprep.subr.mxu0 0.0
        %6700 = vmatpush1.xpose.msra.mxu0 0.0
        %6701 = vmatprep.subr.mxu0 0.0
        %6702 = vmatpush1.xpose.msra.mxu0 0.0
        %6703 = vmatprep.subr.mxu0 0.0
        %6704 = vmatpush1.xpose.msra.mxu0 0.0
        %6705 = vmatprep.subr.mxu0 0.0
        %6706 = vmatpush1.xpose.msra.mxu0 0.0
        %6707 = vmatprep.subr.mxu0 0.0
        %6708 = vmatpush1.xpose.msra.mxu0 0.0
        %6709 = vmatprep.subr.mxu0 0.0
        %6710 = vmatpush1.xpose.msra.mxu0 0.0
        %6711 = vmatprep.subr.mxu0 0.0
        %6712 = vmatpush1.xpose.msra.mxu0 0.0
        %6713 = vmatprep.subr.mxu0 0.0
        %6714 = vmatpush1.xpose.msra.mxu0 0.0
        %6715 = vmatprep.subr.mxu0 0.0
        %6716 = vmatpush1.xpose.msra.mxu0 0.0
        %6717 = vmatprep.subr.mxu0 0.0
        %6718 = vmatpush1.xpose.msra.mxu0 0.0
        %6719 = vmatprep.subr.mxu0 0.0
        %6720 = vmatpush1.xpose.msra.mxu0 0.0
        %6721 = vmatprep.subr.mxu0 0.0
        %6722 = vmatpush1.xpose.msra.mxu0 0.0
        %6723 = vmatprep.subr.mxu0 0.0
        %6724 = vmatpush1.xpose.msra.mxu0 0.0
        %6725 = vmatprep.subr.mxu0 0.0
        %6726 = vmatpush1.xpose.msra.mxu0 0.0
        %6727 = vmatprep.subr.mxu0 0.0
        %6728 = vmatpush1.xpose.msra.mxu0 0.0
        %6729 = vmatprep.subr.mxu0 0.0
        %6730 = vmatpush1.xpose.msra.mxu0 0.0
        %6731 = vmatprep.mubr.f32.mxu0 0.0
        %6732 = vmatmul.mubr.f32.gmra.mrb[0].mxu0 %v6655
        %v6733 = vpop.f32.mrb[0].mxu0
        %v6734 = vadd.f32 0.0, %v6733
        %v6735 = vpop.f32.mrb[0].mxu0
        %6736 = vmatprep.mubr.f32.mxu0 0.0
        %6737 = vmatmul.mubr.f32.gmra.mrb[0].mxu0 %v6657
        %v6738 = vpop.f32.mrb[0].mxu0
        %v6739 = vadd.f32 0.0, %v6738
        %v6740 = vpop.f32.mrb[0].mxu0
        %6741 = vdwg.mxu0
        %6742 = vrot.lane.b32.xlu0 %v845, 32
        %v6743 = vpop.permute.xlu0 %6742
        %6744 = vrot.lane.b32.xlu0 %v850, 32
        %v6745 = vpop.permute.xlu0 %6744
        %6746 = vrot.lane.b32.xlu0 %v1104, 32
        %v6747 = vpop.permute.xlu0 %6746
        %6748 = vrot.lane.b32.xlu0 %v1110, 32
        %v6749 = vpop.permute.xlu0 %6748
        %6750 = vrot.lane.b32.xlu0 %v1116, 32
        %v6751 = vpop.permute.xlu0 %6750
        %6752 = vrot.lane.b32.xlu0 %v1122, 32
        %v6753 = vpop.permute.xlu0 %6752
        %v6754 = vsel %vm1174, %v6743, 0
        %v6756 = vsel %vm1174, %v6745, 0
        %v6758 = vsel %vm1174, %v6747, 0
        %v6760 = vsel %vm1174, %v6749, 0
        %v6762 = vsel %vm1174, %v6751, 0
        %v6764 = vsel %vm1174, %v6753, 0
        %6766 = vmatprep.subr.mxu0 0.0
        %6767 = vmatpush1.xpose.msra.mxu0 %v6758
        %6768 = vmatprep.subr.mxu0 0.0
        %6769 = vmatpush1.xpose.msra.mxu0 %v6760
        %6770 = vmatprep.subr.mxu0 0.0
        %6771 = vmatpush1.xpose.msra.mxu0 %v6762
        %6772 = vmatprep.subr.mxu0 0.0
        %6773 = vmatpush1.xpose.msra.mxu0 %v6764
        %6774 = vmatprep.subr.mxu0 0.0
        %6775 = vmatpush1.xpose.msra.mxu0 0.0
        %6776 = vmatprep.subr.mxu0 0.0
        %6777 = vmatpush1.xpose.msra.mxu0 0.0
        %6778 = vmatprep.subr.mxu0 0.0
        %6779 = vmatpush1.xpose.msra.mxu0 0.0
        %6780 = vmatprep.subr.mxu0 0.0
        %6781 = vmatpush1.xpose.msra.mxu0 0.0
        %6782 = vmatprep.subr.mxu0 0.0
        %6783 = vmatpush1.xpose.msra.mxu0 0.0
        %6784 = vmatprep.subr.mxu0 0.0
        %6785 = vmatpush1.xpose.msra.mxu0 0.0
        %6786 = vmatprep.subr.mxu0 0.0
        %6787 = vmatpush1.xpose.msra.mxu0 0.0
        %6788 = vmatprep.subr.mxu0 0.0
        %6789 = vmatpush1.xpose.msra.mxu0 0.0
        %6790 = vmatprep.subr.mxu0 0.0
        %6791 = vmatpush1.xpose.msra.mxu0 0.0
        %6792 = vmatprep.subr.mxu0 0.0
        %6793 = vmatpush1.xpose.msra.mxu0 0.0
        %6794 = vmatprep.subr.mxu0 0.0
        %6795 = vmatpush1.xpose.msra.mxu0 0.0
        %6796 = vmatprep.subr.mxu0 0.0
        %6797 = vmatpush1.xpose.msra.mxu0 0.0
        %6798 = vmatprep.subr.mxu0 0.0
        %6799 = vmatpush1.xpose.msra.mxu0 0.0
        %6800 = vmatprep.subr.mxu0 0.0
        %6801 = vmatpush1.xpose.msra.mxu0 0.0
        %6802 = vmatprep.subr.mxu0 0.0
        %6803 = vmatpush1.xpose.msra.mxu0 0.0
        %6804 = vmatprep.subr.mxu0 0.0
        %6805 = vmatpush1.xpose.msra.mxu0 0.0
        %6806 = vmatprep.subr.mxu0 0.0
        %6807 = vmatpush1.xpose.msra.mxu0 0.0
        %6808 = vmatprep.subr.mxu0 0.0
        %6809 = vmatpush1.xpose.msra.mxu0 0.0
        %6810 = vmatprep.subr.mxu0 0.0
        %6811 = vmatpush1.xpose.msra.mxu0 0.0
        %6812 = vmatprep.subr.mxu0 0.0
        %6813 = vmatpush1.xpose.msra.mxu0 0.0
        %6814 = vmatprep.subr.mxu0 0.0
        %6815 = vmatpush1.xpose.msra.mxu0 0.0
        %6816 = vmatprep.subr.mxu0 0.0
        %6817 = vmatpush1.xpose.msra.mxu0 0.0
        %6818 = vmatprep.subr.mxu0 0.0
        %6819 = vmatpush1.xpose.msra.mxu0 0.0
        %6820 = vmatprep.subr.mxu0 0.0
        %6821 = vmatpush1.xpose.msra.mxu0 0.0
        %6822 = vmatprep.subr.mxu0 0.0
        %6823 = vmatpush1.xpose.msra.mxu0 0.0
        %6824 = vmatprep.subr.mxu0 0.0
        %6825 = vmatpush1.xpose.msra.mxu0 0.0
        %6826 = vmatprep.subr.mxu0 0.0
        %6827 = vmatpush1.xpose.msra.mxu0 0.0
        %6828 = vmatprep.subr.mxu0 0.0
        %6829 = vmatpush1.xpose.msra.mxu0 0.0
        %6830 = vmatprep.mubr.f32.mxu0 0.0
        %6831 = vmatmul.mubr.f32.gmra.mrb[0].mxu0 %v6754
        %v6832 = vpop.f32.mrb[0].mxu0
        %v6833 = vadd.f32 0.0, %v6832
        %v6834 = vpop.f32.mrb[0].mxu0
        %6835 = vmatprep.mubr.f32.mxu0 0.0
        %6836 = vmatmul.mubr.f32.gmra.mrb[0].mxu0 %v6756
        %v6837 = vpop.f32.mrb[0].mxu0
        %v6838 = vadd.f32 0.0, %v6837
        %v6839 = vpop.f32.mrb[0].mxu0
        %6840 = vdwg.mxu0
        %6841 = vrot.lane.b32.xlu0 %v855, 32
        %v6842 = vpop.permute.xlu0 %6841
        %6843 = vrot.lane.b32.xlu0 %v860, 32
        %v6844 = vpop.permute.xlu0 %6843
        %6845 = vrot.lane.b32.xlu0 %v1128, 32
        %v6846 = vpop.permute.xlu0 %6845
        %6847 = vrot.lane.b32.xlu0 %v1134, 32
        %v6848 = vpop.permute.xlu0 %6847
        %6849 = vrot.lane.b32.xlu0 %v1140, 32
        %v6850 = vpop.permute.xlu0 %6849
        %6851 = vrot.lane.b32.xlu0 %v1146, 32
        %v6852 = vpop.permute.xlu0 %6851
        %v6853 = vsel %vm1174, %v6842, 0
        %v6855 = vsel %vm1174, %v6844, 0
        %v6857 = vsel %vm1174, %v6846, 0
        %v6859 = vsel %vm1174, %v6848, 0
        %v6861 = vsel %vm1174, %v6850, 0
        %v6863 = vsel %vm1174, %v6852, 0
        %6865 = vmatprep.subr.mxu0 0.0
        %6866 = vmatpush1.xpose.msra.mxu0 %v6857
        %6867 = vmatprep.subr.mxu0 0.0
        %6868 = vmatpush1.xpose.msra.mxu0 %v6859
        %6869 = vmatprep.subr.mxu0 0.0
        %6870 = vmatpush1.xpose.msra.mxu0 %v6861
        %6871 = vmatprep.subr.mxu0 0.0
        %6872 = vmatpush1.xpose.msra.mxu0 %v6863
        %6873 = vmatprep.subr.mxu0 0.0
        %6874 = vmatpush1.xpose.msra.mxu0 0.0
        %6875 = vmatprep.subr.mxu0 0.0
        %6876 = vmatpush1.xpose.msra.mxu0 0.0
        %6877 = vmatprep.subr.mxu0 0.0
        %6878 = vmatpush1.xpose.msra.mxu0 0.0
        %6879 = vmatprep.subr.mxu0 0.0
        %6880 = vmatpush1.xpose.msra.mxu0 0.0
        %6881 = vmatprep.subr.mxu0 0.0
        %6882 = vmatpush1.xpose.msra.mxu0 0.0
        %6883 = vmatprep.subr.mxu0 0.0
        %6884 = vmatpush1.xpose.msra.mxu0 0.0
        %6885 = vmatprep.subr.mxu0 0.0
        %6886 = vmatpush1.xpose.msra.mxu0 0.0
        %6887 = vmatprep.subr.mxu0 0.0
        %6888 = vmatpush1.xpose.msra.mxu0 0.0
        %6889 = vmatprep.subr.mxu0 0.0
        %6890 = vmatpush1.xpose.msra.mxu0 0.0
        %6891 = vmatprep.subr.mxu0 0.0
        %6892 = vmatpush1.xpose.msra.mxu0 0.0
        %6893 = vmatprep.subr.mxu0 0.0
        %6894 = vmatpush1.xpose.msra.mxu0 0.0
        %6895 = vmatprep.subr.mxu0 0.0
        %6896 = vmatpush1.xpose.msra.mxu0 0.0
        %6897 = vmatprep.subr.mxu0 0.0
        %6898 = vmatpush1.xpose.msra.mxu0 0.0
        %6899 = vmatprep.subr.mxu0 0.0
        %6900 = vmatpush1.xpose.msra.mxu0 0.0
        %6901 = vmatprep.subr.mxu0 0.0
        %6902 = vmatpush1.xpose.msra.mxu0 0.0
        %6903 = vmatprep.subr.mxu0 0.0
        %6904 = vmatpush1.xpose.msra.mxu0 0.0
        %6905 = vmatprep.subr.mxu0 0.0
        %6906 = vmatpush1.xpose.msra.mxu0 0.0
        %6907 = vmatprep.subr.mxu0 0.0
        %6908 = vmatpush1.xpose.msra.mxu0 0.0
        %6909 = vmatprep.subr.mxu0 0.0
        %6910 = vmatpush1.xpose.msra.mxu0 0.0
        %6911 = vmatprep.subr.mxu0 0.0
        %6912 = vmatpush1.xpose.msra.mxu0 0.0
        %6913 = vmatprep.subr.mxu0 0.0
        %6914 = vmatpush1.xpose.msra.mxu0 0.0
        %6915 = vmatprep.subr.mxu0 0.0
        %6916 = vmatpush1.xpose.msra.mxu0 0.0
        %6917 = vmatprep.subr.mxu0 0.0
        %6918 = vmatpush1.xpose.msra.mxu0 0.0
        %6919 = vmatprep.subr.mxu0 0.0
        %6920 = vmatpush1.xpose.msra.mxu0 0.0
        %6921 = vmatprep.subr.mxu0 0.0
        %6922 = vmatpush1.xpose.msra.mxu0 0.0
        %6923 = vmatprep.subr.mxu0 0.0
        %6924 = vmatpush1.xpose.msra.mxu0 0.0
        %6925 = vmatprep.subr.mxu0 0.0
        %6926 = vmatpush1.xpose.msra.mxu0 0.0
        %6927 = vmatprep.subr.mxu0 0.0
        %6928 = vmatpush1.xpose.msra.mxu0 0.0
        %6929 = vmatprep.mubr.f32.mxu0 0.0
        %6930 = vmatmul.mubr.f32.gmra.mrb[0].mxu0 %v6853
        %v6931 = vpop.f32.mrb[0].mxu0
        %v6932 = vadd.f32 0.0, %v6931
        %v6933 = vpop.f32.mrb[0].mxu0
        %6934 = vmatprep.mubr.f32.mxu0 0.0
        %6935 = vmatmul.mubr.f32.gmra.mrb[0].mxu0 %v6855
        %v6936 = vpop.f32.mrb[0].mxu0
        %v6937 = vadd.f32 0.0, %v6936
        %v6938 = vpop.f32.mrb[0].mxu0
        %6939 = vdwg.mxu0
        %6940 = vrot.lane.b32.xlu0 %v865, 32
        %v6941 = vpop.permute.xlu0 %6940
        %6942 = vrot.lane.b32.xlu0 %v870, 32
        %v6943 = vpop.permute.xlu0 %6942
        %6944 = vrot.lane.b32.xlu0 %v1152, 32
        %v6945 = vpop.permute.xlu0 %6944
        %6946 = vrot.lane.b32.xlu0 %v1158, 32
        %v6947 = vpop.permute.xlu0 %6946
        %6948 = vrot.lane.b32.xlu0 %v1164, 32
        %v6949 = vpop.permute.xlu0 %6948
        %6950 = vrot.lane.b32.xlu0 %v1170, 32
        %v6951 = vpop.permute.xlu0 %6950
        %v6952 = vsel %vm1174, %v6941, 0
        %v6954 = vsel %vm1174, %v6943, 0
        %v6956 = vsel %vm1174, %v6945, 0
        %v6958 = vsel %vm1174, %v6947, 0
        %v6960 = vsel %vm1174, %v6949, 0
        %v6962 = vsel %vm1174, %v6951, 0
        %6964 = vmatprep.subr.mxu0 0.0
        %6965 = vmatpush1.xpose.msra.mxu0 %v6956
        %6966 = vmatprep.subr.mxu0 0.0
        %6967 = vmatpush1.xpose.msra.mxu0 %v6958
        %6968 = vmatprep.subr.mxu0 0.0
        %6969 = vmatpush1.xpose.msra.mxu0 %v6960
        %6970 = vmatprep.subr.mxu0 0.0
        %6971 = vmatpush1.xpose.msra.mxu0 %v6962
        %6972 = vmatprep.subr.mxu0 0.0
        %6973 = vmatpush1.xpose.msra.mxu0 0.0
        %6974 = vmatprep.subr.mxu0 0.0
        %6975 = vmatpush1.xpose.msra.mxu0 0.0
        %6976 = vmatprep.subr.mxu0 0.0
        %6977 = vmatpush1.xpose.msra.mxu0 0.0
        %6978 = vmatprep.subr.mxu0 0.0
        %6979 = vmatpush1.xpose.msra.mxu0 0.0
        %6980 = vmatprep.subr.mxu0 0.0
        %6981 = vmatpush1.xpose.msra.mxu0 0.0
        %6982 = vmatprep.subr.mxu0 0.0
        %6983 = vmatpush1.xpose.msra.mxu0 0.0
        %6984 = vmatprep.subr.mxu0 0.0
        %6985 = vmatpush1.xpose.msra.mxu0 0.0
        %6986 = vmatprep.subr.mxu0 0.0
        %6987 = vmatpush1.xpose.msra.mxu0 0.0
        %6988 = vmatprep.subr.mxu0 0.0
        %6989 = vmatpush1.xpose.msra.mxu0 0.0
        %6990 = vmatprep.subr.mxu0 0.0
        %6991 = vmatpush1.xpose.msra.mxu0 0.0
        %6992 = vmatprep.subr.mxu0 0.0
        %6993 = vmatpush1.xpose.msra.mxu0 0.0
        %6994 = vmatprep.subr.mxu0 0.0
        %6995 = vmatpush1.xpose.msra.mxu0 0.0
        %6996 = vmatprep.subr.mxu0 0.0
        %6997 = vmatpush1.xpose.msra.mxu0 0.0
        %6998 = vmatprep.subr.mxu0 0.0
        %6999 = vmatpush1.xpose.msra.mxu0 0.0
        %7000 = vmatprep.subr.mxu0 0.0
        %7001 = vmatpush1.xpose.msra.mxu0 0.0
        %7002 = vmatprep.subr.mxu0 0.0
        %7003 = vmatpush1.xpose.msra.mxu0 0.0
        %7004 = vmatprep.subr.mxu0 0.0
        %7005 = vmatpush1.xpose.msra.mxu0 0.0
        %7006 = vmatprep.subr.mxu0 0.0
        %7007 = vmatpush1.xpose.msra.mxu0 0.0
        %7008 = vmatprep.subr.mxu0 0.0
        %7009 = vmatpush1.xpose.msra.mxu0 0.0
        %7010 = vmatprep.subr.mxu0 0.0
        %7011 = vmatpush1.xpose.msra.mxu0 0.0
        %7012 = vmatprep.subr.mxu0 0.0
        %7013 = vmatpush1.xpose.msra.mxu0 0.0
        %7014 = vmatprep.subr.mxu0 0.0
        %7015 = vmatpush1.xpose.msra.mxu0 0.0
        %7016 = vmatprep.subr.mxu0 0.0
        %7017 = vmatpush1.xpose.msra.mxu0 0.0
        %7018 = vmatprep.subr.mxu0 0.0
        %7019 = vmatpush1.xpose.msra.mxu0 0.0
        %7020 = vmatprep.subr.mxu0 0.0
        %7021 = vmatpush1.xpose.msra.mxu0 0.0
        %7022 = vmatprep.subr.mxu0 0.0
        %7023 = vmatpush1.xpose.msra.mxu0 0.0
        %7024 = vmatprep.subr.mxu0 0.0
        %7025 = vmatpush1.xpose.msra.mxu0 0.0
        %7026 = vmatprep.subr.mxu0 0.0
        %7027 = vmatpush1.xpose.msra.mxu0 0.0
        %7028 = vmatprep.mubr.f32.mxu0 0.0
        %7029 = vmatmul.mubr.f32.gmra.mrb[0].mxu0 %v6952
        %v7030 = vpop.f32.mrb[0].mxu0
        %v7031 = vadd.f32 0.0, %v7030
        %v7032 = vpop.f32.mrb[0].mxu0
        %7033 = vmatprep.mubr.f32.mxu0 0.0
        %7034 = vmatmul.mubr.f32.gmra.mrb[0].mxu0 %v6954
        %v7035 = vpop.f32.mrb[0].mxu0
        %v7036 = vadd.f32 0.0, %v7035
        %v7037 = vpop.f32.mrb[0].mxu0
        %7038 = vdwg.mxu0
        %v7039 = vsel %vm1174, %v6338, -inf
        %7040 = vmax.xlane.f32.xlu0 %v7039
        %v7041 = vpop.xlane.xlu0 %7040
        %v7042 = vsel %vm1174, %v6343, -inf
        %7043 = vmax.xlane.f32.xlu0 %v7042
        %v7044 = vpop.xlane.xlu0 %7043
        %v7045 = vsel %vm1174, %v6437, -inf
        %7046 = vmax.xlane.f32.xlu0 %v7045
        %v7047 = vpop.xlane.xlu0 %7046
        %v7048 = vsel %vm1174, %v6442, -inf
        %7049 = vmax.xlane.f32.xlu0 %v7048
        %v7050 = vpop.xlane.xlu0 %7049
        %v7051 = vsel %vm1174, %v6536, -inf
        %7052 = vmax.xlane.f32.xlu0 %v7051
        %v7053 = vpop.xlane.xlu0 %7052
        %v7054 = vsel %vm1174, %v6541, -inf
        %7055 = vmax.xlane.f32.xlu0 %v7054
        %v7056 = vpop.xlane.xlu0 %7055
        %v7057 = vsel %vm1174, %v6635, -inf
        %7058 = vmax.xlane.f32.xlu0 %v7057
        %v7059 = vpop.xlane.xlu0 %7058
        %v7060 = vsel %vm1174, %v6640, -inf
        %7061 = vmax.xlane.f32.xlu0 %v7060
        %v7062 = vpop.xlane.xlu0 %7061
        %v7063 = vsel %vm1174, %v6734, -inf
        %7064 = vmax.xlane.f32.xlu0 %v7063
        %v7065 = vpop.xlane.xlu0 %7064
        %v7066 = vsel %vm1174, %v6739, -inf
        %7067 = vmax.xlane.f32.xlu0 %v7066
        %v7068 = vpop.xlane.xlu0 %7067
        %v7069 = vsel %vm1174, %v6833, -inf
        %7070 = vmax.xlane.f32.xlu0 %v7069
        %v7071 = vpop.xlane.xlu0 %7070
        %v7072 = vsel %vm1174, %v6838, -inf
        %7073 = vmax.xlane.f32.xlu0 %v7072
        %v7074 = vpop.xlane.xlu0 %7073
        %v7075 = vsel %vm1174, %v6932, -inf
        %7076 = vmax.xlane.f32.xlu0 %v7075
        %v7077 = vpop.xlane.xlu0 %7076
        %v7078 = vsel %vm1174, %v6937, -inf
        %7079 = vmax.xlane.f32.xlu0 %v7078
        %v7080 = vpop.xlane.xlu0 %7079
        %v7081 = vsel %vm1174, %v7031, -inf
        %7082 = vmax.xlane.f32.xlu0 %v7081
        %v7083 = vpop.xlane.xlu0 %7082
        %v7084 = vsel %vm1174, %v7036, -inf
        %7085 = vmax.xlane.f32.xlu0 %v7084
        %v7086 = vpop.xlane.xlu0 %7085
        %v7087 = vsub.f32 %v6338, %v7041
        %v7088 = vsub.f32 %v6343, %v7044
        %v7089 = vsub.f32 %v6437, %v7047
        %v7090 = vsub.f32 %v6442, %v7050
        %v7091 = vsub.f32 %v6536, %v7053
        %v7092 = vsub.f32 %v6541, %v7056
        %v7093 = vsub.f32 %v6635, %v7059
        %v7094 = vsub.f32 %v6640, %v7062
        %v7095 = vsub.f32 %v6734, %v7065
        %v7096 = vsub.f32 %v6739, %v7068
        %v7097 = vsub.f32 %v6833, %v7071
        %v7098 = vsub.f32 %v6838, %v7074
        %v7099 = vsub.f32 %v6932, %v7077
        %v7100 = vsub.f32 %v6937, %v7080
        %v7101 = vsub.f32 %v7031, %v7083
        %v7102 = vsub.f32 %v7036, %v7086
        %v7103 = vmul.f32 %v7087, 1.442695
        %v7104 = vpow.pop %v7103
        %v7105 = vmul.f32 %v7088, 1.442695
        %v7106 = vpow.pop %v7105
        %v7107 = vmul.f32 %v7089, 1.442695
        %v7108 = vpow.pop %v7107
        %v7109 = vmul.f32 %v7090, 1.442695
        %v7110 = vpow.pop %v7109
        %v7111 = vmul.f32 %v7091, 1.442695
        %v7112 = vpow.pop %v7111
        %v7113 = vmul.f32 %v7092, 1.442695
        %v7114 = vpow.pop %v7113
        %v7115 = vmul.f32 %v7093, 1.442695
        %v7116 = vpow.pop %v7115
        %v7117 = vmul.f32 %v7094, 1.442695
        %v7118 = vpow.pop %v7117
        %v7119 = vmul.f32 %v7095, 1.442695
        %v7120 = vpow.pop %v7119
        %v7121 = vmul.f32 %v7096, 1.442695
        %v7122 = vpow.pop %v7121
        %v7123 = vmul.f32 %v7097, 1.442695
        %v7124 = vpow.pop %v7123
        %v7125 = vmul.f32 %v7098, 1.442695
        %v7126 = vpow.pop %v7125
        %v7127 = vmul.f32 %v7099, 1.442695
        %v7128 = vpow.pop %v7127
        %v7129 = vmul.f32 %v7100, 1.442695
        %v7130 = vpow.pop %v7129
        %v7131 = vmul.f32 %v7101, 1.442695
        %v7132 = vpow.pop %v7131
        %v7133 = vmul.f32 %v7102, 1.442695
        %v7134 = vpow.pop %v7133
        %v7135 = vsel %vm1174, %v7104, 0.0
        %7136 = vadd.xlane.f32.xlu0 %v7135
        %v7137 = vpop.xlane.xlu0 %7136
        %v7138 = vsel %vm1174, %v7106, 0.0
        %7139 = vadd.xlane.f32.xlu0 %v7138
        %v7140 = vpop.xlane.xlu0 %7139
        %v7141 = vsel %vm1174, %v7108, 0.0
        %7142 = vadd.xlane.f32.xlu0 %v7141
        %v7143 = vpop.xlane.xlu0 %7142
        %v7144 = vsel %vm1174, %v7110, 0.0
        %7145 = vadd.xlane.f32.xlu0 %v7144
        %v7146 = vpop.xlane.xlu0 %7145
        %v7147 = vsel %vm1174, %v7112, 0.0
        %7148 = vadd.xlane.f32.xlu0 %v7147
        %v7149 = vpop.xlane.xlu0 %7148
        %v7150 = vsel %vm1174, %v7114, 0.0
        %7151 = vadd.xlane.f32.xlu0 %v7150
        %v7152 = vpop.xlane.xlu0 %7151
        %v7153 = vsel %vm1174, %v7116, 0.0
        %7154 = vadd.xlane.f32.xlu0 %v7153
        %v7155 = vpop.xlane.xlu0 %7154
        %v7156 = vsel %vm1174, %v7118, 0.0
        %7157 = vadd.xlane.f32.xlu0 %v7156
        %v7158 = vpop.xlane.xlu0 %7157
        %v7159 = vsel %vm1174, %v7120, 0.0
        %7160 = vadd.xlane.f32.xlu0 %v7159
        %v7161 = vpop.xlane.xlu0 %7160
        %v7162 = vsel %vm1174, %v7122, 0.0
        %7163 = vadd.xlane.f32.xlu0 %v7162
        %v7164 = vpop.xlane.xlu0 %7163
        %v7165 = vsel %vm1174, %v7124, 0.0
        %7166 = vadd.xlane.f32.xlu0 %v7165
        %v7167 = vpop.xlane.xlu0 %7166
        %v7168 = vsel %vm1174, %v7126, 0.0
        %7169 = vadd.xlane.f32.xlu0 %v7168
        %v7170 = vpop.xlane.xlu0 %7169
        %v7171 = vsel %vm1174, %v7128, 0.0
        %7172 = vadd.xlane.f32.xlu0 %v7171
        %v7173 = vpop.xlane.xlu0 %7172
        %v7174 = vsel %vm1174, %v7130, 0.0
        %7175 = vadd.xlane.f32.xlu0 %v7174
        %v7176 = vpop.xlane.xlu0 %7175
        %v7177 = vsel %vm1174, %v7132, 0.0
        %7178 = vadd.xlane.f32.xlu0 %v7177
        %v7179 = vpop.xlane.xlu0 %7178
        %v7180 = vsel %vm1174, %v7134, 0.0
        %7181 = vadd.xlane.f32.xlu0 %v7180
        %v7182 = vpop.xlane.xlu0 %7181
        %v7183 = vrcp.pop %v7137
        %v7184 = vmul.f32 1.0, %v7183
        %v7185 = vrcp.pop %v7140
        %v7186 = vmul.f32 1.0, %v7185
        %v7187 = vrcp.pop %v7143
        %v7188 = vmul.f32 1.0, %v7187
        %v7189 = vrcp.pop %v7146
        %v7190 = vmul.f32 1.0, %v7189
        %v7191 = vrcp.pop %v7149
        %v7192 = vmul.f32 1.0, %v7191
        %v7193 = vrcp.pop %v7152
        %v7194 = vmul.f32 1.0, %v7193
        %v7195 = vrcp.pop %v7155
        %v7196 = vmul.f32 1.0, %v7195
        %v7197 = vrcp.pop %v7158
        %v7198 = vmul.f32 1.0, %v7197
        %v7199 = vrcp.pop %v7161
        %v7200 = vmul.f32 1.0, %v7199
        %v7201 = vrcp.pop %v7164
        %v7202 = vmul.f32 1.0, %v7201
        %v7203 = vrcp.pop %v7167
        %v7204 = vmul.f32 1.0, %v7203
        %v7205 = vrcp.pop %v7170
        %v7206 = vmul.f32 1.0, %v7205
        %v7207 = vrcp.pop %v7173
        %v7208 = vmul.f32 1.0, %v7207
        %v7209 = vrcp.pop %v7176
        %v7210 = vmul.f32 1.0, %v7209
        %v7211 = vrcp.pop %v7179
        %v7212 = vmul.f32 1.0, %v7211
        %v7213 = vrcp.pop %v7182
        %v7214 = vmul.f32 1.0, %v7213
        %7215 = vrot.lane.b32.xlu0 %v986, 32
        %v7216 = vpop.permute.xlu0 %7215
        %7217 = vrot.lane.b32.xlu0 %v992, 32
        %v7218 = vpop.permute.xlu0 %7217
        %7219 = vrot.lane.b32.xlu0 %v998, 32
        %v7220 = vpop.permute.xlu0 %7219
        %7221 = vrot.lane.b32.xlu0 %v1004, 32
        %v7222 = vpop.permute.xlu0 %7221
        %v7228 = vsel %vm1174, %v7104, 0
        %v7231 = vsel %vm1174, %v7106, 0
        %7233 = vmatprep.subr.mxu0 0.0
        %7234 = vmatpush1.msra.mxu0 %v7216
        %7235 = vmatprep.subr.mxu0 0.0
        %7236 = vmatpush1.msra.mxu0 %v7218
        %7237 = vmatprep.subr.mxu0 0.0
        %7238 = vmatpush1.msra.mxu0 %v7220
        %7239 = vmatprep.subr.mxu0 0.0
        %7240 = vmatpush1.msra.mxu0 %v7222
        %7241 = vmatprep.subr.mxu0 0.0
        %7242 = vmatpush1.msra.mxu0 0.0
        %7243 = vmatprep.subr.mxu0 0.0
        %7244 = vmatpush1.msra.mxu0 0.0
        %7245 = vmatprep.subr.mxu0 0.0
        %7246 = vmatpush1.msra.mxu0 0.0
        %7247 = vmatprep.subr.mxu0 0.0
        %7248 = vmatpush1.msra.mxu0 0.0
        %7249 = vmatprep.subr.mxu0 0.0
        %7250 = vmatpush1.msra.mxu0 0.0
        %7251 = vmatprep.subr.mxu0 0.0
        %7252 = vmatpush1.msra.mxu0 0.0
        %7253 = vmatprep.subr.mxu0 0.0
        %7254 = vmatpush1.msra.mxu0 0.0
        %7255 = vmatprep.subr.mxu0 0.0
        %7256 = vmatpush1.msra.mxu0 0.0
        %7257 = vmatprep.subr.mxu0 0.0
        %7258 = vmatpush1.msra.mxu0 0.0
        %7259 = vmatprep.subr.mxu0 0.0
        %7260 = vmatpush1.msra.mxu0 0.0
        %7261 = vmatprep.subr.mxu0 0.0
        %7262 = vmatpush1.msra.mxu0 0.0
        %7263 = vmatprep.subr.mxu0 0.0
        %7264 = vmatpush1.msra.mxu0 0.0
        %7265 = vmatprep.subr.mxu0 0.0
        %7266 = vmatpush1.msra.mxu0 0.0
        %7267 = vmatprep.subr.mxu0 0.0
        %7268 = vmatpush1.msra.mxu0 0.0
        %7269 = vmatprep.subr.mxu0 0.0
        %7270 = vmatpush1.msra.mxu0 0.0
        %7271 = vmatprep.subr.mxu0 0.0
        %7272 = vmatpush1.msra.mxu0 0.0
        %7273 = vmatprep.subr.mxu0 0.0
        %7274 = vmatpush1.msra.mxu0 0.0
        %7275 = vmatprep.subr.mxu0 0.0
        %7276 = vmatpush1.msra.mxu0 0.0
        %7277 = vmatprep.subr.mxu0 0.0
        %7278 = vmatpush1.msra.mxu0 0.0
        %7279 = vmatprep.subr.mxu0 0.0
        %7280 = vmatpush1.msra.mxu0 0.0
        %7281 = vmatprep.subr.mxu0 0.0
        %7282 = vmatpush1.msra.mxu0 0.0
        %7283 = vmatprep.subr.mxu0 0.0
        %7284 = vmatpush1.msra.mxu0 0.0
        %7285 = vmatprep.subr.mxu0 0.0
        %7286 = vmatpush1.msra.mxu0 0.0
        %7287 = vmatprep.subr.mxu0 0.0
        %7288 = vmatpush1.msra.mxu0 0.0
        %7289 = vmatprep.subr.mxu0 0.0
        %7290 = vmatpush1.msra.mxu0 0.0
        %7291 = vmatprep.subr.mxu0 0.0
        %7292 = vmatpush1.msra.mxu0 0.0
        %7293 = vmatprep.subr.mxu0 0.0
        %7294 = vmatpush1.msra.mxu0 0.0
        %7295 = vmatprep.subr.mxu0 0.0
        %7296 = vmatpush1.msra.mxu0 0.0
        %7297 = vmatprep.mubr.f32.mxu0 0.0
        %7298 = vmatmul.mubr.f32.gmra.mrb[0].mxu0 %v7228
        %v7299 = vpop.f32.mrb[0].mxu0
        %v7300 = vadd.f32 0.0, %v7299
        %v7301 = vpop.f32.mrb[0].mxu0
        %7302 = vmatprep.mubr.f32.mxu0 0.0
        %7303 = vmatmul.mubr.f32.gmra.mrb[0].mxu0 %v7231
        %v7304 = vpop.f32.mrb[0].mxu0
        %v7305 = vadd.f32 0.0, %v7304
        %v7306 = vpop.f32.mrb[0].mxu0
        %7307 = vdwg.mxu0
        %7308 = vrot.lane.b32.xlu0 %v1010, 32
        %v7309 = vpop.permute.xlu0 %7308
        %7310 = vrot.lane.b32.xlu0 %v1016, 32
        %v7311 = vpop.permute.xlu0 %7310
        %7312 = vrot.lane.b32.xlu0 %v1022, 32
        %v7313 = vpop.permute.xlu0 %7312
        %7314 = vrot.lane.b32.xlu0 %v1028, 32
        %v7315 = vpop.permute.xlu0 %7314
        %v7321 = vsel %vm1174, %v7108, 0
        %v7324 = vsel %vm1174, %v7110, 0
        %7326 = vmatprep.subr.mxu0 0.0
        %7327 = vmatpush1.msra.mxu0 %v7309
        %7328 = vmatprep.subr.mxu0 0.0
        %7329 = vmatpush1.msra.mxu0 %v7311
        %7330 = vmatprep.subr.mxu0 0.0
        %7331 = vmatpush1.msra.mxu0 %v7313
        %7332 = vmatprep.subr.mxu0 0.0
        %7333 = vmatpush1.msra.mxu0 %v7315
        %7334 = vmatprep.subr.mxu0 0.0
        %7335 = vmatpush1.msra.mxu0 0.0
        %7336 = vmatprep.subr.mxu0 0.0
        %7337 = vmatpush1.msra.mxu0 0.0
        %7338 = vmatprep.subr.mxu0 0.0
        %7339 = vmatpush1.msra.mxu0 0.0
        %7340 = vmatprep.subr.mxu0 0.0
        %7341 = vmatpush1.msra.mxu0 0.0
        %7342 = vmatprep.subr.mxu0 0.0
        %7343 = vmatpush1.msra.mxu0 0.0
        %7344 = vmatprep.subr.mxu0 0.0
        %7345 = vmatpush1.msra.mxu0 0.0
        %7346 = vmatprep.subr.mxu0 0.0
        %7347 = vmatpush1.msra.mxu0 0.0
        %7348 = vmatprep.subr.mxu0 0.0
        %7349 = vmatpush1.msra.mxu0 0.0
        %7350 = vmatprep.subr.mxu0 0.0
        %7351 = vmatpush1.msra.mxu0 0.0
        %7352 = vmatprep.subr.mxu0 0.0
        %7353 = vmatpush1.msra.mxu0 0.0
        %7354 = vmatprep.subr.mxu0 0.0
        %7355 = vmatpush1.msra.mxu0 0.0
        %7356 = vmatprep.subr.mxu0 0.0
        %7357 = vmatpush1.msra.mxu0 0.0
        %7358 = vmatprep.subr.mxu0 0.0
        %7359 = vmatpush1.msra.mxu0 0.0
        %7360 = vmatprep.subr.mxu0 0.0
        %7361 = vmatpush1.msra.mxu0 0.0
        %7362 = vmatprep.subr.mxu0 0.0
        %7363 = vmatpush1.msra.mxu0 0.0
        %7364 = vmatprep.subr.mxu0 0.0
        %7365 = vmatpush1.msra.mxu0 0.0
        %7366 = vmatprep.subr.mxu0 0.0
        %7367 = vmatpush1.msra.mxu0 0.0
        %7368 = vmatprep.subr.mxu0 0.0
        %7369 = vmatpush1.msra.mxu0 0.0
        %7370 = vmatprep.subr.mxu0 0.0
        %7371 = vmatpush1.msra.mxu0 0.0
        %7372 = vmatprep.subr.mxu0 0.0
        %7373 = vmatpush1.msra.mxu0 0.0
        %7374 = vmatprep.subr.mxu0 0.0
        %7375 = vmatpush1.msra.mxu0 0.0
        %7376 = vmatprep.subr.mxu0 0.0
        %7377 = vmatpush1.msra.mxu0 0.0
        %7378 = vmatprep.subr.mxu0 0.0
        %7379 = vmatpush1.msra.mxu0 0.0
        %7380 = vmatprep.subr.mxu0 0.0
        %7381 = vmatpush1.msra.mxu0 0.0
        %7382 = vmatprep.subr.mxu0 0.0
        %7383 = vmatpush1.msra.mxu0 0.0
        %7384 = vmatprep.subr.mxu0 0.0
        %7385 = vmatpush1.msra.mxu0 0.0
        %7386 = vmatprep.subr.mxu0 0.0
        %7387 = vmatpush1.msra.mxu0 0.0
        %7388 = vmatprep.subr.mxu0 0.0
        %7389 = vmatpush1.msra.mxu0 0.0
        %7390 = vmatprep.mubr.f32.mxu0 0.0
        %7391 = vmatmul.mubr.f32.gmra.mrb[0].mxu0 %v7321
        %v7392 = vpop.f32.mrb[0].mxu0
        %v7393 = vadd.f32 0.0, %v7392
        %v7394 = vpop.f32.mrb[0].mxu0
        %7395 = vmatprep.mubr.f32.mxu0 0.0
        %7396 = vmatmul.mubr.f32.gmra.mrb[0].mxu0 %v7324
        %v7397 = vpop.f32.mrb[0].mxu0
        %v7398 = vadd.f32 0.0, %v7397
        %v7399 = vpop.f32.mrb[0].mxu0
        %7400 = vdwg.mxu0
        %7401 = vrot.lane.b32.xlu0 %v1034, 32
        %v7402 = vpop.permute.xlu0 %7401
        %7403 = vrot.lane.b32.xlu0 %v1040, 32
        %v7404 = vpop.permute.xlu0 %7403
        %7405 = vrot.lane.b32.xlu0 %v1046, 32
        %v7406 = vpop.permute.xlu0 %7405
        %7407 = vrot.lane.b32.xlu0 %v1052, 32
        %v7408 = vpop.permute.xlu0 %7407
        %v7414 = vsel %vm1174, %v7112, 0
        %v7417 = vsel %vm1174, %v7114, 0
        %7419 = vmatprep.subr.mxu0 0.0
        %7420 = vmatpush1.msra.mxu0 %v7402
        %7421 = vmatprep.subr.mxu0 0.0
        %7422 = vmatpush1.msra.mxu0 %v7404
        %7423 = vmatprep.subr.mxu0 0.0
        %7424 = vmatpush1.msra.mxu0 %v7406
        %7425 = vmatprep.subr.mxu0 0.0
        %7426 = vmatpush1.msra.mxu0 %v7408
        %7427 = vmatprep.subr.mxu0 0.0
        %7428 = vmatpush1.msra.mxu0 0.0
        %7429 = vmatprep.subr.mxu0 0.0
        %7430 = vmatpush1.msra.mxu0 0.0
        %7431 = vmatprep.subr.mxu0 0.0
        %7432 = vmatpush1.msra.mxu0 0.0
        %7433 = vmatprep.subr.mxu0 0.0
        %7434 = vmatpush1.msra.mxu0 0.0
        %7435 = vmatprep.subr.mxu0 0.0
        %7436 = vmatpush1.msra.mxu0 0.0
        %7437 = vmatprep.subr.mxu0 0.0
        %7438 = vmatpush1.msra.mxu0 0.0
        %7439 = vmatprep.subr.mxu0 0.0
        %7440 = vmatpush1.msra.mxu0 0.0
        %7441 = vmatprep.subr.mxu0 0.0
        %7442 = vmatpush1.msra.mxu0 0.0
        %7443 = vmatprep.subr.mxu0 0.0
        %7444 = vmatpush1.msra.mxu0 0.0
        %7445 = vmatprep.subr.mxu0 0.0
        %7446 = vmatpush1.msra.mxu0 0.0
        %7447 = vmatprep.subr.mxu0 0.0
        %7448 = vmatpush1.msra.mxu0 0.0
        %7449 = vmatprep.subr.mxu0 0.0
        %7450 = vmatpush1.msra.mxu0 0.0
        %7451 = vmatprep.subr.mxu0 0.0
        %7452 = vmatpush1.msra.mxu0 0.0
        %7453 = vmatprep.subr.mxu0 0.0
        %7454 = vmatpush1.msra.mxu0 0.0
        %7455 = vmatprep.subr.mxu0 0.0
        %7456 = vmatpush1.msra.mxu0 0.0
        %7457 = vmatprep.subr.mxu0 0.0
        %7458 = vmatpush1.msra.mxu0 0.0
        %7459 = vmatprep.subr.mxu0 0.0
        %7460 = vmatpush1.msra.mxu0 0.0
        %7461 = vmatprep.subr.mxu0 0.0
        %7462 = vmatpush1.msra.mxu0 0.0
        %7463 = vmatprep.subr.mxu0 0.0
        %7464 = vmatpush1.msra.mxu0 0.0
        %7465 = vmatprep.subr.mxu0 0.0
        %7466 = vmatpush1.msra.mxu0 0.0
        %7467 = vmatprep.subr.mxu0 0.0
        %7468 = vmatpush1.msra.mxu0 0.0
        %7469 = vmatprep.subr.mxu0 0.0
        %7470 = vmatpush1.msra.mxu0 0.0
        %7471 = vmatprep.subr.mxu0 0.0
        %7472 = vmatpush1.msra.mxu0 0.0
        %7473 = vmatprep.subr.mxu0 0.0
        %7474 = vmatpush1.msra.mxu0 0.0
        %7475 = vmatprep.subr.mxu0 0.0
        %7476 = vmatpush1.msra.mxu0 0.0
        %7477 = vmatprep.subr.mxu0 0.0
        %7478 = vmatpush1.msra.mxu0 0.0
        %7479 = vmatprep.subr.mxu0 0.0
        %7480 = vmatpush1.msra.mxu0 0.0
        %7481 = vmatprep.subr.mxu0 0.0
        %7482 = vmatpush1.msra.mxu0 0.0
        %7483 = vmatprep.mubr.f32.mxu0 0.0
        %7484 = vmatmul.mubr.f32.gmra.mrb[0].mxu0 %v7414
        %v7485 = vpop.f32.mrb[0].mxu0
        %v7486 = vadd.f32 0.0, %v7485
        %v7487 = vpop.f32.mrb[0].mxu0
        %7488 = vmatprep.mubr.f32.mxu0 0.0
        %7489 = vmatmul.mubr.f32.gmra.mrb[0].mxu0 %v7417
        %v7490 = vpop.f32.mrb[0].mxu0
        %v7491 = vadd.f32 0.0, %v7490
        %v7492 = vpop.f32.mrb[0].mxu0
        %7493 = vdwg.mxu0
        %7494 = vrot.lane.b32.xlu0 %v1058, 32
        %v7495 = vpop.permute.xlu0 %7494
        %7496 = vrot.lane.b32.xlu0 %v1064, 32
        %v7497 = vpop.permute.xlu0 %7496
        %7498 = vrot.lane.b32.xlu0 %v1070, 32
        %v7499 = vpop.permute.xlu0 %7498
        %7500 = vrot.lane.b32.xlu0 %v1076, 32
        %v7501 = vpop.permute.xlu0 %7500
        %v7507 = vsel %vm1174, %v7116, 0
        %v7510 = vsel %vm1174, %v7118, 0
        %7512 = vmatprep.subr.mxu0 0.0
        %7513 = vmatpush1.msra.mxu0 %v7495
        %7514 = vmatprep.subr.mxu0 0.0
        %7515 = vmatpush1.msra.mxu0 %v7497
        %7516 = vmatprep.subr.mxu0 0.0
        %7517 = vmatpush1.msra.mxu0 %v7499
        %7518 = vmatprep.subr.mxu0 0.0
        %7519 = vmatpush1.msra.mxu0 %v7501
        %7520 = vmatprep.subr.mxu0 0.0
        %7521 = vmatpush1.msra.mxu0 0.0
        %7522 = vmatprep.subr.mxu0 0.0
        %7523 = vmatpush1.msra.mxu0 0.0
        %7524 = vmatprep.subr.mxu0 0.0
        %7525 = vmatpush1.msra.mxu0 0.0
        %7526 = vmatprep.subr.mxu0 0.0
        %7527 = vmatpush1.msra.mxu0 0.0
        %7528 = vmatprep.subr.mxu0 0.0
        %7529 = vmatpush1.msra.mxu0 0.0
        %7530 = vmatprep.subr.mxu0 0.0
        %7531 = vmatpush1.msra.mxu0 0.0
        %7532 = vmatprep.subr.mxu0 0.0
        %7533 = vmatpush1.msra.mxu0 0.0
        %7534 = vmatprep.subr.mxu0 0.0
        %7535 = vmatpush1.msra.mxu0 0.0
        %7536 = vmatprep.subr.mxu0 0.0
        %7537 = vmatpush1.msra.mxu0 0.0
        %7538 = vmatprep.subr.mxu0 0.0
        %7539 = vmatpush1.msra.mxu0 0.0
        %7540 = vmatprep.subr.mxu0 0.0
        %7541 = vmatpush1.msra.mxu0 0.0
        %7542 = vmatprep.subr.mxu0 0.0
        %7543 = vmatpush1.msra.mxu0 0.0
        %7544 = vmatprep.subr.mxu0 0.0
        %7545 = vmatpush1.msra.mxu0 0.0
        %7546 = vmatprep.subr.mxu0 0.0
        %7547 = vmatpush1.msra.mxu0 0.0
        %7548 = vmatprep.subr.mxu0 0.0
        %7549 = vmatpush1.msra.mxu0 0.0
        %7550 = vmatprep.subr.mxu0 0.0
        %7551 = vmatpush1.msra.mxu0 0.0
        %7552 = vmatprep.subr.mxu0 0.0
        %7553 = vmatpush1.msra.mxu0 0.0
        %7554 = vmatprep.subr.mxu0 0.0
        %7555 = vmatpush1.msra.mxu0 0.0
        %7556 = vmatprep.subr.mxu0 0.0
        %7557 = vmatpush1.msra.mxu0 0.0
        %7558 = vmatprep.subr.mxu0 0.0
        %7559 = vmatpush1.msra.mxu0 0.0
        %7560 = vmatprep.subr.mxu0 0.0
        %7561 = vmatpush1.msra.mxu0 0.0
        %7562 = vmatprep.subr.mxu0 0.0
        %7563 = vmatpush1.msra.mxu0 0.0
        %7564 = vmatprep.subr.mxu0 0.0
        %7565 = vmatpush1.msra.mxu0 0.0
        %7566 = vmatprep.subr.mxu0 0.0
        %7567 = vmatpush1.msra.mxu0 0.0
        %7568 = vmatprep.subr.mxu0 0.0
        %7569 = vmatpush1.msra.mxu0 0.0
        %7570 = vmatprep.subr.mxu0 0.0
        %7571 = vmatpush1.msra.mxu0 0.0
        %7572 = vmatprep.subr.mxu0 0.0
        %7573 = vmatpush1.msra.mxu0 0.0
        %7574 = vmatprep.subr.mxu0 0.0
        %7575 = vmatpush1.msra.mxu0 0.0
        %7576 = vmatprep.mubr.f32.mxu0 0.0
        %7577 = vmatmul.mubr.f32.gmra.mrb[0].mxu0 %v7507
        %v7578 = vpop.f32.mrb[0].mxu0
        %v7579 = vadd.f32 0.0, %v7578
        %v7580 = vpop.f32.mrb[0].mxu0
        %7581 = vmatprep.mubr.f32.mxu0 0.0
        %7582 = vmatmul.mubr.f32.gmra.mrb[0].mxu0 %v7510
        %v7583 = vpop.f32.mrb[0].mxu0
        %v7584 = vadd.f32 0.0, %v7583
        %v7585 = vpop.f32.mrb[0].mxu0
        %7586 = vdwg.mxu0
        %7587 = vrot.lane.b32.xlu0 %v1082, 32
        %v7588 = vpop.permute.xlu0 %7587
        %7589 = vrot.lane.b32.xlu0 %v1088, 32
        %v7590 = vpop.permute.xlu0 %7589
        %7591 = vrot.lane.b32.xlu0 %v1094, 32
        %v7592 = vpop.permute.xlu0 %7591
        %7593 = vrot.lane.b32.xlu0 %v1100, 32
        %v7594 = vpop.permute.xlu0 %7593
        %v7600 = vsel %vm1174, %v7120, 0
        %v7603 = vsel %vm1174, %v7122, 0
        %7605 = vmatprep.subr.mxu0 0.0
        %7606 = vmatpush1.msra.mxu0 %v7588
        %7607 = vmatprep.subr.mxu0 0.0
        %7608 = vmatpush1.msra.mxu0 %v7590
        %7609 = vmatprep.subr.mxu0 0.0
        %7610 = vmatpush1.msra.mxu0 %v7592
        %7611 = vmatprep.subr.mxu0 0.0
        %7612 = vmatpush1.msra.mxu0 %v7594
        %7613 = vmatprep.subr.mxu0 0.0
        %7614 = vmatpush1.msra.mxu0 0.0
        %7615 = vmatprep.subr.mxu0 0.0
        %7616 = vmatpush1.msra.mxu0 0.0
        %7617 = vmatprep.subr.mxu0 0.0
        %7618 = vmatpush1.msra.mxu0 0.0
        %7619 = vmatprep.subr.mxu0 0.0
        %7620 = vmatpush1.msra.mxu0 0.0
        %7621 = vmatprep.subr.mxu0 0.0
        %7622 = vmatpush1.msra.mxu0 0.0
        %7623 = vmatprep.subr.mxu0 0.0
        %7624 = vmatpush1.msra.mxu0 0.0
        %7625 = vmatprep.subr.mxu0 0.0
        %7626 = vmatpush1.msra.mxu0 0.0
        %7627 = vmatprep.subr.mxu0 0.0
        %7628 = vmatpush1.msra.mxu0 0.0
        %7629 = vmatprep.subr.mxu0 0.0
        %7630 = vmatpush1.msra.mxu0 0.0
        %7631 = vmatprep.subr.mxu0 0.0
        %7632 = vmatpush1.msra.mxu0 0.0
        %7633 = vmatprep.subr.mxu0 0.0
        %7634 = vmatpush1.msra.mxu0 0.0
        %7635 = vmatprep.subr.mxu0 0.0
        %7636 = vmatpush1.msra.mxu0 0.0
        %7637 = vmatprep.subr.mxu0 0.0
        %7638 = vmatpush1.msra.mxu0 0.0
        %7639 = vmatprep.subr.mxu0 0.0
        %7640 = vmatpush1.msra.mxu0 0.0
        %7641 = vmatprep.subr.mxu0 0.0
        %7642 = vmatpush1.msra.mxu0 0.0
        %7643 = vmatprep.subr.mxu0 0.0
        %7644 = vmatpush1.msra.mxu0 0.0
        %7645 = vmatprep.subr.mxu0 0.0
        %7646 = vmatpush1.msra.mxu0 0.0
        %7647 = vmatprep.subr.mxu0 0.0
        %7648 = vmatpush1.msra.mxu0 0.0
        %7649 = vmatprep.subr.mxu0 0.0
        %7650 = vmatpush1.msra.mxu0 0.0
        %7651 = vmatprep.subr.mxu0 0.0
        %7652 = vmatpush1.msra.mxu0 0.0
        %7653 = vmatprep.subr.mxu0 0.0
        %7654 = vmatpush1.msra.mxu0 0.0
        %7655 = vmatprep.subr.mxu0 0.0
        %7656 = vmatpush1.msra.mxu0 0.0
        %7657 = vmatprep.subr.mxu0 0.0
        %7658 = vmatpush1.msra.mxu0 0.0
        %7659 = vmatprep.subr.mxu0 0.0
        %7660 = vmatpush1.msra.mxu0 0.0
        %7661 = vmatprep.subr.mxu0 0.0
        %7662 = vmatpush1.msra.mxu0 0.0
        %7663 = vmatprep.subr.mxu0 0.0
        %7664 = vmatpush1.msra.mxu0 0.0
        %7665 = vmatprep.subr.mxu0 0.0
        %7666 = vmatpush1.msra.mxu0 0.0
        %7667 = vmatprep.subr.mxu0 0.0
        %7668 = vmatpush1.msra.mxu0 0.0
        %7669 = vmatprep.mubr.f32.mxu0 0.0
        %7670 = vmatmul.mubr.f32.gmra.mrb[0].mxu0 %v7600
        %v7671 = vpop.f32.mrb[0].mxu0
        %v7672 = vadd.f32 0.0, %v7671
        %v7673 = vpop.f32.mrb[0].mxu0
        %7674 = vmatprep.mubr.f32.mxu0 0.0
        %7675 = vmatmul.mubr.f32.gmra.mrb[0].mxu0 %v7603
        %v7676 = vpop.f32.mrb[0].mxu0
        %v7677 = vadd.f32 0.0, %v7676
        %v7678 = vpop.f32.mrb[0].mxu0
        %7679 = vdwg.mxu0
        %7680 = vrot.lane.b32.xlu0 %v1106, 32
        %v7681 = vpop.permute.xlu0 %7680
        %7682 = vrot.lane.b32.xlu0 %v1112, 32
        %v7683 = vpop.permute.xlu0 %7682
        %7684 = vrot.lane.b32.xlu0 %v1118, 32
        %v7685 = vpop.permute.xlu0 %7684
        %7686 = vrot.lane.b32.xlu0 %v1124, 32
        %v7687 = vpop.permute.xlu0 %7686
        %v7693 = vsel %vm1174, %v7124, 0
        %v7696 = vsel %vm1174, %v7126, 0
        %7698 = vmatprep.subr.mxu0 0.0
        %7699 = vmatpush1.msra.mxu0 %v7681
        %7700 = vmatprep.subr.mxu0 0.0
        %7701 = vmatpush1.msra.mxu0 %v7683
        %7702 = vmatprep.subr.mxu0 0.0
        %7703 = vmatpush1.msra.mxu0 %v7685
        %7704 = vmatprep.subr.mxu0 0.0
        %7705 = vmatpush1.msra.mxu0 %v7687
        %7706 = vmatprep.subr.mxu0 0.0
        %7707 = vmatpush1.msra.mxu0 0.0
        %7708 = vmatprep.subr.mxu0 0.0
        %7709 = vmatpush1.msra.mxu0 0.0
        %7710 = vmatprep.subr.mxu0 0.0
        %7711 = vmatpush1.msra.mxu0 0.0
        %7712 = vmatprep.subr.mxu0 0.0
        %7713 = vmatpush1.msra.mxu0 0.0
        %7714 = vmatprep.subr.mxu0 0.0
        %7715 = vmatpush1.msra.mxu0 0.0
        %7716 = vmatprep.subr.mxu0 0.0
        %7717 = vmatpush1.msra.mxu0 0.0
        %7718 = vmatprep.subr.mxu0 0.0
        %7719 = vmatpush1.msra.mxu0 0.0
        %7720 = vmatprep.subr.mxu0 0.0
        %7721 = vmatpush1.msra.mxu0 0.0
        %7722 = vmatprep.subr.mxu0 0.0
        %7723 = vmatpush1.msra.mxu0 0.0
        %7724 = vmatprep.subr.mxu0 0.0
        %7725 = vmatpush1.msra.mxu0 0.0
        %7726 = vmatprep.subr.mxu0 0.0
        %7727 = vmatpush1.msra.mxu0 0.0
        %7728 = vmatprep.subr.mxu0 0.0
        %7729 = vmatpush1.msra.mxu0 0.0
        %7730 = vmatprep.subr.mxu0 0.0
        %7731 = vmatpush1.msra.mxu0 0.0
        %7732 = vmatprep.subr.mxu0 0.0
        %7733 = vmatpush1.msra.mxu0 0.0
        %7734 = vmatprep.subr.mxu0 0.0
        %7735 = vmatpush1.msra.mxu0 0.0
        %7736 = vmatprep.subr.mxu0 0.0
        %7737 = vmatpush1.msra.mxu0 0.0
        %7738 = vmatprep.subr.mxu0 0.0
        %7739 = vmatpush1.msra.mxu0 0.0
        %7740 = vmatprep.subr.mxu0 0.0
        %7741 = vmatpush1.msra.mxu0 0.0
        %7742 = vmatprep.subr.mxu0 0.0
        %7743 = vmatpush1.msra.mxu0 0.0
        %7744 = vmatprep.subr.mxu0 0.0
        %7745 = vmatpush1.msra.mxu0 0.0
        %7746 = vmatprep.subr.mxu0 0.0
        %7747 = vmatpush1.msra.mxu0 0.0
        %7748 = vmatprep.subr.mxu0 0.0
        %7749 = vmatpush1.msra.mxu0 0.0
        %7750 = vmatprep.subr.mxu0 0.0
        %7751 = vmatpush1.msra.mxu0 0.0
        %7752 = vmatprep.subr.mxu0 0.0
        %7753 = vmatpush1.msra.mxu0 0.0
        %7754 = vmatprep.subr.mxu0 0.0
        %7755 = vmatpush1.msra.mxu0 0.0
        %7756 = vmatprep.subr.mxu0 0.0
        %7757 = vmatpush1.msra.mxu0 0.0
        %7758 = vmatprep.subr.mxu0 0.0
        %7759 = vmatpush1.msra.mxu0 0.0
        %7760 = vmatprep.subr.mxu0 0.0
        %7761 = vmatpush1.msra.mxu0 0.0
        %7762 = vmatprep.mubr.f32.mxu0 0.0
        %7763 = vmatmul.mubr.f32.gmra.mrb[0].mxu0 %v7693
        %v7764 = vpop.f32.mrb[0].mxu0
        %v7765 = vadd.f32 0.0, %v7764
        %v7766 = vpop.f32.mrb[0].mxu0
        %7767 = vmatprep.mubr.f32.mxu0 0.0
        %7768 = vmatmul.mubr.f32.gmra.mrb[0].mxu0 %v7696
        %v7769 = vpop.f32.mrb[0].mxu0
        %v7770 = vadd.f32 0.0, %v7769
        %v7771 = vpop.f32.mrb[0].mxu0
        %7772 = vdwg.mxu0
        %7773 = vrot.lane.b32.xlu0 %v1130, 32
        %v7774 = vpop.permute.xlu0 %7773
        %7775 = vrot.lane.b32.xlu0 %v1136, 32
        %v7776 = vpop.permute.xlu0 %7775
        %7777 = vrot.lane.b32.xlu0 %v1142, 32
        %v7778 = vpop.permute.xlu0 %7777
        %7779 = vrot.lane.b32.xlu0 %v1148, 32
        %v7780 = vpop.permute.xlu0 %7779
        %v7786 = vsel %vm1174, %v7128, 0
        %v7789 = vsel %vm1174, %v7130, 0
        %7791 = vmatprep.subr.mxu0 0.0
        %7792 = vmatpush1.msra.mxu0 %v7774
        %7793 = vmatprep.subr.mxu0 0.0
        %7794 = vmatpush1.msra.mxu0 %v7776
        %7795 = vmatprep.subr.mxu0 0.0
        %7796 = vmatpush1.msra.mxu0 %v7778
        %7797 = vmatprep.subr.mxu0 0.0
        %7798 = vmatpush1.msra.mxu0 %v7780
        %7799 = vmatprep.subr.mxu0 0.0
        %7800 = vmatpush1.msra.mxu0 0.0
        %7801 = vmatprep.subr.mxu0 0.0
        %7802 = vmatpush1.msra.mxu0 0.0
        %7803 = vmatprep.subr.mxu0 0.0
        %7804 = vmatpush1.msra.mxu0 0.0
        %7805 = vmatprep.subr.mxu0 0.0
        %7806 = vmatpush1.msra.mxu0 0.0
        %7807 = vmatprep.subr.mxu0 0.0
        %7808 = vmatpush1.msra.mxu0 0.0
        %7809 = vmatprep.subr.mxu0 0.0
        %7810 = vmatpush1.msra.mxu0 0.0
        %7811 = vmatprep.subr.mxu0 0.0
        %7812 = vmatpush1.msra.mxu0 0.0
        %7813 = vmatprep.subr.mxu0 0.0
        %7814 = vmatpush1.msra.mxu0 0.0
        %7815 = vmatprep.subr.mxu0 0.0
        %7816 = vmatpush1.msra.mxu0 0.0
        %7817 = vmatprep.subr.mxu0 0.0
        %7818 = vmatpush1.msra.mxu0 0.0
        %7819 = vmatprep.subr.mxu0 0.0
        %7820 = vmatpush1.msra.mxu0 0.0
        %7821 = vmatprep.subr.mxu0 0.0
        %7822 = vmatpush1.msra.mxu0 0.0
        %7823 = vmatprep.subr.mxu0 0.0
        %7824 = vmatpush1.msra.mxu0 0.0
        %7825 = vmatprep.subr.mxu0 0.0
        %7826 = vmatpush1.msra.mxu0 0.0
        %7827 = vmatprep.subr.mxu0 0.0
        %7828 = vmatpush1.msra.mxu0 0.0
        %7829 = vmatprep.subr.mxu0 0.0
        %7830 = vmatpush1.msra.mxu0 0.0
        %7831 = vmatprep.subr.mxu0 0.0
        %7832 = vmatpush1.msra.mxu0 0.0
        %7833 = vmatprep.subr.mxu0 0.0
        %7834 = vmatpush1.msra.mxu0 0.0
        %7835 = vmatprep.subr.mxu0 0.0
        %7836 = vmatpush1.msra.mxu0 0.0
        %7837 = vmatprep.subr.mxu0 0.0
        %7838 = vmatpush1.msra.mxu0 0.0
        %7839 = vmatprep.subr.mxu0 0.0
        %7840 = vmatpush1.msra.mxu0 0.0
        %7841 = vmatprep.subr.mxu0 0.0
        %7842 = vmatpush1.msra.mxu0 0.0
        %7843 = vmatprep.subr.mxu0 0.0
        %7844 = vmatpush1.msra.mxu0 0.0
        %7845 = vmatprep.subr.mxu0 0.0
        %7846 = vmatpush1.msra.mxu0 0.0
        %7847 = vmatprep.subr.mxu0 0.0
        %7848 = vmatpush1.msra.mxu0 0.0
        %7849 = vmatprep.subr.mxu0 0.0
        %7850 = vmatpush1.msra.mxu0 0.0
        %7851 = vmatprep.subr.mxu0 0.0
        %7852 = vmatpush1.msra.mxu0 0.0
        %7853 = vmatprep.subr.mxu0 0.0
        %7854 = vmatpush1.msra.mxu0 0.0
        %7855 = vmatprep.mubr.f32.mxu0 0.0
        %7856 = vmatmul.mubr.f32.gmra.mrb[0].mxu0 %v7786
        %v7857 = vpop.f32.mrb[0].mxu0
        %v7858 = vadd.f32 0.0, %v7857
        %v7859 = vpop.f32.mrb[0].mxu0
        %7860 = vmatprep.mubr.f32.mxu0 0.0
        %7861 = vmatmul.mubr.f32.gmra.mrb[0].mxu0 %v7789
        %v7862 = vpop.f32.mrb[0].mxu0
        %v7863 = vadd.f32 0.0, %v7862
        %v7864 = vpop.f32.mrb[0].mxu0
        %7865 = vdwg.mxu0
        %7866 = vrot.lane.b32.xlu0 %v1154, 32
        %v7867 = vpop.permute.xlu0 %7866
        %7868 = vrot.lane.b32.xlu0 %v1160, 32
        %v7869 = vpop.permute.xlu0 %7868
        %7870 = vrot.lane.b32.xlu0 %v1166, 32
        %v7871 = vpop.permute.xlu0 %7870
        %7872 = vrot.lane.b32.xlu0 %v1172, 32
        %v7873 = vpop.permute.xlu0 %7872
        %v7879 = vsel %vm1174, %v7132, 0
        %v7882 = vsel %vm1174, %v7134, 0
        %7884 = vmatprep.subr.mxu0 0.0
        %7885 = vmatpush1.msra.mxu0 %v7867
        %7886 = vmatprep.subr.mxu0 0.0
        %7887 = vmatpush1.msra.mxu0 %v7869
        %7888 = vmatprep.subr.mxu0 0.0
        %7889 = vmatpush1.msra.mxu0 %v7871
        %7890 = vmatprep.subr.mxu0 0.0
        %7891 = vmatpush1.msra.mxu0 %v7873
        %7892 = vmatprep.subr.mxu0 0.0
        %7893 = vmatpush1.msra.mxu0 0.0
        %7894 = vmatprep.subr.mxu0 0.0
        %7895 = vmatpush1.msra.mxu0 0.0
        %7896 = vmatprep.subr.mxu0 0.0
        %7897 = vmatpush1.msra.mxu0 0.0
        %7898 = vmatprep.subr.mxu0 0.0
        %7899 = vmatpush1.msra.mxu0 0.0
        %7900 = vmatprep.subr.mxu0 0.0
        %7901 = vmatpush1.msra.mxu0 0.0
        %7902 = vmatprep.subr.mxu0 0.0
        %7903 = vmatpush1.msra.mxu0 0.0
        %7904 = vmatprep.subr.mxu0 0.0
        %7905 = vmatpush1.msra.mxu0 0.0
        %7906 = vmatprep.subr.mxu0 0.0
        %7907 = vmatpush1.msra.mxu0 0.0
        %7908 = vmatprep.subr.mxu0 0.0
        %7909 = vmatpush1.msra.mxu0 0.0
        %7910 = vmatprep.subr.mxu0 0.0
        %7911 = vmatpush1.msra.mxu0 0.0
        %7912 = vmatprep.subr.mxu0 0.0
        %7913 = vmatpush1.msra.mxu0 0.0
        %7914 = vmatprep.subr.mxu0 0.0
        %7915 = vmatpush1.msra.mxu0 0.0
        %7916 = vmatprep.subr.mxu0 0.0
        %7917 = vmatpush1.msra.mxu0 0.0
        %7918 = vmatprep.subr.mxu0 0.0
        %7919 = vmatpush1.msra.mxu0 0.0
        %7920 = vmatprep.subr.mxu0 0.0
        %7921 = vmatpush1.msra.mxu0 0.0
        %7922 = vmatprep.subr.mxu0 0.0
        %7923 = vmatpush1.msra.mxu0 0.0
        %7924 = vmatprep.subr.mxu0 0.0
        %7925 = vmatpush1.msra.mxu0 0.0
        %7926 = vmatprep.subr.mxu0 0.0
        %7927 = vmatpush1.msra.mxu0 0.0
        %7928 = vmatprep.subr.mxu0 0.0
        %7929 = vmatpush1.msra.mxu0 0.0
        %7930 = vmatprep.subr.mxu0 0.0
        %7931 = vmatpush1.msra.mxu0 0.0
        %7932 = vmatprep.subr.mxu0 0.0
        %7933 = vmatpush1.msra.mxu0 0.0
        %7934 = vmatprep.subr.mxu0 0.0
        %7935 = vmatpush1.msra.mxu0 0.0
        %7936 = vmatprep.subr.mxu0 0.0
        %7937 = vmatpush1.msra.mxu0 0.0
        %7938 = vmatprep.subr.mxu0 0.0
        %7939 = vmatpush1.msra.mxu0 0.0
        %7940 = vmatprep.subr.mxu0 0.0
        %7941 = vmatpush1.msra.mxu0 0.0
        %7942 = vmatprep.subr.mxu0 0.0
        %7943 = vmatpush1.msra.mxu0 0.0
        %7944 = vmatprep.subr.mxu0 0.0
        %7945 = vmatpush1.msra.mxu0 0.0
        %7946 = vmatprep.subr.mxu0 0.0
        %7947 = vmatpush1.msra.mxu0 0.0
        %7948 = vmatprep.mubr.f32.mxu0 0.0
        %7949 = vmatmul.mubr.f32.gmra.mrb[0].mxu0 %v7879
        %v7950 = vpop.f32.mrb[0].mxu0
        %v7951 = vadd.f32 0.0, %v7950
        %v7952 = vpop.f32.mrb[0].mxu0
        %7953 = vmatprep.mubr.f32.mxu0 0.0
        %7954 = vmatmul.mubr.f32.gmra.mrb[0].mxu0 %v7882
        %v7955 = vpop.f32.mrb[0].mxu0
        %v7956 = vadd.f32 0.0, %v7955
        %v7957 = vpop.f32.mrb[0].mxu0
        %7958 = vdwg.mxu0
        %v7959 = vmul.f32 %v7300, %v7184
        %v7960 = vmul.f32 %v7305, %v7186
        %v7961 = vmul.f32 %v7393, %v7188
        %v7962 = vmul.f32 %v7398, %v7190
        %v7963 = vmul.f32 %v7486, %v7192
        %v7964 = vmul.f32 %v7491, %v7194
        %v7965 = vmul.f32 %v7579, %v7196
        %v7966 = vmul.f32 %v7584, %v7198
        %v7967 = vmul.f32 %v7672, %v7200
        %v7968 = vmul.f32 %v7677, %v7202
        %v7969 = vmul.f32 %v7765, %v7204
        %v7970 = vmul.f32 %v7770, %v7206
        %v7971 = vmul.f32 %v7858, %v7208
        %v7972 = vmul.f32 %v7863, %v7210
        %v7973 = vmul.f32 %v7951, %v7212
        %v7974 = vmul.f32 %v7956, %v7214
        %7991 = vrot.lane.b32.xlu0 %v4503, 32
        %v7992 = vpop.permute.xlu0 %7991
        %7993 = vrot.lane.b32.xlu0 %v4504, 32
        %v7994 = vpop.permute.xlu0 %7993
        %7995 = vrot.lane.b32.xlu0 %v4505, 32
        %v7996 = vpop.permute.xlu0 %7995
        %7997 = vrot.lane.b32.xlu0 %v4506, 32
        %v7998 = vpop.permute.xlu0 %7997
        %7999 = vrot.lane.b32.xlu0 %v4507, 32
        %v8000 = vpop.permute.xlu0 %7999
        %8001 = vrot.lane.b32.xlu0 %v4508, 32
        %v8002 = vpop.permute.xlu0 %8001
        %8003 = vrot.lane.b32.xlu0 %v4509, 32
        %v8004 = vpop.permute.xlu0 %8003
        %8005 = vrot.lane.b32.xlu0 %v4510, 32
        %v8006 = vpop.permute.xlu0 %8005
        %8007 = vrot.lane.b32.xlu0 %v4511, 32
        %v8008 = vpop.permute.xlu0 %8007
        %8009 = vrot.lane.b32.xlu0 %v4512, 32
        %v8010 = vpop.permute.xlu0 %8009
        %8011 = vrot.lane.b32.xlu0 %v4513, 32
        %v8012 = vpop.permute.xlu0 %8011
        %8013 = vrot.lane.b32.xlu0 %v4514, 32
        %v8014 = vpop.permute.xlu0 %8013
        %8015 = vrot.lane.b32.xlu0 %v4515, 32
        %v8016 = vpop.permute.xlu0 %8015
        %8017 = vrot.lane.b32.xlu0 %v4516, 32
        %v8018 = vpop.permute.xlu0 %8017
        %8019 = vrot.lane.b32.xlu0 %v4517, 32
        %v8020 = vpop.permute.xlu0 %8019
        %8021 = vrot.lane.b32.xlu0 %v4518, 32
        %v8022 = vpop.permute.xlu0 %8021
        %8055 = vrot.lane.b32.xlu0 %v6231, 64
        %v8056 = vpop.permute.xlu0 %8055
        %8057 = vrot.lane.b32.xlu0 %v6232, 64
        %v8058 = vpop.permute.xlu0 %8057
        %8059 = vrot.lane.b32.xlu0 %v6233, 64
        %v8060 = vpop.permute.xlu0 %8059
        %8061 = vrot.lane.b32.xlu0 %v6234, 64
        %v8062 = vpop.permute.xlu0 %8061
        %8063 = vrot.lane.b32.xlu0 %v6235, 64
        %v8064 = vpop.permute.xlu0 %8063
        %8065 = vrot.lane.b32.xlu0 %v6236, 64
        %v8066 = vpop.permute.xlu0 %8065
        %8067 = vrot.lane.b32.xlu0 %v6237, 64
        %v8068 = vpop.permute.xlu0 %8067
        %8069 = vrot.lane.b32.xlu0 %v6238, 64
        %v8070 = vpop.permute.xlu0 %8069
        %8071 = vrot.lane.b32.xlu0 %v6239, 64
        %v8072 = vpop.permute.xlu0 %8071
        %8073 = vrot.lane.b32.xlu0 %v6240, 64
        %v8074 = vpop.permute.xlu0 %8073
        %8075 = vrot.lane.b32.xlu0 %v6241, 64
        %v8076 = vpop.permute.xlu0 %8075
        %8077 = vrot.lane.b32.xlu0 %v6242, 64
        %v8078 = vpop.permute.xlu0 %8077
        %8079 = vrot.lane.b32.xlu0 %v6243, 64
        %v8080 = vpop.permute.xlu0 %8079
        %8081 = vrot.lane.b32.xlu0 %v6244, 64
        %v8082 = vpop.permute.xlu0 %8081
        %8083 = vrot.lane.b32.xlu0 %v6245, 64
        %v8084 = vpop.permute.xlu0 %8083
        %8085 = vrot.lane.b32.xlu0 %v6246, 64
        %v8086 = vpop.permute.xlu0 %8085
        %8119 = vrot.lane.b32.xlu0 %v7959, 96
        %v8120 = vpop.permute.xlu0 %8119
        %8121 = vrot.lane.b32.xlu0 %v7960, 96
        %v8122 = vpop.permute.xlu0 %8121
        %8123 = vrot.lane.b32.xlu0 %v7961, 96
        %v8124 = vpop.permute.xlu0 %8123
        %8125 = vrot.lane.b32.xlu0 %v7962, 96
        %v8126 = vpop.permute.xlu0 %8125
        %8127 = vrot.lane.b32.xlu0 %v7963, 96
        %v8128 = vpop.permute.xlu0 %8127
        %8129 = vrot.lane.b32.xlu0 %v7964, 96
        %v8130 = vpop.permute.xlu0 %8129
        %8131 = vrot.lane.b32.xlu0 %v7965, 96
        %v8132 = vpop.permute.xlu0 %8131
        %8133 = vrot.lane.b32.xlu0 %v7966, 96
        %v8134 = vpop.permute.xlu0 %8133
        %8135 = vrot.lane.b32.xlu0 %v7967, 96
        %v8136 = vpop.permute.xlu0 %8135
        %8137 = vrot.lane.b32.xlu0 %v7968, 96
        %v8138 = vpop.permute.xlu0 %8137
        %8139 = vrot.lane.b32.xlu0 %v7969, 96
        %v8140 = vpop.permute.xlu0 %8139
        %8141 = vrot.lane.b32.xlu0 %v7970, 96
        %v8142 = vpop.permute.xlu0 %8141
        %8143 = vrot.lane.b32.xlu0 %v7971, 96
        %v8144 = vpop.permute.xlu0 %8143
        %8145 = vrot.lane.b32.xlu0 %v7972, 96
        %v8146 = vpop.permute.xlu0 %8145
        %8147 = vrot.lane.b32.xlu0 %v7973, 96
        %v8148 = vpop.permute.xlu0 %8147
        %8149 = vrot.lane.b32.xlu0 %v7974, 96
        %v8150 = vpop.permute.xlu0 %8149
        %v8167 = vsel %vm1174, %v2743, %v7992
        %v8168 = vsel %vm1174, %v2744, %v7994
        %v8169 = vsel %vm1174, %v2745, %v7996
        %v8170 = vsel %vm1174, %v2746, %v7998
        %v8171 = vsel %vm1174, %v2747, %v8000
        %v8172 = vsel %vm1174, %v2748, %v8002
        %v8173 = vsel %vm1174, %v2749, %v8004
        %v8174 = vsel %vm1174, %v2750, %v8006
        %v8175 = vsel %vm1174, %v2751, %v8008
        %v8176 = vsel %vm1174, %v2752, %v8010
        %v8177 = vsel %vm1174, %v2753, %v8012
        %v8178 = vsel %vm1174, %v2754, %v8014
        %v8179 = vsel %vm1174, %v2755, %v8016
        %v8180 = vsel %vm1174, %v2756, %v8018
        %v8181 = vsel %vm1174, %v2757, %v8020
        %v8182 = vsel %vm1174, %v2758, %v8022
        %vm8183 = vcmask 523264
        %v8184 = vsel %vm8183, %v8167, %v8056
        %v8185 = vsel %vm8183, %v8168, %v8058
        %v8186 = vsel %vm8183, %v8169, %v8060
        %v8187 = vsel %vm8183, %v8170, %v8062
        %v8188 = vsel %vm8183, %v8171, %v8064
        %v8189 = vsel %vm8183, %v8172, %v8066
        %v8190 = vsel %vm8183, %v8173, %v8068
        %v8191 = vsel %vm8183, %v8174, %v8070
        %v8192 = vsel %vm8183, %v8175, %v8072
        %v8193 = vsel %vm8183, %v8176, %v8074
        %v8194 = vsel %vm8183, %v8177, %v8076
        %v8195 = vsel %vm8183, %v8178, %v8078
        %v8196 = vsel %vm8183, %v8179, %v8080
        %v8197 = vsel %vm8183, %v8180, %v8082
        %v8198 = vsel %vm8183, %v8181, %v8084
        %v8199 = vsel %vm8183, %v8182, %v8086
        %vm8200 = vcmask 785408
        %v8201 = vsel %vm8200, %v8184, %v8120
        %v8202 = vsel %vm8200, %v8185, %v8122
        %v8203 = vsel %vm8200, %v8186, %v8124
        %v8204 = vsel %vm8200, %v8187, %v8126
        %v8205 = vsel %vm8200, %v8188, %v8128
        %v8206 = vsel %vm8200, %v8189, %v8130
        %v8207 = vsel %vm8200, %v8190, %v8132
        %v8208 = vsel %vm8200, %v8191, %v8134
        %v8209 = vsel %vm8200, %v8192, %v8136
        %v8210 = vsel %vm8200, %v8193, %v8138
        %v8211 = vsel %vm8200, %v8194, %v8140
        %v8212 = vsel %vm8200, %v8195, %v8142
        %v8213 = vsel %vm8200, %v8196, %v8144
        %v8214 = vsel %vm8200, %v8197, %v8146
        %v8215 = vsel %vm8200, %v8198, %v8148
        %v8216 = vsel %vm8200, %v8199, %v8150
        %v8217 = vld [vmem:[#allocation10] sm:$0xff]
        %v8218 = vld [vmem:[#allocation10 + $0x8] sm:$0xff]
        %v8219 = vld [vmem:[#allocation10 + $0x10] sm:$0xff]
        %v8220 = vld [vmem:[#allocation10 + $0x18] sm:$0xff]
        %v8221 = vld [vmem:[#allocation10 + $0x20] sm:$0xff]
        %v8222 = vld [vmem:[#allocation10 + $0x28] sm:$0xff]
        %v8223 = vld [vmem:[#allocation10 + $0x30] sm:$0xff]
        %v8224 = vld [vmem:[#allocation10 + $0x38] sm:$0xff]
        %v8225 = vld [vmem:[#allocation10 + $0x40] sm:$0xff]
        %v8226 = vld [vmem:[#allocation10 + $0x48] sm:$0xff]
        %v8227 = vld [vmem:[#allocation10 + $0x50] sm:$0xff]
        %v8228 = vld [vmem:[#allocation10 + $0x58] sm:$0xff]
        %v8229 = vld [vmem:[#allocation10 + $0x60] sm:$0xff]
        %v8230 = vld [vmem:[#allocation10 + $0x68] sm:$0xff]
        %v8231 = vld [vmem:[#allocation10 + $0x70] sm:$0xff]
        %v8232 = vld [vmem:[#allocation10 + $0x78] sm:$0xff]
        %v8233 = vld [vmem:[%s7] sm:$0x1]
        %v8235 = vlaneseq
        %v8236 = vshrl.u32 %v8235, 7
        %v8237 = vsub.s32 0, %v8236
        %v8238 = vrot.slane %v8233, %v8237
        %8240 = vmatprep.subr.mxu0 0.0
        %8241 = vmatpush1.msra.mxu0 %v8217
        %8242 = vmatprep.subr.mxu0 0.0
        %8243 = vmatpush1.msra.mxu0 %v8218
        %8244 = vmatprep.subr.mxu0 0.0
        %8245 = vmatpush1.msra.mxu0 %v8219
        %8246 = vmatprep.subr.mxu0 0.0
        %8247 = vmatpush1.msra.mxu0 %v8220
        %8248 = vmatprep.subr.mxu0 0.0
        %8249 = vmatpush1.msra.mxu0 %v8221
        %8250 = vmatprep.subr.mxu0 0.0
        %8251 = vmatpush1.msra.mxu0 %v8222
        %8252 = vmatprep.subr.mxu0 0.0
        %8253 = vmatpush1.msra.mxu0 %v8223
        %8254 = vmatprep.subr.mxu0 0.0
        %8255 = vmatpush1.msra.mxu0 %v8224
        %8256 = vmatprep.subr.mxu0 0.0
        %8257 = vmatpush1.msra.mxu0 %v8225
        %8258 = vmatprep.subr.mxu0 0.0
        %8259 = vmatpush1.msra.mxu0 %v8226
        %8260 = vmatprep.subr.mxu0 0.0
        %8261 = vmatpush1.msra.mxu0 %v8227
        %8262 = vmatprep.subr.mxu0 0.0
        %8263 = vmatpush1.msra.mxu0 %v8228
        %8264 = vmatprep.subr.mxu0 0.0
        %8265 = vmatpush1.msra.mxu0 %v8229
        %8266 = vmatprep.subr.mxu0 0.0
        %8267 = vmatpush1.msra.mxu0 %v8230
        %8268 = vmatprep.subr.mxu0 0.0
        %8269 = vmatpush1.msra.mxu0 %v8231
        %8270 = vmatprep.subr.mxu0 0.0
        %8271 = vmatpush1.msra.mxu0 %v8232
        %8272 = vmatprep.subr.mxu0 0.0
        %8273 = vmatpush1.msra.mxu0 0.0
        %8274 = vmatprep.subr.mxu0 0.0
        %8275 = vmatpush1.msra.mxu0 0.0
        %8276 = vmatprep.subr.mxu0 0.0
        %8277 = vmatpush1.msra.mxu0 0.0
        %8278 = vmatprep.subr.mxu0 0.0
        %8279 = vmatpush1.msra.mxu0 0.0
        %8280 = vmatprep.subr.mxu0 0.0
        %8281 = vmatpush1.msra.mxu0 0.0
        %8282 = vmatprep.subr.mxu0 0.0
        %8283 = vmatpush1.msra.mxu0 0.0
        %8284 = vmatprep.subr.mxu0 0.0
        %8285 = vmatpush1.msra.mxu0 0.0
        %8286 = vmatprep.subr.mxu0 0.0
        %8287 = vmatpush1.msra.mxu0 0.0
        %8288 = vmatprep.subr.mxu0 0.0
        %8289 = vmatpush1.msra.mxu0 0.0
        %8290 = vmatprep.subr.mxu0 0.0
        %8291 = vmatpush1.msra.mxu0 0.0
        %8292 = vmatprep.subr.mxu0 0.0
        %8293 = vmatpush1.msra.mxu0 0.0
        %8294 = vmatprep.subr.mxu0 0.0
        %8295 = vmatpush1.msra.mxu0 0.0
        %8296 = vmatprep.subr.mxu0 0.0
        %8297 = vmatpush1.msra.mxu0 0.0
        %8298 = vmatprep.subr.mxu0 0.0
        %8299 = vmatpush1.msra.mxu0 0.0
        %8300 = vmatprep.subr.mxu0 0.0
        %8301 = vmatpush1.msra.mxu0 0.0
        %8302 = vmatprep.subr.mxu0 0.0
        %8303 = vmatpush1.msra.mxu0 0.0
        %8304 = vmatprep.mubr.f32.mxu0 0.0
        %8305 = vmatmul.mubr.f32.gmra.mrb[0].mxu0 %v8201
        %v8306 = vpop.f32.mrb[0].mxu0
        %v8307 = vadd.f32 %v8238, %v8306
        %v8308 = vpop.f32.mrb[0].mxu0
        %8309 = vmatprep.mubr.f32.mxu0 0.0
        %8310 = vmatmul.mubr.f32.gmra.mrb[0].mxu0 %v8202
        %v8311 = vpop.f32.mrb[0].mxu0
        %v8312 = vadd.f32 %v8238, %v8311
        %v8313 = vpop.f32.mrb[0].mxu0
        %8314 = vmatprep.mubr.f32.mxu0 0.0
        %8315 = vmatmul.mubr.f32.gmra.mrb[0].mxu0 %v8203
        %v8316 = vpop.f32.mrb[0].mxu0
        %v8317 = vadd.f32 %v8238, %v8316
        %v8318 = vpop.f32.mrb[0].mxu0
        %8319 = vmatprep.mubr.f32.mxu0 0.0
        %8320 = vmatmul.mubr.f32.gmra.mrb[0].mxu0 %v8204
        %v8321 = vpop.f32.mrb[0].mxu0
        %v8322 = vadd.f32 %v8238, %v8321
        %v8323 = vpop.f32.mrb[0].mxu0
        %8324 = vmatprep.mubr.f32.mxu0 0.0
        %8325 = vmatmul.mubr.f32.gmra.mrb[0].mxu0 %v8205
        %v8326 = vpop.f32.mrb[0].mxu0
        %v8327 = vadd.f32 %v8238, %v8326
        %v8328 = vpop.f32.mrb[0].mxu0
        %8329 = vmatprep.mubr.f32.mxu0 0.0
        %8330 = vmatmul.mubr.f32.gmra.mrb[0].mxu0 %v8206
        %v8331 = vpop.f32.mrb[0].mxu0
        %v8332 = vadd.f32 %v8238, %v8331
        %v8333 = vpop.f32.mrb[0].mxu0
        %8334 = vmatprep.mubr.f32.mxu0 0.0
        %8335 = vmatmul.mubr.f32.gmra.mrb[0].mxu0 %v8207
        %v8336 = vpop.f32.mrb[0].mxu0
        %v8337 = vadd.f32 %v8238, %v8336
        %v8338 = vpop.f32.mrb[0].mxu0
        %8339 = vmatprep.mubr.f32.mxu0 0.0
        %8340 = vmatmul.mubr.f32.gmra.mrb[0].mxu0 %v8208
        %v8341 = vpop.f32.mrb[0].mxu0
        %v8342 = vadd.f32 %v8238, %v8341
        %v8343 = vpop.f32.mrb[0].mxu0
        %8344 = vmatprep.mubr.f32.mxu0 0.0
        %8345 = vmatmul.mubr.f32.gmra.mrb[0].mxu0 %v8209
        %v8346 = vpop.f32.mrb[0].mxu0
        %v8347 = vadd.f32 %v8238, %v8346
        %v8348 = vpop.f32.mrb[0].mxu0
        %8349 = vmatprep.mubr.f32.mxu0 0.0
        %8350 = vmatmul.mubr.f32.gmra.mrb[0].mxu0 %v8210
        %v8351 = vpop.f32.mrb[0].mxu0
        %v8352 = vadd.f32 %v8238, %v8351
        %v8353 = vpop.f32.mrb[0].mxu0
        %8354 = vmatprep.mubr.f32.mxu0 0.0
        %8355 = vmatmul.mubr.f32.gmra.mrb[0].mxu0 %v8211
        %v8356 = vpop.f32.mrb[0].mxu0
        %v8357 = vadd.f32 %v8238, %v8356
        %v8358 = vpop.f32.mrb[0].mxu0
        %8359 = vmatprep.mubr.f32.mxu0 0.0
        %8360 = vmatmul.mubr.f32.gmra.mrb[0].mxu0 %v8212
        %v8361 = vpop.f32.mrb[0].mxu0
        %v8362 = vadd.f32 %v8238, %v8361
        %v8363 = vpop.f32.mrb[0].mxu0
        %8364 = vmatprep.mubr.f32.mxu0 0.0
        %8365 = vmatmul.mubr.f32.gmra.mrb[0].mxu0 %v8213
        %v8366 = vpop.f32.mrb[0].mxu0
        %v8367 = vadd.f32 %v8238, %v8366
        %v8368 = vpop.f32.mrb[0].mxu0
        %8369 = vmatprep.mubr.f32.mxu0 0.0
        %8370 = vmatmul.mubr.f32.gmra.mrb[0].mxu0 %v8214
        %v8371 = vpop.f32.mrb[0].mxu0
        %v8372 = vadd.f32 %v8238, %v8371
        %v8373 = vpop.f32.mrb[0].mxu0
        %8374 = vmatprep.mubr.f32.mxu0 0.0
        %8375 = vmatmul.mubr.f32.gmra.mrb[0].mxu0 %v8215
        %v8376 = vpop.f32.mrb[0].mxu0
        %v8377 = vadd.f32 %v8238, %v8376
        %v8378 = vpop.f32.mrb[0].mxu0
        %8379 = vmatprep.mubr.f32.mxu0 0.0
        %8380 = vmatmul.mubr.f32.gmra.mrb[0].mxu0 %v8216
        %v8381 = vpop.f32.mrb[0].mxu0
        %v8382 = vadd.f32 %v8238, %v8381
        %v8383 = vpop.f32.mrb[0].mxu0
        %8384 = vdwg.mxu0
        %v8385 = vadd.f32 %v657, %v8307
        %v8386 = vadd.f32 %v658, %v8312
        %v8387 = vadd.f32 %v659, %v8317
        %v8388 = vadd.f32 %v660, %v8322
        %v8389 = vadd.f32 %v661, %v8327
        %v8390 = vadd.f32 %v662, %v8332
        %v8391 = vadd.f32 %v663, %v8337
        %v8392 = vadd.f32 %v664, %v8342
        %v8393 = vadd.f32 %v665, %v8347
        %v8394 = vadd.f32 %v666, %v8352
        %v8395 = vadd.f32 %v667, %v8357
        %v8396 = vadd.f32 %v668, %v8362
        %v8397 = vadd.f32 %v669, %v8367
        %v8398 = vadd.f32 %v670, %v8372
        %v8399 = vadd.f32 %v671, %v8377
        %v8400 = vadd.f32 %v672, %v8382
        %v8401 = vld [vmem:[%s8] sm:$0x1]
        %v8402 = vld [vmem:[%s9] sm:$0x1]
        %8403 = vadd.xlane.f32.xlu0 %v8385
        %v8404 = vpop.xlane.xlu0 %8403
        %8405 = vadd.xlane.f32.xlu0 %v8386
        %v8406 = vpop.xlane.xlu0 %8405
        %8407 = vadd.xlane.f32.xlu0 %v8387
        %v8408 = vpop.xlane.xlu0 %8407
        %8409 = vadd.xlane.f32.xlu0 %v8388
        %v8410 = vpop.xlane.xlu0 %8409
        %8411 = vadd.xlane.f32.xlu0 %v8389
        %v8412 = vpop.xlane.xlu0 %8411
        %8413 = vadd.xlane.f32.xlu0 %v8390
        %v8414 = vpop.xlane.xlu0 %8413
        %8415 = vadd.xlane.f32.xlu0 %v8391
        %v8416 = vpop.xlane.xlu0 %8415
        %8417 = vadd.xlane.f32.xlu0 %v8392
        %v8418 = vpop.xlane.xlu0 %8417
        %8419 = vadd.xlane.f32.xlu0 %v8393
        %v8420 = vpop.xlane.xlu0 %8419
        %8421 = vadd.xlane.f32.xlu0 %v8394
        %v8422 = vpop.xlane.xlu0 %8421
        %8423 = vadd.xlane.f32.xlu0 %v8395
        %v8424 = vpop.xlane.xlu0 %8423
        %8425 = vadd.xlane.f32.xlu0 %v8396
        %v8426 = vpop.xlane.xlu0 %8425
        %8427 = vadd.xlane.f32.xlu0 %v8397
        %v8428 = vpop.xlane.xlu0 %8427
        %8429 = vadd.xlane.f32.xlu0 %v8398
        %v8430 = vpop.xlane.xlu0 %8429
        %8431 = vadd.xlane.f32.xlu0 %v8399
        %v8432 = vpop.xlane.xlu0 %8431
        %8433 = vadd.xlane.f32.xlu0 %v8400
        %v8434 = vpop.xlane.xlu0 %8433
        %v8435 = vrcp.pop 128.0
        %v8436 = vmul.f32 %v8404, %v8435
        %v8437 = vmul.f32 %v8406, %v8435
        %v8438 = vmul.f32 %v8408, %v8435
        %v8439 = vmul.f32 %v8410, %v8435
        %v8440 = vmul.f32 %v8412, %v8435
        %v8441 = vmul.f32 %v8414, %v8435
        %v8442 = vmul.f32 %v8416, %v8435
        %v8443 = vmul.f32 %v8418, %v8435
        %v8444 = vmul.f32 %v8420, %v8435
        %v8445 = vmul.f32 %v8422, %v8435
        %v8446 = vmul.f32 %v8424, %v8435
        %v8447 = vmul.f32 %v8426, %v8435
        %v8448 = vmul.f32 %v8428, %v8435
        %v8449 = vmul.f32 %v8430, %v8435
        %v8450 = vmul.f32 %v8432, %v8435
        %v8451 = vmul.f32 %v8434, %v8435
        %v8452 = vmul.f32 %v8385, %v8385
        %v8453 = vmul.f32 %v8386, %v8386
        %v8454 = vmul.f32 %v8387, %v8387
        %v8455 = vmul.f32 %v8388, %v8388
        %v8456 = vmul.f32 %v8389, %v8389
        %v8457 = vmul.f32 %v8390, %v8390
        %v8458 = vmul.f32 %v8391, %v8391
        %v8459 = vmul.f32 %v8392, %v8392
        %v8460 = vmul.f32 %v8393, %v8393
        %v8461 = vmul.f32 %v8394, %v8394
        %v8462 = vmul.f32 %v8395, %v8395
        %v8463 = vmul.f32 %v8396, %v8396
        %v8464 = vmul.f32 %v8397, %v8397
        %v8465 = vmul.f32 %v8398, %v8398
        %v8466 = vmul.f32 %v8399, %v8399
        %v8467 = vmul.f32 %v8400, %v8400
        %8468 = vadd.xlane.f32.xlu0 %v8452
        %v8469 = vpop.xlane.xlu0 %8468
        %8470 = vadd.xlane.f32.xlu0 %v8453
        %v8471 = vpop.xlane.xlu0 %8470
        %8472 = vadd.xlane.f32.xlu0 %v8454
        %v8473 = vpop.xlane.xlu0 %8472
        %8474 = vadd.xlane.f32.xlu0 %v8455
        %v8475 = vpop.xlane.xlu0 %8474
        %8476 = vadd.xlane.f32.xlu0 %v8456
        %v8477 = vpop.xlane.xlu0 %8476
        %8478 = vadd.xlane.f32.xlu0 %v8457
        %v8479 = vpop.xlane.xlu0 %8478
        %8480 = vadd.xlane.f32.xlu0 %v8458
        %v8481 = vpop.xlane.xlu0 %8480
        %8482 = vadd.xlane.f32.xlu0 %v8459
        %v8483 = vpop.xlane.xlu0 %8482
        %8484 = vadd.xlane.f32.xlu0 %v8460
        %v8485 = vpop.xlane.xlu0 %8484
        %8486 = vadd.xlane.f32.xlu0 %v8461
        %v8487 = vpop.xlane.xlu0 %8486
        %8488 = vadd.xlane.f32.xlu0 %v8462
        %v8489 = vpop.xlane.xlu0 %8488
        %8490 = vadd.xlane.f32.xlu0 %v8463
        %v8491 = vpop.xlane.xlu0 %8490
        %8492 = vadd.xlane.f32.xlu0 %v8464
        %v8493 = vpop.xlane.xlu0 %8492
        %8494 = vadd.xlane.f32.xlu0 %v8465
        %v8495 = vpop.xlane.xlu0 %8494
        %8496 = vadd.xlane.f32.xlu0 %v8466
        %v8497 = vpop.xlane.xlu0 %8496
        %8498 = vadd.xlane.f32.xlu0 %v8467
        %v8499 = vpop.xlane.xlu0 %8498
        %v8500 = vmul.f32 %v8469, %v8435
        %v8501 = vmul.f32 %v8471, %v8435
        %v8502 = vmul.f32 %v8473, %v8435
        %v8503 = vmul.f32 %v8475, %v8435
        %v8504 = vmul.f32 %v8477, %v8435
        %v8505 = vmul.f32 %v8479, %v8435
        %v8506 = vmul.f32 %v8481, %v8435
        %v8507 = vmul.f32 %v8483, %v8435
        %v8508 = vmul.f32 %v8485, %v8435
        %v8509 = vmul.f32 %v8487, %v8435
        %v8510 = vmul.f32 %v8489, %v8435
        %v8511 = vmul.f32 %v8491, %v8435
        %v8512 = vmul.f32 %v8493, %v8435
        %v8513 = vmul.f32 %v8495, %v8435
        %v8514 = vmul.f32 %v8497, %v8435
        %v8515 = vmul.f32 %v8499, %v8435
        %v8516 = vmul.f32 %v8436, %v8436
        %v8517 = vmul.f32 %v8437, %v8437
        %v8518 = vmul.f32 %v8438, %v8438
        %v8519 = vmul.f32 %v8439, %v8439
        %v8520 = vmul.f32 %v8440, %v8440
        %v8521 = vmul.f32 %v8441, %v8441
        %v8522 = vmul.f32 %v8442, %v8442
        %v8523 = vmul.f32 %v8443, %v8443
        %v8524 = vmul.f32 %v8444, %v8444
        %v8525 = vmul.f32 %v8445, %v8445
        %v8526 = vmul.f32 %v8446, %v8446
        %v8527 = vmul.f32 %v8447, %v8447
        %v8528 = vmul.f32 %v8448, %v8448
        %v8529 = vmul.f32 %v8449, %v8449
        %v8530 = vmul.f32 %v8450, %v8450
        %v8531 = vmul.f32 %v8451, %v8451
        %v8532 = vsub.f32 %v8500, %v8516
        %v8533 = vsub.f32 %v8501, %v8517
        %v8534 = vsub.f32 %v8502, %v8518
        %v8535 = vsub.f32 %v8503, %v8519
        %v8536 = vsub.f32 %v8504, %v8520
        %v8537 = vsub.f32 %v8505, %v8521
        %v8538 = vsub.f32 %v8506, %v8522
        %v8539 = vsub.f32 %v8507, %v8523
        %v8540 = vsub.f32 %v8508, %v8524
        %v8541 = vsub.f32 %v8509, %v8525
        %v8542 = vsub.f32 %v8510, %v8526
        %v8543 = vsub.f32 %v8511, %v8527
        %v8544 = vsub.f32 %v8512, %v8528
        %v8545 = vsub.f32 %v8513, %v8529
        %v8546 = vsub.f32 %v8514, %v8530
        %v8547 = vsub.f32 %v8515, %v8531
        %v8548 = vmax.f32 %v8532, 0.0
        %v8549 = vmax.f32 %v8533, 0.0
        %v8550 = vmax.f32 %v8534, 0.0
        %v8551 = vmax.f32 %v8535, 0.0
        %v8552 = vmax.f32 %v8536, 0.0
        %v8553 = vmax.f32 %v8537, 0.0
        %v8554 = vmax.f32 %v8538, 0.0
        %v8555 = vmax.f32 %v8539, 0.0
        %v8556 = vmax.f32 %v8540, 0.0
        %v8557 = vmax.f32 %v8541, 0.0
        %v8558 = vmax.f32 %v8542, 0.0
        %v8559 = vmax.f32 %v8543, 0.0
        %v8560 = vmax.f32 %v8544, 0.0
        %v8561 = vmax.f32 %v8545, 0.0
        %v8562 = vmax.f32 %v8546, 0.0
        %v8563 = vmax.f32 %v8547, 0.0
        %v8564 = vsub.f32 %v8385, %v8436
        %v8565 = vsub.f32 %v8386, %v8437
        %v8566 = vsub.f32 %v8387, %v8438
        %v8567 = vsub.f32 %v8388, %v8439
        %v8568 = vsub.f32 %v8389, %v8440
        %v8569 = vsub.f32 %v8390, %v8441
        %v8570 = vsub.f32 %v8391, %v8442
        %v8571 = vsub.f32 %v8392, %v8443
        %v8572 = vsub.f32 %v8393, %v8444
        %v8573 = vsub.f32 %v8394, %v8445
        %v8574 = vsub.f32 %v8395, %v8446
        %v8575 = vsub.f32 %v8396, %v8447
        %v8576 = vsub.f32 %v8397, %v8448
        %v8577 = vsub.f32 %v8398, %v8449
        %v8578 = vsub.f32 %v8399, %v8450
        %v8579 = vsub.f32 %v8400, %v8451
        %v8580 = vadd.f32 %v8548, 1e-05
        %v8581 = vadd.f32 %v8549, 1e-05
        %v8582 = vadd.f32 %v8550, 1e-05
        %v8583 = vadd.f32 %v8551, 1e-05
        %v8584 = vadd.f32 %v8552, 1e-05
        %v8585 = vadd.f32 %v8553, 1e-05
        %v8586 = vadd.f32 %v8554, 1e-05
        %v8587 = vadd.f32 %v8555, 1e-05
        %v8588 = vadd.f32 %v8556, 1e-05
        %v8589 = vadd.f32 %v8557, 1e-05
        %v8590 = vadd.f32 %v8558, 1e-05
        %v8591 = vadd.f32 %v8559, 1e-05
        %v8592 = vadd.f32 %v8560, 1e-05
        %v8593 = vadd.f32 %v8561, 1e-05
        %v8594 = vadd.f32 %v8562, 1e-05
        %v8595 = vadd.f32 %v8563, 1e-05
        %v8596 = vrsqrt.pop %v8580
        %v8597 = vrsqrt.pop %v8581
        %v8598 = vrsqrt.pop %v8582
        %v8599 = vrsqrt.pop %v8583
        %v8600 = vrsqrt.pop %v8584
        %v8601 = vrsqrt.pop %v8585
        %v8602 = vrsqrt.pop %v8586
        %v8603 = vrsqrt.pop %v8587
        %v8604 = vrsqrt.pop %v8588
        %v8605 = vrsqrt.pop %v8589
        %v8606 = vrsqrt.pop %v8590
        %v8607 = vrsqrt.pop %v8591
        %v8608 = vrsqrt.pop %v8592
        %v8609 = vrsqrt.pop %v8593
        %v8610 = vrsqrt.pop %v8594
        %v8611 = vrsqrt.pop %v8595
        %v8612 = vmul.f32 %v8564, %v8596
        %v8613 = vmul.f32 %v8565, %v8597
        %v8614 = vmul.f32 %v8566, %v8598
        %v8615 = vmul.f32 %v8567, %v8599
        %v8616 = vmul.f32 %v8568, %v8600
        %v8617 = vmul.f32 %v8569, %v8601
        %v8618 = vmul.f32 %v8570, %v8602
        %v8619 = vmul.f32 %v8571, %v8603
        %v8620 = vmul.f32 %v8572, %v8604
        %v8621 = vmul.f32 %v8573, %v8605
        %v8622 = vmul.f32 %v8574, %v8606
        %v8623 = vmul.f32 %v8575, %v8607
        %v8624 = vmul.f32 %v8576, %v8608
        %v8625 = vmul.f32 %v8577, %v8609
        %v8626 = vmul.f32 %v8578, %v8610
        %v8627 = vmul.f32 %v8579, %v8611
        %v8629 = vlaneseq
        %v8630 = vshrl.u32 %v8629, 7
        %v8631 = vsub.s32 0, %v8630
        %v8632 = vrot.slane %v8401, %v8631
        %v8634 = vmul.f32 %v8612, %v8632
        %v8635 = vmul.f32 %v8613, %v8632
        %v8636 = vmul.f32 %v8614, %v8632
        %v8637 = vmul.f32 %v8615, %v8632
        %v8638 = vmul.f32 %v8616, %v8632
        %v8639 = vmul.f32 %v8617, %v8632
        %v8640 = vmul.f32 %v8618, %v8632
        %v8641 = vmul.f32 %v8619, %v8632
        %v8642 = vmul.f32 %v8620, %v8632
        %v8643 = vmul.f32 %v8621, %v8632
        %v8644 = vmul.f32 %v8622, %v8632
        %v8645 = vmul.f32 %v8623, %v8632
        %v8646 = vmul.f32 %v8624, %v8632
        %v8647 = vmul.f32 %v8625, %v8632
        %v8648 = vmul.f32 %v8626, %v8632
        %v8649 = vmul.f32 %v8627, %v8632
        %v8651 = vlaneseq
        %v8652 = vshrl.u32 %v8651, 7
        %v8653 = vsub.s32 0, %v8652
        %v8654 = vrot.slane %v8402, %v8653
        %v8656 = vadd.f32 %v8634, %v8654
        %v8657 = vadd.f32 %v8635, %v8654
        %v8658 = vadd.f32 %v8636, %v8654
        %v8659 = vadd.f32 %v8637, %v8654
        %v8660 = vadd.f32 %v8638, %v8654
        %v8661 = vadd.f32 %v8639, %v8654
        %v8662 = vadd.f32 %v8640, %v8654
        %v8663 = vadd.f32 %v8641, %v8654
        %v8664 = vadd.f32 %v8642, %v8654
        %v8665 = vadd.f32 %v8643, %v8654
        %v8666 = vadd.f32 %v8644, %v8654
        %v8667 = vadd.f32 %v8645, %v8654
        %v8668 = vadd.f32 %v8646, %v8654
        %v8669 = vadd.f32 %v8647, %v8654
        %v8670 = vadd.f32 %v8648, %v8654
        %v8671 = vadd.f32 %v8649, %v8654
        %v8672 = vld [vmem:[#allocation11] sm:$0xff]
        %v8673 = vld [vmem:[#allocation11 + $0x8] sm:$0xff]
        %v8674 = vld [vmem:[#allocation11 + $0x10] sm:$0xff]
        %v8675 = vld [vmem:[#allocation11 + $0x18] sm:$0xff]
        %v8676 = vld [vmem:[#allocation11 + $0x20] sm:$0xff]
        %v8677 = vld [vmem:[#allocation11 + $0x28] sm:$0xff]
        %v8678 = vld [vmem:[#allocation11 + $0x30] sm:$0xff]
        %v8679 = vld [vmem:[#allocation11 + $0x38] sm:$0xff]
        %v8680 = vld [vmem:[#allocation11 + $0x40] sm:$0xff]
        %v8681 = vld [vmem:[#allocation11 + $0x48] sm:$0xff]
        %v8682 = vld [vmem:[#allocation11 + $0x50] sm:$0xff]
        %v8683 = vld [vmem:[#allocation11 + $0x58] sm:$0xff]
        %v8684 = vld [vmem:[#allocation11 + $0x60] sm:$0xff]
        %v8685 = vld [vmem:[#allocation11 + $0x68] sm:$0xff]
        %v8686 = vld [vmem:[#allocation11 + $0x70] sm:$0xff]
        %v8687 = vld [vmem:[#allocation11 + $0x78] sm:$0xff]
        %v8688 = vld [vmem:[#allocation11 + $0x80] sm:$0xff]
        %v8689 = vld [vmem:[#allocation11 + $0x88] sm:$0xff]
        %v8690 = vld [vmem:[#allocation11 + $0x90] sm:$0xff]
        %v8691 = vld [vmem:[#allocation11 + $0x98] sm:$0xff]
        %v8692 = vld [vmem:[#allocation11 + $0xa0] sm:$0xff]
        %v8693 = vld [vmem:[#allocation11 + $0xa8] sm:$0xff]
        %v8694 = vld [vmem:[#allocation11 + $0xb0] sm:$0xff]
        %v8695 = vld [vmem:[#allocation11 + $0xb8] sm:$0xff]
        %v8696 = vld [vmem:[#allocation11 + $0xc0] sm:$0xff]
        %v8697 = vld [vmem:[#allocation11 + $0xc8] sm:$0xff]
        %v8698 = vld [vmem:[#allocation11 + $0xd0] sm:$0xff]
        %v8699 = vld [vmem:[#allocation11 + $0xd8] sm:$0xff]
        %v8700 = vld [vmem:[#allocation11 + $0xe0] sm:$0xff]
        %v8701 = vld [vmem:[#allocation11 + $0xe8] sm:$0xff]
        %v8702 = vld [vmem:[#allocation11 + $0xf0] sm:$0xff]
        %v8703 = vld [vmem:[#allocation11 + $0xf8] sm:$0xff]
        %v8704 = vld [vmem:[%s13] sm:$0x3]
        %v8706 = vlaneseq
        %v8707 = vshrl.u32 %v8706, 7
        %v8708 = vsub.s32 0, %v8707
        %v8709 = vrot.slane %v8704, %v8708
        %v8710 = vlaneseq
        %v8711 = vshrl.u32 %v8710, 7
        %v8712 = vsub.s32 1, %v8711
        %v8713 = vrot.slane %v8704, %v8712
        %8716 = vmatprep.subr.mxu0 %v8673
        %8717 = vmatpush1.msra.mxu0 %v8672
        %8718 = vmatprep.subr.mxu0 %v8675
        %8719 = vmatpush1.msra.mxu0 %v8674
        %8720 = vmatprep.subr.mxu0 %v8677
        %8721 = vmatpush1.msra.mxu0 %v8676
        %8722 = vmatprep.subr.mxu0 %v8679
        %8723 = vmatpush1.msra.mxu0 %v8678
        %8724 = vmatprep.subr.mxu0 %v8681
        %8725 = vmatpush1.msra.mxu0 %v8680
        %8726 = vmatprep.subr.mxu0 %v8683
        %8727 = vmatpush1.msra.mxu0 %v8682
        %8728 = vmatprep.subr.mxu0 %v8685
        %8729 = vmatpush1.msra.mxu0 %v8684
        %8730 = vmatprep.subr.mxu0 %v8687
        %8731 = vmatpush1.msra.mxu0 %v8686
        %8732 = vmatprep.subr.mxu0 %v8689
        %8733 = vmatpush1.msra.mxu0 %v8688
        %8734 = vmatprep.subr.mxu0 %v8691
        %8735 = vmatpush1.msra.mxu0 %v8690
        %8736 = vmatprep.subr.mxu0 %v8693
        %8737 = vmatpush1.msra.mxu0 %v8692
        %8738 = vmatprep.subr.mxu0 %v8695
        %8739 = vmatpush1.msra.mxu0 %v8694
        %8740 = vmatprep.subr.mxu0 %v8697
        %8741 = vmatpush1.msra.mxu0 %v8696
        %8742 = vmatprep.subr.mxu0 %v8699
        %8743 = vmatpush1.msra.mxu0 %v8698
        %8744 = vmatprep.subr.mxu0 %v8701
        %8745 = vmatpush1.msra.mxu0 %v8700
        %8746 = vmatprep.subr.mxu0 %v8703
        %8747 = vmatpush1.msra.mxu0 %v8702
        %8748 = vmatprep.subr.mxu0 0.0
        %8749 = vmatpush1.msra.mxu0 0.0
        %8750 = vmatprep.subr.mxu0 0.0
        %8751 = vmatpush1.msra.mxu0 0.0
        %8752 = vmatprep.subr.mxu0 0.0
        %8753 = vmatpush1.msra.mxu0 0.0
        %8754 = vmatprep.subr.mxu0 0.0
        %8755 = vmatpush1.msra.mxu0 0.0
        %8756 = vmatprep.subr.mxu0 0.0
        %8757 = vmatpush1.msra.mxu0 0.0
        %8758 = vmatprep.subr.mxu0 0.0
        %8759 = vmatpush1.msra.mxu0 0.0
        %8760 = vmatprep.subr.mxu0 0.0
        %8761 = vmatpush1.msra.mxu0 0.0
        %8762 = vmatprep.subr.mxu0 0.0
        %8763 = vmatpush1.msra.mxu0 0.0
        %8764 = vmatprep.subr.mxu0 0.0
        %8765 = vmatpush1.msra.mxu0 0.0
        %8766 = vmatprep.subr.mxu0 0.0
        %8767 = vmatpush1.msra.mxu0 0.0
        %8768 = vmatprep.subr.mxu0 0.0
        %8769 = vmatpush1.msra.mxu0 0.0
        %8770 = vmatprep.subr.mxu0 0.0
        %8771 = vmatpush1.msra.mxu0 0.0
        %8772 = vmatprep.subr.mxu0 0.0
        %8773 = vmatpush1.msra.mxu0 0.0
        %8774 = vmatprep.subr.mxu0 0.0
        %8775 = vmatpush1.msra.mxu0 0.0
        %8776 = vmatprep.subr.mxu0 0.0
        %8777 = vmatpush1.msra.mxu0 0.0
        %8778 = vmatprep.subr.mxu0 0.0
        %8779 = vmatpush1.msra.mxu0 0.0
        %8780 = vmatprep.mubr.f32.mxu0 0.0
        %8781 = vmatmul.mubr.f32.gmra.mrb[0].mxu0 %v8656
        %v8782 = vpop.f32.mrb[0].mxu0
        %v8783 = vadd.f32 %v8709, %v8782
        %v8784 = vpop.f32.mrb[0].mxu0
        %v8785 = vadd.f32 %v8713, %v8784
        %8786 = vmatprep.mubr.f32.mxu0 0.0
        %8787 = vmatmul.mubr.f32.gmra.mrb[0].mxu0 %v8657
        %v8788 = vpop.f32.mrb[0].mxu0
        %v8789 = vadd.f32 %v8709, %v8788
        %v8790 = vpop.f32.mrb[0].mxu0
        %v8791 = vadd.f32 %v8713, %v8790
        %8792 = vmatprep.mubr.f32.mxu0 0.0
        %8793 = vmatmul.mubr.f32.gmra.mrb[0].mxu0 %v8658
        %v8794 = vpop.f32.mrb[0].mxu0
        %v8795 = vadd.f32 %v8709, %v8794
        %v8796 = vpop.f32.mrb[0].mxu0
        %v8797 = vadd.f32 %v8713, %v8796
        %8798 = vmatprep.mubr.f32.mxu0 0.0
        %8799 = vmatmul.mubr.f32.gmra.mrb[0].mxu0 %v8659
        %v8800 = vpop.f32.mrb[0].mxu0
        %v8801 = vadd.f32 %v8709, %v8800
        %v8802 = vpop.f32.mrb[0].mxu0
        %v8803 = vadd.f32 %v8713, %v8802
        %8804 = vmatprep.mubr.f32.mxu0 0.0
        %8805 = vmatmul.mubr.f32.gmra.mrb[0].mxu0 %v8660
        %v8806 = vpop.f32.mrb[0].mxu0
        %v8807 = vadd.f32 %v8709, %v8806
        %v8808 = vpop.f32.mrb[0].mxu0
        %v8809 = vadd.f32 %v8713, %v8808
        %8810 = vmatprep.mubr.f32.mxu0 0.0
        %8811 = vmatmul.mubr.f32.gmra.mrb[0].mxu0 %v8661
        %v8812 = vpop.f32.mrb[0].mxu0
        %v8813 = vadd.f32 %v8709, %v8812
        %v8814 = vpop.f32.mrb[0].mxu0
        %v8815 = vadd.f32 %v8713, %v8814
        %8816 = vmatprep.mubr.f32.mxu0 0.0
        %8817 = vmatmul.mubr.f32.gmra.mrb[0].mxu0 %v8662
        %v8818 = vpop.f32.mrb[0].mxu0
        %v8819 = vadd.f32 %v8709, %v8818
        %v8820 = vpop.f32.mrb[0].mxu0
        %v8821 = vadd.f32 %v8713, %v8820
        %8822 = vmatprep.mubr.f32.mxu0 0.0
        %8823 = vmatmul.mubr.f32.gmra.mrb[0].mxu0 %v8663
        %v8824 = vpop.f32.mrb[0].mxu0
        %v8825 = vadd.f32 %v8709, %v8824
        %v8826 = vpop.f32.mrb[0].mxu0
        %v8827 = vadd.f32 %v8713, %v8826
        %8828 = vmatprep.mubr.f32.mxu0 0.0
        %8829 = vmatmul.mubr.f32.gmra.mrb[0].mxu0 %v8664
        %v8830 = vpop.f32.mrb[0].mxu0
        %v8831 = vadd.f32 %v8709, %v8830
        %v8832 = vpop.f32.mrb[0].mxu0
        %v8833 = vadd.f32 %v8713, %v8832
        %8834 = vmatprep.mubr.f32.mxu0 0.0
        %8835 = vmatmul.mubr.f32.gmra.mrb[0].mxu0 %v8665
        %v8836 = vpop.f32.mrb[0].mxu0
        %v8837 = vadd.f32 %v8709, %v8836
        %v8838 = vpop.f32.mrb[0].mxu0
        %v8839 = vadd.f32 %v8713, %v8838
        %8840 = vmatprep.mubr.f32.mxu0 0.0
        %8841 = vmatmul.mubr.f32.gmra.mrb[0].mxu0 %v8666
        %v8842 = vpop.f32.mrb[0].mxu0
        %v8843 = vadd.f32 %v8709, %v8842
        %v8844 = vpop.f32.mrb[0].mxu0
        %v8845 = vadd.f32 %v8713, %v8844
        %8846 = vmatprep.mubr.f32.mxu0 0.0
        %8847 = vmatmul.mubr.f32.gmra.mrb[0].mxu0 %v8667
        %v8848 = vpop.f32.mrb[0].mxu0
        %v8849 = vadd.f32 %v8709, %v8848
        %v8850 = vpop.f32.mrb[0].mxu0
        %v8851 = vadd.f32 %v8713, %v8850
        %8852 = vmatprep.mubr.f32.mxu0 0.0
        %8853 = vmatmul.mubr.f32.gmra.mrb[0].mxu0 %v8668
        %v8854 = vpop.f32.mrb[0].mxu0
        %v8855 = vadd.f32 %v8709, %v8854
        %v8856 = vpop.f32.mrb[0].mxu0
        %v8857 = vadd.f32 %v8713, %v8856
        %8858 = vmatprep.mubr.f32.mxu0 0.0
        %8859 = vmatmul.mubr.f32.gmra.mrb[0].mxu0 %v8669
        %v8860 = vpop.f32.mrb[0].mxu0
        %v8861 = vadd.f32 %v8709, %v8860
        %v8862 = vpop.f32.mrb[0].mxu0
        %v8863 = vadd.f32 %v8713, %v8862
        %8864 = vmatprep.mubr.f32.mxu0 0.0
        %8865 = vmatmul.mubr.f32.gmra.mrb[0].mxu0 %v8670
        %v8866 = vpop.f32.mrb[0].mxu0
        %v8867 = vadd.f32 %v8709, %v8866
        %v8868 = vpop.f32.mrb[0].mxu0
        %v8869 = vadd.f32 %v8713, %v8868
        %8870 = vmatprep.mubr.f32.mxu0 0.0
        %8871 = vmatmul.mubr.f32.gmra.mrb[0].mxu0 %v8671
        %v8872 = vpop.f32.mrb[0].mxu0
        %v8873 = vadd.f32 %v8709, %v8872
        %v8874 = vpop.f32.mrb[0].mxu0
        %v8875 = vadd.f32 %v8713, %v8874
        %8876 = vdwg.mxu0
        %v8877 = vmax.f32 %v8783, 0.0
        %v8878 = vmax.f32 %v8785, 0.0
        %v8879 = vmax.f32 %v8789, 0.0
        %v8880 = vmax.f32 %v8791, 0.0
        %v8881 = vmax.f32 %v8795, 0.0
        %v8882 = vmax.f32 %v8797, 0.0
        %v8883 = vmax.f32 %v8801, 0.0
        %v8884 = vmax.f32 %v8803, 0.0
        %v8885 = vmax.f32 %v8807, 0.0
        %v8886 = vmax.f32 %v8809, 0.0
        %v8887 = vmax.f32 %v8813, 0.0
        %v8888 = vmax.f32 %v8815, 0.0
        %v8889 = vmax.f32 %v8819, 0.0
        %v8890 = vmax.f32 %v8821, 0.0
        %v8891 = vmax.f32 %v8825, 0.0
        %v8892 = vmax.f32 %v8827, 0.0
        %v8893 = vmax.f32 %v8831, 0.0
        %v8894 = vmax.f32 %v8833, 0.0
        %v8895 = vmax.f32 %v8837, 0.0
        %v8896 = vmax.f32 %v8839, 0.0
        %v8897 = vmax.f32 %v8843, 0.0
        %v8898 = vmax.f32 %v8845, 0.0
        %v8899 = vmax.f32 %v8849, 0.0
        %v8900 = vmax.f32 %v8851, 0.0
        %v8901 = vmax.f32 %v8855, 0.0
        %v8902 = vmax.f32 %v8857, 0.0
        %v8903 = vmax.f32 %v8861, 0.0
        %v8904 = vmax.f32 %v8863, 0.0
        %v8905 = vmax.f32 %v8867, 0.0
        %v8906 = vmax.f32 %v8869, 0.0
        %v8907 = vmax.f32 %v8873, 0.0
        %v8908 = vmax.f32 %v8875, 0.0
        %v8909 = vld [vmem:[#allocation13] sm:$0xff]
        %v8910 = vld [vmem:[#allocation13 + $0x8] sm:$0xff]
        %v8911 = vld [vmem:[#allocation13 + $0x10] sm:$0xff]
        %v8912 = vld [vmem:[#allocation13 + $0x18] sm:$0xff]
        %v8913 = vld [vmem:[#allocation13 + $0x20] sm:$0xff]
        %v8914 = vld [vmem:[#allocation13 + $0x28] sm:$0xff]
        %v8915 = vld [vmem:[#allocation13 + $0x30] sm:$0xff]
        %v8916 = vld [vmem:[#allocation13 + $0x38] sm:$0xff]
        %v8917 = vld [vmem:[#allocation13 + $0x40] sm:$0xff]
        %v8918 = vld [vmem:[#allocation13 + $0x48] sm:$0xff]
        %v8919 = vld [vmem:[#allocation13 + $0x50] sm:$0xff]
        %v8920 = vld [vmem:[#allocation13 + $0x58] sm:$0xff]
        %v8921 = vld [vmem:[#allocation13 + $0x60] sm:$0xff]
        %v8922 = vld [vmem:[#allocation13 + $0x68] sm:$0xff]
        %v8923 = vld [vmem:[#allocation13 + $0x70] sm:$0xff]
        %v8924 = vld [vmem:[#allocation13 + $0x78] sm:$0xff]
        %v8925 = vld [vmem:[#allocation13 + $0x80] sm:$0xff]
        %v8926 = vld [vmem:[#allocation13 + $0x88] sm:$0xff]
        %v8927 = vld [vmem:[#allocation13 + $0x90] sm:$0xff]
        %v8928 = vld [vmem:[#allocation13 + $0x98] sm:$0xff]
        %v8929 = vld [vmem:[#allocation13 + $0xa0] sm:$0xff]
        %v8930 = vld [vmem:[#allocation13 + $0xa8] sm:$0xff]
        %v8931 = vld [vmem:[#allocation13 + $0xb0] sm:$0xff]
        %v8932 = vld [vmem:[#allocation13 + $0xb8] sm:$0xff]
        %v8933 = vld [vmem:[#allocation13 + $0xc0] sm:$0xff]
        %v8934 = vld [vmem:[#allocation13 + $0xc8] sm:$0xff]
        %v8935 = vld [vmem:[#allocation13 + $0xd0] sm:$0xff]
        %v8936 = vld [vmem:[#allocation13 + $0xd8] sm:$0xff]
        %v8937 = vld [vmem:[#allocation13 + $0xe0] sm:$0xff]
        %v8938 = vld [vmem:[#allocation13 + $0xe8] sm:$0xff]
        %v8939 = vld [vmem:[#allocation13 + $0xf0] sm:$0xff]
        %v8940 = vld [vmem:[#allocation13 + $0xf8] sm:$0xff]
        %v8941 = vld [vmem:[%s15] sm:$0x1]
        %v8943 = vlaneseq
        %v8944 = vshrl.u32 %v8943, 7
        %v8945 = vsub.s32 0, %v8944
        %v8946 = vrot.slane %v8941, %v8945
        %8948 = vmatprep.subr.mxu0 0.0
        %8949 = vmatpush1.msra.mxu0 %v8909
        %8950 = vmatprep.subr.mxu0 0.0
        %8951 = vmatpush1.msra.mxu0 %v8910
        %8952 = vmatprep.subr.mxu0 0.0
        %8953 = vmatpush1.msra.mxu0 %v8911
        %8954 = vmatprep.subr.mxu0 0.0
        %8955 = vmatpush1.msra.mxu0 %v8912
        %8956 = vmatprep.subr.mxu0 0.0
        %8957 = vmatpush1.msra.mxu0 %v8913
        %8958 = vmatprep.subr.mxu0 0.0
        %8959 = vmatpush1.msra.mxu0 %v8914
        %8960 = vmatprep.subr.mxu0 0.0
        %8961 = vmatpush1.msra.mxu0 %v8915
        %8962 = vmatprep.subr.mxu0 0.0
        %8963 = vmatpush1.msra.mxu0 %v8916
        %8964 = vmatprep.subr.mxu0 0.0
        %8965 = vmatpush1.msra.mxu0 %v8917
        %8966 = vmatprep.subr.mxu0 0.0
        %8967 = vmatpush1.msra.mxu0 %v8918
        %8968 = vmatprep.subr.mxu0 0.0
        %8969 = vmatpush1.msra.mxu0 %v8919
        %8970 = vmatprep.subr.mxu0 0.0
        %8971 = vmatpush1.msra.mxu0 %v8920
        %8972 = vmatprep.subr.mxu0 0.0
        %8973 = vmatpush1.msra.mxu0 %v8921
        %8974 = vmatprep.subr.mxu0 0.0
        %8975 = vmatpush1.msra.mxu0 %v8922
        %8976 = vmatprep.subr.mxu0 0.0
        %8977 = vmatpush1.msra.mxu0 %v8923
        %8978 = vmatprep.subr.mxu0 0.0
        %8979 = vmatpush1.msra.mxu0 %v8924
        %8980 = vmatprep.subr.mxu0 0.0
        %8981 = vmatpush1.msra.mxu0 %v8925
        %8982 = vmatprep.subr.mxu0 0.0
        %8983 = vmatpush1.msra.mxu0 %v8926
        %8984 = vmatprep.subr.mxu0 0.0
        %8985 = vmatpush1.msra.mxu0 %v8927
        %8986 = vmatprep.subr.mxu0 0.0
        %8987 = vmatpush1.msra.mxu0 %v8928
        %8988 = vmatprep.subr.mxu0 0.0
        %8989 = vmatpush1.msra.mxu0 %v8929
        %8990 = vmatprep.subr.mxu0 0.0
        %8991 = vmatpush1.msra.mxu0 %v8930
        %8992 = vmatprep.subr.mxu0 0.0
        %8993 = vmatpush1.msra.mxu0 %v8931
        %8994 = vmatprep.subr.mxu0 0.0
        %8995 = vmatpush1.msra.mxu0 %v8932
        %8996 = vmatprep.subr.mxu0 0.0
        %8997 = vmatpush1.msra.mxu0 %v8933
        %8998 = vmatprep.subr.mxu0 0.0
        %8999 = vmatpush1.msra.mxu0 %v8934
        %9000 = vmatprep.subr.mxu0 0.0
        %9001 = vmatpush1.msra.mxu0 %v8935
        %9002 = vmatprep.subr.mxu0 0.0
        %9003 = vmatpush1.msra.mxu0 %v8936
        %9004 = vmatprep.subr.mxu0 0.0
        %9005 = vmatpush1.msra.mxu0 %v8937
        %9006 = vmatprep.subr.mxu0 0.0
        %9007 = vmatpush1.msra.mxu0 %v8938
        %9008 = vmatprep.subr.mxu0 0.0
        %9009 = vmatpush1.msra.mxu0 %v8939
        %9010 = vmatprep.subr.mxu0 0.0
        %9011 = vmatpush1.msra.mxu0 %v8940
        %9012 = vmatprep.mubr.f32.mxu0 %v8878
        %9013 = vmatmul.mubr.f32.gmra.mrb[0].mxu0 %v8877
        %v9014 = vpop.f32.mrb[0].mxu0
        %v9015 = vadd.f32 %v8946, %v9014
        %v9016 = vpop.f32.mrb[0].mxu0
        %9017 = vmatprep.mubr.f32.mxu0 %v8880
        %9018 = vmatmul.mubr.f32.gmra.mrb[0].mxu0 %v8879
        %v9019 = vpop.f32.mrb[0].mxu0
        %v9020 = vadd.f32 %v8946, %v9019
        %v9021 = vpop.f32.mrb[0].mxu0
        %9022 = vmatprep.mubr.f32.mxu0 %v8882
        %9023 = vmatmul.mubr.f32.gmra.mrb[0].mxu0 %v8881
        %v9024 = vpop.f32.mrb[0].mxu0
        %v9025 = vadd.f32 %v8946, %v9024
        %v9026 = vpop.f32.mrb[0].mxu0
        %9027 = vmatprep.mubr.f32.mxu0 %v8884
        %9028 = vmatmul.mubr.f32.gmra.mrb[0].mxu0 %v8883
        %v9029 = vpop.f32.mrb[0].mxu0
        %v9030 = vadd.f32 %v8946, %v9029
        %v9031 = vpop.f32.mrb[0].mxu0
        %9032 = vmatprep.mubr.f32.mxu0 %v8886
        %9033 = vmatmul.mubr.f32.gmra.mrb[0].mxu0 %v8885
        %v9034 = vpop.f32.mrb[0].mxu0
        %v9035 = vadd.f32 %v8946, %v9034
        %v9036 = vpop.f32.mrb[0].mxu0
        %9037 = vmatprep.mubr.f32.mxu0 %v8888
        %9038 = vmatmul.mubr.f32.gmra.mrb[0].mxu0 %v8887
        %v9039 = vpop.f32.mrb[0].mxu0
        %v9040 = vadd.f32 %v8946, %v9039
        %v9041 = vpop.f32.mrb[0].mxu0
        %9042 = vmatprep.mubr.f32.mxu0 %v8890
        %9043 = vmatmul.mubr.f32.gmra.mrb[0].mxu0 %v8889
        %v9044 = vpop.f32.mrb[0].mxu0
        %v9045 = vadd.f32 %v8946, %v9044
        %v9046 = vpop.f32.mrb[0].mxu0
        %9047 = vmatprep.mubr.f32.mxu0 %v8892
        %9048 = vmatmul.mubr.f32.gmra.mrb[0].mxu0 %v8891
        %v9049 = vpop.f32.mrb[0].mxu0
        %v9050 = vadd.f32 %v8946, %v9049
        %v9051 = vpop.f32.mrb[0].mxu0
        %9052 = vmatprep.mubr.f32.mxu0 %v8894
        %9053 = vmatmul.mubr.f32.gmra.mrb[0].mxu0 %v8893
        %v9054 = vpop.f32.mrb[0].mxu0
        %v9055 = vadd.f32 %v8946, %v9054
        %v9056 = vpop.f32.mrb[0].mxu0
        %9057 = vmatprep.mubr.f32.mxu0 %v8896
        %9058 = vmatmul.mubr.f32.gmra.mrb[0].mxu0 %v8895
        %v9059 = vpop.f32.mrb[0].mxu0
        %v9060 = vadd.f32 %v8946, %v9059
        %v9061 = vpop.f32.mrb[0].mxu0
        %9062 = vmatprep.mubr.f32.mxu0 %v8898
        %9063 = vmatmul.mubr.f32.gmra.mrb[0].mxu0 %v8897
        %v9064 = vpop.f32.mrb[0].mxu0
        %v9065 = vadd.f32 %v8946, %v9064
        %v9066 = vpop.f32.mrb[0].mxu0
        %9067 = vmatprep.mubr.f32.mxu0 %v8900
        %9068 = vmatmul.mubr.f32.gmra.mrb[0].mxu0 %v8899
        %v9069 = vpop.f32.mrb[0].mxu0
        %v9070 = vadd.f32 %v8946, %v9069
        %v9071 = vpop.f32.mrb[0].mxu0
        %9072 = vmatprep.mubr.f32.mxu0 %v8902
        %9073 = vmatmul.mubr.f32.gmra.mrb[0].mxu0 %v8901
        %v9074 = vpop.f32.mrb[0].mxu0
        %v9075 = vadd.f32 %v8946, %v9074
        %v9076 = vpop.f32.mrb[0].mxu0
        %9077 = vmatprep.mubr.f32.mxu0 %v8904
        %9078 = vmatmul.mubr.f32.gmra.mrb[0].mxu0 %v8903
        %v9079 = vpop.f32.mrb[0].mxu0
        %v9080 = vadd.f32 %v8946, %v9079
        %v9081 = vpop.f32.mrb[0].mxu0
        %9082 = vmatprep.mubr.f32.mxu0 %v8906
        %9083 = vmatmul.mubr.f32.gmra.mrb[0].mxu0 %v8905
        %v9084 = vpop.f32.mrb[0].mxu0
        %v9085 = vadd.f32 %v8946, %v9084
        %v9086 = vpop.f32.mrb[0].mxu0
        %9087 = vmatprep.mubr.f32.mxu0 %v8908
        %9088 = vmatmul.mubr.f32.gmra.mrb[0].mxu0 %v8907
        %v9089 = vpop.f32.mrb[0].mxu0
        %v9090 = vadd.f32 %v8946, %v9089
        %v9091 = vpop.f32.mrb[0].mxu0
        %9092 = vdwg.mxu0
        %v9093 = vadd.f32 %v657, %v9015
        %v9094 = vadd.f32 %v658, %v9020
        %v9095 = vadd.f32 %v659, %v9025
        %v9096 = vadd.f32 %v660, %v9030
        %v9097 = vadd.f32 %v661, %v9035
        %v9098 = vadd.f32 %v662, %v9040
        %v9099 = vadd.f32 %v663, %v9045
        %v9100 = vadd.f32 %v664, %v9050
        %v9101 = vadd.f32 %v665, %v9055
        %v9102 = vadd.f32 %v666, %v9060
        %v9103 = vadd.f32 %v667, %v9065
        %v9104 = vadd.f32 %v668, %v9070
        %v9105 = vadd.f32 %v669, %v9075
        %v9106 = vadd.f32 %v670, %v9080
        %v9107 = vadd.f32 %v671, %v9085
        %v9108 = vadd.f32 %v672, %v9090
        %v9109 = vld [vmem:[%s10] sm:$0x1]
        %v9110 = vld [vmem:[%s11] sm:$0x1]
        %9111 = vadd.xlane.f32.xlu0 %v9093
        %v9112 = vpop.xlane.xlu0 %9111
        %9113 = vadd.xlane.f32.xlu0 %v9094
        %v9114 = vpop.xlane.xlu0 %9113
        %9115 = vadd.xlane.f32.xlu0 %v9095
        %v9116 = vpop.xlane.xlu0 %9115
        %9117 = vadd.xlane.f32.xlu0 %v9096
        %v9118 = vpop.xlane.xlu0 %9117
        %9119 = vadd.xlane.f32.xlu0 %v9097
        %v9120 = vpop.xlane.xlu0 %9119
        %9121 = vadd.xlane.f32.xlu0 %v9098
        %v9122 = vpop.xlane.xlu0 %9121
        %9123 = vadd.xlane.f32.xlu0 %v9099
        %v9124 = vpop.xlane.xlu0 %9123
        %9125 = vadd.xlane.f32.xlu0 %v9100
        %v9126 = vpop.xlane.xlu0 %9125
        %9127 = vadd.xlane.f32.xlu0 %v9101
        %v9128 = vpop.xlane.xlu0 %9127
        %9129 = vadd.xlane.f32.xlu0 %v9102
        %v9130 = vpop.xlane.xlu0 %9129
        %9131 = vadd.xlane.f32.xlu0 %v9103
        %v9132 = vpop.xlane.xlu0 %9131
        %9133 = vadd.xlane.f32.xlu0 %v9104
        %v9134 = vpop.xlane.xlu0 %9133
        %9135 = vadd.xlane.f32.xlu0 %v9105
        %v9136 = vpop.xlane.xlu0 %9135
        %9137 = vadd.xlane.f32.xlu0 %v9106
        %v9138 = vpop.xlane.xlu0 %9137
        %9139 = vadd.xlane.f32.xlu0 %v9107
        %v9140 = vpop.xlane.xlu0 %9139
        %9141 = vadd.xlane.f32.xlu0 %v9108
        %v9142 = vpop.xlane.xlu0 %9141
        %v9143 = vmul.f32 %v9112, %v8435
        %v9144 = vmul.f32 %v9114, %v8435
        %v9145 = vmul.f32 %v9116, %v8435
        %v9146 = vmul.f32 %v9118, %v8435
        %v9147 = vmul.f32 %v9120, %v8435
        %v9148 = vmul.f32 %v9122, %v8435
        %v9149 = vmul.f32 %v9124, %v8435
        %v9150 = vmul.f32 %v9126, %v8435
        %v9151 = vmul.f32 %v9128, %v8435
        %v9152 = vmul.f32 %v9130, %v8435
        %v9153 = vmul.f32 %v9132, %v8435
        %v9154 = vmul.f32 %v9134, %v8435
        %v9155 = vmul.f32 %v9136, %v8435
        %v9156 = vmul.f32 %v9138, %v8435
        %v9157 = vmul.f32 %v9140, %v8435
        %v9158 = vmul.f32 %v9142, %v8435
        %v9159 = vmul.f32 %v9093, %v9093
        %v9160 = vmul.f32 %v9094, %v9094
        %v9161 = vmul.f32 %v9095, %v9095
        %v9162 = vmul.f32 %v9096, %v9096
        %v9163 = vmul.f32 %v9097, %v9097
        %v9164 = vmul.f32 %v9098, %v9098
        %v9165 = vmul.f32 %v9099, %v9099
        %v9166 = vmul.f32 %v9100, %v9100
        %v9167 = vmul.f32 %v9101, %v9101
        %v9168 = vmul.f32 %v9102, %v9102
        %v9169 = vmul.f32 %v9103, %v9103
        %v9170 = vmul.f32 %v9104, %v9104
        %v9171 = vmul.f32 %v9105, %v9105
        %v9172 = vmul.f32 %v9106, %v9106
        %v9173 = vmul.f32 %v9107, %v9107
        %v9174 = vmul.f32 %v9108, %v9108
        %9175 = vadd.xlane.f32.xlu0 %v9159
        %v9176 = vpop.xlane.xlu0 %9175
        %9177 = vadd.xlane.f32.xlu0 %v9160
        %v9178 = vpop.xlane.xlu0 %9177
        %9179 = vadd.xlane.f32.xlu0 %v9161
        %v9180 = vpop.xlane.xlu0 %9179
        %9181 = vadd.xlane.f32.xlu0 %v9162
        %v9182 = vpop.xlane.xlu0 %9181
        %9183 = vadd.xlane.f32.xlu0 %v9163
        %v9184 = vpop.xlane.xlu0 %9183
        %9185 = vadd.xlane.f32.xlu0 %v9164
        %v9186 = vpop.xlane.xlu0 %9185
        %9187 = vadd.xlane.f32.xlu0 %v9165
        %v9188 = vpop.xlane.xlu0 %9187
        %9189 = vadd.xlane.f32.xlu0 %v9166
        %v9190 = vpop.xlane.xlu0 %9189
        %9191 = vadd.xlane.f32.xlu0 %v9167
        %v9192 = vpop.xlane.xlu0 %9191
        %9193 = vadd.xlane.f32.xlu0 %v9168
        %v9194 = vpop.xlane.xlu0 %9193
        %9195 = vadd.xlane.f32.xlu0 %v9169
        %v9196 = vpop.xlane.xlu0 %9195
        %9197 = vadd.xlane.f32.xlu0 %v9170
        %v9198 = vpop.xlane.xlu0 %9197
        %9199 = vadd.xlane.f32.xlu0 %v9171
        %v9200 = vpop.xlane.xlu0 %9199
        %9201 = vadd.xlane.f32.xlu0 %v9172
        %v9202 = vpop.xlane.xlu0 %9201
        %9203 = vadd.xlane.f32.xlu0 %v9173
        %v9204 = vpop.xlane.xlu0 %9203
        %9205 = vadd.xlane.f32.xlu0 %v9174
        %v9206 = vpop.xlane.xlu0 %9205
        %v9207 = vmul.f32 %v9176, %v8435
        %v9208 = vmul.f32 %v9178, %v8435
        %v9209 = vmul.f32 %v9180, %v8435
        %v9210 = vmul.f32 %v9182, %v8435
        %v9211 = vmul.f32 %v9184, %v8435
        %v9212 = vmul.f32 %v9186, %v8435
        %v9213 = vmul.f32 %v9188, %v8435
        %v9214 = vmul.f32 %v9190, %v8435
        %v9215 = vmul.f32 %v9192, %v8435
        %v9216 = vmul.f32 %v9194, %v8435
        %v9217 = vmul.f32 %v9196, %v8435
        %v9218 = vmul.f32 %v9198, %v8435
        %v9219 = vmul.f32 %v9200, %v8435
        %v9220 = vmul.f32 %v9202, %v8435
        %v9221 = vmul.f32 %v9204, %v8435
        %v9222 = vmul.f32 %v9206, %v8435
        %v9223 = vmul.f32 %v9143, %v9143
        %v9224 = vmul.f32 %v9144, %v9144
        %v9225 = vmul.f32 %v9145, %v9145
        %v9226 = vmul.f32 %v9146, %v9146
        %v9227 = vmul.f32 %v9147, %v9147
        %v9228 = vmul.f32 %v9148, %v9148
        %v9229 = vmul.f32 %v9149, %v9149
        %v9230 = vmul.f32 %v9150, %v9150
        %v9231 = vmul.f32 %v9151, %v9151
        %v9232 = vmul.f32 %v9152, %v9152
        %v9233 = vmul.f32 %v9153, %v9153
        %v9234 = vmul.f32 %v9154, %v9154
        %v9235 = vmul.f32 %v9155, %v9155
        %v9236 = vmul.f32 %v9156, %v9156
        %v9237 = vmul.f32 %v9157, %v9157
        %v9238 = vmul.f32 %v9158, %v9158
        %v9239 = vsub.f32 %v9207, %v9223
        %v9240 = vsub.f32 %v9208, %v9224
        %v9241 = vsub.f32 %v9209, %v9225
        %v9242 = vsub.f32 %v9210, %v9226
        %v9243 = vsub.f32 %v9211, %v9227
        %v9244 = vsub.f32 %v9212, %v9228
        %v9245 = vsub.f32 %v9213, %v9229
        %v9246 = vsub.f32 %v9214, %v9230
        %v9247 = vsub.f32 %v9215, %v9231
        %v9248 = vsub.f32 %v9216, %v9232
        %v9249 = vsub.f32 %v9217, %v9233
        %v9250 = vsub.f32 %v9218, %v9234
        %v9251 = vsub.f32 %v9219, %v9235
        %v9252 = vsub.f32 %v9220, %v9236
        %v9253 = vsub.f32 %v9221, %v9237
        %v9254 = vsub.f32 %v9222, %v9238
        %v9255 = vmax.f32 %v9239, 0.0
        %v9256 = vmax.f32 %v9240, 0.0
        %v9257 = vmax.f32 %v9241, 0.0
        %v9258 = vmax.f32 %v9242, 0.0
        %v9259 = vmax.f32 %v9243, 0.0
        %v9260 = vmax.f32 %v9244, 0.0
        %v9261 = vmax.f32 %v9245, 0.0
        %v9262 = vmax.f32 %v9246, 0.0
        %v9263 = vmax.f32 %v9247, 0.0
        %v9264 = vmax.f32 %v9248, 0.0
        %v9265 = vmax.f32 %v9249, 0.0
        %v9266 = vmax.f32 %v9250, 0.0
        %v9267 = vmax.f32 %v9251, 0.0
        %v9268 = vmax.f32 %v9252, 0.0
        %v9269 = vmax.f32 %v9253, 0.0
        %v9270 = vmax.f32 %v9254, 0.0
        %v9271 = vsub.f32 %v9093, %v9143
        %v9272 = vsub.f32 %v9094, %v9144
        %v9273 = vsub.f32 %v9095, %v9145
        %v9274 = vsub.f32 %v9096, %v9146
        %v9275 = vsub.f32 %v9097, %v9147
        %v9276 = vsub.f32 %v9098, %v9148
        %v9277 = vsub.f32 %v9099, %v9149
        %v9278 = vsub.f32 %v9100, %v9150
        %v9279 = vsub.f32 %v9101, %v9151
        %v9280 = vsub.f32 %v9102, %v9152
        %v9281 = vsub.f32 %v9103, %v9153
        %v9282 = vsub.f32 %v9104, %v9154
        %v9283 = vsub.f32 %v9105, %v9155
        %v9284 = vsub.f32 %v9106, %v9156
        %v9285 = vsub.f32 %v9107, %v9157
        %v9286 = vsub.f32 %v9108, %v9158
        %v9287 = vadd.f32 %v9255, 1e-05
        %v9288 = vadd.f32 %v9256, 1e-05
        %v9289 = vadd.f32 %v9257, 1e-05
        %v9290 = vadd.f32 %v9258, 1e-05
        %v9291 = vadd.f32 %v9259, 1e-05
        %v9292 = vadd.f32 %v9260, 1e-05
        %v9293 = vadd.f32 %v9261, 1e-05
        %v9294 = vadd.f32 %v9262, 1e-05
        %v9295 = vadd.f32 %v9263, 1e-05
        %v9296 = vadd.f32 %v9264, 1e-05
        %v9297 = vadd.f32 %v9265, 1e-05
        %v9298 = vadd.f32 %v9266, 1e-05
        %v9299 = vadd.f32 %v9267, 1e-05
        %v9300 = vadd.f32 %v9268, 1e-05
        %v9301 = vadd.f32 %v9269, 1e-05
        %v9302 = vadd.f32 %v9270, 1e-05
        %v9303 = vrsqrt.pop %v9287
        %v9304 = vrsqrt.pop %v9288
        %v9305 = vrsqrt.pop %v9289
        %v9306 = vrsqrt.pop %v9290
        %v9307 = vrsqrt.pop %v9291
        %v9308 = vrsqrt.pop %v9292
        %v9309 = vrsqrt.pop %v9293
        %v9310 = vrsqrt.pop %v9294
        %v9311 = vrsqrt.pop %v9295
        %v9312 = vrsqrt.pop %v9296
        %v9313 = vrsqrt.pop %v9297
        %v9314 = vrsqrt.pop %v9298
        %v9315 = vrsqrt.pop %v9299
        %v9316 = vrsqrt.pop %v9300
        %v9317 = vrsqrt.pop %v9301
        %v9318 = vrsqrt.pop %v9302
        %v9319 = vmul.f32 %v9271, %v9303
        %v9320 = vmul.f32 %v9272, %v9304
        %v9321 = vmul.f32 %v9273, %v9305
        %v9322 = vmul.f32 %v9274, %v9306
        %v9323 = vmul.f32 %v9275, %v9307
        %v9324 = vmul.f32 %v9276, %v9308
        %v9325 = vmul.f32 %v9277, %v9309
        %v9326 = vmul.f32 %v9278, %v9310
        %v9327 = vmul.f32 %v9279, %v9311
        %v9328 = vmul.f32 %v9280, %v9312
        %v9329 = vmul.f32 %v9281, %v9313
        %v9330 = vmul.f32 %v9282, %v9314
        %v9331 = vmul.f32 %v9283, %v9315
        %v9332 = vmul.f32 %v9284, %v9316
        %v9333 = vmul.f32 %v9285, %v9317
        %v9334 = vmul.f32 %v9286, %v9318
        %v9336 = vlaneseq
        %v9337 = vshrl.u32 %v9336, 7
        %v9338 = vsub.s32 0, %v9337
        %v9339 = vrot.slane %v9109, %v9338
        %v9341 = vmul.f32 %v9319, %v9339
        %v9342 = vmul.f32 %v9320, %v9339
        %v9343 = vmul.f32 %v9321, %v9339
        %v9344 = vmul.f32 %v9322, %v9339
        %v9345 = vmul.f32 %v9323, %v9339
        %v9346 = vmul.f32 %v9324, %v9339
        %v9347 = vmul.f32 %v9325, %v9339
        %v9348 = vmul.f32 %v9326, %v9339
        %v9349 = vmul.f32 %v9327, %v9339
        %v9350 = vmul.f32 %v9328, %v9339
        %v9351 = vmul.f32 %v9329, %v9339
        %v9352 = vmul.f32 %v9330, %v9339
        %v9353 = vmul.f32 %v9331, %v9339
        %v9354 = vmul.f32 %v9332, %v9339
        %v9355 = vmul.f32 %v9333, %v9339
        %v9356 = vmul.f32 %v9334, %v9339
        %v9358 = vlaneseq
        %v9359 = vshrl.u32 %v9358, 7
        %v9360 = vsub.s32 0, %v9359
        %v9361 = vrot.slane %v9110, %v9360
        %v9363 = vadd.f32 %v9341, %v9361
        %v9364 = vadd.f32 %v9342, %v9361
        %v9365 = vadd.f32 %v9343, %v9361
        %v9366 = vadd.f32 %v9344, %v9361
        %v9367 = vadd.f32 %v9345, %v9361
        %v9368 = vadd.f32 %v9346, %v9361
        %v9369 = vadd.f32 %v9347, %v9361
        %v9370 = vadd.f32 %v9348, %v9361
        %v9371 = vadd.f32 %v9349, %v9361
        %v9372 = vadd.f32 %v9350, %v9361
        %v9373 = vadd.f32 %v9351, %v9361
        %v9374 = vadd.f32 %v9352, %v9361
        %v9375 = vadd.f32 %v9353, %v9361
        %v9376 = vadd.f32 %v9354, %v9361
        %v9377 = vadd.f32 %v9355, %v9361
        %v9378 = vadd.f32 %v9356, %v9361
        %9379 = vst [vmem:[%s653] sm:$0xff] %v9363
        %9380 = vst [vmem:[%s653 + $0x8] sm:$0xff] %v9364
        %9381 = vst [vmem:[%s653 + $0x10] sm:$0xff] %v9365
        %9382 = vst [vmem:[%s653 + $0x18] sm:$0xff] %v9366
        %9383 = vst [vmem:[%s653 + $0x20] sm:$0xff] %v9367
        %9384 = vst [vmem:[%s653 + $0x28] sm:$0xff] %v9368
        %9385 = vst [vmem:[%s653 + $0x30] sm:$0xff] %v9369
        %9386 = vst [vmem:[%s653 + $0x38] sm:$0xff] %v9370
        %9387 = vst [vmem:[%s653 + $0x40] sm:$0xff] %v9371
        %9388 = vst [vmem:[%s653 + $0x48] sm:$0xff] %v9372
        %9389 = vst [vmem:[%s653 + $0x50] sm:$0xff] %v9373
        %9390 = vst [vmem:[%s653 + $0x58] sm:$0xff] %v9374
        %9391 = vst [vmem:[%s653 + $0x60] sm:$0xff] %v9375
        %9392 = vst [vmem:[%s653 + $0x68] sm:$0xff] %v9376
        %9393 = vst [vmem:[%s653 + $0x70] sm:$0xff] %v9377
        %9394 = vst [vmem:[%s653 + $0x78] sm:$0xff] %v9378
        %s9395 = sand.u32 %s392, 1
        %s9396 = scalar_lea.sflag [#allocation4], %s9395
        %s9397 = sand.u32 %s392, 1
        %s9398 = smul.addr %s9397, 128
        %s9399 = scalar_lea.vmem [#allocation14], %s9398
        // Predicated region
        $region113: #{tpu_custom_call.1} parent=83 // pred_check
          %p9400 = pneg %p402
        $region114: #{tpu_custom_call.1} parent=83 // pred_check_branch
          %9402 = sbr.rel (%p9400) target = $region116
        $region115: #{tpu_custom_call.1} parent=83 // pred_region
          %s9403 = smul.u32 8, %s38
          %s9405 = ssub.s32 2048, 2048
          %9406 = vsyncadd %s9396, %s9405
          %s9407 = smul.addr %s9403, 2
          %s9408 = smul.addr %s9407, 128
          %s9409 = scalar_lea.hbm %s16, %s9408
          %s9410 = sshll.u32 %s9399, 4
          %s9411 = int_to_ptr.vmem [resolvable:$true] %s9410
          %9416 = dma.vmem_to_hbm [thread:$0]  %s9411, 2048, %s9409, %s9396, 128, 128, 8
        $region116: #{tpu_custom_call.1} parent=83 // pred_fallthru
          _
      $region84: #{tpu_custom_call.1} parent=5 // pred_fallthru
        _
      %p9417 = scmp.le.s32.totalorder 2, %s33
      // Predicated region
      $region117: #{tpu_custom_call.1} parent=5 // pred_check
        %p9418 = pneg %p9417
      $region118: #{tpu_custom_call.1} parent=5 // pred_check_branch
        %9420 = sbr.rel (%p9418) target = $region120
      $region119: #{tpu_custom_call.1} parent=5 // pred_region
        %s9421 = ssub.s32 %s33, 2
        // Predicated region
        $region121: #{tpu_custom_call.1} parent=119 // pred_check
          %p9422 = pneg %p408
        $region122: #{tpu_custom_call.1} parent=119 // pred_check_branch
          %9424 = sbr.rel (%p9422) target = $region124
        $region123: #{tpu_custom_call.1} parent=119 // pred_region
          %s9425 = sand.u32 %s393, 1
          %s9426 = scalar_lea.sflag [#allocation4], %s9425
          %s9427 = sand.u32 %s393, 1
          %s9428 = smul.addr %s9427, 128
          %s9429 = scalar_lea.vmem [#allocation14], %s9428
          %9430 = dma.done %s9426, 2048
        $region124: #{tpu_custom_call.1} parent=119 // pred_fallthru
          _
      $region120: #{tpu_custom_call.1} parent=5 // pred_fallthru
        _
    $region6: #{tpu_custom_call.1} parent=1 // loop_footer
      %s37 = sadd.s32 1, %s33
    $region7: #{tpu_custom_call.1} parent=1 // loop_footer_branch
      %32 = sbr.rel target = $region3
    $region8: #{tpu_custom_call.1} parent=1 // loop_exit
      _
    %9431 = vsyncpa [#allocation3], 1
    %s9432 = scalar_lea.sflag [#allocation3], 1
    %9433 = vsyncpa %s9432, 1
    %9434 = vsyncpa [#allocation6], 1
    %s9435 = scalar_lea.sflag [#allocation6], 1
    %9436 = vsyncpa %s9435, 1
    %9437 = vsyncpa [#allocation9], 1
    %9438 = vsyncpa [#allocation12], 1
    %9439 = vsyncpa [#allocation4], 1
    %s9440 = scalar_lea.sflag [#allocation4], 1
    %9441 = vsyncpa %s9440, 1

</llo_original>
